<compile_context>
chip_gen: v5e
topology: v5e:2x2
jax: 0.10.0
libtpu: 0.0.40
codegen_flags: <defaults>
</compile_context>

<pallas_src>
import jax
import jax.numpy as jnp
from jax import lax
from jax.experimental import pallas as pl
from jax.experimental.pallas import tpu as pltpu

EPS = 1e-3


def fused_mul_conv_bn_kernel(x_ref, s_ref, w_ref, gamma_ref, beta_ref, o_ref):
    # x_ref: (Cin, P) bf16, s_ref: (Cin, 1) bf16, w_ref: (Coutb, Cin) bf16
    # gamma_ref/beta_ref: (Coutb, 1) f32, o_ref: (Coutb, P) f32
    x = x_ref[...] * s_ref[...]                                     # (Cin, P) bf16
    # 1x1 conv == matmul on the MXU: (Coutb, Cin) @ (Cin, P) -> (Coutb, P), f32 acc
    y = jnp.dot(w_ref[...], x, preferred_element_type=jnp.float32)

    # BatchNorm2d training mode: biased stats over N*H*W (axis 1), per channel.
    # One pass: var = E[y^2] - mean^2, affine folded into scale/shift.
    inv_p = 1.0 / y.shape[1]
    s1 = jnp.sum(y, axis=1, keepdims=True)                          # (Coutb, 1)
    s2 = jnp.sum(y * y, axis=1, keepdims=True)                      # (Coutb, 1)
    mean = s1 * inv_p
    var = jnp.maximum(s2 * inv_p - mean * mean, 0.0)
    scale = gamma_ref[...] * lax.rsqrt(var + EPS)                   # (Coutb, 1)
    shift = beta_ref[...] - mean * scale                            # (Coutb, 1)
    o_ref[...] = (y * scale + shift).astype(o_ref.dtype)


def fused_mul_conv_bn(x_nchw, scale_nc11, w_oihw, gamma, beta, *, cout_blocks=2):
    """x_nchw: (N, Cin, H, W); scale: (1, Cin, 1, 1); w: (Cout, Cin, 1, 1)."""
    N, Cin, H, W = x_nchw.shape
    Cout = w_oihw.shape[0]
    assert N == 1, "fast layout path assumes N == 1 (as in the reference module)"
    assert Cout % cout_blocks == 0
    P = N * H * W
    cb = Cout // cout_blocks

    # Free re-layouts (pure views) + bf16 cast of the MXU operands.
    x2d = x_nchw.reshape(Cin, P).astype(jnp.bfloat16)
    s2d = scale_nc11.reshape(Cin, 1).astype(jnp.bfloat16)
    # TODO(synk): if the conv weight is static across calls, pre-cast it to
    # bf16 once outside the hot path instead of per call.
    w2d = w_oihw.reshape(Cout, Cin).astype(jnp.bfloat16)
    g2d = gamma.reshape(Cout, 1).astype(jnp.float32)
    b2d = beta.reshape(Cout, 1).astype(jnp.float32)

    out2d = pl.pallas_call(
        fused_mul_conv_bn_kernel,
        out_shape=jax.ShapeDtypeStruct((Cout, P), jnp.float32),
        grid=(cout_blocks,),
        in_specs=[
            pl.BlockSpec((Cin, P), lambda j: (0, 0)),   # x, resident across blocks
            pl.BlockSpec((Cin, 1), lambda j: (0, 0)),   # per-channel scale
            pl.BlockSpec((cb, Cin), lambda j: (j, 0)),  # weight slab for block j
            pl.BlockSpec((cb, 1), lambda j: (j, 0)),    # gamma
            pl.BlockSpec((cb, 1), lambda j: (j, 0)),    # beta
        ],
        out_specs=pl.BlockSpec((cb, P), lambda j: (j, 0)),
        compiler_params=pltpu.CompilerParams(
            dimension_semantics=("parallel",),
        ),
    )(x2d, s2d, w2d, g2d, b2d)

    # Free reshape back to NCHW (N == 1).
    return out2d.reshape(N, Cout, H, W)


if __name__ == "__main__":
    # Shapes implied by the module's forward.
    N, Cin, H, W = 1, 2304, 7, 7
    Cout = 384

    key = jax.random.PRNGKey(0)
    k1, k2, k3, k4, k5 = jax.random.split(key, 5)

    x625 = jax.random.normal(k1, (N, Cin, H, W), dtype=jnp.float32)
    x630 = jax.random.normal(k2, (1, Cin, 1, 1), dtype=jnp.float32)

    # Deterministic synthetic parameters (not loaded from a checkpoint).
    conv_w = jax.random.normal(k3, (Cout, Cin, 1, 1), dtype=jnp.float32) * 0.02
    bn_gamma = jnp.ones((Cout,), dtype=jnp.float32) + 0.01 * jax.random.normal(
        k4, (Cout,), dtype=jnp.float32
    )
    bn_beta = 0.01 * jax.random.normal(k5, (Cout,), dtype=jnp.float32)

    out = jax.block_until_ready(
        fused_mul_conv_bn(x625, x630, conv_w, bn_gamma, bn_beta)
    )
    assert out.shape == (N, Cout, H, W)

    # Pure-JAX f32 reference (bf16 matmul operands in the kernel => loose tol).
    # TODO(synk): BatchNorm2d training-mode running_mean/running_var updates
    # (momentum=0.01, unbiased var) are a buffer side effect not produced here.
    x631 = x630 * x625
    y_ref = jnp.einsum("oc,nchw->nohw", conv_w.reshape(Cout, Cin), x631)
    mean = y_ref.mean(axis=(0, 2, 3), keepdims=True)
    var = ((y_ref - mean) ** 2).mean(axis=(0, 2, 3), keepdims=True)
    ref = (y_ref - mean) * lax.rsqrt(var + EPS) * bn_gamma.reshape(
        1, Cout, 1, 1
    ) + bn_beta.reshape(1, Cout, 1, 1)
    max_err = float(jnp.max(jnp.abs(out - ref)))
    assert max_err < 0.15, max_err

    print("KERNEL_OK")
</pallas_src>

<mosaic_0001>
module attributes {stable_mosaic.version = 11 : i64} {
  func.func @fused_mul_conv_bn_kernel(%arg0: i32, %arg1: memref<2304x49xbf16, #tpu.memory_space<vmem>>, %arg2: memref<2304x1xbf16, #tpu.memory_space<vmem>>, %arg3: memref<192x2304xbf16, #tpu.memory_space<vmem>>, %arg4: memref<192x1xf32, #tpu.memory_space<vmem>>, %arg5: memref<192x1xf32, #tpu.memory_space<vmem>>, %arg6: memref<192x49xf32, #tpu.memory_space<vmem>>) attributes {dimension_semantics = [#tpu.dimension_semantics<parallel>], iteration_bounds = array<i64: 2>, scalar_prefetch = 0 : i64, scratch_operands = 0 : i64, tpu.core_type = #tpu.core_type<tc>, window_params = [{pipeline_mode = #tpu.pipeline_mode<synchronous>, transform_indices = @transform_0, window_bounds = array<i64: 2304, 49>}, {pipeline_mode = #tpu.pipeline_mode<synchronous>, transform_indices = @transform_1, window_bounds = array<i64: 2304, 1>}, {transform_indices = @transform_2, window_bounds = array<i64: 192, 2304>}, {transform_indices = @transform_3, window_bounds = array<i64: 192, 1>}, {transform_indices = @transform_4, window_bounds = array<i64: 192, 1>}, {transform_indices = @transform_5, window_bounds = array<i64: 192, 49>}]} {
    %c0 = arith.constant 0 : index
    %c0_0 = arith.constant 0 : index
    %0 = vector.load %arg1[%c0, %c0_0] : memref<2304x49xbf16, #tpu.memory_space<vmem>>, vector<2304x49xbf16>
    %c0_1 = arith.constant 0 : index
    %c0_2 = arith.constant 0 : index
    %1 = vector.load %arg2[%c0_1, %c0_2] : memref<2304x1xbf16, #tpu.memory_space<vmem>>, vector<2304x1xbf16>
    %2 = vector.broadcast %1 : vector<2304x1xbf16> to vector<2304x49xbf16>
    %3 = arith.mulf %0, %2 : vector<2304x49xbf16>
    %c0_3 = arith.constant 0 : index
    %c0_4 = arith.constant 0 : index
    %4 = vector.load %arg3[%c0_3, %c0_4] : memref<192x2304xbf16, #tpu.memory_space<vmem>>, vector<192x2304xbf16>
    %cst = arith.constant dense<0.000000e+00> : vector<192x49xf32>
    %5 = tpu.matmul %4, %3, %cst {dimension_numbers = #tpu.dot_dimension_numbers<[1], [0], [0], [1], [0, 0, 1, 1], [], []>} : vector<192x2304xbf16>, vector<2304x49xbf16>, vector<192x49xf32> -> vector<192x49xf32>
    %cst_5 = arith.constant dense<0.000000e+00> : vector<192xf32>
    %6 = vector.multi_reduction <add>, %5, %cst_5 [1] : vector<192x49xf32> to vector<192xf32>
    %7 = vector.shape_cast %6 : vector<192xf32> to vector<192x1xf32>
    %8 = arith.mulf %5, %5 : vector<192x49xf32>
    %cst_6 = arith.constant dense<0.000000e+00> : vector<192xf32>
    %9 = vector.multi_reduction <add>, %8, %cst_6 [1] : vector<192x49xf32> to vector<192xf32>
    %10 = vector.shape_cast %9 : vector<192xf32> to vector<192x1xf32>
    %cst_7 = arith.constant 0.0204081628 : f32
    %11 = vector.broadcast %cst_7 : f32 to vector<192x1xf32>
    %12 = arith.mulf %7, %11 : vector<192x1xf32>
    %cst_8 = arith.constant 0.0204081628 : f32
    %13 = vector.broadcast %cst_8 : f32 to vector<192x1xf32>
    %14 = arith.mulf %10, %13 : vector<192x1xf32>
    %15 = arith.mulf %12, %12 : vector<192x1xf32>
    %16 = arith.subf %14, %15 : vector<192x1xf32>
    %cst_9 = arith.constant 0.000000e+00 : f32
    %17 = vector.broadcast %cst_9 : f32 to vector<192x1xf32>
    %18 = arith.maximumf %16, %17 : vector<192x1xf32>
    %c0_10 = arith.constant 0 : index
    %c0_11 = arith.constant 0 : index
    %19 = vector.load %arg4[%c0_10, %c0_11] : memref<192x1xf32, #tpu.memory_space<vmem>>, vector<192x1xf32>
    %cst_12 = arith.constant 1.000000e-03 : f32
    %20 = vector.broadcast %cst_12 : f32 to vector<192x1xf32>
    %21 = arith.addf %18, %20 : vector<192x1xf32>
    %22 = math.rsqrt %21 : vector<192x1xf32>
    %23 = arith.mulf %19, %22 : vector<192x1xf32>
    %c0_13 = arith.constant 0 : index
    %c0_14 = arith.constant 0 : index
    %24 = vector.load %arg5[%c0_13, %c0_14] : memref<192x1xf32, #tpu.memory_space<vmem>>, vector<192x1xf32>
    %25 = arith.mulf %12, %23 : vector<192x1xf32>
    %26 = arith.subf %24, %25 : vector<192x1xf32>
    %27 = vector.broadcast %23 : vector<192x1xf32> to vector<192x49xf32>
    %28 = arith.mulf %5, %27 : vector<192x49xf32>
    %29 = vector.broadcast %26 : vector<192x1xf32> to vector<192x49xf32>
    %30 = arith.addf %28, %29 : vector<192x49xf32>
    %c0_15 = arith.constant 0 : index
    %c0_16 = arith.constant 0 : index
    %31 = vector.load %arg6[%c0_15, %c0_16] : memref<192x49xf32, #tpu.memory_space<vmem>>, vector<192x49xf32>
    tpu.vector_store %arg6[%c0_15, %c0_16], %30 {strides = array<i32>} : memref<192x49xf32, #tpu.memory_space<vmem>>, vector<192x49xf32>,
    return
  }
  func.func @transform_0(%arg0: i32) -> (i32, i32) {
    %c0_i32 = arith.constant 0 : i32
    %c0_i32_0 = arith.constant 0 : i32
    %c0_i32_1 = arith.constant 0 : i32
    return %c0_i32, %c0_i32_0 : i32, i32
  }
  func.func @transform_1(%arg0: i32) -> (i32, i32) {
    %c0_i32 = arith.constant 0 : i32
    %c0_i32_0 = arith.constant 0 : i32
    %c0_i32_1 = arith.constant 0 : i32
    return %c0_i32, %c0_i32_0 : i32, i32
  }
  func.func @transform_2(%arg0: i32) -> (i32, i32) {
    %c0_i32 = arith.constant 0 : i32
    %c0_i32_0 = arith.constant 0 : i32
    return %arg0, %c0_i32 : i32, i32
  }
  func.func @transform_3(%arg0: i32) -> (i32, i32) {
    %c0_i32 = arith.constant 0 : i32
    %c0_i32_0 = arith.constant 0 : i32
    return %arg0, %c0_i32 : i32, i32
  }
  func.func @transform_4(%arg0: i32) -> (i32, i32) {
    %c0_i32 = arith.constant 0 : i32
    %c0_i32_0 = arith.constant 0 : i32
    return %arg0, %c0_i32 : i32, i32
  }
  func.func @transform_5(%arg0: i32) -> (i32, i32) {
    %c0_i32 = arith.constant 0 : i32
    %c0_i32_0 = arith.constant 0 : i32
    return %arg0, %c0_i32 : i32, i32
  }
}

</mosaic_0001>

<llo_original>
// kernel: tpu_custom_call.1
$region0: #{tpu_custom_call.1}
  #allocation0 [shape = 'u32[]', space=smem, size = 0x4, offset = 0x4, fixed_abs, tag = 'smem constant byte address 0x4 - core index']
  #allocation1 [shape = 'u32[72,128]{1,0:T(1,128)}', space=vmem, size = 0x9000, scoped, tag = 'internal scratch']
  %s0 = inlined_call_operand.vmem [shape: bf16[2304,49], index: 0, kind: input, shape index: {}]
  %s1 = inlined_call_operand.vmem [shape: bf16[2304,1], index: 1, kind: input, shape index: {}]
  %s2 = inlined_call_operand.vmem [shape: bf16[384,2304], index: 2, kind: input, shape index: {}]
  %s3 = inlined_call_operand.vmem [shape: f32[384,1], index: 3, kind: input, shape index: {}]
  %s4 = inlined_call_operand.vmem [shape: f32[384,1], index: 4, kind: input, shape index: {}]
  %s5 = inlined_call_operand.vmem [shape: f32[384,49], index: 5, kind: output, shape index: {}]
  %s6 = sld [smem:[#allocation0]]
  $region53: #{tpu_custom_call.1} parent=0
    _
  %s8 = ssub.s32 1, %s6
  %s9 = scalar_select 0, %s8, %s6
  loop: start=0, step=1, limit=4
  $region2: #{tpu_custom_call.1} parent=0 // loop_pre_header
    _
  $region3: #{tpu_custom_call.1} parent=0 // loop_header
    %s11 = sphi 0, %s15
    %p12 = scmp.ge.s32.totalorder %s11, 4
    %s19 = sphi 0, %s19
    %s21 = sphi 0, %s19
    %s22 = sphi 0, %s21
    %s36 = sphi 0, %s22
    %s40 = sphi 0, %s40
    %s42 = sphi 0, %s40
    %s43 = sphi 0, %s42
    %s57 = sphi 0, %s43
    %s63 = sphi 0, %s65
    %s66 = sphi 0, %s63
    %s67 = sphi 0, %s66
    %s83 = sphi 0, %s67
    %s89 = sphi 0, %s91
    %s92 = sphi 0, %s89
    %s93 = sphi 0, %s92
    %s109 = sphi 0, %s93
    %s115 = sphi 0, %s117
    %s118 = sphi 0, %s115
    %s119 = sphi 0, %s118
    %s135 = sphi 0, %s119
    %s141 = sphi 0, %s143
    %s144 = sphi 0, %s141
    %s145 = sphi 0, %s144
    %s161 = sphi 0, %s145
  $region4: #{tpu_custom_call.1} parent=0 // loop_header_branch
    %14 = sbr.rel (%p12) target = $region8
  $region5: #{tpu_custom_call.1} parent=0 // loop_body
    %s16 = ssub.s32 %s11, 1
    %s17 = ssub.s32 %s11, 2
    %s18 = sadd.s32 %s11, 1
    %s20 = sadd.s32 %s19, 1
    %p23 = scmp.eq.s32.totalorder %s11, 1
    %p24 = scmp.ne.s32.totalorder %s19, %s21
    %p25 = scmp.eq.s32.totalorder %s11, 0
    %p26 = por %p24, %p25
    %p27 = scmp.ne.s32.totalorder %s19, %s21
    %p28 = scmp.eq.s32.totalorder %s16, 1
    %p29 = por %p27, %p28
    %p30 = scmp.ne.s32.totalorder %s21, %s22
    %p31 = scmp.eq.s32.totalorder %s16, 0
    %p32 = por %p30, %p31
    %p33 = scmp.ne.s32.totalorder %s21, %s22
    %p34 = scmp.eq.s32.totalorder %s17, 1
    %p35 = por %p33, %p34
    %p37 = scmp.ne.s32.totalorder %s22, %s36
    %p38 = scmp.eq.s32.totalorder %s17, 0
    %p39 = por %p37, %p38
    %s41 = sadd.s32 %s40, 1
    %p44 = scmp.eq.s32.totalorder %s11, 1
    %p45 = scmp.ne.s32.totalorder %s40, %s42
    %p46 = scmp.eq.s32.totalorder %s11, 0
    %p47 = por %p45, %p46
    %p48 = scmp.ne.s32.totalorder %s40, %s42
    %p49 = scmp.eq.s32.totalorder %s16, 1
    %p50 = por %p48, %p49
    %p51 = scmp.ne.s32.totalorder %s42, %s43
    %p52 = scmp.eq.s32.totalorder %s16, 0
    %p53 = por %p51, %p52
    %p54 = scmp.ne.s32.totalorder %s42, %s43
    %p55 = scmp.eq.s32.totalorder %s17, 1
    %p56 = por %p54, %p55
    %p58 = scmp.ne.s32.totalorder %s43, %s57
    %p59 = scmp.eq.s32.totalorder %s17, 0
    %p60 = por %p58, %p59
    %s61 = ssub.s32 %s11, %s18
    %p62 = scmp.eq.s32.totalorder %s61, 0
    %s64 = sadd.s32 %s63, 1
    %s65 = scalar_select %p62, %s63, %s64
    %p68 = pneg %p62
    %p69 = scmp.eq.s32.totalorder %s11, 1
    %p70 = por %p68, %p69
    %p71 = scmp.ne.s32.totalorder %s63, %s66
    %p72 = scmp.eq.s32.totalorder %s11, 0
    %p73 = por %p71, %p72
    %p74 = scmp.ne.s32.totalorder %s63, %s66
    %p75 = scmp.eq.s32.totalorder %s16, 1
    %p76 = por %p74, %p75
    %p77 = scmp.ne.s32.totalorder %s66, %s67
    %p78 = scmp.eq.s32.totalorder %s16, 0
    %p79 = por %p77, %p78
    %p80 = scmp.ne.s32.totalorder %s66, %s67
    %p81 = scmp.eq.s32.totalorder %s17, 1
    %p82 = por %p80, %p81
    %p84 = scmp.ne.s32.totalorder %s67, %s83
    %p85 = scmp.eq.s32.totalorder %s17, 0
    %p86 = por %p84, %p85
    %s87 = ssub.s32 %s11, %s18
    %p88 = scmp.eq.s32.totalorder %s87, 0
    %s90 = sadd.s32 %s89, 1
    %s91 = scalar_select %p88, %s89, %s90
    %p94 = pneg %p88
    %p95 = scmp.eq.s32.totalorder %s11, 1
    %p96 = por %p94, %p95
    %p97 = scmp.ne.s32.totalorder %s89, %s92
    %p98 = scmp.eq.s32.totalorder %s11, 0
    %p99 = por %p97, %p98
    %p100 = scmp.ne.s32.totalorder %s89, %s92
    %p101 = scmp.eq.s32.totalorder %s16, 1
    %p102 = por %p100, %p101
    %p103 = scmp.ne.s32.totalorder %s92, %s93
    %p104 = scmp.eq.s32.totalorder %s16, 0
    %p105 = por %p103, %p104
    %p106 = scmp.ne.s32.totalorder %s92, %s93
    %p107 = scmp.eq.s32.totalorder %s17, 1
    %p108 = por %p106, %p107
    %p110 = scmp.ne.s32.totalorder %s93, %s109
    %p111 = scmp.eq.s32.totalorder %s17, 0
    %p112 = por %p110, %p111
    %s113 = ssub.s32 %s11, %s18
    %p114 = scmp.eq.s32.totalorder %s113, 0
    %s116 = sadd.s32 %s115, 1
    %s117 = scalar_select %p114, %s115, %s116
    %p120 = pneg %p114
    %p121 = scmp.eq.s32.totalorder %s11, 1
    %p122 = por %p120, %p121
    %p123 = scmp.ne.s32.totalorder %s115, %s118
    %p124 = scmp.eq.s32.totalorder %s11, 0
    %p125 = por %p123, %p124
    %p126 = scmp.ne.s32.totalorder %s115, %s118
    %p127 = scmp.eq.s32.totalorder %s16, 1
    %p128 = por %p126, %p127
    %p129 = scmp.ne.s32.totalorder %s118, %s119
    %p130 = scmp.eq.s32.totalorder %s16, 0
    %p131 = por %p129, %p130
    %p132 = scmp.ne.s32.totalorder %s118, %s119
    %p133 = scmp.eq.s32.totalorder %s17, 1
    %p134 = por %p132, %p133
    %p136 = scmp.ne.s32.totalorder %s119, %s135
    %p137 = scmp.eq.s32.totalorder %s17, 0
    %p138 = por %p136, %p137
    %s139 = ssub.s32 %s11, %s18
    %p140 = scmp.eq.s32.totalorder %s139, 0
    %s142 = sadd.s32 %s141, 1
    %s143 = scalar_select %p140, %s141, %s142
    %p146 = pneg %p140
    %p147 = scmp.eq.s32.totalorder %s11, 1
    %p148 = por %p146, %p147
    %p149 = scmp.ne.s32.totalorder %s141, %s144
    %p150 = scmp.eq.s32.totalorder %s11, 0
    %p151 = por %p149, %p150
    %p152 = scmp.ne.s32.totalorder %s141, %s144
    %p153 = scmp.eq.s32.totalorder %s16, 1
    %p154 = por %p152, %p153
    %p155 = scmp.ne.s32.totalorder %s144, %s145
    %p156 = scmp.eq.s32.totalorder %s16, 0
    %p157 = por %p155, %p156
    %p158 = scmp.ne.s32.totalorder %s144, %s145
    %p159 = scmp.eq.s32.totalorder %s17, 1
    %p160 = por %p158, %p159
    %p162 = scmp.ne.s32.totalorder %s145, %s161
    %p163 = scmp.eq.s32.totalorder %s17, 0
    %p164 = por %p162, %p163
    %p165 = scmp.le.s32.totalorder 1, %s11
    %p166 = scmp.lt.s32.totalorder %s11, 3
    %p167 = pnand %p165, %p166
    %p168 = pneg %p167
    // Predicated region
    $region9: #{tpu_custom_call.1} parent=5 // pred_check
      _
    $region10: #{tpu_custom_call.1} parent=5 // pred_check_branch
      %170 = sbr.rel (%p167) target = $region12
    $region11: #{tpu_custom_call.1} parent=5 // pred_region
      %s171 = ssub.s32 %s11, 1
      // Predicated region
      $region13: #{tpu_custom_call.1} parent=11 // pred_check
        %p172 = pneg %p32
      $region14: #{tpu_custom_call.1} parent=11 // pred_check_branch
        %174 = sbr.rel (%p172) target = $region16
      $region15: #{tpu_custom_call.1} parent=11 // pred_region
        _
      $region16: #{tpu_custom_call.1} parent=11 // pred_fallthru
        _
      // Predicated region
      $region17: #{tpu_custom_call.1} parent=11 // pred_check
        %p175 = pneg %p53
      $region18: #{tpu_custom_call.1} parent=11 // pred_check_branch
        %177 = sbr.rel (%p175) target = $region20
      $region19: #{tpu_custom_call.1} parent=11 // pred_region
        _
      $region20: #{tpu_custom_call.1} parent=11 // pred_fallthru
        _
    $region12: #{tpu_custom_call.1} parent=5 // pred_fallthru
      _
    %p178 = scmp.lt.s32.totalorder %s11, 2
    // Predicated region
    $region21: #{tpu_custom_call.1} parent=5 // pred_check
      %p179 = pneg %p178
    $region22: #{tpu_custom_call.1} parent=5 // pred_check_branch
      %181 = sbr.rel (%p179) target = $region24
    $region23: #{tpu_custom_call.1} parent=5 // pred_region
      // Predicated region
      $region25: #{tpu_custom_call.1} parent=23 // pred_check
        %p182 = pneg %p73
      $region26: #{tpu_custom_call.1} parent=23 // pred_check_branch
        %184 = sbr.rel (%p182) target = $region28
      $region27: #{tpu_custom_call.1} parent=23 // pred_region
        %s185 = smul.u32 24, %s11
        %p186 = scmp.lt.s32.totalorder %s185, 47
        %s187 = scalar_select %p186, %s185, 47
        %s188 = smul.addr %s187, 18
        %s189 = smul.addr %s188, 4
        %s190 = scalar_lea.vmem %s2, %s189
        %s191 = smul.u32 24, %s11
      $region28: #{tpu_custom_call.1} parent=23 // pred_fallthru
        _
      // Predicated region
      $region29: #{tpu_custom_call.1} parent=23 // pred_check
        %p192 = pneg %p99
      $region30: #{tpu_custom_call.1} parent=23 // pred_check_branch
        %194 = sbr.rel (%p192) target = $region32
      $region31: #{tpu_custom_call.1} parent=23 // pred_region
        %s195 = smul.u32 24, %s11
        %p196 = scmp.lt.s32.totalorder %s195, 47
        %s197 = scalar_select %p196, %s195, 47
        %s198 = smul.addr %s197, 8
        %s199 = scalar_lea.vmem %s3, %s198
        %s200 = smul.u32 24, %s11
      $region32: #{tpu_custom_call.1} parent=23 // pred_fallthru
        _
      // Predicated region
      $region33: #{tpu_custom_call.1} parent=23 // pred_check
        %p201 = pneg %p125
      $region34: #{tpu_custom_call.1} parent=23 // pred_check_branch
        %203 = sbr.rel (%p201) target = $region36
      $region35: #{tpu_custom_call.1} parent=23 // pred_region
        %s204 = smul.u32 24, %s11
        %p205 = scmp.lt.s32.totalorder %s204, 47
        %s206 = scalar_select %p205, %s204, 47
        %s207 = smul.addr %s206, 8
        %s208 = scalar_lea.vmem %s4, %s207
        %s209 = smul.u32 24, %s11
      $region36: #{tpu_custom_call.1} parent=23 // pred_fallthru
        _
    $region24: #{tpu_custom_call.1} parent=5 // pred_fallthru
      _
    %p210 = scmp.le.s32.totalorder 1, %s11
    %p211 = scmp.lt.s32.totalorder %s11, 3
    %p212 = pnand %p210, %p211
    %p213 = pneg %p212
    // Predicated region
    $region37: #{tpu_custom_call.1} parent=5 // pred_check
      _
    $region38: #{tpu_custom_call.1} parent=5 // pred_check_branch
      %215 = sbr.rel (%p212) target = $region40
    $region39: #{tpu_custom_call.1} parent=5 // pred_region
      %s216 = ssub.s32 %s11, 1
      %p217 = pneg %p32
      %p218 = pneg %p29
      %p219 = pneg %p53
      %p220 = pneg %p50
      %s221 = smul.u32 24, %s16
      %p222 = scmp.lt.s32.totalorder %s221, 47
      %s223 = scalar_select %p222, %s221, 47
      %s224 = smul.addr %s223, 18
      %s225 = smul.addr %s224, 4
      %s226 = scalar_lea.vmem %s2, %s225
      %p227 = pneg %p79
      %p228 = pneg %p76
      %s229 = smul.u32 24, %s16
      %p230 = scmp.lt.s32.totalorder %s229, 47
      %s231 = scalar_select %p230, %s229, 47
      %s232 = smul.addr %s231, 8
      %s233 = scalar_lea.vmem %s3, %s232
      %p234 = pneg %p105
      %p235 = pneg %p102
      %s236 = smul.u32 24, %s16
      %p237 = scmp.lt.s32.totalorder %s236, 47
      %s238 = scalar_select %p237, %s236, 47
      %s239 = smul.addr %s238, 8
      %s240 = scalar_lea.vmem %s4, %s239
      %p241 = pneg %p131
      %p242 = pneg %p128
      %p243 = pneg %p157
      %p244 = pneg %p154
      %s245 = smul.u32 24, %s16
      %p246 = scmp.lt.s32.totalorder %s245, 47
      %s247 = scalar_select %p246, %s245, 47
      %s248 = smul.addr %s247, 8
      %s249 = scalar_lea.vmem %s5, %s248
      %s250 = smul.u32 24, %s16
      %p251 = scmp.lt.s32.totalorder %s250, 47
      %s252 = scalar_select %p251, %s250, 47
      %s253 = smul.addr %s252, 18
      %s254 = smul.addr %s253, 4
      %s255 = scalar_lea.vmem %s2, %s254
      %s256 = smul.u32 24, %s16
      %s257 = smul.u32 24, %s16
      %p258 = scmp.lt.s32.totalorder %s257, 47
      %s259 = scalar_select %p258, %s257, 47
      %s260 = smul.addr %s259, 8
      %s261 = scalar_lea.vmem %s3, %s260
      %s262 = smul.u32 24, %s16
      %s263 = smul.u32 24, %s16
      %p264 = scmp.lt.s32.totalorder %s263, 47
      %s265 = scalar_select %p264, %s263, 47
      %s266 = smul.addr %s265, 8
      %s267 = scalar_lea.vmem %s4, %s266
      %s268 = smul.u32 24, %s16
      %s269 = smul.u32 24, %s16
      %p270 = scmp.lt.s32.totalorder %s269, 47
      %s271 = scalar_select %p270, %s269, 47
      %s272 = smul.addr %s271, 8
      %s273 = scalar_lea.vmem %s5, %s272
      %s274 = smul.u32 24, %s16
      %v275 = vld [vmem:[%s0] sm:$0xf]
      %v276 = vld [vmem:[%s0 + $0x4] sm:$0xf]
      %v277 = vld [vmem:[%s0 + $0x8] sm:$0xf]
      %v278 = vld [vmem:[%s0 + $0xc] sm:$0xf]
      %v279 = vld [vmem:[%s0 + $0x10] sm:$0xf]
      %v280 = vld [vmem:[%s0 + $0x14] sm:$0xf]
      %v281 = vld [vmem:[%s0 + $0x18] sm:$0xf]
      %v282 = vld [vmem:[%s0 + $0x1c] sm:$0xf]
      %v283 = vld [vmem:[%s0 + $0x20] sm:$0xf]
      %v284 = vld [vmem:[%s0 + $0x24] sm:$0xf]
      %v285 = vld [vmem:[%s0 + $0x28] sm:$0xf]
      %v286 = vld [vmem:[%s0 + $0x2c] sm:$0xf]
      %v287 = vld [vmem:[%s0 + $0x30] sm:$0xf]
      %v288 = vld [vmem:[%s0 + $0x34] sm:$0xf]
      %v289 = vld [vmem:[%s0 + $0x38] sm:$0xf]
      %v290 = vld [vmem:[%s0 + $0x3c] sm:$0xf]
      %v291 = vld [vmem:[%s0 + $0x40] sm:$0xf]
      %v292 = vld [vmem:[%s0 + $0x44] sm:$0xf]
      %v293 = vld [vmem:[%s0 + $0x48] sm:$0xf]
      %v294 = vld [vmem:[%s0 + $0x4c] sm:$0xf]
      %v295 = vld [vmem:[%s0 + $0x50] sm:$0xf]
      %v296 = vld [vmem:[%s0 + $0x54] sm:$0xf]
      %v297 = vld [vmem:[%s0 + $0x58] sm:$0xf]
      %v298 = vld [vmem:[%s0 + $0x5c] sm:$0xf]
      %v299 = vld [vmem:[%s0 + $0x60] sm:$0xf]
      %v300 = vld [vmem:[%s0 + $0x64] sm:$0xf]
      %v301 = vld [vmem:[%s0 + $0x68] sm:$0xf]
      %v302 = vld [vmem:[%s0 + $0x6c] sm:$0xf]
      %v303 = vld [vmem:[%s0 + $0x70] sm:$0xf]
      %v304 = vld [vmem:[%s0 + $0x74] sm:$0xf]
      %v305 = vld [vmem:[%s0 + $0x78] sm:$0xf]
      %v306 = vld [vmem:[%s0 + $0x7c] sm:$0xf]
      %v307 = vld [vmem:[%s0 + $0x80] sm:$0xf]
      %v308 = vld [vmem:[%s0 + $0x84] sm:$0xf]
      %v309 = vld [vmem:[%s0 + $0x88] sm:$0xf]
      %v310 = vld [vmem:[%s0 + $0x8c] sm:$0xf]
      %v311 = vld [vmem:[%s0 + $0x90] sm:$0xf]
      %v312 = vld [vmem:[%s0 + $0x94] sm:$0xf]
      %v313 = vld [vmem:[%s0 + $0x98] sm:$0xf]
      %v314 = vld [vmem:[%s0 + $0x9c] sm:$0xf]
      %v315 = vld [vmem:[%s0 + $0xa0] sm:$0xf]
      %v316 = vld [vmem:[%s0 + $0xa4] sm:$0xf]
      %v317 = vld [vmem:[%s0 + $0xa8] sm:$0xf]
      %v318 = vld [vmem:[%s0 + $0xac] sm:$0xf]
      %v319 = vld [vmem:[%s0 + $0xb0] sm:$0xf]
      %v320 = vld [vmem:[%s0 + $0xb4] sm:$0xf]
      %v321 = vld [vmem:[%s0 + $0xb8] sm:$0xf]
      %v322 = vld [vmem:[%s0 + $0xbc] sm:$0xf]
      %v323 = vld [vmem:[%s0 + $0xc0] sm:$0xf]
      %v324 = vld [vmem:[%s0 + $0xc4] sm:$0xf]
      %v325 = vld [vmem:[%s0 + $0xc8] sm:$0xf]
      %v326 = vld [vmem:[%s0 + $0xcc] sm:$0xf]
      %v327 = vld [vmem:[%s0 + $0xd0] sm:$0xf]
      %v328 = vld [vmem:[%s0 + $0xd4] sm:$0xf]
      %v329 = vld [vmem:[%s0 + $0xd8] sm:$0xf]
      %v330 = vld [vmem:[%s0 + $0xdc] sm:$0xf]
      %v331 = vld [vmem:[%s0 + $0xe0] sm:$0xf]
      %v332 = vld [vmem:[%s0 + $0xe4] sm:$0xf]
      %v333 = vld [vmem:[%s0 + $0xe8] sm:$0xf]
      %v334 = vld [vmem:[%s0 + $0xec] sm:$0xf]
      %v335 = vld [vmem:[%s0 + $0xf0] sm:$0xf]
      %v336 = vld [vmem:[%s0 + $0xf4] sm:$0xf]
      %v337 = vld [vmem:[%s0 + $0xf8] sm:$0xf]
      %v338 = vld [vmem:[%s0 + $0xfc] sm:$0xf]
      %v339 = vld [vmem:[%s0 + $0x100] sm:$0xf]
      %v340 = vld [vmem:[%s0 + $0x104] sm:$0xf]
      %v341 = vld [vmem:[%s0 + $0x108] sm:$0xf]
      %v342 = vld [vmem:[%s0 + $0x10c] sm:$0xf]
      %v343 = vld [vmem:[%s0 + $0x110] sm:$0xf]
      %v344 = vld [vmem:[%s0 + $0x114] sm:$0xf]
      %v345 = vld [vmem:[%s0 + $0x118] sm:$0xf]
      %v346 = vld [vmem:[%s0 + $0x11c] sm:$0xf]
      %v347 = vld [vmem:[%s0 + $0x120] sm:$0xf]
      %v348 = vld [vmem:[%s0 + $0x124] sm:$0xf]
      %v349 = vld [vmem:[%s0 + $0x128] sm:$0xf]
      %v350 = vld [vmem:[%s0 + $0x12c] sm:$0xf]
      %v351 = vld [vmem:[%s0 + $0x130] sm:$0xf]
      %v352 = vld [vmem:[%s0 + $0x134] sm:$0xf]
      %v353 = vld [vmem:[%s0 + $0x138] sm:$0xf]
      %v354 = vld [vmem:[%s0 + $0x13c] sm:$0xf]
      %v355 = vld [vmem:[%s0 + $0x140] sm:$0xf]
      %v356 = vld [vmem:[%s0 + $0x144] sm:$0xf]
      %v357 = vld [vmem:[%s0 + $0x148] sm:$0xf]
      %v358 = vld [vmem:[%s0 + $0x14c] sm:$0xf]
      %v359 = vld [vmem:[%s0 + $0x150] sm:$0xf]
      %v360 = vld [vmem:[%s0 + $0x154] sm:$0xf]
      %v361 = vld [vmem:[%s0 + $0x158] sm:$0xf]
      %v362 = vld [vmem:[%s0 + $0x15c] sm:$0xf]
      %v363 = vld [vmem:[%s0 + $0x160] sm:$0xf]
      %v364 = vld [vmem:[%s0 + $0x164] sm:$0xf]
      %v365 = vld [vmem:[%s0 + $0x168] sm:$0xf]
      %v366 = vld [vmem:[%s0 + $0x16c] sm:$0xf]
      %v367 = vld [vmem:[%s0 + $0x170] sm:$0xf]
      %v368 = vld [vmem:[%s0 + $0x174] sm:$0xf]
      %v369 = vld [vmem:[%s0 + $0x178] sm:$0xf]
      %v370 = vld [vmem:[%s0 + $0x17c] sm:$0xf]
      %v371 = vld [vmem:[%s0 + $0x180] sm:$0xf]
      %v372 = vld [vmem:[%s0 + $0x184] sm:$0xf]
      %v373 = vld [vmem:[%s0 + $0x188] sm:$0xf]
      %v374 = vld [vmem:[%s0 + $0x18c] sm:$0xf]
      %v375 = vld [vmem:[%s0 + $0x190] sm:$0xf]
      %v376 = vld [vmem:[%s0 + $0x194] sm:$0xf]
      %v377 = vld [vmem:[%s0 + $0x198] sm:$0xf]
      %v378 = vld [vmem:[%s0 + $0x19c] sm:$0xf]
      %v379 = vld [vmem:[%s0 + $0x1a0] sm:$0xf]
      %v380 = vld [vmem:[%s0 + $0x1a4] sm:$0xf]
      %v381 = vld [vmem:[%s0 + $0x1a8] sm:$0xf]
      %v382 = vld [vmem:[%s0 + $0x1ac] sm:$0xf]
      %v383 = vld [vmem:[%s0 + $0x1b0] sm:$0xf]
      %v384 = vld [vmem:[%s0 + $0x1b4] sm:$0xf]
      %v385 = vld [vmem:[%s0 + $0x1b8] sm:$0xf]
      %v386 = vld [vmem:[%s0 + $0x1bc] sm:$0xf]
      %v387 = vld [vmem:[%s0 + $0x1c0] sm:$0xf]
      %v388 = vld [vmem:[%s0 + $0x1c4] sm:$0xf]
      %v389 = vld [vmem:[%s0 + $0x1c8] sm:$0xf]
      %v390 = vld [vmem:[%s0 + $0x1cc] sm:$0xf]
      %v391 = vld [vmem:[%s0 + $0x1d0] sm:$0xf]
      %v392 = vld [vmem:[%s0 + $0x1d4] sm:$0xf]
      %v393 = vld [vmem:[%s0 + $0x1d8] sm:$0xf]
      %v394 = vld [vmem:[%s0 + $0x1dc] sm:$0xf]
      %v395 = vld [vmem:[%s0 + $0x1e0] sm:$0xf]
      %v396 = vld [vmem:[%s0 + $0x1e4] sm:$0xf]
      %v397 = vld [vmem:[%s0 + $0x1e8] sm:$0xf]
      %v398 = vld [vmem:[%s0 + $0x1ec] sm:$0xf]
      %v399 = vld [vmem:[%s0 + $0x1f0] sm:$0xf]
      %v400 = vld [vmem:[%s0 + $0x1f4] sm:$0xf]
      %v401 = vld [vmem:[%s0 + $0x1f8] sm:$0xf]
      %v402 = vld [vmem:[%s0 + $0x1fc] sm:$0xf]
      %v403 = vld [vmem:[%s0 + $0x200] sm:$0xf]
      %v404 = vld [vmem:[%s0 + $0x204] sm:$0xf]
      %v405 = vld [vmem:[%s0 + $0x208] sm:$0xf]
      %v406 = vld [vmem:[%s0 + $0x20c] sm:$0xf]
      %v407 = vld [vmem:[%s0 + $0x210] sm:$0xf]
      %v408 = vld [vmem:[%s0 + $0x214] sm:$0xf]
      %v409 = vld [vmem:[%s0 + $0x218] sm:$0xf]
      %v410 = vld [vmem:[%s0 + $0x21c] sm:$0xf]
      %v411 = vld [vmem:[%s0 + $0x220] sm:$0xf]
      %v412 = vld [vmem:[%s0 + $0x224] sm:$0xf]
      %v413 = vld [vmem:[%s0 + $0x228] sm:$0xf]
      %v414 = vld [vmem:[%s0 + $0x22c] sm:$0xf]
      %v415 = vld [vmem:[%s0 + $0x230] sm:$0xf]
      %v416 = vld [vmem:[%s0 + $0x234] sm:$0xf]
      %v417 = vld [vmem:[%s0 + $0x238] sm:$0xf]
      %v418 = vld [vmem:[%s0 + $0x23c] sm:$0xf]
      %v419 = vld [vmem:[%s0 + $0x240] sm:$0xf]
      %v420 = vld [vmem:[%s0 + $0x244] sm:$0xf]
      %v421 = vld [vmem:[%s0 + $0x248] sm:$0xf]
      %v422 = vld [vmem:[%s0 + $0x24c] sm:$0xf]
      %v423 = vld [vmem:[%s0 + $0x250] sm:$0xf]
      %v424 = vld [vmem:[%s0 + $0x254] sm:$0xf]
      %v425 = vld [vmem:[%s0 + $0x258] sm:$0xf]
      %v426 = vld [vmem:[%s0 + $0x25c] sm:$0xf]
      %v427 = vld [vmem:[%s0 + $0x260] sm:$0xf]
      %v428 = vld [vmem:[%s0 + $0x264] sm:$0xf]
      %v429 = vld [vmem:[%s0 + $0x268] sm:$0xf]
      %v430 = vld [vmem:[%s0 + $0x26c] sm:$0xf]
      %v431 = vld [vmem:[%s0 + $0x270] sm:$0xf]
      %v432 = vld [vmem:[%s0 + $0x274] sm:$0xf]
      %v433 = vld [vmem:[%s0 + $0x278] sm:$0xf]
      %v434 = vld [vmem:[%s0 + $0x27c] sm:$0xf]
      %v435 = vld [vmem:[%s0 + $0x280] sm:$0xf]
      %v436 = vld [vmem:[%s0 + $0x284] sm:$0xf]
      %v437 = vld [vmem:[%s0 + $0x288] sm:$0xf]
      %v438 = vld [vmem:[%s0 + $0x28c] sm:$0xf]
      %v439 = vld [vmem:[%s0 + $0x290] sm:$0xf]
      %v440 = vld [vmem:[%s0 + $0x294] sm:$0xf]
      %v441 = vld [vmem:[%s0 + $0x298] sm:$0xf]
      %v442 = vld [vmem:[%s0 + $0x29c] sm:$0xf]
      %v443 = vld [vmem:[%s0 + $0x2a0] sm:$0xf]
      %v444 = vld [vmem:[%s0 + $0x2a4] sm:$0xf]
      %v445 = vld [vmem:[%s0 + $0x2a8] sm:$0xf]
      %v446 = vld [vmem:[%s0 + $0x2ac] sm:$0xf]
      %v447 = vld [vmem:[%s0 + $0x2b0] sm:$0xf]
      %v448 = vld [vmem:[%s0 + $0x2b4] sm:$0xf]
      %v449 = vld [vmem:[%s0 + $0x2b8] sm:$0xf]
      %v450 = vld [vmem:[%s0 + $0x2bc] sm:$0xf]
      %v451 = vld [vmem:[%s0 + $0x2c0] sm:$0xf]
      %v452 = vld [vmem:[%s0 + $0x2c4] sm:$0xf]
      %v453 = vld [vmem:[%s0 + $0x2c8] sm:$0xf]
      %v454 = vld [vmem:[%s0 + $0x2cc] sm:$0xf]
      %v455 = vld [vmem:[%s0 + $0x2d0] sm:$0xf]
      %v456 = vld [vmem:[%s0 + $0x2d4] sm:$0xf]
      %v457 = vld [vmem:[%s0 + $0x2d8] sm:$0xf]
      %v458 = vld [vmem:[%s0 + $0x2dc] sm:$0xf]
      %v459 = vld [vmem:[%s0 + $0x2e0] sm:$0xf]
      %v460 = vld [vmem:[%s0 + $0x2e4] sm:$0xf]
      %v461 = vld [vmem:[%s0 + $0x2e8] sm:$0xf]
      %v462 = vld [vmem:[%s0 + $0x2ec] sm:$0xf]
      %v463 = vld [vmem:[%s0 + $0x2f0] sm:$0xf]
      %v464 = vld [vmem:[%s0 + $0x2f4] sm:$0xf]
      %v465 = vld [vmem:[%s0 + $0x2f8] sm:$0xf]
      %v466 = vld [vmem:[%s0 + $0x2fc] sm:$0xf]
      %v467 = vld [vmem:[%s0 + $0x300] sm:$0xf]
      %v468 = vld [vmem:[%s0 + $0x304] sm:$0xf]
      %v469 = vld [vmem:[%s0 + $0x308] sm:$0xf]
      %v470 = vld [vmem:[%s0 + $0x30c] sm:$0xf]
      %v471 = vld [vmem:[%s0 + $0x310] sm:$0xf]
      %v472 = vld [vmem:[%s0 + $0x314] sm:$0xf]
      %v473 = vld [vmem:[%s0 + $0x318] sm:$0xf]
      %v474 = vld [vmem:[%s0 + $0x31c] sm:$0xf]
      %v475 = vld [vmem:[%s0 + $0x320] sm:$0xf]
      %v476 = vld [vmem:[%s0 + $0x324] sm:$0xf]
      %v477 = vld [vmem:[%s0 + $0x328] sm:$0xf]
      %v478 = vld [vmem:[%s0 + $0x32c] sm:$0xf]
      %v479 = vld [vmem:[%s0 + $0x330] sm:$0xf]
      %v480 = vld [vmem:[%s0 + $0x334] sm:$0xf]
      %v481 = vld [vmem:[%s0 + $0x338] sm:$0xf]
      %v482 = vld [vmem:[%s0 + $0x33c] sm:$0xf]
      %v483 = vld [vmem:[%s0 + $0x340] sm:$0xf]
      %v484 = vld [vmem:[%s0 + $0x344] sm:$0xf]
      %v485 = vld [vmem:[%s0 + $0x348] sm:$0xf]
      %v486 = vld [vmem:[%s0 + $0x34c] sm:$0xf]
      %v487 = vld [vmem:[%s0 + $0x350] sm:$0xf]
      %v488 = vld [vmem:[%s0 + $0x354] sm:$0xf]
      %v489 = vld [vmem:[%s0 + $0x358] sm:$0xf]
      %v490 = vld [vmem:[%s0 + $0x35c] sm:$0xf]
      %v491 = vld [vmem:[%s0 + $0x360] sm:$0xf]
      %v492 = vld [vmem:[%s0 + $0x364] sm:$0xf]
      %v493 = vld [vmem:[%s0 + $0x368] sm:$0xf]
      %v494 = vld [vmem:[%s0 + $0x36c] sm:$0xf]
      %v495 = vld [vmem:[%s0 + $0x370] sm:$0xf]
      %v496 = vld [vmem:[%s0 + $0x374] sm:$0xf]
      %v497 = vld [vmem:[%s0 + $0x378] sm:$0xf]
      %v498 = vld [vmem:[%s0 + $0x37c] sm:$0xf]
      %v499 = vld [vmem:[%s0 + $0x380] sm:$0xf]
      %v500 = vld [vmem:[%s0 + $0x384] sm:$0xf]
      %v501 = vld [vmem:[%s0 + $0x388] sm:$0xf]
      %v502 = vld [vmem:[%s0 + $0x38c] sm:$0xf]
      %v503 = vld [vmem:[%s0 + $0x390] sm:$0xf]
      %v504 = vld [vmem:[%s0 + $0x394] sm:$0xf]
      %v505 = vld [vmem:[%s0 + $0x398] sm:$0xf]
      %v506 = vld [vmem:[%s0 + $0x39c] sm:$0xf]
      %v507 = vld [vmem:[%s0 + $0x3a0] sm:$0xf]
      %v508 = vld [vmem:[%s0 + $0x3a4] sm:$0xf]
      %v509 = vld [vmem:[%s0 + $0x3a8] sm:$0xf]
      %v510 = vld [vmem:[%s0 + $0x3ac] sm:$0xf]
      %v511 = vld [vmem:[%s0 + $0x3b0] sm:$0xf]
      %v512 = vld [vmem:[%s0 + $0x3b4] sm:$0xf]
      %v513 = vld [vmem:[%s0 + $0x3b8] sm:$0xf]
      %v514 = vld [vmem:[%s0 + $0x3bc] sm:$0xf]
      %v515 = vld [vmem:[%s0 + $0x3c0] sm:$0xf]
      %v516 = vld [vmem:[%s0 + $0x3c4] sm:$0xf]
      %v517 = vld [vmem:[%s0 + $0x3c8] sm:$0xf]
      %v518 = vld [vmem:[%s0 + $0x3cc] sm:$0xf]
      %v519 = vld [vmem:[%s0 + $0x3d0] sm:$0xf]
      %v520 = vld [vmem:[%s0 + $0x3d4] sm:$0xf]
      %v521 = vld [vmem:[%s0 + $0x3d8] sm:$0xf]
      %v522 = vld [vmem:[%s0 + $0x3dc] sm:$0xf]
      %v523 = vld [vmem:[%s0 + $0x3e0] sm:$0xf]
      %v524 = vld [vmem:[%s0 + $0x3e4] sm:$0xf]
      %v525 = vld [vmem:[%s0 + $0x3e8] sm:$0xf]
      %v526 = vld [vmem:[%s0 + $0x3ec] sm:$0xf]
      %v527 = vld [vmem:[%s0 + $0x3f0] sm:$0xf]
      %v528 = vld [vmem:[%s0 + $0x3f4] sm:$0xf]
      %v529 = vld [vmem:[%s0 + $0x3f8] sm:$0xf]
      %v530 = vld [vmem:[%s0 + $0x3fc] sm:$0xf]
      %v531 = vld [vmem:[%s0 + $0x400] sm:$0xf]
      %v532 = vld [vmem:[%s0 + $0x404] sm:$0xf]
      %v533 = vld [vmem:[%s0 + $0x408] sm:$0xf]
      %v534 = vld [vmem:[%s0 + $0x40c] sm:$0xf]
      %v535 = vld [vmem:[%s0 + $0x410] sm:$0xf]
      %v536 = vld [vmem:[%s0 + $0x414] sm:$0xf]
      %v537 = vld [vmem:[%s0 + $0x418] sm:$0xf]
      %v538 = vld [vmem:[%s0 + $0x41c] sm:$0xf]
      %v539 = vld [vmem:[%s0 + $0x420] sm:$0xf]
      %v540 = vld [vmem:[%s0 + $0x424] sm:$0xf]
      %v541 = vld [vmem:[%s0 + $0x428] sm:$0xf]
      %v542 = vld [vmem:[%s0 + $0x42c] sm:$0xf]
      %v543 = vld [vmem:[%s0 + $0x430] sm:$0xf]
      %v544 = vld [vmem:[%s0 + $0x434] sm:$0xf]
      %v545 = vld [vmem:[%s0 + $0x438] sm:$0xf]
      %v546 = vld [vmem:[%s0 + $0x43c] sm:$0xf]
      %v547 = vld [vmem:[%s0 + $0x440] sm:$0xf]
      %v548 = vld [vmem:[%s0 + $0x444] sm:$0xf]
      %v549 = vld [vmem:[%s0 + $0x448] sm:$0xf]
      %v550 = vld [vmem:[%s0 + $0x44c] sm:$0xf]
      %v551 = vld [vmem:[%s0 + $0x450] sm:$0xf]
      %v552 = vld [vmem:[%s0 + $0x454] sm:$0xf]
      %v553 = vld [vmem:[%s0 + $0x458] sm:$0xf]
      %v554 = vld [vmem:[%s0 + $0x45c] sm:$0xf]
      %v555 = vld [vmem:[%s0 + $0x460] sm:$0xf]
      %v556 = vld [vmem:[%s0 + $0x464] sm:$0xf]
      %v557 = vld [vmem:[%s0 + $0x468] sm:$0xf]
      %v558 = vld [vmem:[%s0 + $0x46c] sm:$0xf]
      %v559 = vld [vmem:[%s0 + $0x470] sm:$0xf]
      %v560 = vld [vmem:[%s0 + $0x474] sm:$0xf]
      %v561 = vld [vmem:[%s0 + $0x478] sm:$0xf]
      %v562 = vld [vmem:[%s0 + $0x47c] sm:$0xf]
      %v563 = vld [vmem:[%s1] sm:$0xf]
      %v564 = vld [vmem:[%s1 + $0x4] sm:$0xf]
      %v565 = vld [vmem:[%s1 + $0x8] sm:$0xf]
      %v566 = vld [vmem:[%s1 + $0xc] sm:$0xf]
      %v567 = vld [vmem:[%s1 + $0x10] sm:$0xf]
      %v568 = vld [vmem:[%s1 + $0x14] sm:$0xf]
      %v569 = vld [vmem:[%s1 + $0x18] sm:$0xf]
      %v570 = vld [vmem:[%s1 + $0x1c] sm:$0xf]
      %v571 = vld [vmem:[%s1 + $0x20] sm:$0xf]
      %v572 = vld [vmem:[%s1 + $0x24] sm:$0xf]
      %v573 = vld [vmem:[%s1 + $0x28] sm:$0xf]
      %v574 = vld [vmem:[%s1 + $0x2c] sm:$0xf]
      %v575 = vld [vmem:[%s1 + $0x30] sm:$0xf]
      %v576 = vld [vmem:[%s1 + $0x34] sm:$0xf]
      %v577 = vld [vmem:[%s1 + $0x38] sm:$0xf]
      %v578 = vld [vmem:[%s1 + $0x3c] sm:$0xf]
      %v579 = vld [vmem:[%s1 + $0x40] sm:$0xf]
      %v580 = vld [vmem:[%s1 + $0x44] sm:$0xf]
      %v581 = vld [vmem:[%s1 + $0x48] sm:$0xf]
      %v582 = vld [vmem:[%s1 + $0x4c] sm:$0xf]
      %v583 = vld [vmem:[%s1 + $0x50] sm:$0xf]
      %v584 = vld [vmem:[%s1 + $0x54] sm:$0xf]
      %v585 = vld [vmem:[%s1 + $0x58] sm:$0xf]
      %v586 = vld [vmem:[%s1 + $0x5c] sm:$0xf]
      %v587 = vld [vmem:[%s1 + $0x60] sm:$0xf]
      %v588 = vld [vmem:[%s1 + $0x64] sm:$0xf]
      %v589 = vld [vmem:[%s1 + $0x68] sm:$0xf]
      %v590 = vld [vmem:[%s1 + $0x6c] sm:$0xf]
      %v591 = vld [vmem:[%s1 + $0x70] sm:$0xf]
      %v592 = vld [vmem:[%s1 + $0x74] sm:$0xf]
      %v593 = vld [vmem:[%s1 + $0x78] sm:$0xf]
      %v594 = vld [vmem:[%s1 + $0x7c] sm:$0xf]
      %v595 = vld [vmem:[%s1 + $0x80] sm:$0xf]
      %v596 = vld [vmem:[%s1 + $0x84] sm:$0xf]
      %v597 = vld [vmem:[%s1 + $0x88] sm:$0xf]
      %v598 = vld [vmem:[%s1 + $0x8c] sm:$0xf]
      %v599 = vld [vmem:[%s1 + $0x90] sm:$0xf]
      %v600 = vld [vmem:[%s1 + $0x94] sm:$0xf]
      %v601 = vld [vmem:[%s1 + $0x98] sm:$0xf]
      %v602 = vld [vmem:[%s1 + $0x9c] sm:$0xf]
      %v603 = vld [vmem:[%s1 + $0xa0] sm:$0xf]
      %v604 = vld [vmem:[%s1 + $0xa4] sm:$0xf]
      %v605 = vld [vmem:[%s1 + $0xa8] sm:$0xf]
      %v606 = vld [vmem:[%s1 + $0xac] sm:$0xf]
      %v607 = vld [vmem:[%s1 + $0xb0] sm:$0xf]
      %v608 = vld [vmem:[%s1 + $0xb4] sm:$0xf]
      %v609 = vld [vmem:[%s1 + $0xb8] sm:$0xf]
      %v610 = vld [vmem:[%s1 + $0xbc] sm:$0xf]
      %v611 = vld [vmem:[%s1 + $0xc0] sm:$0xf]
      %v612 = vld [vmem:[%s1 + $0xc4] sm:$0xf]
      %v613 = vld [vmem:[%s1 + $0xc8] sm:$0xf]
      %v614 = vld [vmem:[%s1 + $0xcc] sm:$0xf]
      %v615 = vld [vmem:[%s1 + $0xd0] sm:$0xf]
      %v616 = vld [vmem:[%s1 + $0xd4] sm:$0xf]
      %v617 = vld [vmem:[%s1 + $0xd8] sm:$0xf]
      %v618 = vld [vmem:[%s1 + $0xdc] sm:$0xf]
      %v619 = vld [vmem:[%s1 + $0xe0] sm:$0xf]
      %v620 = vld [vmem:[%s1 + $0xe4] sm:$0xf]
      %v621 = vld [vmem:[%s1 + $0xe8] sm:$0xf]
      %v622 = vld [vmem:[%s1 + $0xec] sm:$0xf]
      %v623 = vld [vmem:[%s1 + $0xf0] sm:$0xf]
      %v624 = vld [vmem:[%s1 + $0xf4] sm:$0xf]
      %v625 = vld [vmem:[%s1 + $0xf8] sm:$0xf]
      %v626 = vld [vmem:[%s1 + $0xfc] sm:$0xf]
      %v627 = vld [vmem:[%s1 + $0x100] sm:$0xf]
      %v628 = vld [vmem:[%s1 + $0x104] sm:$0xf]
      %v629 = vld [vmem:[%s1 + $0x108] sm:$0xf]
      %v630 = vld [vmem:[%s1 + $0x10c] sm:$0xf]
      %v631 = vld [vmem:[%s1 + $0x110] sm:$0xf]
      %v632 = vld [vmem:[%s1 + $0x114] sm:$0xf]
      %v633 = vld [vmem:[%s1 + $0x118] sm:$0xf]
      %v634 = vld [vmem:[%s1 + $0x11c] sm:$0xf]
      %v635 = vld [vmem:[%s1 + $0x120] sm:$0xf]
      %v636 = vld [vmem:[%s1 + $0x124] sm:$0xf]
      %v637 = vld [vmem:[%s1 + $0x128] sm:$0xf]
      %v638 = vld [vmem:[%s1 + $0x12c] sm:$0xf]
      %v639 = vld [vmem:[%s1 + $0x130] sm:$0xf]
      %v640 = vld [vmem:[%s1 + $0x134] sm:$0xf]
      %v641 = vld [vmem:[%s1 + $0x138] sm:$0xf]
      %v642 = vld [vmem:[%s1 + $0x13c] sm:$0xf]
      %v643 = vld [vmem:[%s1 + $0x140] sm:$0xf]
      %v644 = vld [vmem:[%s1 + $0x144] sm:$0xf]
      %v645 = vld [vmem:[%s1 + $0x148] sm:$0xf]
      %v646 = vld [vmem:[%s1 + $0x14c] sm:$0xf]
      %v647 = vld [vmem:[%s1 + $0x150] sm:$0xf]
      %v648 = vld [vmem:[%s1 + $0x154] sm:$0xf]
      %v649 = vld [vmem:[%s1 + $0x158] sm:$0xf]
      %v650 = vld [vmem:[%s1 + $0x15c] sm:$0xf]
      %v651 = vld [vmem:[%s1 + $0x160] sm:$0xf]
      %v652 = vld [vmem:[%s1 + $0x164] sm:$0xf]
      %v653 = vld [vmem:[%s1 + $0x168] sm:$0xf]
      %v654 = vld [vmem:[%s1 + $0x16c] sm:$0xf]
      %v655 = vld [vmem:[%s1 + $0x170] sm:$0xf]
      %v656 = vld [vmem:[%s1 + $0x174] sm:$0xf]
      %v657 = vld [vmem:[%s1 + $0x178] sm:$0xf]
      %v658 = vld [vmem:[%s1 + $0x17c] sm:$0xf]
      %v659 = vld [vmem:[%s1 + $0x180] sm:$0xf]
      %v660 = vld [vmem:[%s1 + $0x184] sm:$0xf]
      %v661 = vld [vmem:[%s1 + $0x188] sm:$0xf]
      %v662 = vld [vmem:[%s1 + $0x18c] sm:$0xf]
      %v663 = vld [vmem:[%s1 + $0x190] sm:$0xf]
      %v664 = vld [vmem:[%s1 + $0x194] sm:$0xf]
      %v665 = vld [vmem:[%s1 + $0x198] sm:$0xf]
      %v666 = vld [vmem:[%s1 + $0x19c] sm:$0xf]
      %v667 = vld [vmem:[%s1 + $0x1a0] sm:$0xf]
      %v668 = vld [vmem:[%s1 + $0x1a4] sm:$0xf]
      %v669 = vld [vmem:[%s1 + $0x1a8] sm:$0xf]
      %v670 = vld [vmem:[%s1 + $0x1ac] sm:$0xf]
      %v671 = vld [vmem:[%s1 + $0x1b0] sm:$0xf]
      %v672 = vld [vmem:[%s1 + $0x1b4] sm:$0xf]
      %v673 = vld [vmem:[%s1 + $0x1b8] sm:$0xf]
      %v674 = vld [vmem:[%s1 + $0x1bc] sm:$0xf]
      %v675 = vld [vmem:[%s1 + $0x1c0] sm:$0xf]
      %v676 = vld [vmem:[%s1 + $0x1c4] sm:$0xf]
      %v677 = vld [vmem:[%s1 + $0x1c8] sm:$0xf]
      %v678 = vld [vmem:[%s1 + $0x1cc] sm:$0xf]
      %v679 = vld [vmem:[%s1 + $0x1d0] sm:$0xf]
      %v680 = vld [vmem:[%s1 + $0x1d4] sm:$0xf]
      %v681 = vld [vmem:[%s1 + $0x1d8] sm:$0xf]
      %v682 = vld [vmem:[%s1 + $0x1dc] sm:$0xf]
      %v683 = vld [vmem:[%s1 + $0x1e0] sm:$0xf]
      %v684 = vld [vmem:[%s1 + $0x1e4] sm:$0xf]
      %v685 = vld [vmem:[%s1 + $0x1e8] sm:$0xf]
      %v686 = vld [vmem:[%s1 + $0x1ec] sm:$0xf]
      %v687 = vld [vmem:[%s1 + $0x1f0] sm:$0xf]
      %v688 = vld [vmem:[%s1 + $0x1f4] sm:$0xf]
      %v689 = vld [vmem:[%s1 + $0x1f8] sm:$0xf]
      %v690 = vld [vmem:[%s1 + $0x1fc] sm:$0xf]
      %v691 = vld [vmem:[%s1 + $0x200] sm:$0xf]
      %v692 = vld [vmem:[%s1 + $0x204] sm:$0xf]
      %v693 = vld [vmem:[%s1 + $0x208] sm:$0xf]
      %v694 = vld [vmem:[%s1 + $0x20c] sm:$0xf]
      %v695 = vld [vmem:[%s1 + $0x210] sm:$0xf]
      %v696 = vld [vmem:[%s1 + $0x214] sm:$0xf]
      %v697 = vld [vmem:[%s1 + $0x218] sm:$0xf]
      %v698 = vld [vmem:[%s1 + $0x21c] sm:$0xf]
      %v699 = vld [vmem:[%s1 + $0x220] sm:$0xf]
      %v700 = vld [vmem:[%s1 + $0x224] sm:$0xf]
      %v701 = vld [vmem:[%s1 + $0x228] sm:$0xf]
      %v702 = vld [vmem:[%s1 + $0x22c] sm:$0xf]
      %v703 = vld [vmem:[%s1 + $0x230] sm:$0xf]
      %v704 = vld [vmem:[%s1 + $0x234] sm:$0xf]
      %v705 = vld [vmem:[%s1 + $0x238] sm:$0xf]
      %v706 = vld [vmem:[%s1 + $0x23c] sm:$0xf]
      %v707 = vld [vmem:[%s1 + $0x240] sm:$0xf]
      %v708 = vld [vmem:[%s1 + $0x244] sm:$0xf]
      %v709 = vld [vmem:[%s1 + $0x248] sm:$0xf]
      %v710 = vld [vmem:[%s1 + $0x24c] sm:$0xf]
      %v711 = vld [vmem:[%s1 + $0x250] sm:$0xf]
      %v712 = vld [vmem:[%s1 + $0x254] sm:$0xf]
      %v713 = vld [vmem:[%s1 + $0x258] sm:$0xf]
      %v714 = vld [vmem:[%s1 + $0x25c] sm:$0xf]
      %v715 = vld [vmem:[%s1 + $0x260] sm:$0xf]
      %v716 = vld [vmem:[%s1 + $0x264] sm:$0xf]
      %v717 = vld [vmem:[%s1 + $0x268] sm:$0xf]
      %v718 = vld [vmem:[%s1 + $0x26c] sm:$0xf]
      %v719 = vld [vmem:[%s1 + $0x270] sm:$0xf]
      %v720 = vld [vmem:[%s1 + $0x274] sm:$0xf]
      %v721 = vld [vmem:[%s1 + $0x278] sm:$0xf]
      %v722 = vld [vmem:[%s1 + $0x27c] sm:$0xf]
      %v723 = vld [vmem:[%s1 + $0x280] sm:$0xf]
      %v724 = vld [vmem:[%s1 + $0x284] sm:$0xf]
      %v725 = vld [vmem:[%s1 + $0x288] sm:$0xf]
      %v726 = vld [vmem:[%s1 + $0x28c] sm:$0xf]
      %v727 = vld [vmem:[%s1 + $0x290] sm:$0xf]
      %v728 = vld [vmem:[%s1 + $0x294] sm:$0xf]
      %v729 = vld [vmem:[%s1 + $0x298] sm:$0xf]
      %v730 = vld [vmem:[%s1 + $0x29c] sm:$0xf]
      %v731 = vld [vmem:[%s1 + $0x2a0] sm:$0xf]
      %v732 = vld [vmem:[%s1 + $0x2a4] sm:$0xf]
      %v733 = vld [vmem:[%s1 + $0x2a8] sm:$0xf]
      %v734 = vld [vmem:[%s1 + $0x2ac] sm:$0xf]
      %v735 = vld [vmem:[%s1 + $0x2b0] sm:$0xf]
      %v736 = vld [vmem:[%s1 + $0x2b4] sm:$0xf]
      %v737 = vld [vmem:[%s1 + $0x2b8] sm:$0xf]
      %v738 = vld [vmem:[%s1 + $0x2bc] sm:$0xf]
      %v739 = vld [vmem:[%s1 + $0x2c0] sm:$0xf]
      %v740 = vld [vmem:[%s1 + $0x2c4] sm:$0xf]
      %v741 = vld [vmem:[%s1 + $0x2c8] sm:$0xf]
      %v742 = vld [vmem:[%s1 + $0x2cc] sm:$0xf]
      %v743 = vld [vmem:[%s1 + $0x2d0] sm:$0xf]
      %v744 = vld [vmem:[%s1 + $0x2d4] sm:$0xf]
      %v745 = vld [vmem:[%s1 + $0x2d8] sm:$0xf]
      %v746 = vld [vmem:[%s1 + $0x2dc] sm:$0xf]
      %v747 = vld [vmem:[%s1 + $0x2e0] sm:$0xf]
      %v748 = vld [vmem:[%s1 + $0x2e4] sm:$0xf]
      %v749 = vld [vmem:[%s1 + $0x2e8] sm:$0xf]
      %v750 = vld [vmem:[%s1 + $0x2ec] sm:$0xf]
      %v751 = vld [vmem:[%s1 + $0x2f0] sm:$0xf]
      %v752 = vld [vmem:[%s1 + $0x2f4] sm:$0xf]
      %v753 = vld [vmem:[%s1 + $0x2f8] sm:$0xf]
      %v754 = vld [vmem:[%s1 + $0x2fc] sm:$0xf]
      %v755 = vld [vmem:[%s1 + $0x300] sm:$0xf]
      %v756 = vld [vmem:[%s1 + $0x304] sm:$0xf]
      %v757 = vld [vmem:[%s1 + $0x308] sm:$0xf]
      %v758 = vld [vmem:[%s1 + $0x30c] sm:$0xf]
      %v759 = vld [vmem:[%s1 + $0x310] sm:$0xf]
      %v760 = vld [vmem:[%s1 + $0x314] sm:$0xf]
      %v761 = vld [vmem:[%s1 + $0x318] sm:$0xf]
      %v762 = vld [vmem:[%s1 + $0x31c] sm:$0xf]
      %v763 = vld [vmem:[%s1 + $0x320] sm:$0xf]
      %v764 = vld [vmem:[%s1 + $0x324] sm:$0xf]
      %v765 = vld [vmem:[%s1 + $0x328] sm:$0xf]
      %v766 = vld [vmem:[%s1 + $0x32c] sm:$0xf]
      %v767 = vld [vmem:[%s1 + $0x330] sm:$0xf]
      %v768 = vld [vmem:[%s1 + $0x334] sm:$0xf]
      %v769 = vld [vmem:[%s1 + $0x338] sm:$0xf]
      %v770 = vld [vmem:[%s1 + $0x33c] sm:$0xf]
      %v771 = vld [vmem:[%s1 + $0x340] sm:$0xf]
      %v772 = vld [vmem:[%s1 + $0x344] sm:$0xf]
      %v773 = vld [vmem:[%s1 + $0x348] sm:$0xf]
      %v774 = vld [vmem:[%s1 + $0x34c] sm:$0xf]
      %v775 = vld [vmem:[%s1 + $0x350] sm:$0xf]
      %v776 = vld [vmem:[%s1 + $0x354] sm:$0xf]
      %v777 = vld [vmem:[%s1 + $0x358] sm:$0xf]
      %v778 = vld [vmem:[%s1 + $0x35c] sm:$0xf]
      %v779 = vld [vmem:[%s1 + $0x360] sm:$0xf]
      %v780 = vld [vmem:[%s1 + $0x364] sm:$0xf]
      %v781 = vld [vmem:[%s1 + $0x368] sm:$0xf]
      %v782 = vld [vmem:[%s1 + $0x36c] sm:$0xf]
      %v783 = vld [vmem:[%s1 + $0x370] sm:$0xf]
      %v784 = vld [vmem:[%s1 + $0x374] sm:$0xf]
      %v785 = vld [vmem:[%s1 + $0x378] sm:$0xf]
      %v786 = vld [vmem:[%s1 + $0x37c] sm:$0xf]
      %v787 = vld [vmem:[%s1 + $0x380] sm:$0xf]
      %v788 = vld [vmem:[%s1 + $0x384] sm:$0xf]
      %v789 = vld [vmem:[%s1 + $0x388] sm:$0xf]
      %v790 = vld [vmem:[%s1 + $0x38c] sm:$0xf]
      %v791 = vld [vmem:[%s1 + $0x390] sm:$0xf]
      %v792 = vld [vmem:[%s1 + $0x394] sm:$0xf]
      %v793 = vld [vmem:[%s1 + $0x398] sm:$0xf]
      %v794 = vld [vmem:[%s1 + $0x39c] sm:$0xf]
      %v795 = vld [vmem:[%s1 + $0x3a0] sm:$0xf]
      %v796 = vld [vmem:[%s1 + $0x3a4] sm:$0xf]
      %v797 = vld [vmem:[%s1 + $0x3a8] sm:$0xf]
      %v798 = vld [vmem:[%s1 + $0x3ac] sm:$0xf]
      %v799 = vld [vmem:[%s1 + $0x3b0] sm:$0xf]
      %v800 = vld [vmem:[%s1 + $0x3b4] sm:$0xf]
      %v801 = vld [vmem:[%s1 + $0x3b8] sm:$0xf]
      %v802 = vld [vmem:[%s1 + $0x3bc] sm:$0xf]
      %v803 = vld [vmem:[%s1 + $0x3c0] sm:$0xf]
      %v804 = vld [vmem:[%s1 + $0x3c4] sm:$0xf]
      %v805 = vld [vmem:[%s1 + $0x3c8] sm:$0xf]
      %v806 = vld [vmem:[%s1 + $0x3cc] sm:$0xf]
      %v807 = vld [vmem:[%s1 + $0x3d0] sm:$0xf]
      %v808 = vld [vmem:[%s1 + $0x3d4] sm:$0xf]
      %v809 = vld [vmem:[%s1 + $0x3d8] sm:$0xf]
      %v810 = vld [vmem:[%s1 + $0x3dc] sm:$0xf]
      %v811 = vld [vmem:[%s1 + $0x3e0] sm:$0xf]
      %v812 = vld [vmem:[%s1 + $0x3e4] sm:$0xf]
      %v813 = vld [vmem:[%s1 + $0x3e8] sm:$0xf]
      %v814 = vld [vmem:[%s1 + $0x3ec] sm:$0xf]
      %v815 = vld [vmem:[%s1 + $0x3f0] sm:$0xf]
      %v816 = vld [vmem:[%s1 + $0x3f4] sm:$0xf]
      %v817 = vld [vmem:[%s1 + $0x3f8] sm:$0xf]
      %v818 = vld [vmem:[%s1 + $0x3fc] sm:$0xf]
      %v819 = vld [vmem:[%s1 + $0x400] sm:$0xf]
      %v820 = vld [vmem:[%s1 + $0x404] sm:$0xf]
      %v821 = vld [vmem:[%s1 + $0x408] sm:$0xf]
      %v822 = vld [vmem:[%s1 + $0x40c] sm:$0xf]
      %v823 = vld [vmem:[%s1 + $0x410] sm:$0xf]
      %v824 = vld [vmem:[%s1 + $0x414] sm:$0xf]
      %v825 = vld [vmem:[%s1 + $0x418] sm:$0xf]
      %v826 = vld [vmem:[%s1 + $0x41c] sm:$0xf]
      %v827 = vld [vmem:[%s1 + $0x420] sm:$0xf]
      %v828 = vld [vmem:[%s1 + $0x424] sm:$0xf]
      %v829 = vld [vmem:[%s1 + $0x428] sm:$0xf]
      %v830 = vld [vmem:[%s1 + $0x42c] sm:$0xf]
      %v831 = vld [vmem:[%s1 + $0x430] sm:$0xf]
      %v832 = vld [vmem:[%s1 + $0x434] sm:$0xf]
      %v833 = vld [vmem:[%s1 + $0x438] sm:$0xf]
      %v834 = vld [vmem:[%s1 + $0x43c] sm:$0xf]
      %v835 = vld [vmem:[%s1 + $0x440] sm:$0xf]
      %v836 = vld [vmem:[%s1 + $0x444] sm:$0xf]
      %v837 = vld [vmem:[%s1 + $0x448] sm:$0xf]
      %v838 = vld [vmem:[%s1 + $0x44c] sm:$0xf]
      %v839 = vld [vmem:[%s1 + $0x450] sm:$0xf]
      %v840 = vld [vmem:[%s1 + $0x454] sm:$0xf]
      %v841 = vld [vmem:[%s1 + $0x458] sm:$0xf]
      %v842 = vld [vmem:[%s1 + $0x45c] sm:$0xf]
      %v843 = vld [vmem:[%s1 + $0x460] sm:$0xf]
      %v844 = vld [vmem:[%s1 + $0x464] sm:$0xf]
      %v845 = vld [vmem:[%s1 + $0x468] sm:$0xf]
      %v846 = vld [vmem:[%s1 + $0x46c] sm:$0xf]
      %v847 = vld [vmem:[%s1 + $0x470] sm:$0xf]
      %v848 = vld [vmem:[%s1 + $0x474] sm:$0xf]
      %v849 = vld [vmem:[%s1 + $0x478] sm:$0xf]
      %v850 = vld [vmem:[%s1 + $0x47c] sm:$0xf]
      %852 = vset.pattern.permute.xlu0 0
      %853 = vperm.xlu0 %852, %v563
      %v854 = vpop.permute.xlu0 %853
      %v857 = vunpack.c.l.s4 839922192
      %v858 = vunpack.c.0.s8 %v857
      %v859 = vperm.slane %v854, %v858
      %861 = vset.pattern.permute.xlu0 0
      %862 = vperm.xlu0 %861, %v564
      %v863 = vpop.permute.xlu0 %862
      %v866 = vunpack.c.l.s4 839922192
      %v867 = vunpack.c.0.s8 %v866
      %v868 = vperm.slane %v863, %v867
      %870 = vset.pattern.permute.xlu0 0
      %871 = vperm.xlu0 %870, %v565
      %v872 = vpop.permute.xlu0 %871
      %v875 = vunpack.c.l.s4 839922192
      %v876 = vunpack.c.0.s8 %v875
      %v877 = vperm.slane %v872, %v876
      %879 = vset.pattern.permute.xlu0 0
      %880 = vperm.xlu0 %879, %v566
      %v881 = vpop.permute.xlu0 %880
      %v884 = vunpack.c.l.s4 839922192
      %v885 = vunpack.c.0.s8 %v884
      %v886 = vperm.slane %v881, %v885
      %888 = vset.pattern.permute.xlu0 0
      %889 = vperm.xlu0 %888, %v567
      %v890 = vpop.permute.xlu0 %889
      %v893 = vunpack.c.l.s4 839922192
      %v894 = vunpack.c.0.s8 %v893
      %v895 = vperm.slane %v890, %v894
      %897 = vset.pattern.permute.xlu0 0
      %898 = vperm.xlu0 %897, %v568
      %v899 = vpop.permute.xlu0 %898
      %v902 = vunpack.c.l.s4 839922192
      %v903 = vunpack.c.0.s8 %v902
      %v904 = vperm.slane %v899, %v903
      %906 = vset.pattern.permute.xlu0 0
      %907 = vperm.xlu0 %906, %v569
      %v908 = vpop.permute.xlu0 %907
      %v911 = vunpack.c.l.s4 839922192
      %v912 = vunpack.c.0.s8 %v911
      %v913 = vperm.slane %v908, %v912
      %915 = vset.pattern.permute.xlu0 0
      %916 = vperm.xlu0 %915, %v570
      %v917 = vpop.permute.xlu0 %916
      %v920 = vunpack.c.l.s4 839922192
      %v921 = vunpack.c.0.s8 %v920
      %v922 = vperm.slane %v917, %v921
      %924 = vset.pattern.permute.xlu0 0
      %925 = vperm.xlu0 %924, %v571
      %v926 = vpop.permute.xlu0 %925
      %v929 = vunpack.c.l.s4 839922192
      %v930 = vunpack.c.0.s8 %v929
      %v931 = vperm.slane %v926, %v930
      %933 = vset.pattern.permute.xlu0 0
      %934 = vperm.xlu0 %933, %v572
      %v935 = vpop.permute.xlu0 %934
      %v938 = vunpack.c.l.s4 839922192
      %v939 = vunpack.c.0.s8 %v938
      %v940 = vperm.slane %v935, %v939
      %942 = vset.pattern.permute.xlu0 0
      %943 = vperm.xlu0 %942, %v573
      %v944 = vpop.permute.xlu0 %943
      %v947 = vunpack.c.l.s4 839922192
      %v948 = vunpack.c.0.s8 %v947
      %v949 = vperm.slane %v944, %v948
      %951 = vset.pattern.permute.xlu0 0
      %952 = vperm.xlu0 %951, %v574
      %v953 = vpop.permute.xlu0 %952
      %v956 = vunpack.c.l.s4 839922192
      %v957 = vunpack.c.0.s8 %v956
      %v958 = vperm.slane %v953, %v957
      %960 = vset.pattern.permute.xlu0 0
      %961 = vperm.xlu0 %960, %v575
      %v962 = vpop.permute.xlu0 %961
      %v965 = vunpack.c.l.s4 839922192
      %v966 = vunpack.c.0.s8 %v965
      %v967 = vperm.slane %v962, %v966
      %969 = vset.pattern.permute.xlu0 0
      %970 = vperm.xlu0 %969, %v576
      %v971 = vpop.permute.xlu0 %970
      %v974 = vunpack.c.l.s4 839922192
      %v975 = vunpack.c.0.s8 %v974
      %v976 = vperm.slane %v971, %v975
      %978 = vset.pattern.permute.xlu0 0
      %979 = vperm.xlu0 %978, %v577
      %v980 = vpop.permute.xlu0 %979
      %v983 = vunpack.c.l.s4 839922192
      %v984 = vunpack.c.0.s8 %v983
      %v985 = vperm.slane %v980, %v984
      %987 = vset.pattern.permute.xlu0 0
      %988 = vperm.xlu0 %987, %v578
      %v989 = vpop.permute.xlu0 %988
      %v992 = vunpack.c.l.s4 839922192
      %v993 = vunpack.c.0.s8 %v992
      %v994 = vperm.slane %v989, %v993
      %996 = vset.pattern.permute.xlu0 0
      %997 = vperm.xlu0 %996, %v579
      %v998 = vpop.permute.xlu0 %997
      %v1001 = vunpack.c.l.s4 839922192
      %v1002 = vunpack.c.0.s8 %v1001
      %v1003 = vperm.slane %v998, %v1002
      %1005 = vset.pattern.permute.xlu0 0
      %1006 = vperm.xlu0 %1005, %v580
      %v1007 = vpop.permute.xlu0 %1006
      %v1010 = vunpack.c.l.s4 839922192
      %v1011 = vunpack.c.0.s8 %v1010
      %v1012 = vperm.slane %v1007, %v1011
      %1014 = vset.pattern.permute.xlu0 0
      %1015 = vperm.xlu0 %1014, %v581
      %v1016 = vpop.permute.xlu0 %1015
      %v1019 = vunpack.c.l.s4 839922192
      %v1020 = vunpack.c.0.s8 %v1019
      %v1021 = vperm.slane %v1016, %v1020
      %1023 = vset.pattern.permute.xlu0 0
      %1024 = vperm.xlu0 %1023, %v582
      %v1025 = vpop.permute.xlu0 %1024
      %v1028 = vunpack.c.l.s4 839922192
      %v1029 = vunpack.c.0.s8 %v1028
      %v1030 = vperm.slane %v1025, %v1029
      %1032 = vset.pattern.permute.xlu0 0
      %1033 = vperm.xlu0 %1032, %v583
      %v1034 = vpop.permute.xlu0 %1033
      %v1037 = vunpack.c.l.s4 839922192
      %v1038 = vunpack.c.0.s8 %v1037
      %v1039 = vperm.slane %v1034, %v1038
      %1041 = vset.pattern.permute.xlu0 0
      %1042 = vperm.xlu0 %1041, %v584
      %v1043 = vpop.permute.xlu0 %1042
      %v1046 = vunpack.c.l.s4 839922192
      %v1047 = vunpack.c.0.s8 %v1046
      %v1048 = vperm.slane %v1043, %v1047
      %1050 = vset.pattern.permute.xlu0 0
      %1051 = vperm.xlu0 %1050, %v585
      %v1052 = vpop.permute.xlu0 %1051
      %v1055 = vunpack.c.l.s4 839922192
      %v1056 = vunpack.c.0.s8 %v1055
      %v1057 = vperm.slane %v1052, %v1056
      %1059 = vset.pattern.permute.xlu0 0
      %1060 = vperm.xlu0 %1059, %v586
      %v1061 = vpop.permute.xlu0 %1060
      %v1064 = vunpack.c.l.s4 839922192
      %v1065 = vunpack.c.0.s8 %v1064
      %v1066 = vperm.slane %v1061, %v1065
      %1068 = vset.pattern.permute.xlu0 0
      %1069 = vperm.xlu0 %1068, %v587
      %v1070 = vpop.permute.xlu0 %1069
      %v1073 = vunpack.c.l.s4 839922192
      %v1074 = vunpack.c.0.s8 %v1073
      %v1075 = vperm.slane %v1070, %v1074
      %1077 = vset.pattern.permute.xlu0 0
      %1078 = vperm.xlu0 %1077, %v588
      %v1079 = vpop.permute.xlu0 %1078
      %v1082 = vunpack.c.l.s4 839922192
      %v1083 = vunpack.c.0.s8 %v1082
      %v1084 = vperm.slane %v1079, %v1083
      %1086 = vset.pattern.permute.xlu0 0
      %1087 = vperm.xlu0 %1086, %v589
      %v1088 = vpop.permute.xlu0 %1087
      %v1091 = vunpack.c.l.s4 839922192
      %v1092 = vunpack.c.0.s8 %v1091
      %v1093 = vperm.slane %v1088, %v1092
      %1095 = vset.pattern.permute.xlu0 0
      %1096 = vperm.xlu0 %1095, %v590
      %v1097 = vpop.permute.xlu0 %1096
      %v1100 = vunpack.c.l.s4 839922192
      %v1101 = vunpack.c.0.s8 %v1100
      %v1102 = vperm.slane %v1097, %v1101
      %1104 = vset.pattern.permute.xlu0 0
      %1105 = vperm.xlu0 %1104, %v591
      %v1106 = vpop.permute.xlu0 %1105
      %v1109 = vunpack.c.l.s4 839922192
      %v1110 = vunpack.c.0.s8 %v1109
      %v1111 = vperm.slane %v1106, %v1110
      %1113 = vset.pattern.permute.xlu0 0
      %1114 = vperm.xlu0 %1113, %v592
      %v1115 = vpop.permute.xlu0 %1114
      %v1118 = vunpack.c.l.s4 839922192
      %v1119 = vunpack.c.0.s8 %v1118
      %v1120 = vperm.slane %v1115, %v1119
      %1122 = vset.pattern.permute.xlu0 0
      %1123 = vperm.xlu0 %1122, %v593
      %v1124 = vpop.permute.xlu0 %1123
      %v1127 = vunpack.c.l.s4 839922192
      %v1128 = vunpack.c.0.s8 %v1127
      %v1129 = vperm.slane %v1124, %v1128
      %1131 = vset.pattern.permute.xlu0 0
      %1132 = vperm.xlu0 %1131, %v594
      %v1133 = vpop.permute.xlu0 %1132
      %v1136 = vunpack.c.l.s4 839922192
      %v1137 = vunpack.c.0.s8 %v1136
      %v1138 = vperm.slane %v1133, %v1137
      %1140 = vset.pattern.permute.xlu0 0
      %1141 = vperm.xlu0 %1140, %v595
      %v1142 = vpop.permute.xlu0 %1141
      %v1145 = vunpack.c.l.s4 839922192
      %v1146 = vunpack.c.0.s8 %v1145
      %v1147 = vperm.slane %v1142, %v1146
      %1149 = vset.pattern.permute.xlu0 0
      %1150 = vperm.xlu0 %1149, %v596
      %v1151 = vpop.permute.xlu0 %1150
      %v1154 = vunpack.c.l.s4 839922192
      %v1155 = vunpack.c.0.s8 %v1154
      %v1156 = vperm.slane %v1151, %v1155
      %1158 = vset.pattern.permute.xlu0 0
      %1159 = vperm.xlu0 %1158, %v597
      %v1160 = vpop.permute.xlu0 %1159
      %v1163 = vunpack.c.l.s4 839922192
      %v1164 = vunpack.c.0.s8 %v1163
      %v1165 = vperm.slane %v1160, %v1164
      %1167 = vset.pattern.permute.xlu0 0
      %1168 = vperm.xlu0 %1167, %v598
      %v1169 = vpop.permute.xlu0 %1168
      %v1172 = vunpack.c.l.s4 839922192
      %v1173 = vunpack.c.0.s8 %v1172
      %v1174 = vperm.slane %v1169, %v1173
      %1176 = vset.pattern.permute.xlu0 0
      %1177 = vperm.xlu0 %1176, %v599
      %v1178 = vpop.permute.xlu0 %1177
      %v1181 = vunpack.c.l.s4 839922192
      %v1182 = vunpack.c.0.s8 %v1181
      %v1183 = vperm.slane %v1178, %v1182
      %1185 = vset.pattern.permute.xlu0 0
      %1186 = vperm.xlu0 %1185, %v600
      %v1187 = vpop.permute.xlu0 %1186
      %v1190 = vunpack.c.l.s4 839922192
      %v1191 = vunpack.c.0.s8 %v1190
      %v1192 = vperm.slane %v1187, %v1191
      %1194 = vset.pattern.permute.xlu0 0
      %1195 = vperm.xlu0 %1194, %v601
      %v1196 = vpop.permute.xlu0 %1195
      %v1199 = vunpack.c.l.s4 839922192
      %v1200 = vunpack.c.0.s8 %v1199
      %v1201 = vperm.slane %v1196, %v1200
      %1203 = vset.pattern.permute.xlu0 0
      %1204 = vperm.xlu0 %1203, %v602
      %v1205 = vpop.permute.xlu0 %1204
      %v1208 = vunpack.c.l.s4 839922192
      %v1209 = vunpack.c.0.s8 %v1208
      %v1210 = vperm.slane %v1205, %v1209
      %1212 = vset.pattern.permute.xlu0 0
      %1213 = vperm.xlu0 %1212, %v603
      %v1214 = vpop.permute.xlu0 %1213
      %v1217 = vunpack.c.l.s4 839922192
      %v1218 = vunpack.c.0.s8 %v1217
      %v1219 = vperm.slane %v1214, %v1218
      %1221 = vset.pattern.permute.xlu0 0
      %1222 = vperm.xlu0 %1221, %v604
      %v1223 = vpop.permute.xlu0 %1222
      %v1226 = vunpack.c.l.s4 839922192
      %v1227 = vunpack.c.0.s8 %v1226
      %v1228 = vperm.slane %v1223, %v1227
      %1230 = vset.pattern.permute.xlu0 0
      %1231 = vperm.xlu0 %1230, %v605
      %v1232 = vpop.permute.xlu0 %1231
      %v1235 = vunpack.c.l.s4 839922192
      %v1236 = vunpack.c.0.s8 %v1235
      %v1237 = vperm.slane %v1232, %v1236
      %1239 = vset.pattern.permute.xlu0 0
      %1240 = vperm.xlu0 %1239, %v606
      %v1241 = vpop.permute.xlu0 %1240
      %v1244 = vunpack.c.l.s4 839922192
      %v1245 = vunpack.c.0.s8 %v1244
      %v1246 = vperm.slane %v1241, %v1245
      %1248 = vset.pattern.permute.xlu0 0
      %1249 = vperm.xlu0 %1248, %v607
      %v1250 = vpop.permute.xlu0 %1249
      %v1253 = vunpack.c.l.s4 839922192
      %v1254 = vunpack.c.0.s8 %v1253
      %v1255 = vperm.slane %v1250, %v1254
      %1257 = vset.pattern.permute.xlu0 0
      %1258 = vperm.xlu0 %1257, %v608
      %v1259 = vpop.permute.xlu0 %1258
      %v1262 = vunpack.c.l.s4 839922192
      %v1263 = vunpack.c.0.s8 %v1262
      %v1264 = vperm.slane %v1259, %v1263
      %1266 = vset.pattern.permute.xlu0 0
      %1267 = vperm.xlu0 %1266, %v609
      %v1268 = vpop.permute.xlu0 %1267
      %v1271 = vunpack.c.l.s4 839922192
      %v1272 = vunpack.c.0.s8 %v1271
      %v1273 = vperm.slane %v1268, %v1272
      %1275 = vset.pattern.permute.xlu0 0
      %1276 = vperm.xlu0 %1275, %v610
      %v1277 = vpop.permute.xlu0 %1276
      %v1280 = vunpack.c.l.s4 839922192
      %v1281 = vunpack.c.0.s8 %v1280
      %v1282 = vperm.slane %v1277, %v1281
      %1284 = vset.pattern.permute.xlu0 0
      %1285 = vperm.xlu0 %1284, %v611
      %v1286 = vpop.permute.xlu0 %1285
      %v1289 = vunpack.c.l.s4 839922192
      %v1290 = vunpack.c.0.s8 %v1289
      %v1291 = vperm.slane %v1286, %v1290
      %1293 = vset.pattern.permute.xlu0 0
      %1294 = vperm.xlu0 %1293, %v612
      %v1295 = vpop.permute.xlu0 %1294
      %v1298 = vunpack.c.l.s4 839922192
      %v1299 = vunpack.c.0.s8 %v1298
      %v1300 = vperm.slane %v1295, %v1299
      %1302 = vset.pattern.permute.xlu0 0
      %1303 = vperm.xlu0 %1302, %v613
      %v1304 = vpop.permute.xlu0 %1303
      %v1307 = vunpack.c.l.s4 839922192
      %v1308 = vunpack.c.0.s8 %v1307
      %v1309 = vperm.slane %v1304, %v1308
      %1311 = vset.pattern.permute.xlu0 0
      %1312 = vperm.xlu0 %1311, %v614
      %v1313 = vpop.permute.xlu0 %1312
      %v1316 = vunpack.c.l.s4 839922192
      %v1317 = vunpack.c.0.s8 %v1316
      %v1318 = vperm.slane %v1313, %v1317
      %1320 = vset.pattern.permute.xlu0 0
      %1321 = vperm.xlu0 %1320, %v615
      %v1322 = vpop.permute.xlu0 %1321
      %v1325 = vunpack.c.l.s4 839922192
      %v1326 = vunpack.c.0.s8 %v1325
      %v1327 = vperm.slane %v1322, %v1326
      %1329 = vset.pattern.permute.xlu0 0
      %1330 = vperm.xlu0 %1329, %v616
      %v1331 = vpop.permute.xlu0 %1330
      %v1334 = vunpack.c.l.s4 839922192
      %v1335 = vunpack.c.0.s8 %v1334
      %v1336 = vperm.slane %v1331, %v1335
      %1338 = vset.pattern.permute.xlu0 0
      %1339 = vperm.xlu0 %1338, %v617
      %v1340 = vpop.permute.xlu0 %1339
      %v1343 = vunpack.c.l.s4 839922192
      %v1344 = vunpack.c.0.s8 %v1343
      %v1345 = vperm.slane %v1340, %v1344
      %1347 = vset.pattern.permute.xlu0 0
      %1348 = vperm.xlu0 %1347, %v618
      %v1349 = vpop.permute.xlu0 %1348
      %v1352 = vunpack.c.l.s4 839922192
      %v1353 = vunpack.c.0.s8 %v1352
      %v1354 = vperm.slane %v1349, %v1353
      %1356 = vset.pattern.permute.xlu0 0
      %1357 = vperm.xlu0 %1356, %v619
      %v1358 = vpop.permute.xlu0 %1357
      %v1361 = vunpack.c.l.s4 839922192
      %v1362 = vunpack.c.0.s8 %v1361
      %v1363 = vperm.slane %v1358, %v1362
      %1365 = vset.pattern.permute.xlu0 0
      %1366 = vperm.xlu0 %1365, %v620
      %v1367 = vpop.permute.xlu0 %1366
      %v1370 = vunpack.c.l.s4 839922192
      %v1371 = vunpack.c.0.s8 %v1370
      %v1372 = vperm.slane %v1367, %v1371
      %1374 = vset.pattern.permute.xlu0 0
      %1375 = vperm.xlu0 %1374, %v621
      %v1376 = vpop.permute.xlu0 %1375
      %v1379 = vunpack.c.l.s4 839922192
      %v1380 = vunpack.c.0.s8 %v1379
      %v1381 = vperm.slane %v1376, %v1380
      %1383 = vset.pattern.permute.xlu0 0
      %1384 = vperm.xlu0 %1383, %v622
      %v1385 = vpop.permute.xlu0 %1384
      %v1388 = vunpack.c.l.s4 839922192
      %v1389 = vunpack.c.0.s8 %v1388
      %v1390 = vperm.slane %v1385, %v1389
      %1392 = vset.pattern.permute.xlu0 0
      %1393 = vperm.xlu0 %1392, %v623
      %v1394 = vpop.permute.xlu0 %1393
      %v1397 = vunpack.c.l.s4 839922192
      %v1398 = vunpack.c.0.s8 %v1397
      %v1399 = vperm.slane %v1394, %v1398
      %1401 = vset.pattern.permute.xlu0 0
      %1402 = vperm.xlu0 %1401, %v624
      %v1403 = vpop.permute.xlu0 %1402
      %v1406 = vunpack.c.l.s4 839922192
      %v1407 = vunpack.c.0.s8 %v1406
      %v1408 = vperm.slane %v1403, %v1407
      %1410 = vset.pattern.permute.xlu0 0
      %1411 = vperm.xlu0 %1410, %v625
      %v1412 = vpop.permute.xlu0 %1411
      %v1415 = vunpack.c.l.s4 839922192
      %v1416 = vunpack.c.0.s8 %v1415
      %v1417 = vperm.slane %v1412, %v1416
      %1419 = vset.pattern.permute.xlu0 0
      %1420 = vperm.xlu0 %1419, %v626
      %v1421 = vpop.permute.xlu0 %1420
      %v1424 = vunpack.c.l.s4 839922192
      %v1425 = vunpack.c.0.s8 %v1424
      %v1426 = vperm.slane %v1421, %v1425
      %1428 = vset.pattern.permute.xlu0 0
      %1429 = vperm.xlu0 %1428, %v627
      %v1430 = vpop.permute.xlu0 %1429
      %v1433 = vunpack.c.l.s4 839922192
      %v1434 = vunpack.c.0.s8 %v1433
      %v1435 = vperm.slane %v1430, %v1434
      %1437 = vset.pattern.permute.xlu0 0
      %1438 = vperm.xlu0 %1437, %v628
      %v1439 = vpop.permute.xlu0 %1438
      %v1442 = vunpack.c.l.s4 839922192
      %v1443 = vunpack.c.0.s8 %v1442
      %v1444 = vperm.slane %v1439, %v1443
      %1446 = vset.pattern.permute.xlu0 0
      %1447 = vperm.xlu0 %1446, %v629
      %v1448 = vpop.permute.xlu0 %1447
      %v1451 = vunpack.c.l.s4 839922192
      %v1452 = vunpack.c.0.s8 %v1451
      %v1453 = vperm.slane %v1448, %v1452
      %1455 = vset.pattern.permute.xlu0 0
      %1456 = vperm.xlu0 %1455, %v630
      %v1457 = vpop.permute.xlu0 %1456
      %v1460 = vunpack.c.l.s4 839922192
      %v1461 = vunpack.c.0.s8 %v1460
      %v1462 = vperm.slane %v1457, %v1461
      %1464 = vset.pattern.permute.xlu0 0
      %1465 = vperm.xlu0 %1464, %v631
      %v1466 = vpop.permute.xlu0 %1465
      %v1469 = vunpack.c.l.s4 839922192
      %v1470 = vunpack.c.0.s8 %v1469
      %v1471 = vperm.slane %v1466, %v1470
      %1473 = vset.pattern.permute.xlu0 0
      %1474 = vperm.xlu0 %1473, %v632
      %v1475 = vpop.permute.xlu0 %1474
      %v1478 = vunpack.c.l.s4 839922192
      %v1479 = vunpack.c.0.s8 %v1478
      %v1480 = vperm.slane %v1475, %v1479
      %1482 = vset.pattern.permute.xlu0 0
      %1483 = vperm.xlu0 %1482, %v633
      %v1484 = vpop.permute.xlu0 %1483
      %v1487 = vunpack.c.l.s4 839922192
      %v1488 = vunpack.c.0.s8 %v1487
      %v1489 = vperm.slane %v1484, %v1488
      %1491 = vset.pattern.permute.xlu0 0
      %1492 = vperm.xlu0 %1491, %v634
      %v1493 = vpop.permute.xlu0 %1492
      %v1496 = vunpack.c.l.s4 839922192
      %v1497 = vunpack.c.0.s8 %v1496
      %v1498 = vperm.slane %v1493, %v1497
      %1500 = vset.pattern.permute.xlu0 0
      %1501 = vperm.xlu0 %1500, %v635
      %v1502 = vpop.permute.xlu0 %1501
      %v1505 = vunpack.c.l.s4 839922192
      %v1506 = vunpack.c.0.s8 %v1505
      %v1507 = vperm.slane %v1502, %v1506
      %1509 = vset.pattern.permute.xlu0 0
      %1510 = vperm.xlu0 %1509, %v636
      %v1511 = vpop.permute.xlu0 %1510
      %v1514 = vunpack.c.l.s4 839922192
      %v1515 = vunpack.c.0.s8 %v1514
      %v1516 = vperm.slane %v1511, %v1515
      %1518 = vset.pattern.permute.xlu0 0
      %1519 = vperm.xlu0 %1518, %v637
      %v1520 = vpop.permute.xlu0 %1519
      %v1523 = vunpack.c.l.s4 839922192
      %v1524 = vunpack.c.0.s8 %v1523
      %v1525 = vperm.slane %v1520, %v1524
      %1527 = vset.pattern.permute.xlu0 0
      %1528 = vperm.xlu0 %1527, %v638
      %v1529 = vpop.permute.xlu0 %1528
      %v1532 = vunpack.c.l.s4 839922192
      %v1533 = vunpack.c.0.s8 %v1532
      %v1534 = vperm.slane %v1529, %v1533
      %1536 = vset.pattern.permute.xlu0 0
      %1537 = vperm.xlu0 %1536, %v639
      %v1538 = vpop.permute.xlu0 %1537
      %v1541 = vunpack.c.l.s4 839922192
      %v1542 = vunpack.c.0.s8 %v1541
      %v1543 = vperm.slane %v1538, %v1542
      %1545 = vset.pattern.permute.xlu0 0
      %1546 = vperm.xlu0 %1545, %v640
      %v1547 = vpop.permute.xlu0 %1546
      %v1550 = vunpack.c.l.s4 839922192
      %v1551 = vunpack.c.0.s8 %v1550
      %v1552 = vperm.slane %v1547, %v1551
      %1554 = vset.pattern.permute.xlu0 0
      %1555 = vperm.xlu0 %1554, %v641
      %v1556 = vpop.permute.xlu0 %1555
      %v1559 = vunpack.c.l.s4 839922192
      %v1560 = vunpack.c.0.s8 %v1559
      %v1561 = vperm.slane %v1556, %v1560
      %1563 = vset.pattern.permute.xlu0 0
      %1564 = vperm.xlu0 %1563, %v642
      %v1565 = vpop.permute.xlu0 %1564
      %v1568 = vunpack.c.l.s4 839922192
      %v1569 = vunpack.c.0.s8 %v1568
      %v1570 = vperm.slane %v1565, %v1569
      %1572 = vset.pattern.permute.xlu0 0
      %1573 = vperm.xlu0 %1572, %v643
      %v1574 = vpop.permute.xlu0 %1573
      %v1577 = vunpack.c.l.s4 839922192
      %v1578 = vunpack.c.0.s8 %v1577
      %v1579 = vperm.slane %v1574, %v1578
      %1581 = vset.pattern.permute.xlu0 0
      %1582 = vperm.xlu0 %1581, %v644
      %v1583 = vpop.permute.xlu0 %1582
      %v1586 = vunpack.c.l.s4 839922192
      %v1587 = vunpack.c.0.s8 %v1586
      %v1588 = vperm.slane %v1583, %v1587
      %1590 = vset.pattern.permute.xlu0 0
      %1591 = vperm.xlu0 %1590, %v645
      %v1592 = vpop.permute.xlu0 %1591
      %v1595 = vunpack.c.l.s4 839922192
      %v1596 = vunpack.c.0.s8 %v1595
      %v1597 = vperm.slane %v1592, %v1596
      %1599 = vset.pattern.permute.xlu0 0
      %1600 = vperm.xlu0 %1599, %v646
      %v1601 = vpop.permute.xlu0 %1600
      %v1604 = vunpack.c.l.s4 839922192
      %v1605 = vunpack.c.0.s8 %v1604
      %v1606 = vperm.slane %v1601, %v1605
      %1608 = vset.pattern.permute.xlu0 0
      %1609 = vperm.xlu0 %1608, %v647
      %v1610 = vpop.permute.xlu0 %1609
      %v1613 = vunpack.c.l.s4 839922192
      %v1614 = vunpack.c.0.s8 %v1613
      %v1615 = vperm.slane %v1610, %v1614
      %1617 = vset.pattern.permute.xlu0 0
      %1618 = vperm.xlu0 %1617, %v648
      %v1619 = vpop.permute.xlu0 %1618
      %v1622 = vunpack.c.l.s4 839922192
      %v1623 = vunpack.c.0.s8 %v1622
      %v1624 = vperm.slane %v1619, %v1623
      %1626 = vset.pattern.permute.xlu0 0
      %1627 = vperm.xlu0 %1626, %v649
      %v1628 = vpop.permute.xlu0 %1627
      %v1631 = vunpack.c.l.s4 839922192
      %v1632 = vunpack.c.0.s8 %v1631
      %v1633 = vperm.slane %v1628, %v1632
      %1635 = vset.pattern.permute.xlu0 0
      %1636 = vperm.xlu0 %1635, %v650
      %v1637 = vpop.permute.xlu0 %1636
      %v1640 = vunpack.c.l.s4 839922192
      %v1641 = vunpack.c.0.s8 %v1640
      %v1642 = vperm.slane %v1637, %v1641
      %1644 = vset.pattern.permute.xlu0 0
      %1645 = vperm.xlu0 %1644, %v651
      %v1646 = vpop.permute.xlu0 %1645
      %v1649 = vunpack.c.l.s4 839922192
      %v1650 = vunpack.c.0.s8 %v1649
      %v1651 = vperm.slane %v1646, %v1650
      %1653 = vset.pattern.permute.xlu0 0
      %1654 = vperm.xlu0 %1653, %v652
      %v1655 = vpop.permute.xlu0 %1654
      %v1658 = vunpack.c.l.s4 839922192
      %v1659 = vunpack.c.0.s8 %v1658
      %v1660 = vperm.slane %v1655, %v1659
      %1662 = vset.pattern.permute.xlu0 0
      %1663 = vperm.xlu0 %1662, %v653
      %v1664 = vpop.permute.xlu0 %1663
      %v1667 = vunpack.c.l.s4 839922192
      %v1668 = vunpack.c.0.s8 %v1667
      %v1669 = vperm.slane %v1664, %v1668
      %1671 = vset.pattern.permute.xlu0 0
      %1672 = vperm.xlu0 %1671, %v654
      %v1673 = vpop.permute.xlu0 %1672
      %v1676 = vunpack.c.l.s4 839922192
      %v1677 = vunpack.c.0.s8 %v1676
      %v1678 = vperm.slane %v1673, %v1677
      %1680 = vset.pattern.permute.xlu0 0
      %1681 = vperm.xlu0 %1680, %v655
      %v1682 = vpop.permute.xlu0 %1681
      %v1685 = vunpack.c.l.s4 839922192
      %v1686 = vunpack.c.0.s8 %v1685
      %v1687 = vperm.slane %v1682, %v1686
      %1689 = vset.pattern.permute.xlu0 0
      %1690 = vperm.xlu0 %1689, %v656
      %v1691 = vpop.permute.xlu0 %1690
      %v1694 = vunpack.c.l.s4 839922192
      %v1695 = vunpack.c.0.s8 %v1694
      %v1696 = vperm.slane %v1691, %v1695
      %1698 = vset.pattern.permute.xlu0 0
      %1699 = vperm.xlu0 %1698, %v657
      %v1700 = vpop.permute.xlu0 %1699
      %v1703 = vunpack.c.l.s4 839922192
      %v1704 = vunpack.c.0.s8 %v1703
      %v1705 = vperm.slane %v1700, %v1704
      %1707 = vset.pattern.permute.xlu0 0
      %1708 = vperm.xlu0 %1707, %v658
      %v1709 = vpop.permute.xlu0 %1708
      %v1712 = vunpack.c.l.s4 839922192
      %v1713 = vunpack.c.0.s8 %v1712
      %v1714 = vperm.slane %v1709, %v1713
      %1716 = vset.pattern.permute.xlu0 0
      %1717 = vperm.xlu0 %1716, %v659
      %v1718 = vpop.permute.xlu0 %1717
      %v1721 = vunpack.c.l.s4 839922192
      %v1722 = vunpack.c.0.s8 %v1721
      %v1723 = vperm.slane %v1718, %v1722
      %1725 = vset.pattern.permute.xlu0 0
      %1726 = vperm.xlu0 %1725, %v660
      %v1727 = vpop.permute.xlu0 %1726
      %v1730 = vunpack.c.l.s4 839922192
      %v1731 = vunpack.c.0.s8 %v1730
      %v1732 = vperm.slane %v1727, %v1731
      %1734 = vset.pattern.permute.xlu0 0
      %1735 = vperm.xlu0 %1734, %v661
      %v1736 = vpop.permute.xlu0 %1735
      %v1739 = vunpack.c.l.s4 839922192
      %v1740 = vunpack.c.0.s8 %v1739
      %v1741 = vperm.slane %v1736, %v1740
      %1743 = vset.pattern.permute.xlu0 0
      %1744 = vperm.xlu0 %1743, %v662
      %v1745 = vpop.permute.xlu0 %1744
      %v1748 = vunpack.c.l.s4 839922192
      %v1749 = vunpack.c.0.s8 %v1748
      %v1750 = vperm.slane %v1745, %v1749
      %1752 = vset.pattern.permute.xlu0 0
      %1753 = vperm.xlu0 %1752, %v663
      %v1754 = vpop.permute.xlu0 %1753
      %v1757 = vunpack.c.l.s4 839922192
      %v1758 = vunpack.c.0.s8 %v1757
      %v1759 = vperm.slane %v1754, %v1758
      %1761 = vset.pattern.permute.xlu0 0
      %1762 = vperm.xlu0 %1761, %v664
      %v1763 = vpop.permute.xlu0 %1762
      %v1766 = vunpack.c.l.s4 839922192
      %v1767 = vunpack.c.0.s8 %v1766
      %v1768 = vperm.slane %v1763, %v1767
      %1770 = vset.pattern.permute.xlu0 0
      %1771 = vperm.xlu0 %1770, %v665
      %v1772 = vpop.permute.xlu0 %1771
      %v1775 = vunpack.c.l.s4 839922192
      %v1776 = vunpack.c.0.s8 %v1775
      %v1777 = vperm.slane %v1772, %v1776
      %1779 = vset.pattern.permute.xlu0 0
      %1780 = vperm.xlu0 %1779, %v666
      %v1781 = vpop.permute.xlu0 %1780
      %v1784 = vunpack.c.l.s4 839922192
      %v1785 = vunpack.c.0.s8 %v1784
      %v1786 = vperm.slane %v1781, %v1785
      %1788 = vset.pattern.permute.xlu0 0
      %1789 = vperm.xlu0 %1788, %v667
      %v1790 = vpop.permute.xlu0 %1789
      %v1793 = vunpack.c.l.s4 839922192
      %v1794 = vunpack.c.0.s8 %v1793
      %v1795 = vperm.slane %v1790, %v1794
      %1797 = vset.pattern.permute.xlu0 0
      %1798 = vperm.xlu0 %1797, %v668
      %v1799 = vpop.permute.xlu0 %1798
      %v1802 = vunpack.c.l.s4 839922192
      %v1803 = vunpack.c.0.s8 %v1802
      %v1804 = vperm.slane %v1799, %v1803
      %1806 = vset.pattern.permute.xlu0 0
      %1807 = vperm.xlu0 %1806, %v669
      %v1808 = vpop.permute.xlu0 %1807
      %v1811 = vunpack.c.l.s4 839922192
      %v1812 = vunpack.c.0.s8 %v1811
      %v1813 = vperm.slane %v1808, %v1812
      %1815 = vset.pattern.permute.xlu0 0
      %1816 = vperm.xlu0 %1815, %v670
      %v1817 = vpop.permute.xlu0 %1816
      %v1820 = vunpack.c.l.s4 839922192
      %v1821 = vunpack.c.0.s8 %v1820
      %v1822 = vperm.slane %v1817, %v1821
      %1824 = vset.pattern.permute.xlu0 0
      %1825 = vperm.xlu0 %1824, %v671
      %v1826 = vpop.permute.xlu0 %1825
      %v1829 = vunpack.c.l.s4 839922192
      %v1830 = vunpack.c.0.s8 %v1829
      %v1831 = vperm.slane %v1826, %v1830
      %1833 = vset.pattern.permute.xlu0 0
      %1834 = vperm.xlu0 %1833, %v672
      %v1835 = vpop.permute.xlu0 %1834
      %v1838 = vunpack.c.l.s4 839922192
      %v1839 = vunpack.c.0.s8 %v1838
      %v1840 = vperm.slane %v1835, %v1839
      %1842 = vset.pattern.permute.xlu0 0
      %1843 = vperm.xlu0 %1842, %v673
      %v1844 = vpop.permute.xlu0 %1843
      %v1847 = vunpack.c.l.s4 839922192
      %v1848 = vunpack.c.0.s8 %v1847
      %v1849 = vperm.slane %v1844, %v1848
      %1851 = vset.pattern.permute.xlu0 0
      %1852 = vperm.xlu0 %1851, %v674
      %v1853 = vpop.permute.xlu0 %1852
      %v1856 = vunpack.c.l.s4 839922192
      %v1857 = vunpack.c.0.s8 %v1856
      %v1858 = vperm.slane %v1853, %v1857
      %1860 = vset.pattern.permute.xlu0 0
      %1861 = vperm.xlu0 %1860, %v675
      %v1862 = vpop.permute.xlu0 %1861
      %v1865 = vunpack.c.l.s4 839922192
      %v1866 = vunpack.c.0.s8 %v1865
      %v1867 = vperm.slane %v1862, %v1866
      %1869 = vset.pattern.permute.xlu0 0
      %1870 = vperm.xlu0 %1869, %v676
      %v1871 = vpop.permute.xlu0 %1870
      %v1874 = vunpack.c.l.s4 839922192
      %v1875 = vunpack.c.0.s8 %v1874
      %v1876 = vperm.slane %v1871, %v1875
      %1878 = vset.pattern.permute.xlu0 0
      %1879 = vperm.xlu0 %1878, %v677
      %v1880 = vpop.permute.xlu0 %1879
      %v1883 = vunpack.c.l.s4 839922192
      %v1884 = vunpack.c.0.s8 %v1883
      %v1885 = vperm.slane %v1880, %v1884
      %1887 = vset.pattern.permute.xlu0 0
      %1888 = vperm.xlu0 %1887, %v678
      %v1889 = vpop.permute.xlu0 %1888
      %v1892 = vunpack.c.l.s4 839922192
      %v1893 = vunpack.c.0.s8 %v1892
      %v1894 = vperm.slane %v1889, %v1893
      %1896 = vset.pattern.permute.xlu0 0
      %1897 = vperm.xlu0 %1896, %v679
      %v1898 = vpop.permute.xlu0 %1897
      %v1901 = vunpack.c.l.s4 839922192
      %v1902 = vunpack.c.0.s8 %v1901
      %v1903 = vperm.slane %v1898, %v1902
      %1905 = vset.pattern.permute.xlu0 0
      %1906 = vperm.xlu0 %1905, %v680
      %v1907 = vpop.permute.xlu0 %1906
      %v1910 = vunpack.c.l.s4 839922192
      %v1911 = vunpack.c.0.s8 %v1910
      %v1912 = vperm.slane %v1907, %v1911
      %1914 = vset.pattern.permute.xlu0 0
      %1915 = vperm.xlu0 %1914, %v681
      %v1916 = vpop.permute.xlu0 %1915
      %v1919 = vunpack.c.l.s4 839922192
      %v1920 = vunpack.c.0.s8 %v1919
      %v1921 = vperm.slane %v1916, %v1920
      %1923 = vset.pattern.permute.xlu0 0
      %1924 = vperm.xlu0 %1923, %v682
      %v1925 = vpop.permute.xlu0 %1924
      %v1928 = vunpack.c.l.s4 839922192
      %v1929 = vunpack.c.0.s8 %v1928
      %v1930 = vperm.slane %v1925, %v1929
      %1932 = vset.pattern.permute.xlu0 0
      %1933 = vperm.xlu0 %1932, %v683
      %v1934 = vpop.permute.xlu0 %1933
      %v1937 = vunpack.c.l.s4 839922192
      %v1938 = vunpack.c.0.s8 %v1937
      %v1939 = vperm.slane %v1934, %v1938
      %1941 = vset.pattern.permute.xlu0 0
      %1942 = vperm.xlu0 %1941, %v684
      %v1943 = vpop.permute.xlu0 %1942
      %v1946 = vunpack.c.l.s4 839922192
      %v1947 = vunpack.c.0.s8 %v1946
      %v1948 = vperm.slane %v1943, %v1947
      %1950 = vset.pattern.permute.xlu0 0
      %1951 = vperm.xlu0 %1950, %v685
      %v1952 = vpop.permute.xlu0 %1951
      %v1955 = vunpack.c.l.s4 839922192
      %v1956 = vunpack.c.0.s8 %v1955
      %v1957 = vperm.slane %v1952, %v1956
      %1959 = vset.pattern.permute.xlu0 0
      %1960 = vperm.xlu0 %1959, %v686
      %v1961 = vpop.permute.xlu0 %1960
      %v1964 = vunpack.c.l.s4 839922192
      %v1965 = vunpack.c.0.s8 %v1964
      %v1966 = vperm.slane %v1961, %v1965
      %1968 = vset.pattern.permute.xlu0 0
      %1969 = vperm.xlu0 %1968, %v687
      %v1970 = vpop.permute.xlu0 %1969
      %v1973 = vunpack.c.l.s4 839922192
      %v1974 = vunpack.c.0.s8 %v1973
      %v1975 = vperm.slane %v1970, %v1974
      %1977 = vset.pattern.permute.xlu0 0
      %1978 = vperm.xlu0 %1977, %v688
      %v1979 = vpop.permute.xlu0 %1978
      %v1982 = vunpack.c.l.s4 839922192
      %v1983 = vunpack.c.0.s8 %v1982
      %v1984 = vperm.slane %v1979, %v1983
      %1986 = vset.pattern.permute.xlu0 0
      %1987 = vperm.xlu0 %1986, %v689
      %v1988 = vpop.permute.xlu0 %1987
      %v1991 = vunpack.c.l.s4 839922192
      %v1992 = vunpack.c.0.s8 %v1991
      %v1993 = vperm.slane %v1988, %v1992
      %1995 = vset.pattern.permute.xlu0 0
      %1996 = vperm.xlu0 %1995, %v690
      %v1997 = vpop.permute.xlu0 %1996
      %v2000 = vunpack.c.l.s4 839922192
      %v2001 = vunpack.c.0.s8 %v2000
      %v2002 = vperm.slane %v1997, %v2001
      %2004 = vset.pattern.permute.xlu0 0
      %2005 = vperm.xlu0 %2004, %v691
      %v2006 = vpop.permute.xlu0 %2005
      %v2009 = vunpack.c.l.s4 839922192
      %v2010 = vunpack.c.0.s8 %v2009
      %v2011 = vperm.slane %v2006, %v2010
      %2013 = vset.pattern.permute.xlu0 0
      %2014 = vperm.xlu0 %2013, %v692
      %v2015 = vpop.permute.xlu0 %2014
      %v2018 = vunpack.c.l.s4 839922192
      %v2019 = vunpack.c.0.s8 %v2018
      %v2020 = vperm.slane %v2015, %v2019
      %2022 = vset.pattern.permute.xlu0 0
      %2023 = vperm.xlu0 %2022, %v693
      %v2024 = vpop.permute.xlu0 %2023
      %v2027 = vunpack.c.l.s4 839922192
      %v2028 = vunpack.c.0.s8 %v2027
      %v2029 = vperm.slane %v2024, %v2028
      %2031 = vset.pattern.permute.xlu0 0
      %2032 = vperm.xlu0 %2031, %v694
      %v2033 = vpop.permute.xlu0 %2032
      %v2036 = vunpack.c.l.s4 839922192
      %v2037 = vunpack.c.0.s8 %v2036
      %v2038 = vperm.slane %v2033, %v2037
      %2040 = vset.pattern.permute.xlu0 0
      %2041 = vperm.xlu0 %2040, %v695
      %v2042 = vpop.permute.xlu0 %2041
      %v2045 = vunpack.c.l.s4 839922192
      %v2046 = vunpack.c.0.s8 %v2045
      %v2047 = vperm.slane %v2042, %v2046
      %2049 = vset.pattern.permute.xlu0 0
      %2050 = vperm.xlu0 %2049, %v696
      %v2051 = vpop.permute.xlu0 %2050
      %v2054 = vunpack.c.l.s4 839922192
      %v2055 = vunpack.c.0.s8 %v2054
      %v2056 = vperm.slane %v2051, %v2055
      %2058 = vset.pattern.permute.xlu0 0
      %2059 = vperm.xlu0 %2058, %v697
      %v2060 = vpop.permute.xlu0 %2059
      %v2063 = vunpack.c.l.s4 839922192
      %v2064 = vunpack.c.0.s8 %v2063
      %v2065 = vperm.slane %v2060, %v2064
      %2067 = vset.pattern.permute.xlu0 0
      %2068 = vperm.xlu0 %2067, %v698
      %v2069 = vpop.permute.xlu0 %2068
      %v2072 = vunpack.c.l.s4 839922192
      %v2073 = vunpack.c.0.s8 %v2072
      %v2074 = vperm.slane %v2069, %v2073
      %2076 = vset.pattern.permute.xlu0 0
      %2077 = vperm.xlu0 %2076, %v699
      %v2078 = vpop.permute.xlu0 %2077
      %v2081 = vunpack.c.l.s4 839922192
      %v2082 = vunpack.c.0.s8 %v2081
      %v2083 = vperm.slane %v2078, %v2082
      %2085 = vset.pattern.permute.xlu0 0
      %2086 = vperm.xlu0 %2085, %v700
      %v2087 = vpop.permute.xlu0 %2086
      %v2090 = vunpack.c.l.s4 839922192
      %v2091 = vunpack.c.0.s8 %v2090
      %v2092 = vperm.slane %v2087, %v2091
      %2094 = vset.pattern.permute.xlu0 0
      %2095 = vperm.xlu0 %2094, %v701
      %v2096 = vpop.permute.xlu0 %2095
      %v2099 = vunpack.c.l.s4 839922192
      %v2100 = vunpack.c.0.s8 %v2099
      %v2101 = vperm.slane %v2096, %v2100
      %2103 = vset.pattern.permute.xlu0 0
      %2104 = vperm.xlu0 %2103, %v702
      %v2105 = vpop.permute.xlu0 %2104
      %v2108 = vunpack.c.l.s4 839922192
      %v2109 = vunpack.c.0.s8 %v2108
      %v2110 = vperm.slane %v2105, %v2109
      %2112 = vset.pattern.permute.xlu0 0
      %2113 = vperm.xlu0 %2112, %v703
      %v2114 = vpop.permute.xlu0 %2113
      %v2117 = vunpack.c.l.s4 839922192
      %v2118 = vunpack.c.0.s8 %v2117
      %v2119 = vperm.slane %v2114, %v2118
      %2121 = vset.pattern.permute.xlu0 0
      %2122 = vperm.xlu0 %2121, %v704
      %v2123 = vpop.permute.xlu0 %2122
      %v2126 = vunpack.c.l.s4 839922192
      %v2127 = vunpack.c.0.s8 %v2126
      %v2128 = vperm.slane %v2123, %v2127
      %2130 = vset.pattern.permute.xlu0 0
      %2131 = vperm.xlu0 %2130, %v705
      %v2132 = vpop.permute.xlu0 %2131
      %v2135 = vunpack.c.l.s4 839922192
      %v2136 = vunpack.c.0.s8 %v2135
      %v2137 = vperm.slane %v2132, %v2136
      %2139 = vset.pattern.permute.xlu0 0
      %2140 = vperm.xlu0 %2139, %v706
      %v2141 = vpop.permute.xlu0 %2140
      %v2144 = vunpack.c.l.s4 839922192
      %v2145 = vunpack.c.0.s8 %v2144
      %v2146 = vperm.slane %v2141, %v2145
      %2148 = vset.pattern.permute.xlu0 0
      %2149 = vperm.xlu0 %2148, %v707
      %v2150 = vpop.permute.xlu0 %2149
      %v2153 = vunpack.c.l.s4 839922192
      %v2154 = vunpack.c.0.s8 %v2153
      %v2155 = vperm.slane %v2150, %v2154
      %2157 = vset.pattern.permute.xlu0 0
      %2158 = vperm.xlu0 %2157, %v708
      %v2159 = vpop.permute.xlu0 %2158
      %v2162 = vunpack.c.l.s4 839922192
      %v2163 = vunpack.c.0.s8 %v2162
      %v2164 = vperm.slane %v2159, %v2163
      %2166 = vset.pattern.permute.xlu0 0
      %2167 = vperm.xlu0 %2166, %v709
      %v2168 = vpop.permute.xlu0 %2167
      %v2171 = vunpack.c.l.s4 839922192
      %v2172 = vunpack.c.0.s8 %v2171
      %v2173 = vperm.slane %v2168, %v2172
      %2175 = vset.pattern.permute.xlu0 0
      %2176 = vperm.xlu0 %2175, %v710
      %v2177 = vpop.permute.xlu0 %2176
      %v2180 = vunpack.c.l.s4 839922192
      %v2181 = vunpack.c.0.s8 %v2180
      %v2182 = vperm.slane %v2177, %v2181
      %2184 = vset.pattern.permute.xlu0 0
      %2185 = vperm.xlu0 %2184, %v711
      %v2186 = vpop.permute.xlu0 %2185
      %v2189 = vunpack.c.l.s4 839922192
      %v2190 = vunpack.c.0.s8 %v2189
      %v2191 = vperm.slane %v2186, %v2190
      %2193 = vset.pattern.permute.xlu0 0
      %2194 = vperm.xlu0 %2193, %v712
      %v2195 = vpop.permute.xlu0 %2194
      %v2198 = vunpack.c.l.s4 839922192
      %v2199 = vunpack.c.0.s8 %v2198
      %v2200 = vperm.slane %v2195, %v2199
      %2202 = vset.pattern.permute.xlu0 0
      %2203 = vperm.xlu0 %2202, %v713
      %v2204 = vpop.permute.xlu0 %2203
      %v2207 = vunpack.c.l.s4 839922192
      %v2208 = vunpack.c.0.s8 %v2207
      %v2209 = vperm.slane %v2204, %v2208
      %2211 = vset.pattern.permute.xlu0 0
      %2212 = vperm.xlu0 %2211, %v714
      %v2213 = vpop.permute.xlu0 %2212
      %v2216 = vunpack.c.l.s4 839922192
      %v2217 = vunpack.c.0.s8 %v2216
      %v2218 = vperm.slane %v2213, %v2217
      %2220 = vset.pattern.permute.xlu0 0
      %2221 = vperm.xlu0 %2220, %v715
      %v2222 = vpop.permute.xlu0 %2221
      %v2225 = vunpack.c.l.s4 839922192
      %v2226 = vunpack.c.0.s8 %v2225
      %v2227 = vperm.slane %v2222, %v2226
      %2229 = vset.pattern.permute.xlu0 0
      %2230 = vperm.xlu0 %2229, %v716
      %v2231 = vpop.permute.xlu0 %2230
      %v2234 = vunpack.c.l.s4 839922192
      %v2235 = vunpack.c.0.s8 %v2234
      %v2236 = vperm.slane %v2231, %v2235
      %2238 = vset.pattern.permute.xlu0 0
      %2239 = vperm.xlu0 %2238, %v717
      %v2240 = vpop.permute.xlu0 %2239
      %v2243 = vunpack.c.l.s4 839922192
      %v2244 = vunpack.c.0.s8 %v2243
      %v2245 = vperm.slane %v2240, %v2244
      %2247 = vset.pattern.permute.xlu0 0
      %2248 = vperm.xlu0 %2247, %v718
      %v2249 = vpop.permute.xlu0 %2248
      %v2252 = vunpack.c.l.s4 839922192
      %v2253 = vunpack.c.0.s8 %v2252
      %v2254 = vperm.slane %v2249, %v2253
      %2256 = vset.pattern.permute.xlu0 0
      %2257 = vperm.xlu0 %2256, %v719
      %v2258 = vpop.permute.xlu0 %2257
      %v2261 = vunpack.c.l.s4 839922192
      %v2262 = vunpack.c.0.s8 %v2261
      %v2263 = vperm.slane %v2258, %v2262
      %2265 = vset.pattern.permute.xlu0 0
      %2266 = vperm.xlu0 %2265, %v720
      %v2267 = vpop.permute.xlu0 %2266
      %v2270 = vunpack.c.l.s4 839922192
      %v2271 = vunpack.c.0.s8 %v2270
      %v2272 = vperm.slane %v2267, %v2271
      %2274 = vset.pattern.permute.xlu0 0
      %2275 = vperm.xlu0 %2274, %v721
      %v2276 = vpop.permute.xlu0 %2275
      %v2279 = vunpack.c.l.s4 839922192
      %v2280 = vunpack.c.0.s8 %v2279
      %v2281 = vperm.slane %v2276, %v2280
      %2283 = vset.pattern.permute.xlu0 0
      %2284 = vperm.xlu0 %2283, %v722
      %v2285 = vpop.permute.xlu0 %2284
      %v2288 = vunpack.c.l.s4 839922192
      %v2289 = vunpack.c.0.s8 %v2288
      %v2290 = vperm.slane %v2285, %v2289
      %2292 = vset.pattern.permute.xlu0 0
      %2293 = vperm.xlu0 %2292, %v723
      %v2294 = vpop.permute.xlu0 %2293
      %v2297 = vunpack.c.l.s4 839922192
      %v2298 = vunpack.c.0.s8 %v2297
      %v2299 = vperm.slane %v2294, %v2298
      %2301 = vset.pattern.permute.xlu0 0
      %2302 = vperm.xlu0 %2301, %v724
      %v2303 = vpop.permute.xlu0 %2302
      %v2306 = vunpack.c.l.s4 839922192
      %v2307 = vunpack.c.0.s8 %v2306
      %v2308 = vperm.slane %v2303, %v2307
      %2310 = vset.pattern.permute.xlu0 0
      %2311 = vperm.xlu0 %2310, %v725
      %v2312 = vpop.permute.xlu0 %2311
      %v2315 = vunpack.c.l.s4 839922192
      %v2316 = vunpack.c.0.s8 %v2315
      %v2317 = vperm.slane %v2312, %v2316
      %2319 = vset.pattern.permute.xlu0 0
      %2320 = vperm.xlu0 %2319, %v726
      %v2321 = vpop.permute.xlu0 %2320
      %v2324 = vunpack.c.l.s4 839922192
      %v2325 = vunpack.c.0.s8 %v2324
      %v2326 = vperm.slane %v2321, %v2325
      %2328 = vset.pattern.permute.xlu0 0
      %2329 = vperm.xlu0 %2328, %v727
      %v2330 = vpop.permute.xlu0 %2329
      %v2333 = vunpack.c.l.s4 839922192
      %v2334 = vunpack.c.0.s8 %v2333
      %v2335 = vperm.slane %v2330, %v2334
      %2337 = vset.pattern.permute.xlu0 0
      %2338 = vperm.xlu0 %2337, %v728
      %v2339 = vpop.permute.xlu0 %2338
      %v2342 = vunpack.c.l.s4 839922192
      %v2343 = vunpack.c.0.s8 %v2342
      %v2344 = vperm.slane %v2339, %v2343
      %2346 = vset.pattern.permute.xlu0 0
      %2347 = vperm.xlu0 %2346, %v729
      %v2348 = vpop.permute.xlu0 %2347
      %v2351 = vunpack.c.l.s4 839922192
      %v2352 = vunpack.c.0.s8 %v2351
      %v2353 = vperm.slane %v2348, %v2352
      %2355 = vset.pattern.permute.xlu0 0
      %2356 = vperm.xlu0 %2355, %v730
      %v2357 = vpop.permute.xlu0 %2356
      %v2360 = vunpack.c.l.s4 839922192
      %v2361 = vunpack.c.0.s8 %v2360
      %v2362 = vperm.slane %v2357, %v2361
      %2364 = vset.pattern.permute.xlu0 0
      %2365 = vperm.xlu0 %2364, %v731
      %v2366 = vpop.permute.xlu0 %2365
      %v2369 = vunpack.c.l.s4 839922192
      %v2370 = vunpack.c.0.s8 %v2369
      %v2371 = vperm.slane %v2366, %v2370
      %2373 = vset.pattern.permute.xlu0 0
      %2374 = vperm.xlu0 %2373, %v732
      %v2375 = vpop.permute.xlu0 %2374
      %v2378 = vunpack.c.l.s4 839922192
      %v2379 = vunpack.c.0.s8 %v2378
      %v2380 = vperm.slane %v2375, %v2379
      %2382 = vset.pattern.permute.xlu0 0
      %2383 = vperm.xlu0 %2382, %v733
      %v2384 = vpop.permute.xlu0 %2383
      %v2387 = vunpack.c.l.s4 839922192
      %v2388 = vunpack.c.0.s8 %v2387
      %v2389 = vperm.slane %v2384, %v2388
      %2391 = vset.pattern.permute.xlu0 0
      %2392 = vperm.xlu0 %2391, %v734
      %v2393 = vpop.permute.xlu0 %2392
      %v2396 = vunpack.c.l.s4 839922192
      %v2397 = vunpack.c.0.s8 %v2396
      %v2398 = vperm.slane %v2393, %v2397
      %2400 = vset.pattern.permute.xlu0 0
      %2401 = vperm.xlu0 %2400, %v735
      %v2402 = vpop.permute.xlu0 %2401
      %v2405 = vunpack.c.l.s4 839922192
      %v2406 = vunpack.c.0.s8 %v2405
      %v2407 = vperm.slane %v2402, %v2406
      %2409 = vset.pattern.permute.xlu0 0
      %2410 = vperm.xlu0 %2409, %v736
      %v2411 = vpop.permute.xlu0 %2410
      %v2414 = vunpack.c.l.s4 839922192
      %v2415 = vunpack.c.0.s8 %v2414
      %v2416 = vperm.slane %v2411, %v2415
      %2418 = vset.pattern.permute.xlu0 0
      %2419 = vperm.xlu0 %2418, %v737
      %v2420 = vpop.permute.xlu0 %2419
      %v2423 = vunpack.c.l.s4 839922192
      %v2424 = vunpack.c.0.s8 %v2423
      %v2425 = vperm.slane %v2420, %v2424
      %2427 = vset.pattern.permute.xlu0 0
      %2428 = vperm.xlu0 %2427, %v738
      %v2429 = vpop.permute.xlu0 %2428
      %v2432 = vunpack.c.l.s4 839922192
      %v2433 = vunpack.c.0.s8 %v2432
      %v2434 = vperm.slane %v2429, %v2433
      %2436 = vset.pattern.permute.xlu0 0
      %2437 = vperm.xlu0 %2436, %v739
      %v2438 = vpop.permute.xlu0 %2437
      %v2441 = vunpack.c.l.s4 839922192
      %v2442 = vunpack.c.0.s8 %v2441
      %v2443 = vperm.slane %v2438, %v2442
      %2445 = vset.pattern.permute.xlu0 0
      %2446 = vperm.xlu0 %2445, %v740
      %v2447 = vpop.permute.xlu0 %2446
      %v2450 = vunpack.c.l.s4 839922192
      %v2451 = vunpack.c.0.s8 %v2450
      %v2452 = vperm.slane %v2447, %v2451
      %2454 = vset.pattern.permute.xlu0 0
      %2455 = vperm.xlu0 %2454, %v741
      %v2456 = vpop.permute.xlu0 %2455
      %v2459 = vunpack.c.l.s4 839922192
      %v2460 = vunpack.c.0.s8 %v2459
      %v2461 = vperm.slane %v2456, %v2460
      %2463 = vset.pattern.permute.xlu0 0
      %2464 = vperm.xlu0 %2463, %v742
      %v2465 = vpop.permute.xlu0 %2464
      %v2468 = vunpack.c.l.s4 839922192
      %v2469 = vunpack.c.0.s8 %v2468
      %v2470 = vperm.slane %v2465, %v2469
      %2472 = vset.pattern.permute.xlu0 0
      %2473 = vperm.xlu0 %2472, %v743
      %v2474 = vpop.permute.xlu0 %2473
      %v2477 = vunpack.c.l.s4 839922192
      %v2478 = vunpack.c.0.s8 %v2477
      %v2479 = vperm.slane %v2474, %v2478
      %2481 = vset.pattern.permute.xlu0 0
      %2482 = vperm.xlu0 %2481, %v744
      %v2483 = vpop.permute.xlu0 %2482
      %v2486 = vunpack.c.l.s4 839922192
      %v2487 = vunpack.c.0.s8 %v2486
      %v2488 = vperm.slane %v2483, %v2487
      %2490 = vset.pattern.permute.xlu0 0
      %2491 = vperm.xlu0 %2490, %v745
      %v2492 = vpop.permute.xlu0 %2491
      %v2495 = vunpack.c.l.s4 839922192
      %v2496 = vunpack.c.0.s8 %v2495
      %v2497 = vperm.slane %v2492, %v2496
      %2499 = vset.pattern.permute.xlu0 0
      %2500 = vperm.xlu0 %2499, %v746
      %v2501 = vpop.permute.xlu0 %2500
      %v2504 = vunpack.c.l.s4 839922192
      %v2505 = vunpack.c.0.s8 %v2504
      %v2506 = vperm.slane %v2501, %v2505
      %2508 = vset.pattern.permute.xlu0 0
      %2509 = vperm.xlu0 %2508, %v747
      %v2510 = vpop.permute.xlu0 %2509
      %v2513 = vunpack.c.l.s4 839922192
      %v2514 = vunpack.c.0.s8 %v2513
      %v2515 = vperm.slane %v2510, %v2514
      %2517 = vset.pattern.permute.xlu0 0
      %2518 = vperm.xlu0 %2517, %v748
      %v2519 = vpop.permute.xlu0 %2518
      %v2522 = vunpack.c.l.s4 839922192
      %v2523 = vunpack.c.0.s8 %v2522
      %v2524 = vperm.slane %v2519, %v2523
      %2526 = vset.pattern.permute.xlu0 0
      %2527 = vperm.xlu0 %2526, %v749
      %v2528 = vpop.permute.xlu0 %2527
      %v2531 = vunpack.c.l.s4 839922192
      %v2532 = vunpack.c.0.s8 %v2531
      %v2533 = vperm.slane %v2528, %v2532
      %2535 = vset.pattern.permute.xlu0 0
      %2536 = vperm.xlu0 %2535, %v750
      %v2537 = vpop.permute.xlu0 %2536
      %v2540 = vunpack.c.l.s4 839922192
      %v2541 = vunpack.c.0.s8 %v2540
      %v2542 = vperm.slane %v2537, %v2541
      %2544 = vset.pattern.permute.xlu0 0
      %2545 = vperm.xlu0 %2544, %v751
      %v2546 = vpop.permute.xlu0 %2545
      %v2549 = vunpack.c.l.s4 839922192
      %v2550 = vunpack.c.0.s8 %v2549
      %v2551 = vperm.slane %v2546, %v2550
      %2553 = vset.pattern.permute.xlu0 0
      %2554 = vperm.xlu0 %2553, %v752
      %v2555 = vpop.permute.xlu0 %2554
      %v2558 = vunpack.c.l.s4 839922192
      %v2559 = vunpack.c.0.s8 %v2558
      %v2560 = vperm.slane %v2555, %v2559
      %2562 = vset.pattern.permute.xlu0 0
      %2563 = vperm.xlu0 %2562, %v753
      %v2564 = vpop.permute.xlu0 %2563
      %v2567 = vunpack.c.l.s4 839922192
      %v2568 = vunpack.c.0.s8 %v2567
      %v2569 = vperm.slane %v2564, %v2568
      %2571 = vset.pattern.permute.xlu0 0
      %2572 = vperm.xlu0 %2571, %v754
      %v2573 = vpop.permute.xlu0 %2572
      %v2576 = vunpack.c.l.s4 839922192
      %v2577 = vunpack.c.0.s8 %v2576
      %v2578 = vperm.slane %v2573, %v2577
      %2580 = vset.pattern.permute.xlu0 0
      %2581 = vperm.xlu0 %2580, %v755
      %v2582 = vpop.permute.xlu0 %2581
      %v2585 = vunpack.c.l.s4 839922192
      %v2586 = vunpack.c.0.s8 %v2585
      %v2587 = vperm.slane %v2582, %v2586
      %2589 = vset.pattern.permute.xlu0 0
      %2590 = vperm.xlu0 %2589, %v756
      %v2591 = vpop.permute.xlu0 %2590
      %v2594 = vunpack.c.l.s4 839922192
      %v2595 = vunpack.c.0.s8 %v2594
      %v2596 = vperm.slane %v2591, %v2595
      %2598 = vset.pattern.permute.xlu0 0
      %2599 = vperm.xlu0 %2598, %v757
      %v2600 = vpop.permute.xlu0 %2599
      %v2603 = vunpack.c.l.s4 839922192
      %v2604 = vunpack.c.0.s8 %v2603
      %v2605 = vperm.slane %v2600, %v2604
      %2607 = vset.pattern.permute.xlu0 0
      %2608 = vperm.xlu0 %2607, %v758
      %v2609 = vpop.permute.xlu0 %2608
      %v2612 = vunpack.c.l.s4 839922192
      %v2613 = vunpack.c.0.s8 %v2612
      %v2614 = vperm.slane %v2609, %v2613
      %2616 = vset.pattern.permute.xlu0 0
      %2617 = vperm.xlu0 %2616, %v759
      %v2618 = vpop.permute.xlu0 %2617
      %v2621 = vunpack.c.l.s4 839922192
      %v2622 = vunpack.c.0.s8 %v2621
      %v2623 = vperm.slane %v2618, %v2622
      %2625 = vset.pattern.permute.xlu0 0
      %2626 = vperm.xlu0 %2625, %v760
      %v2627 = vpop.permute.xlu0 %2626
      %v2630 = vunpack.c.l.s4 839922192
      %v2631 = vunpack.c.0.s8 %v2630
      %v2632 = vperm.slane %v2627, %v2631
      %2634 = vset.pattern.permute.xlu0 0
      %2635 = vperm.xlu0 %2634, %v761
      %v2636 = vpop.permute.xlu0 %2635
      %v2639 = vunpack.c.l.s4 839922192
      %v2640 = vunpack.c.0.s8 %v2639
      %v2641 = vperm.slane %v2636, %v2640
      %2643 = vset.pattern.permute.xlu0 0
      %2644 = vperm.xlu0 %2643, %v762
      %v2645 = vpop.permute.xlu0 %2644
      %v2648 = vunpack.c.l.s4 839922192
      %v2649 = vunpack.c.0.s8 %v2648
      %v2650 = vperm.slane %v2645, %v2649
      %2652 = vset.pattern.permute.xlu0 0
      %2653 = vperm.xlu0 %2652, %v763
      %v2654 = vpop.permute.xlu0 %2653
      %v2657 = vunpack.c.l.s4 839922192
      %v2658 = vunpack.c.0.s8 %v2657
      %v2659 = vperm.slane %v2654, %v2658
      %2661 = vset.pattern.permute.xlu0 0
      %2662 = vperm.xlu0 %2661, %v764
      %v2663 = vpop.permute.xlu0 %2662
      %v2666 = vunpack.c.l.s4 839922192
      %v2667 = vunpack.c.0.s8 %v2666
      %v2668 = vperm.slane %v2663, %v2667
      %2670 = vset.pattern.permute.xlu0 0
      %2671 = vperm.xlu0 %2670, %v765
      %v2672 = vpop.permute.xlu0 %2671
      %v2675 = vunpack.c.l.s4 839922192
      %v2676 = vunpack.c.0.s8 %v2675
      %v2677 = vperm.slane %v2672, %v2676
      %2679 = vset.pattern.permute.xlu0 0
      %2680 = vperm.xlu0 %2679, %v766
      %v2681 = vpop.permute.xlu0 %2680
      %v2684 = vunpack.c.l.s4 839922192
      %v2685 = vunpack.c.0.s8 %v2684
      %v2686 = vperm.slane %v2681, %v2685
      %2688 = vset.pattern.permute.xlu0 0
      %2689 = vperm.xlu0 %2688, %v767
      %v2690 = vpop.permute.xlu0 %2689
      %v2693 = vunpack.c.l.s4 839922192
      %v2694 = vunpack.c.0.s8 %v2693
      %v2695 = vperm.slane %v2690, %v2694
      %2697 = vset.pattern.permute.xlu0 0
      %2698 = vperm.xlu0 %2697, %v768
      %v2699 = vpop.permute.xlu0 %2698
      %v2702 = vunpack.c.l.s4 839922192
      %v2703 = vunpack.c.0.s8 %v2702
      %v2704 = vperm.slane %v2699, %v2703
      %2706 = vset.pattern.permute.xlu0 0
      %2707 = vperm.xlu0 %2706, %v769
      %v2708 = vpop.permute.xlu0 %2707
      %v2711 = vunpack.c.l.s4 839922192
      %v2712 = vunpack.c.0.s8 %v2711
      %v2713 = vperm.slane %v2708, %v2712
      %2715 = vset.pattern.permute.xlu0 0
      %2716 = vperm.xlu0 %2715, %v770
      %v2717 = vpop.permute.xlu0 %2716
      %v2720 = vunpack.c.l.s4 839922192
      %v2721 = vunpack.c.0.s8 %v2720
      %v2722 = vperm.slane %v2717, %v2721
      %2724 = vset.pattern.permute.xlu0 0
      %2725 = vperm.xlu0 %2724, %v771
      %v2726 = vpop.permute.xlu0 %2725
      %v2729 = vunpack.c.l.s4 839922192
      %v2730 = vunpack.c.0.s8 %v2729
      %v2731 = vperm.slane %v2726, %v2730
      %2733 = vset.pattern.permute.xlu0 0
      %2734 = vperm.xlu0 %2733, %v772
      %v2735 = vpop.permute.xlu0 %2734
      %v2738 = vunpack.c.l.s4 839922192
      %v2739 = vunpack.c.0.s8 %v2738
      %v2740 = vperm.slane %v2735, %v2739
      %2742 = vset.pattern.permute.xlu0 0
      %2743 = vperm.xlu0 %2742, %v773
      %v2744 = vpop.permute.xlu0 %2743
      %v2747 = vunpack.c.l.s4 839922192
      %v2748 = vunpack.c.0.s8 %v2747
      %v2749 = vperm.slane %v2744, %v2748
      %2751 = vset.pattern.permute.xlu0 0
      %2752 = vperm.xlu0 %2751, %v774
      %v2753 = vpop.permute.xlu0 %2752
      %v2756 = vunpack.c.l.s4 839922192
      %v2757 = vunpack.c.0.s8 %v2756
      %v2758 = vperm.slane %v2753, %v2757
      %2760 = vset.pattern.permute.xlu0 0
      %2761 = vperm.xlu0 %2760, %v775
      %v2762 = vpop.permute.xlu0 %2761
      %v2765 = vunpack.c.l.s4 839922192
      %v2766 = vunpack.c.0.s8 %v2765
      %v2767 = vperm.slane %v2762, %v2766
      %2769 = vset.pattern.permute.xlu0 0
      %2770 = vperm.xlu0 %2769, %v776
      %v2771 = vpop.permute.xlu0 %2770
      %v2774 = vunpack.c.l.s4 839922192
      %v2775 = vunpack.c.0.s8 %v2774
      %v2776 = vperm.slane %v2771, %v2775
      %2778 = vset.pattern.permute.xlu0 0
      %2779 = vperm.xlu0 %2778, %v777
      %v2780 = vpop.permute.xlu0 %2779
      %v2783 = vunpack.c.l.s4 839922192
      %v2784 = vunpack.c.0.s8 %v2783
      %v2785 = vperm.slane %v2780, %v2784
      %2787 = vset.pattern.permute.xlu0 0
      %2788 = vperm.xlu0 %2787, %v778
      %v2789 = vpop.permute.xlu0 %2788
      %v2792 = vunpack.c.l.s4 839922192
      %v2793 = vunpack.c.0.s8 %v2792
      %v2794 = vperm.slane %v2789, %v2793
      %2796 = vset.pattern.permute.xlu0 0
      %2797 = vperm.xlu0 %2796, %v779
      %v2798 = vpop.permute.xlu0 %2797
      %v2801 = vunpack.c.l.s4 839922192
      %v2802 = vunpack.c.0.s8 %v2801
      %v2803 = vperm.slane %v2798, %v2802
      %2805 = vset.pattern.permute.xlu0 0
      %2806 = vperm.xlu0 %2805, %v780
      %v2807 = vpop.permute.xlu0 %2806
      %v2810 = vunpack.c.l.s4 839922192
      %v2811 = vunpack.c.0.s8 %v2810
      %v2812 = vperm.slane %v2807, %v2811
      %2814 = vset.pattern.permute.xlu0 0
      %2815 = vperm.xlu0 %2814, %v781
      %v2816 = vpop.permute.xlu0 %2815
      %v2819 = vunpack.c.l.s4 839922192
      %v2820 = vunpack.c.0.s8 %v2819
      %v2821 = vperm.slane %v2816, %v2820
      %2823 = vset.pattern.permute.xlu0 0
      %2824 = vperm.xlu0 %2823, %v782
      %v2825 = vpop.permute.xlu0 %2824
      %v2828 = vunpack.c.l.s4 839922192
      %v2829 = vunpack.c.0.s8 %v2828
      %v2830 = vperm.slane %v2825, %v2829
      %2832 = vset.pattern.permute.xlu0 0
      %2833 = vperm.xlu0 %2832, %v783
      %v2834 = vpop.permute.xlu0 %2833
      %v2837 = vunpack.c.l.s4 839922192
      %v2838 = vunpack.c.0.s8 %v2837
      %v2839 = vperm.slane %v2834, %v2838
      %2841 = vset.pattern.permute.xlu0 0
      %2842 = vperm.xlu0 %2841, %v784
      %v2843 = vpop.permute.xlu0 %2842
      %v2846 = vunpack.c.l.s4 839922192
      %v2847 = vunpack.c.0.s8 %v2846
      %v2848 = vperm.slane %v2843, %v2847
      %2850 = vset.pattern.permute.xlu0 0
      %2851 = vperm.xlu0 %2850, %v785
      %v2852 = vpop.permute.xlu0 %2851
      %v2855 = vunpack.c.l.s4 839922192
      %v2856 = vunpack.c.0.s8 %v2855
      %v2857 = vperm.slane %v2852, %v2856
      %2859 = vset.pattern.permute.xlu0 0
      %2860 = vperm.xlu0 %2859, %v786
      %v2861 = vpop.permute.xlu0 %2860
      %v2864 = vunpack.c.l.s4 839922192
      %v2865 = vunpack.c.0.s8 %v2864
      %v2866 = vperm.slane %v2861, %v2865
      %2868 = vset.pattern.permute.xlu0 0
      %2869 = vperm.xlu0 %2868, %v787
      %v2870 = vpop.permute.xlu0 %2869
      %v2873 = vunpack.c.l.s4 839922192
      %v2874 = vunpack.c.0.s8 %v2873
      %v2875 = vperm.slane %v2870, %v2874
      %2877 = vset.pattern.permute.xlu0 0
      %2878 = vperm.xlu0 %2877, %v788
      %v2879 = vpop.permute.xlu0 %2878
      %v2882 = vunpack.c.l.s4 839922192
      %v2883 = vunpack.c.0.s8 %v2882
      %v2884 = vperm.slane %v2879, %v2883
      %2886 = vset.pattern.permute.xlu0 0
      %2887 = vperm.xlu0 %2886, %v789
      %v2888 = vpop.permute.xlu0 %2887
      %v2891 = vunpack.c.l.s4 839922192
      %v2892 = vunpack.c.0.s8 %v2891
      %v2893 = vperm.slane %v2888, %v2892
      %2895 = vset.pattern.permute.xlu0 0
      %2896 = vperm.xlu0 %2895, %v790
      %v2897 = vpop.permute.xlu0 %2896
      %v2900 = vunpack.c.l.s4 839922192
      %v2901 = vunpack.c.0.s8 %v2900
      %v2902 = vperm.slane %v2897, %v2901
      %2904 = vset.pattern.permute.xlu0 0
      %2905 = vperm.xlu0 %2904, %v791
      %v2906 = vpop.permute.xlu0 %2905
      %v2909 = vunpack.c.l.s4 839922192
      %v2910 = vunpack.c.0.s8 %v2909
      %v2911 = vperm.slane %v2906, %v2910
      %2913 = vset.pattern.permute.xlu0 0
      %2914 = vperm.xlu0 %2913, %v792
      %v2915 = vpop.permute.xlu0 %2914
      %v2918 = vunpack.c.l.s4 839922192
      %v2919 = vunpack.c.0.s8 %v2918
      %v2920 = vperm.slane %v2915, %v2919
      %2922 = vset.pattern.permute.xlu0 0
      %2923 = vperm.xlu0 %2922, %v793
      %v2924 = vpop.permute.xlu0 %2923
      %v2927 = vunpack.c.l.s4 839922192
      %v2928 = vunpack.c.0.s8 %v2927
      %v2929 = vperm.slane %v2924, %v2928
      %2931 = vset.pattern.permute.xlu0 0
      %2932 = vperm.xlu0 %2931, %v794
      %v2933 = vpop.permute.xlu0 %2932
      %v2936 = vunpack.c.l.s4 839922192
      %v2937 = vunpack.c.0.s8 %v2936
      %v2938 = vperm.slane %v2933, %v2937
      %2940 = vset.pattern.permute.xlu0 0
      %2941 = vperm.xlu0 %2940, %v795
      %v2942 = vpop.permute.xlu0 %2941
      %v2945 = vunpack.c.l.s4 839922192
      %v2946 = vunpack.c.0.s8 %v2945
      %v2947 = vperm.slane %v2942, %v2946
      %2949 = vset.pattern.permute.xlu0 0
      %2950 = vperm.xlu0 %2949, %v796
      %v2951 = vpop.permute.xlu0 %2950
      %v2954 = vunpack.c.l.s4 839922192
      %v2955 = vunpack.c.0.s8 %v2954
      %v2956 = vperm.slane %v2951, %v2955
      %2958 = vset.pattern.permute.xlu0 0
      %2959 = vperm.xlu0 %2958, %v797
      %v2960 = vpop.permute.xlu0 %2959
      %v2963 = vunpack.c.l.s4 839922192
      %v2964 = vunpack.c.0.s8 %v2963
      %v2965 = vperm.slane %v2960, %v2964
      %2967 = vset.pattern.permute.xlu0 0
      %2968 = vperm.xlu0 %2967, %v798
      %v2969 = vpop.permute.xlu0 %2968
      %v2972 = vunpack.c.l.s4 839922192
      %v2973 = vunpack.c.0.s8 %v2972
      %v2974 = vperm.slane %v2969, %v2973
      %2976 = vset.pattern.permute.xlu0 0
      %2977 = vperm.xlu0 %2976, %v799
      %v2978 = vpop.permute.xlu0 %2977
      %v2981 = vunpack.c.l.s4 839922192
      %v2982 = vunpack.c.0.s8 %v2981
      %v2983 = vperm.slane %v2978, %v2982
      %2985 = vset.pattern.permute.xlu0 0
      %2986 = vperm.xlu0 %2985, %v800
      %v2987 = vpop.permute.xlu0 %2986
      %v2990 = vunpack.c.l.s4 839922192
      %v2991 = vunpack.c.0.s8 %v2990
      %v2992 = vperm.slane %v2987, %v2991
      %2994 = vset.pattern.permute.xlu0 0
      %2995 = vperm.xlu0 %2994, %v801
      %v2996 = vpop.permute.xlu0 %2995
      %v2999 = vunpack.c.l.s4 839922192
      %v3000 = vunpack.c.0.s8 %v2999
      %v3001 = vperm.slane %v2996, %v3000
      %3003 = vset.pattern.permute.xlu0 0
      %3004 = vperm.xlu0 %3003, %v802
      %v3005 = vpop.permute.xlu0 %3004
      %v3008 = vunpack.c.l.s4 839922192
      %v3009 = vunpack.c.0.s8 %v3008
      %v3010 = vperm.slane %v3005, %v3009
      %3012 = vset.pattern.permute.xlu0 0
      %3013 = vperm.xlu0 %3012, %v803
      %v3014 = vpop.permute.xlu0 %3013
      %v3017 = vunpack.c.l.s4 839922192
      %v3018 = vunpack.c.0.s8 %v3017
      %v3019 = vperm.slane %v3014, %v3018
      %3021 = vset.pattern.permute.xlu0 0
      %3022 = vperm.xlu0 %3021, %v804
      %v3023 = vpop.permute.xlu0 %3022
      %v3026 = vunpack.c.l.s4 839922192
      %v3027 = vunpack.c.0.s8 %v3026
      %v3028 = vperm.slane %v3023, %v3027
      %3030 = vset.pattern.permute.xlu0 0
      %3031 = vperm.xlu0 %3030, %v805
      %v3032 = vpop.permute.xlu0 %3031
      %v3035 = vunpack.c.l.s4 839922192
      %v3036 = vunpack.c.0.s8 %v3035
      %v3037 = vperm.slane %v3032, %v3036
      %3039 = vset.pattern.permute.xlu0 0
      %3040 = vperm.xlu0 %3039, %v806
      %v3041 = vpop.permute.xlu0 %3040
      %v3044 = vunpack.c.l.s4 839922192
      %v3045 = vunpack.c.0.s8 %v3044
      %v3046 = vperm.slane %v3041, %v3045
      %3048 = vset.pattern.permute.xlu0 0
      %3049 = vperm.xlu0 %3048, %v807
      %v3050 = vpop.permute.xlu0 %3049
      %v3053 = vunpack.c.l.s4 839922192
      %v3054 = vunpack.c.0.s8 %v3053
      %v3055 = vperm.slane %v3050, %v3054
      %3057 = vset.pattern.permute.xlu0 0
      %3058 = vperm.xlu0 %3057, %v808
      %v3059 = vpop.permute.xlu0 %3058
      %v3062 = vunpack.c.l.s4 839922192
      %v3063 = vunpack.c.0.s8 %v3062
      %v3064 = vperm.slane %v3059, %v3063
      %3066 = vset.pattern.permute.xlu0 0
      %3067 = vperm.xlu0 %3066, %v809
      %v3068 = vpop.permute.xlu0 %3067
      %v3071 = vunpack.c.l.s4 839922192
      %v3072 = vunpack.c.0.s8 %v3071
      %v3073 = vperm.slane %v3068, %v3072
      %3075 = vset.pattern.permute.xlu0 0
      %3076 = vperm.xlu0 %3075, %v810
      %v3077 = vpop.permute.xlu0 %3076
      %v3080 = vunpack.c.l.s4 839922192
      %v3081 = vunpack.c.0.s8 %v3080
      %v3082 = vperm.slane %v3077, %v3081
      %3084 = vset.pattern.permute.xlu0 0
      %3085 = vperm.xlu0 %3084, %v811
      %v3086 = vpop.permute.xlu0 %3085
      %v3089 = vunpack.c.l.s4 839922192
      %v3090 = vunpack.c.0.s8 %v3089
      %v3091 = vperm.slane %v3086, %v3090
      %3093 = vset.pattern.permute.xlu0 0
      %3094 = vperm.xlu0 %3093, %v812
      %v3095 = vpop.permute.xlu0 %3094
      %v3098 = vunpack.c.l.s4 839922192
      %v3099 = vunpack.c.0.s8 %v3098
      %v3100 = vperm.slane %v3095, %v3099
      %3102 = vset.pattern.permute.xlu0 0
      %3103 = vperm.xlu0 %3102, %v813
      %v3104 = vpop.permute.xlu0 %3103
      %v3107 = vunpack.c.l.s4 839922192
      %v3108 = vunpack.c.0.s8 %v3107
      %v3109 = vperm.slane %v3104, %v3108
      %3111 = vset.pattern.permute.xlu0 0
      %3112 = vperm.xlu0 %3111, %v814
      %v3113 = vpop.permute.xlu0 %3112
      %v3116 = vunpack.c.l.s4 839922192
      %v3117 = vunpack.c.0.s8 %v3116
      %v3118 = vperm.slane %v3113, %v3117
      %3120 = vset.pattern.permute.xlu0 0
      %3121 = vperm.xlu0 %3120, %v815
      %v3122 = vpop.permute.xlu0 %3121
      %v3125 = vunpack.c.l.s4 839922192
      %v3126 = vunpack.c.0.s8 %v3125
      %v3127 = vperm.slane %v3122, %v3126
      %3129 = vset.pattern.permute.xlu0 0
      %3130 = vperm.xlu0 %3129, %v816
      %v3131 = vpop.permute.xlu0 %3130
      %v3134 = vunpack.c.l.s4 839922192
      %v3135 = vunpack.c.0.s8 %v3134
      %v3136 = vperm.slane %v3131, %v3135
      %3138 = vset.pattern.permute.xlu0 0
      %3139 = vperm.xlu0 %3138, %v817
      %v3140 = vpop.permute.xlu0 %3139
      %v3143 = vunpack.c.l.s4 839922192
      %v3144 = vunpack.c.0.s8 %v3143
      %v3145 = vperm.slane %v3140, %v3144
      %3147 = vset.pattern.permute.xlu0 0
      %3148 = vperm.xlu0 %3147, %v818
      %v3149 = vpop.permute.xlu0 %3148
      %v3152 = vunpack.c.l.s4 839922192
      %v3153 = vunpack.c.0.s8 %v3152
      %v3154 = vperm.slane %v3149, %v3153
      %3156 = vset.pattern.permute.xlu0 0
      %3157 = vperm.xlu0 %3156, %v819
      %v3158 = vpop.permute.xlu0 %3157
      %v3161 = vunpack.c.l.s4 839922192
      %v3162 = vunpack.c.0.s8 %v3161
      %v3163 = vperm.slane %v3158, %v3162
      %3165 = vset.pattern.permute.xlu0 0
      %3166 = vperm.xlu0 %3165, %v820
      %v3167 = vpop.permute.xlu0 %3166
      %v3170 = vunpack.c.l.s4 839922192
      %v3171 = vunpack.c.0.s8 %v3170
      %v3172 = vperm.slane %v3167, %v3171
      %3174 = vset.pattern.permute.xlu0 0
      %3175 = vperm.xlu0 %3174, %v821
      %v3176 = vpop.permute.xlu0 %3175
      %v3179 = vunpack.c.l.s4 839922192
      %v3180 = vunpack.c.0.s8 %v3179
      %v3181 = vperm.slane %v3176, %v3180
      %3183 = vset.pattern.permute.xlu0 0
      %3184 = vperm.xlu0 %3183, %v822
      %v3185 = vpop.permute.xlu0 %3184
      %v3188 = vunpack.c.l.s4 839922192
      %v3189 = vunpack.c.0.s8 %v3188
      %v3190 = vperm.slane %v3185, %v3189
      %3192 = vset.pattern.permute.xlu0 0
      %3193 = vperm.xlu0 %3192, %v823
      %v3194 = vpop.permute.xlu0 %3193
      %v3197 = vunpack.c.l.s4 839922192
      %v3198 = vunpack.c.0.s8 %v3197
      %v3199 = vperm.slane %v3194, %v3198
      %3201 = vset.pattern.permute.xlu0 0
      %3202 = vperm.xlu0 %3201, %v824
      %v3203 = vpop.permute.xlu0 %3202
      %v3206 = vunpack.c.l.s4 839922192
      %v3207 = vunpack.c.0.s8 %v3206
      %v3208 = vperm.slane %v3203, %v3207
      %3210 = vset.pattern.permute.xlu0 0
      %3211 = vperm.xlu0 %3210, %v825
      %v3212 = vpop.permute.xlu0 %3211
      %v3215 = vunpack.c.l.s4 839922192
      %v3216 = vunpack.c.0.s8 %v3215
      %v3217 = vperm.slane %v3212, %v3216
      %3219 = vset.pattern.permute.xlu0 0
      %3220 = vperm.xlu0 %3219, %v826
      %v3221 = vpop.permute.xlu0 %3220
      %v3224 = vunpack.c.l.s4 839922192
      %v3225 = vunpack.c.0.s8 %v3224
      %v3226 = vperm.slane %v3221, %v3225
      %3228 = vset.pattern.permute.xlu0 0
      %3229 = vperm.xlu0 %3228, %v827
      %v3230 = vpop.permute.xlu0 %3229
      %v3233 = vunpack.c.l.s4 839922192
      %v3234 = vunpack.c.0.s8 %v3233
      %v3235 = vperm.slane %v3230, %v3234
      %3237 = vset.pattern.permute.xlu0 0
      %3238 = vperm.xlu0 %3237, %v828
      %v3239 = vpop.permute.xlu0 %3238
      %v3242 = vunpack.c.l.s4 839922192
      %v3243 = vunpack.c.0.s8 %v3242
      %v3244 = vperm.slane %v3239, %v3243
      %3246 = vset.pattern.permute.xlu0 0
      %3247 = vperm.xlu0 %3246, %v829
      %v3248 = vpop.permute.xlu0 %3247
      %v3251 = vunpack.c.l.s4 839922192
      %v3252 = vunpack.c.0.s8 %v3251
      %v3253 = vperm.slane %v3248, %v3252
      %3255 = vset.pattern.permute.xlu0 0
      %3256 = vperm.xlu0 %3255, %v830
      %v3257 = vpop.permute.xlu0 %3256
      %v3260 = vunpack.c.l.s4 839922192
      %v3261 = vunpack.c.0.s8 %v3260
      %v3262 = vperm.slane %v3257, %v3261
      %3264 = vset.pattern.permute.xlu0 0
      %3265 = vperm.xlu0 %3264, %v831
      %v3266 = vpop.permute.xlu0 %3265
      %v3269 = vunpack.c.l.s4 839922192
      %v3270 = vunpack.c.0.s8 %v3269
      %v3271 = vperm.slane %v3266, %v3270
      %3273 = vset.pattern.permute.xlu0 0
      %3274 = vperm.xlu0 %3273, %v832
      %v3275 = vpop.permute.xlu0 %3274
      %v3278 = vunpack.c.l.s4 839922192
      %v3279 = vunpack.c.0.s8 %v3278
      %v3280 = vperm.slane %v3275, %v3279
      %3282 = vset.pattern.permute.xlu0 0
      %3283 = vperm.xlu0 %3282, %v833
      %v3284 = vpop.permute.xlu0 %3283
      %v3287 = vunpack.c.l.s4 839922192
      %v3288 = vunpack.c.0.s8 %v3287
      %v3289 = vperm.slane %v3284, %v3288
      %3291 = vset.pattern.permute.xlu0 0
      %3292 = vperm.xlu0 %3291, %v834
      %v3293 = vpop.permute.xlu0 %3292
      %v3296 = vunpack.c.l.s4 839922192
      %v3297 = vunpack.c.0.s8 %v3296
      %v3298 = vperm.slane %v3293, %v3297
      %3300 = vset.pattern.permute.xlu0 0
      %3301 = vperm.xlu0 %3300, %v835
      %v3302 = vpop.permute.xlu0 %3301
      %v3305 = vunpack.c.l.s4 839922192
      %v3306 = vunpack.c.0.s8 %v3305
      %v3307 = vperm.slane %v3302, %v3306
      %3309 = vset.pattern.permute.xlu0 0
      %3310 = vperm.xlu0 %3309, %v836
      %v3311 = vpop.permute.xlu0 %3310
      %v3314 = vunpack.c.l.s4 839922192
      %v3315 = vunpack.c.0.s8 %v3314
      %v3316 = vperm.slane %v3311, %v3315
      %3318 = vset.pattern.permute.xlu0 0
      %3319 = vperm.xlu0 %3318, %v837
      %v3320 = vpop.permute.xlu0 %3319
      %v3323 = vunpack.c.l.s4 839922192
      %v3324 = vunpack.c.0.s8 %v3323
      %v3325 = vperm.slane %v3320, %v3324
      %3327 = vset.pattern.permute.xlu0 0
      %3328 = vperm.xlu0 %3327, %v838
      %v3329 = vpop.permute.xlu0 %3328
      %v3332 = vunpack.c.l.s4 839922192
      %v3333 = vunpack.c.0.s8 %v3332
      %v3334 = vperm.slane %v3329, %v3333
      %3336 = vset.pattern.permute.xlu0 0
      %3337 = vperm.xlu0 %3336, %v839
      %v3338 = vpop.permute.xlu0 %3337
      %v3341 = vunpack.c.l.s4 839922192
      %v3342 = vunpack.c.0.s8 %v3341
      %v3343 = vperm.slane %v3338, %v3342
      %3345 = vset.pattern.permute.xlu0 0
      %3346 = vperm.xlu0 %3345, %v840
      %v3347 = vpop.permute.xlu0 %3346
      %v3350 = vunpack.c.l.s4 839922192
      %v3351 = vunpack.c.0.s8 %v3350
      %v3352 = vperm.slane %v3347, %v3351
      %3354 = vset.pattern.permute.xlu0 0
      %3355 = vperm.xlu0 %3354, %v841
      %v3356 = vpop.permute.xlu0 %3355
      %v3359 = vunpack.c.l.s4 839922192
      %v3360 = vunpack.c.0.s8 %v3359
      %v3361 = vperm.slane %v3356, %v3360
      %3363 = vset.pattern.permute.xlu0 0
      %3364 = vperm.xlu0 %3363, %v842
      %v3365 = vpop.permute.xlu0 %3364
      %v3368 = vunpack.c.l.s4 839922192
      %v3369 = vunpack.c.0.s8 %v3368
      %v3370 = vperm.slane %v3365, %v3369
      %3372 = vset.pattern.permute.xlu0 0
      %3373 = vperm.xlu0 %3372, %v843
      %v3374 = vpop.permute.xlu0 %3373
      %v3377 = vunpack.c.l.s4 839922192
      %v3378 = vunpack.c.0.s8 %v3377
      %v3379 = vperm.slane %v3374, %v3378
      %3381 = vset.pattern.permute.xlu0 0
      %3382 = vperm.xlu0 %3381, %v844
      %v3383 = vpop.permute.xlu0 %3382
      %v3386 = vunpack.c.l.s4 839922192
      %v3387 = vunpack.c.0.s8 %v3386
      %v3388 = vperm.slane %v3383, %v3387
      %3390 = vset.pattern.permute.xlu0 0
      %3391 = vperm.xlu0 %3390, %v845
      %v3392 = vpop.permute.xlu0 %3391
      %v3395 = vunpack.c.l.s4 839922192
      %v3396 = vunpack.c.0.s8 %v3395
      %v3397 = vperm.slane %v3392, %v3396
      %3399 = vset.pattern.permute.xlu0 0
      %3400 = vperm.xlu0 %3399, %v846
      %v3401 = vpop.permute.xlu0 %3400
      %v3404 = vunpack.c.l.s4 839922192
      %v3405 = vunpack.c.0.s8 %v3404
      %v3406 = vperm.slane %v3401, %v3405
      %3408 = vset.pattern.permute.xlu0 0
      %3409 = vperm.xlu0 %3408, %v847
      %v3410 = vpop.permute.xlu0 %3409
      %v3413 = vunpack.c.l.s4 839922192
      %v3414 = vunpack.c.0.s8 %v3413
      %v3415 = vperm.slane %v3410, %v3414
      %3417 = vset.pattern.permute.xlu0 0
      %3418 = vperm.xlu0 %3417, %v848
      %v3419 = vpop.permute.xlu0 %3418
      %v3422 = vunpack.c.l.s4 839922192
      %v3423 = vunpack.c.0.s8 %v3422
      %v3424 = vperm.slane %v3419, %v3423
      %3426 = vset.pattern.permute.xlu0 0
      %3427 = vperm.xlu0 %3426, %v849
      %v3428 = vpop.permute.xlu0 %3427
      %v3431 = vunpack.c.l.s4 839922192
      %v3432 = vunpack.c.0.s8 %v3431
      %v3433 = vperm.slane %v3428, %v3432
      %3435 = vset.pattern.permute.xlu0 0
      %3436 = vperm.xlu0 %3435, %v850
      %v3437 = vpop.permute.xlu0 %3436
      %v3440 = vunpack.c.l.s4 839922192
      %v3441 = vunpack.c.0.s8 %v3440
      %v3442 = vperm.slane %v3437, %v3441
      %v3443 = vunpack.c.l.bf16 %v275
      %v3444 = vunpack.c.l.bf16 %v276
      %v3445 = vunpack.c.l.bf16 %v277
      %v3446 = vunpack.c.l.bf16 %v278
      %v3447 = vunpack.c.l.bf16 %v279
      %v3448 = vunpack.c.l.bf16 %v280
      %v3449 = vunpack.c.l.bf16 %v281
      %v3450 = vunpack.c.l.bf16 %v282
      %v3451 = vunpack.c.l.bf16 %v283
      %v3452 = vunpack.c.l.bf16 %v284
      %v3453 = vunpack.c.l.bf16 %v285
      %v3454 = vunpack.c.l.bf16 %v286
      %v3455 = vunpack.c.l.bf16 %v287
      %v3456 = vunpack.c.l.bf16 %v288
      %v3457 = vunpack.c.l.bf16 %v289
      %v3458 = vunpack.c.l.bf16 %v290
      %v3459 = vunpack.c.l.bf16 %v291
      %v3460 = vunpack.c.l.bf16 %v292
      %v3461 = vunpack.c.l.bf16 %v293
      %v3462 = vunpack.c.l.bf16 %v294
      %v3463 = vunpack.c.l.bf16 %v295
      %v3464 = vunpack.c.l.bf16 %v296
      %v3465 = vunpack.c.l.bf16 %v297
      %v3466 = vunpack.c.l.bf16 %v298
      %v3467 = vunpack.c.l.bf16 %v299
      %v3468 = vunpack.c.l.bf16 %v300
      %v3469 = vunpack.c.l.bf16 %v301
      %v3470 = vunpack.c.l.bf16 %v302
      %v3471 = vunpack.c.l.bf16 %v303
      %v3472 = vunpack.c.l.bf16 %v304
      %v3473 = vunpack.c.l.bf16 %v305
      %v3474 = vunpack.c.l.bf16 %v306
      %v3475 = vunpack.c.l.bf16 %v307
      %v3476 = vunpack.c.l.bf16 %v308
      %v3477 = vunpack.c.l.bf16 %v309
      %v3478 = vunpack.c.l.bf16 %v310
      %v3479 = vunpack.c.l.bf16 %v311
      %v3480 = vunpack.c.l.bf16 %v312
      %v3481 = vunpack.c.l.bf16 %v313
      %v3482 = vunpack.c.l.bf16 %v314
      %v3483 = vunpack.c.l.bf16 %v315
      %v3484 = vunpack.c.l.bf16 %v316
      %v3485 = vunpack.c.l.bf16 %v317
      %v3486 = vunpack.c.l.bf16 %v318
      %v3487 = vunpack.c.l.bf16 %v319
      %v3488 = vunpack.c.l.bf16 %v320
      %v3489 = vunpack.c.l.bf16 %v321
      %v3490 = vunpack.c.l.bf16 %v322
      %v3491 = vunpack.c.l.bf16 %v323
      %v3492 = vunpack.c.l.bf16 %v324
      %v3493 = vunpack.c.l.bf16 %v325
      %v3494 = vunpack.c.l.bf16 %v326
      %v3495 = vunpack.c.l.bf16 %v327
      %v3496 = vunpack.c.l.bf16 %v328
      %v3497 = vunpack.c.l.bf16 %v329
      %v3498 = vunpack.c.l.bf16 %v330
      %v3499 = vunpack.c.l.bf16 %v331
      %v3500 = vunpack.c.l.bf16 %v332
      %v3501 = vunpack.c.l.bf16 %v333
      %v3502 = vunpack.c.l.bf16 %v334
      %v3503 = vunpack.c.l.bf16 %v335
      %v3504 = vunpack.c.l.bf16 %v336
      %v3505 = vunpack.c.l.bf16 %v337
      %v3506 = vunpack.c.l.bf16 %v338
      %v3507 = vunpack.c.l.bf16 %v339
      %v3508 = vunpack.c.l.bf16 %v340
      %v3509 = vunpack.c.l.bf16 %v341
      %v3510 = vunpack.c.l.bf16 %v342
      %v3511 = vunpack.c.l.bf16 %v343
      %v3512 = vunpack.c.l.bf16 %v344
      %v3513 = vunpack.c.l.bf16 %v345
      %v3514 = vunpack.c.l.bf16 %v346
      %v3515 = vunpack.c.l.bf16 %v347
      %v3516 = vunpack.c.l.bf16 %v348
      %v3517 = vunpack.c.l.bf16 %v349
      %v3518 = vunpack.c.l.bf16 %v350
      %v3519 = vunpack.c.l.bf16 %v351
      %v3520 = vunpack.c.l.bf16 %v352
      %v3521 = vunpack.c.l.bf16 %v353
      %v3522 = vunpack.c.l.bf16 %v354
      %v3523 = vunpack.c.l.bf16 %v355
      %v3524 = vunpack.c.l.bf16 %v356
      %v3525 = vunpack.c.l.bf16 %v357
      %v3526 = vunpack.c.l.bf16 %v358
      %v3527 = vunpack.c.l.bf16 %v359
      %v3528 = vunpack.c.l.bf16 %v360
      %v3529 = vunpack.c.l.bf16 %v361
      %v3530 = vunpack.c.l.bf16 %v362
      %v3531 = vunpack.c.l.bf16 %v363
      %v3532 = vunpack.c.l.bf16 %v364
      %v3533 = vunpack.c.l.bf16 %v365
      %v3534 = vunpack.c.l.bf16 %v366
      %v3535 = vunpack.c.l.bf16 %v367
      %v3536 = vunpack.c.l.bf16 %v368
      %v3537 = vunpack.c.l.bf16 %v369
      %v3538 = vunpack.c.l.bf16 %v370
      %v3539 = vunpack.c.l.bf16 %v371
      %v3540 = vunpack.c.l.bf16 %v372
      %v3541 = vunpack.c.l.bf16 %v373
      %v3542 = vunpack.c.l.bf16 %v374
      %v3543 = vunpack.c.l.bf16 %v375
      %v3544 = vunpack.c.l.bf16 %v376
      %v3545 = vunpack.c.l.bf16 %v377
      %v3546 = vunpack.c.l.bf16 %v378
      %v3547 = vunpack.c.l.bf16 %v379
      %v3548 = vunpack.c.l.bf16 %v380
      %v3549 = vunpack.c.l.bf16 %v381
      %v3550 = vunpack.c.l.bf16 %v382
      %v3551 = vunpack.c.l.bf16 %v383
      %v3552 = vunpack.c.l.bf16 %v384
      %v3553 = vunpack.c.l.bf16 %v385
      %v3554 = vunpack.c.l.bf16 %v386
      %v3555 = vunpack.c.l.bf16 %v387
      %v3556 = vunpack.c.l.bf16 %v388
      %v3557 = vunpack.c.l.bf16 %v389
      %v3558 = vunpack.c.l.bf16 %v390
      %v3559 = vunpack.c.l.bf16 %v391
      %v3560 = vunpack.c.l.bf16 %v392
      %v3561 = vunpack.c.l.bf16 %v393
      %v3562 = vunpack.c.l.bf16 %v394
      %v3563 = vunpack.c.l.bf16 %v395
      %v3564 = vunpack.c.l.bf16 %v396
      %v3565 = vunpack.c.l.bf16 %v397
      %v3566 = vunpack.c.l.bf16 %v398
      %v3567 = vunpack.c.l.bf16 %v399
      %v3568 = vunpack.c.l.bf16 %v400
      %v3569 = vunpack.c.l.bf16 %v401
      %v3570 = vunpack.c.l.bf16 %v402
      %v3571 = vunpack.c.l.bf16 %v403
      %v3572 = vunpack.c.l.bf16 %v404
      %v3573 = vunpack.c.l.bf16 %v405
      %v3574 = vunpack.c.l.bf16 %v406
      %v3575 = vunpack.c.l.bf16 %v407
      %v3576 = vunpack.c.l.bf16 %v408
      %v3577 = vunpack.c.l.bf16 %v409
      %v3578 = vunpack.c.l.bf16 %v410
      %v3579 = vunpack.c.l.bf16 %v411
      %v3580 = vunpack.c.l.bf16 %v412
      %v3581 = vunpack.c.l.bf16 %v413
      %v3582 = vunpack.c.l.bf16 %v414
      %v3583 = vunpack.c.l.bf16 %v415
      %v3584 = vunpack.c.l.bf16 %v416
      %v3585 = vunpack.c.l.bf16 %v417
      %v3586 = vunpack.c.l.bf16 %v418
      %v3587 = vunpack.c.l.bf16 %v419
      %v3588 = vunpack.c.l.bf16 %v420
      %v3589 = vunpack.c.l.bf16 %v421
      %v3590 = vunpack.c.l.bf16 %v422
      %v3591 = vunpack.c.l.bf16 %v423
      %v3592 = vunpack.c.l.bf16 %v424
      %v3593 = vunpack.c.l.bf16 %v425
      %v3594 = vunpack.c.l.bf16 %v426
      %v3595 = vunpack.c.l.bf16 %v427
      %v3596 = vunpack.c.l.bf16 %v428
      %v3597 = vunpack.c.l.bf16 %v429
      %v3598 = vunpack.c.l.bf16 %v430
      %v3599 = vunpack.c.l.bf16 %v431
      %v3600 = vunpack.c.l.bf16 %v432
      %v3601 = vunpack.c.l.bf16 %v433
      %v3602 = vunpack.c.l.bf16 %v434
      %v3603 = vunpack.c.l.bf16 %v435
      %v3604 = vunpack.c.l.bf16 %v436
      %v3605 = vunpack.c.l.bf16 %v437
      %v3606 = vunpack.c.l.bf16 %v438
      %v3607 = vunpack.c.l.bf16 %v439
      %v3608 = vunpack.c.l.bf16 %v440
      %v3609 = vunpack.c.l.bf16 %v441
      %v3610 = vunpack.c.l.bf16 %v442
      %v3611 = vunpack.c.l.bf16 %v443
      %v3612 = vunpack.c.l.bf16 %v444
      %v3613 = vunpack.c.l.bf16 %v445
      %v3614 = vunpack.c.l.bf16 %v446
      %v3615 = vunpack.c.l.bf16 %v447
      %v3616 = vunpack.c.l.bf16 %v448
      %v3617 = vunpack.c.l.bf16 %v449
      %v3618 = vunpack.c.l.bf16 %v450
      %v3619 = vunpack.c.l.bf16 %v451
      %v3620 = vunpack.c.l.bf16 %v452
      %v3621 = vunpack.c.l.bf16 %v453
      %v3622 = vunpack.c.l.bf16 %v454
      %v3623 = vunpack.c.l.bf16 %v455
      %v3624 = vunpack.c.l.bf16 %v456
      %v3625 = vunpack.c.l.bf16 %v457
      %v3626 = vunpack.c.l.bf16 %v458
      %v3627 = vunpack.c.l.bf16 %v459
      %v3628 = vunpack.c.l.bf16 %v460
      %v3629 = vunpack.c.l.bf16 %v461
      %v3630 = vunpack.c.l.bf16 %v462
      %v3631 = vunpack.c.l.bf16 %v463
      %v3632 = vunpack.c.l.bf16 %v464
      %v3633 = vunpack.c.l.bf16 %v465
      %v3634 = vunpack.c.l.bf16 %v466
      %v3635 = vunpack.c.l.bf16 %v467
      %v3636 = vunpack.c.l.bf16 %v468
      %v3637 = vunpack.c.l.bf16 %v469
      %v3638 = vunpack.c.l.bf16 %v470
      %v3639 = vunpack.c.l.bf16 %v471
      %v3640 = vunpack.c.l.bf16 %v472
      %v3641 = vunpack.c.l.bf16 %v473
      %v3642 = vunpack.c.l.bf16 %v474
      %v3643 = vunpack.c.l.bf16 %v475
      %v3644 = vunpack.c.l.bf16 %v476
      %v3645 = vunpack.c.l.bf16 %v477
      %v3646 = vunpack.c.l.bf16 %v478
      %v3647 = vunpack.c.l.bf16 %v479
      %v3648 = vunpack.c.l.bf16 %v480
      %v3649 = vunpack.c.l.bf16 %v481
      %v3650 = vunpack.c.l.bf16 %v482
      %v3651 = vunpack.c.l.bf16 %v483
      %v3652 = vunpack.c.l.bf16 %v484
      %v3653 = vunpack.c.l.bf16 %v485
      %v3654 = vunpack.c.l.bf16 %v486
      %v3655 = vunpack.c.l.bf16 %v487
      %v3656 = vunpack.c.l.bf16 %v488
      %v3657 = vunpack.c.l.bf16 %v489
      %v3658 = vunpack.c.l.bf16 %v490
      %v3659 = vunpack.c.l.bf16 %v491
      %v3660 = vunpack.c.l.bf16 %v492
      %v3661 = vunpack.c.l.bf16 %v493
      %v3662 = vunpack.c.l.bf16 %v494
      %v3663 = vunpack.c.l.bf16 %v495
      %v3664 = vunpack.c.l.bf16 %v496
      %v3665 = vunpack.c.l.bf16 %v497
      %v3666 = vunpack.c.l.bf16 %v498
      %v3667 = vunpack.c.l.bf16 %v499
      %v3668 = vunpack.c.l.bf16 %v500
      %v3669 = vunpack.c.l.bf16 %v501
      %v3670 = vunpack.c.l.bf16 %v502
      %v3671 = vunpack.c.l.bf16 %v503
      %v3672 = vunpack.c.l.bf16 %v504
      %v3673 = vunpack.c.l.bf16 %v505
      %v3674 = vunpack.c.l.bf16 %v506
      %v3675 = vunpack.c.l.bf16 %v507
      %v3676 = vunpack.c.l.bf16 %v508
      %v3677 = vunpack.c.l.bf16 %v509
      %v3678 = vunpack.c.l.bf16 %v510
      %v3679 = vunpack.c.l.bf16 %v511
      %v3680 = vunpack.c.l.bf16 %v512
      %v3681 = vunpack.c.l.bf16 %v513
      %v3682 = vunpack.c.l.bf16 %v514
      %v3683 = vunpack.c.l.bf16 %v515
      %v3684 = vunpack.c.l.bf16 %v516
      %v3685 = vunpack.c.l.bf16 %v517
      %v3686 = vunpack.c.l.bf16 %v518
      %v3687 = vunpack.c.l.bf16 %v519
      %v3688 = vunpack.c.l.bf16 %v520
      %v3689 = vunpack.c.l.bf16 %v521
      %v3690 = vunpack.c.l.bf16 %v522
      %v3691 = vunpack.c.l.bf16 %v523
      %v3692 = vunpack.c.l.bf16 %v524
      %v3693 = vunpack.c.l.bf16 %v525
      %v3694 = vunpack.c.l.bf16 %v526
      %v3695 = vunpack.c.l.bf16 %v527
      %v3696 = vunpack.c.l.bf16 %v528
      %v3697 = vunpack.c.l.bf16 %v529
      %v3698 = vunpack.c.l.bf16 %v530
      %v3699 = vunpack.c.l.bf16 %v531
      %v3700 = vunpack.c.l.bf16 %v532
      %v3701 = vunpack.c.l.bf16 %v533
      %v3702 = vunpack.c.l.bf16 %v534
      %v3703 = vunpack.c.l.bf16 %v535
      %v3704 = vunpack.c.l.bf16 %v536
      %v3705 = vunpack.c.l.bf16 %v537
      %v3706 = vunpack.c.l.bf16 %v538
      %v3707 = vunpack.c.l.bf16 %v539
      %v3708 = vunpack.c.l.bf16 %v540
      %v3709 = vunpack.c.l.bf16 %v541
      %v3710 = vunpack.c.l.bf16 %v542
      %v3711 = vunpack.c.l.bf16 %v543
      %v3712 = vunpack.c.l.bf16 %v544
      %v3713 = vunpack.c.l.bf16 %v545
      %v3714 = vunpack.c.l.bf16 %v546
      %v3715 = vunpack.c.l.bf16 %v547
      %v3716 = vunpack.c.l.bf16 %v548
      %v3717 = vunpack.c.l.bf16 %v549
      %v3718 = vunpack.c.l.bf16 %v550
      %v3719 = vunpack.c.l.bf16 %v551
      %v3720 = vunpack.c.l.bf16 %v552
      %v3721 = vunpack.c.l.bf16 %v553
      %v3722 = vunpack.c.l.bf16 %v554
      %v3723 = vunpack.c.l.bf16 %v555
      %v3724 = vunpack.c.l.bf16 %v556
      %v3725 = vunpack.c.l.bf16 %v557
      %v3726 = vunpack.c.l.bf16 %v558
      %v3727 = vunpack.c.l.bf16 %v559
      %v3728 = vunpack.c.l.bf16 %v560
      %v3729 = vunpack.c.l.bf16 %v561
      %v3730 = vunpack.c.l.bf16 %v562
      %v3731 = vunpack.c.l.bf16 %v859
      %v3732 = vunpack.c.l.bf16 %v868
      %v3733 = vunpack.c.l.bf16 %v877
      %v3734 = vunpack.c.l.bf16 %v886
      %v3735 = vunpack.c.l.bf16 %v895
      %v3736 = vunpack.c.l.bf16 %v904
      %v3737 = vunpack.c.l.bf16 %v913
      %v3738 = vunpack.c.l.bf16 %v922
      %v3739 = vunpack.c.l.bf16 %v931
      %v3740 = vunpack.c.l.bf16 %v940
      %v3741 = vunpack.c.l.bf16 %v949
      %v3742 = vunpack.c.l.bf16 %v958
      %v3743 = vunpack.c.l.bf16 %v967
      %v3744 = vunpack.c.l.bf16 %v976
      %v3745 = vunpack.c.l.bf16 %v985
      %v3746 = vunpack.c.l.bf16 %v994
      %v3747 = vunpack.c.l.bf16 %v1003
      %v3748 = vunpack.c.l.bf16 %v1012
      %v3749 = vunpack.c.l.bf16 %v1021
      %v3750 = vunpack.c.l.bf16 %v1030
      %v3751 = vunpack.c.l.bf16 %v1039
      %v3752 = vunpack.c.l.bf16 %v1048
      %v3753 = vunpack.c.l.bf16 %v1057
      %v3754 = vunpack.c.l.bf16 %v1066
      %v3755 = vunpack.c.l.bf16 %v1075
      %v3756 = vunpack.c.l.bf16 %v1084
      %v3757 = vunpack.c.l.bf16 %v1093
      %v3758 = vunpack.c.l.bf16 %v1102
      %v3759 = vunpack.c.l.bf16 %v1111
      %v3760 = vunpack.c.l.bf16 %v1120
      %v3761 = vunpack.c.l.bf16 %v1129
      %v3762 = vunpack.c.l.bf16 %v1138
      %v3763 = vunpack.c.l.bf16 %v1147
      %v3764 = vunpack.c.l.bf16 %v1156
      %v3765 = vunpack.c.l.bf16 %v1165
      %v3766 = vunpack.c.l.bf16 %v1174
      %v3767 = vunpack.c.l.bf16 %v1183
      %v3768 = vunpack.c.l.bf16 %v1192
      %v3769 = vunpack.c.l.bf16 %v1201
      %v3770 = vunpack.c.l.bf16 %v1210
      %v3771 = vunpack.c.l.bf16 %v1219
      %v3772 = vunpack.c.l.bf16 %v1228
      %v3773 = vunpack.c.l.bf16 %v1237
      %v3774 = vunpack.c.l.bf16 %v1246
      %v3775 = vunpack.c.l.bf16 %v1255
      %v3776 = vunpack.c.l.bf16 %v1264
      %v3777 = vunpack.c.l.bf16 %v1273
      %v3778 = vunpack.c.l.bf16 %v1282
      %v3779 = vunpack.c.l.bf16 %v1291
      %v3780 = vunpack.c.l.bf16 %v1300
      %v3781 = vunpack.c.l.bf16 %v1309
      %v3782 = vunpack.c.l.bf16 %v1318
      %v3783 = vunpack.c.l.bf16 %v1327
      %v3784 = vunpack.c.l.bf16 %v1336
      %v3785 = vunpack.c.l.bf16 %v1345
      %v3786 = vunpack.c.l.bf16 %v1354
      %v3787 = vunpack.c.l.bf16 %v1363
      %v3788 = vunpack.c.l.bf16 %v1372
      %v3789 = vunpack.c.l.bf16 %v1381
      %v3790 = vunpack.c.l.bf16 %v1390
      %v3791 = vunpack.c.l.bf16 %v1399
      %v3792 = vunpack.c.l.bf16 %v1408
      %v3793 = vunpack.c.l.bf16 %v1417
      %v3794 = vunpack.c.l.bf16 %v1426
      %v3795 = vunpack.c.l.bf16 %v1435
      %v3796 = vunpack.c.l.bf16 %v1444
      %v3797 = vunpack.c.l.bf16 %v1453
      %v3798 = vunpack.c.l.bf16 %v1462
      %v3799 = vunpack.c.l.bf16 %v1471
      %v3800 = vunpack.c.l.bf16 %v1480
      %v3801 = vunpack.c.l.bf16 %v1489
      %v3802 = vunpack.c.l.bf16 %v1498
      %v3803 = vunpack.c.l.bf16 %v1507
      %v3804 = vunpack.c.l.bf16 %v1516
      %v3805 = vunpack.c.l.bf16 %v1525
      %v3806 = vunpack.c.l.bf16 %v1534
      %v3807 = vunpack.c.l.bf16 %v1543
      %v3808 = vunpack.c.l.bf16 %v1552
      %v3809 = vunpack.c.l.bf16 %v1561
      %v3810 = vunpack.c.l.bf16 %v1570
      %v3811 = vunpack.c.l.bf16 %v1579
      %v3812 = vunpack.c.l.bf16 %v1588
      %v3813 = vunpack.c.l.bf16 %v1597
      %v3814 = vunpack.c.l.bf16 %v1606
      %v3815 = vunpack.c.l.bf16 %v1615
      %v3816 = vunpack.c.l.bf16 %v1624
      %v3817 = vunpack.c.l.bf16 %v1633
      %v3818 = vunpack.c.l.bf16 %v1642
      %v3819 = vunpack.c.l.bf16 %v1651
      %v3820 = vunpack.c.l.bf16 %v1660
      %v3821 = vunpack.c.l.bf16 %v1669
      %v3822 = vunpack.c.l.bf16 %v1678
      %v3823 = vunpack.c.l.bf16 %v1687
      %v3824 = vunpack.c.l.bf16 %v1696
      %v3825 = vunpack.c.l.bf16 %v1705
      %v3826 = vunpack.c.l.bf16 %v1714
      %v3827 = vunpack.c.l.bf16 %v1723
      %v3828 = vunpack.c.l.bf16 %v1732
      %v3829 = vunpack.c.l.bf16 %v1741
      %v3830 = vunpack.c.l.bf16 %v1750
      %v3831 = vunpack.c.l.bf16 %v1759
      %v3832 = vunpack.c.l.bf16 %v1768
      %v3833 = vunpack.c.l.bf16 %v1777
      %v3834 = vunpack.c.l.bf16 %v1786
      %v3835 = vunpack.c.l.bf16 %v1795
      %v3836 = vunpack.c.l.bf16 %v1804
      %v3837 = vunpack.c.l.bf16 %v1813
      %v3838 = vunpack.c.l.bf16 %v1822
      %v3839 = vunpack.c.l.bf16 %v1831
      %v3840 = vunpack.c.l.bf16 %v1840
      %v3841 = vunpack.c.l.bf16 %v1849
      %v3842 = vunpack.c.l.bf16 %v1858
      %v3843 = vunpack.c.l.bf16 %v1867
      %v3844 = vunpack.c.l.bf16 %v1876
      %v3845 = vunpack.c.l.bf16 %v1885
      %v3846 = vunpack.c.l.bf16 %v1894
      %v3847 = vunpack.c.l.bf16 %v1903
      %v3848 = vunpack.c.l.bf16 %v1912
      %v3849 = vunpack.c.l.bf16 %v1921
      %v3850 = vunpack.c.l.bf16 %v1930
      %v3851 = vunpack.c.l.bf16 %v1939
      %v3852 = vunpack.c.l.bf16 %v1948
      %v3853 = vunpack.c.l.bf16 %v1957
      %v3854 = vunpack.c.l.bf16 %v1966
      %v3855 = vunpack.c.l.bf16 %v1975
      %v3856 = vunpack.c.l.bf16 %v1984
      %v3857 = vunpack.c.l.bf16 %v1993
      %v3858 = vunpack.c.l.bf16 %v2002
      %v3859 = vunpack.c.l.bf16 %v2011
      %v3860 = vunpack.c.l.bf16 %v2020
      %v3861 = vunpack.c.l.bf16 %v2029
      %v3862 = vunpack.c.l.bf16 %v2038
      %v3863 = vunpack.c.l.bf16 %v2047
      %v3864 = vunpack.c.l.bf16 %v2056
      %v3865 = vunpack.c.l.bf16 %v2065
      %v3866 = vunpack.c.l.bf16 %v2074
      %v3867 = vunpack.c.l.bf16 %v2083
      %v3868 = vunpack.c.l.bf16 %v2092
      %v3869 = vunpack.c.l.bf16 %v2101
      %v3870 = vunpack.c.l.bf16 %v2110
      %v3871 = vunpack.c.l.bf16 %v2119
      %v3872 = vunpack.c.l.bf16 %v2128
      %v3873 = vunpack.c.l.bf16 %v2137
      %v3874 = vunpack.c.l.bf16 %v2146
      %v3875 = vunpack.c.l.bf16 %v2155
      %v3876 = vunpack.c.l.bf16 %v2164
      %v3877 = vunpack.c.l.bf16 %v2173
      %v3878 = vunpack.c.l.bf16 %v2182
      %v3879 = vunpack.c.l.bf16 %v2191
      %v3880 = vunpack.c.l.bf16 %v2200
      %v3881 = vunpack.c.l.bf16 %v2209
      %v3882 = vunpack.c.l.bf16 %v2218
      %v3883 = vunpack.c.l.bf16 %v2227
      %v3884 = vunpack.c.l.bf16 %v2236
      %v3885 = vunpack.c.l.bf16 %v2245
      %v3886 = vunpack.c.l.bf16 %v2254
      %v3887 = vunpack.c.l.bf16 %v2263
      %v3888 = vunpack.c.l.bf16 %v2272
      %v3889 = vunpack.c.l.bf16 %v2281
      %v3890 = vunpack.c.l.bf16 %v2290
      %v3891 = vunpack.c.l.bf16 %v2299
      %v3892 = vunpack.c.l.bf16 %v2308
      %v3893 = vunpack.c.l.bf16 %v2317
      %v3894 = vunpack.c.l.bf16 %v2326
      %v3895 = vunpack.c.l.bf16 %v2335
      %v3896 = vunpack.c.l.bf16 %v2344
      %v3897 = vunpack.c.l.bf16 %v2353
      %v3898 = vunpack.c.l.bf16 %v2362
      %v3899 = vunpack.c.l.bf16 %v2371
      %v3900 = vunpack.c.l.bf16 %v2380
      %v3901 = vunpack.c.l.bf16 %v2389
      %v3902 = vunpack.c.l.bf16 %v2398
      %v3903 = vunpack.c.l.bf16 %v2407
      %v3904 = vunpack.c.l.bf16 %v2416
      %v3905 = vunpack.c.l.bf16 %v2425
      %v3906 = vunpack.c.l.bf16 %v2434
      %v3907 = vunpack.c.l.bf16 %v2443
      %v3908 = vunpack.c.l.bf16 %v2452
      %v3909 = vunpack.c.l.bf16 %v2461
      %v3910 = vunpack.c.l.bf16 %v2470
      %v3911 = vunpack.c.l.bf16 %v2479
      %v3912 = vunpack.c.l.bf16 %v2488
      %v3913 = vunpack.c.l.bf16 %v2497
      %v3914 = vunpack.c.l.bf16 %v2506
      %v3915 = vunpack.c.l.bf16 %v2515
      %v3916 = vunpack.c.l.bf16 %v2524
      %v3917 = vunpack.c.l.bf16 %v2533
      %v3918 = vunpack.c.l.bf16 %v2542
      %v3919 = vunpack.c.l.bf16 %v2551
      %v3920 = vunpack.c.l.bf16 %v2560
      %v3921 = vunpack.c.l.bf16 %v2569
      %v3922 = vunpack.c.l.bf16 %v2578
      %v3923 = vunpack.c.l.bf16 %v2587
      %v3924 = vunpack.c.l.bf16 %v2596
      %v3925 = vunpack.c.l.bf16 %v2605
      %v3926 = vunpack.c.l.bf16 %v2614
      %v3927 = vunpack.c.l.bf16 %v2623
      %v3928 = vunpack.c.l.bf16 %v2632
      %v3929 = vunpack.c.l.bf16 %v2641
      %v3930 = vunpack.c.l.bf16 %v2650
      %v3931 = vunpack.c.l.bf16 %v2659
      %v3932 = vunpack.c.l.bf16 %v2668
      %v3933 = vunpack.c.l.bf16 %v2677
      %v3934 = vunpack.c.l.bf16 %v2686
      %v3935 = vunpack.c.l.bf16 %v2695
      %v3936 = vunpack.c.l.bf16 %v2704
      %v3937 = vunpack.c.l.bf16 %v2713
      %v3938 = vunpack.c.l.bf16 %v2722
      %v3939 = vunpack.c.l.bf16 %v2731
      %v3940 = vunpack.c.l.bf16 %v2740
      %v3941 = vunpack.c.l.bf16 %v2749
      %v3942 = vunpack.c.l.bf16 %v2758
      %v3943 = vunpack.c.l.bf16 %v2767
      %v3944 = vunpack.c.l.bf16 %v2776
      %v3945 = vunpack.c.l.bf16 %v2785
      %v3946 = vunpack.c.l.bf16 %v2794
      %v3947 = vunpack.c.l.bf16 %v2803
      %v3948 = vunpack.c.l.bf16 %v2812
      %v3949 = vunpack.c.l.bf16 %v2821
      %v3950 = vunpack.c.l.bf16 %v2830
      %v3951 = vunpack.c.l.bf16 %v2839
      %v3952 = vunpack.c.l.bf16 %v2848
      %v3953 = vunpack.c.l.bf16 %v2857
      %v3954 = vunpack.c.l.bf16 %v2866
      %v3955 = vunpack.c.l.bf16 %v2875
      %v3956 = vunpack.c.l.bf16 %v2884
      %v3957 = vunpack.c.l.bf16 %v2893
      %v3958 = vunpack.c.l.bf16 %v2902
      %v3959 = vunpack.c.l.bf16 %v2911
      %v3960 = vunpack.c.l.bf16 %v2920
      %v3961 = vunpack.c.l.bf16 %v2929
      %v3962 = vunpack.c.l.bf16 %v2938
      %v3963 = vunpack.c.l.bf16 %v2947
      %v3964 = vunpack.c.l.bf16 %v2956
      %v3965 = vunpack.c.l.bf16 %v2965
      %v3966 = vunpack.c.l.bf16 %v2974
      %v3967 = vunpack.c.l.bf16 %v2983
      %v3968 = vunpack.c.l.bf16 %v2992
      %v3969 = vunpack.c.l.bf16 %v3001
      %v3970 = vunpack.c.l.bf16 %v3010
      %v3971 = vunpack.c.l.bf16 %v3019
      %v3972 = vunpack.c.l.bf16 %v3028
      %v3973 = vunpack.c.l.bf16 %v3037
      %v3974 = vunpack.c.l.bf16 %v3046
      %v3975 = vunpack.c.l.bf16 %v3055
      %v3976 = vunpack.c.l.bf16 %v3064
      %v3977 = vunpack.c.l.bf16 %v3073
      %v3978 = vunpack.c.l.bf16 %v3082
      %v3979 = vunpack.c.l.bf16 %v3091
      %v3980 = vunpack.c.l.bf16 %v3100
      %v3981 = vunpack.c.l.bf16 %v3109
      %v3982 = vunpack.c.l.bf16 %v3118
      %v3983 = vunpack.c.l.bf16 %v3127
      %v3984 = vunpack.c.l.bf16 %v3136
      %v3985 = vunpack.c.l.bf16 %v3145
      %v3986 = vunpack.c.l.bf16 %v3154
      %v3987 = vunpack.c.l.bf16 %v3163
      %v3988 = vunpack.c.l.bf16 %v3172
      %v3989 = vunpack.c.l.bf16 %v3181
      %v3990 = vunpack.c.l.bf16 %v3190
      %v3991 = vunpack.c.l.bf16 %v3199
      %v3992 = vunpack.c.l.bf16 %v3208
      %v3993 = vunpack.c.l.bf16 %v3217
      %v3994 = vunpack.c.l.bf16 %v3226
      %v3995 = vunpack.c.l.bf16 %v3235
      %v3996 = vunpack.c.l.bf16 %v3244
      %v3997 = vunpack.c.l.bf16 %v3253
      %v3998 = vunpack.c.l.bf16 %v3262
      %v3999 = vunpack.c.l.bf16 %v3271
      %v4000 = vunpack.c.l.bf16 %v3280
      %v4001 = vunpack.c.l.bf16 %v3289
      %v4002 = vunpack.c.l.bf16 %v3298
      %v4003 = vunpack.c.l.bf16 %v3307
      %v4004 = vunpack.c.l.bf16 %v3316
      %v4005 = vunpack.c.l.bf16 %v3325
      %v4006 = vunpack.c.l.bf16 %v3334
      %v4007 = vunpack.c.l.bf16 %v3343
      %v4008 = vunpack.c.l.bf16 %v3352
      %v4009 = vunpack.c.l.bf16 %v3361
      %v4010 = vunpack.c.l.bf16 %v3370
      %v4011 = vunpack.c.l.bf16 %v3379
      %v4012 = vunpack.c.l.bf16 %v3388
      %v4013 = vunpack.c.l.bf16 %v3397
      %v4014 = vunpack.c.l.bf16 %v3406
      %v4015 = vunpack.c.l.bf16 %v3415
      %v4016 = vunpack.c.l.bf16 %v3424
      %v4017 = vunpack.c.l.bf16 %v3433
      %v4018 = vunpack.c.l.bf16 %v3442
      %v4019 = vmul.f32 %v3443, %v3731
      %v4020 = vmul.f32 %v3444, %v3732
      %v4021 = vmul.f32 %v3445, %v3733
      %v4022 = vmul.f32 %v3446, %v3734
      %v4023 = vmul.f32 %v3447, %v3735
      %v4024 = vmul.f32 %v3448, %v3736
      %v4025 = vmul.f32 %v3449, %v3737
      %v4026 = vmul.f32 %v3450, %v3738
      %v4027 = vmul.f32 %v3451, %v3739
      %v4028 = vmul.f32 %v3452, %v3740
      %v4029 = vmul.f32 %v3453, %v3741
      %v4030 = vmul.f32 %v3454, %v3742
      %v4031 = vmul.f32 %v3455, %v3743
      %v4032 = vmul.f32 %v3456, %v3744
      %v4033 = vmul.f32 %v3457, %v3745
      %v4034 = vmul.f32 %v3458, %v3746
      %v4035 = vmul.f32 %v3459, %v3747
      %v4036 = vmul.f32 %v3460, %v3748
      %v4037 = vmul.f32 %v3461, %v3749
      %v4038 = vmul.f32 %v3462, %v3750
      %v4039 = vmul.f32 %v3463, %v3751
      %v4040 = vmul.f32 %v3464, %v3752
      %v4041 = vmul.f32 %v3465, %v3753
      %v4042 = vmul.f32 %v3466, %v3754
      %v4043 = vmul.f32 %v3467, %v3755
      %v4044 = vmul.f32 %v3468, %v3756
      %v4045 = vmul.f32 %v3469, %v3757
      %v4046 = vmul.f32 %v3470, %v3758
      %v4047 = vmul.f32 %v3471, %v3759
      %v4048 = vmul.f32 %v3472, %v3760
      %v4049 = vmul.f32 %v3473, %v3761
      %v4050 = vmul.f32 %v3474, %v3762
      %v4051 = vmul.f32 %v3475, %v3763
      %v4052 = vmul.f32 %v3476, %v3764
      %v4053 = vmul.f32 %v3477, %v3765
      %v4054 = vmul.f32 %v3478, %v3766
      %v4055 = vmul.f32 %v3479, %v3767
      %v4056 = vmul.f32 %v3480, %v3768
      %v4057 = vmul.f32 %v3481, %v3769
      %v4058 = vmul.f32 %v3482, %v3770
      %v4059 = vmul.f32 %v3483, %v3771
      %v4060 = vmul.f32 %v3484, %v3772
      %v4061 = vmul.f32 %v3485, %v3773
      %v4062 = vmul.f32 %v3486, %v3774
      %v4063 = vmul.f32 %v3487, %v3775
      %v4064 = vmul.f32 %v3488, %v3776
      %v4065 = vmul.f32 %v3489, %v3777
      %v4066 = vmul.f32 %v3490, %v3778
      %v4067 = vmul.f32 %v3491, %v3779
      %v4068 = vmul.f32 %v3492, %v3780
      %v4069 = vmul.f32 %v3493, %v3781
      %v4070 = vmul.f32 %v3494, %v3782
      %v4071 = vmul.f32 %v3495, %v3783
      %v4072 = vmul.f32 %v3496, %v3784
      %v4073 = vmul.f32 %v3497, %v3785
      %v4074 = vmul.f32 %v3498, %v3786
      %v4075 = vmul.f32 %v3499, %v3787
      %v4076 = vmul.f32 %v3500, %v3788
      %v4077 = vmul.f32 %v3501, %v3789
      %v4078 = vmul.f32 %v3502, %v3790
      %v4079 = vmul.f32 %v3503, %v3791
      %v4080 = vmul.f32 %v3504, %v3792
      %v4081 = vmul.f32 %v3505, %v3793
      %v4082 = vmul.f32 %v3506, %v3794
      %v4083 = vmul.f32 %v3507, %v3795
      %v4084 = vmul.f32 %v3508, %v3796
      %v4085 = vmul.f32 %v3509, %v3797
      %v4086 = vmul.f32 %v3510, %v3798
      %v4087 = vmul.f32 %v3511, %v3799
      %v4088 = vmul.f32 %v3512, %v3800
      %v4089 = vmul.f32 %v3513, %v3801
      %v4090 = vmul.f32 %v3514, %v3802
      %v4091 = vmul.f32 %v3515, %v3803
      %v4092 = vmul.f32 %v3516, %v3804
      %v4093 = vmul.f32 %v3517, %v3805
      %v4094 = vmul.f32 %v3518, %v3806
      %v4095 = vmul.f32 %v3519, %v3807
      %v4096 = vmul.f32 %v3520, %v3808
      %v4097 = vmul.f32 %v3521, %v3809
      %v4098 = vmul.f32 %v3522, %v3810
      %v4099 = vmul.f32 %v3523, %v3811
      %v4100 = vmul.f32 %v3524, %v3812
      %v4101 = vmul.f32 %v3525, %v3813
      %v4102 = vmul.f32 %v3526, %v3814
      %v4103 = vmul.f32 %v3527, %v3815
      %v4104 = vmul.f32 %v3528, %v3816
      %v4105 = vmul.f32 %v3529, %v3817
      %v4106 = vmul.f32 %v3530, %v3818
      %v4107 = vmul.f32 %v3531, %v3819
      %v4108 = vmul.f32 %v3532, %v3820
      %v4109 = vmul.f32 %v3533, %v3821
      %v4110 = vmul.f32 %v3534, %v3822
      %v4111 = vmul.f32 %v3535, %v3823
      %v4112 = vmul.f32 %v3536, %v3824
      %v4113 = vmul.f32 %v3537, %v3825
      %v4114 = vmul.f32 %v3538, %v3826
      %v4115 = vmul.f32 %v3539, %v3827
      %v4116 = vmul.f32 %v3540, %v3828
      %v4117 = vmul.f32 %v3541, %v3829
      %v4118 = vmul.f32 %v3542, %v3830
      %v4119 = vmul.f32 %v3543, %v3831
      %v4120 = vmul.f32 %v3544, %v3832
      %v4121 = vmul.f32 %v3545, %v3833
      %v4122 = vmul.f32 %v3546, %v3834
      %v4123 = vmul.f32 %v3547, %v3835
      %v4124 = vmul.f32 %v3548, %v3836
      %v4125 = vmul.f32 %v3549, %v3837
      %v4126 = vmul.f32 %v3550, %v3838
      %v4127 = vmul.f32 %v3551, %v3839
      %v4128 = vmul.f32 %v3552, %v3840
      %v4129 = vmul.f32 %v3553, %v3841
      %v4130 = vmul.f32 %v3554, %v3842
      %v4131 = vmul.f32 %v3555, %v3843
      %v4132 = vmul.f32 %v3556, %v3844
      %v4133 = vmul.f32 %v3557, %v3845
      %v4134 = vmul.f32 %v3558, %v3846
      %v4135 = vmul.f32 %v3559, %v3847
      %v4136 = vmul.f32 %v3560, %v3848
      %v4137 = vmul.f32 %v3561, %v3849
      %v4138 = vmul.f32 %v3562, %v3850
      %v4139 = vmul.f32 %v3563, %v3851
      %v4140 = vmul.f32 %v3564, %v3852
      %v4141 = vmul.f32 %v3565, %v3853
      %v4142 = vmul.f32 %v3566, %v3854
      %v4143 = vmul.f32 %v3567, %v3855
      %v4144 = vmul.f32 %v3568, %v3856
      %v4145 = vmul.f32 %v3569, %v3857
      %v4146 = vmul.f32 %v3570, %v3858
      %v4147 = vmul.f32 %v3571, %v3859
      %v4148 = vmul.f32 %v3572, %v3860
      %v4149 = vmul.f32 %v3573, %v3861
      %v4150 = vmul.f32 %v3574, %v3862
      %v4151 = vmul.f32 %v3575, %v3863
      %v4152 = vmul.f32 %v3576, %v3864
      %v4153 = vmul.f32 %v3577, %v3865
      %v4154 = vmul.f32 %v3578, %v3866
      %v4155 = vmul.f32 %v3579, %v3867
      %v4156 = vmul.f32 %v3580, %v3868
      %v4157 = vmul.f32 %v3581, %v3869
      %v4158 = vmul.f32 %v3582, %v3870
      %v4159 = vmul.f32 %v3583, %v3871
      %v4160 = vmul.f32 %v3584, %v3872
      %v4161 = vmul.f32 %v3585, %v3873
      %v4162 = vmul.f32 %v3586, %v3874
      %v4163 = vmul.f32 %v3587, %v3875
      %v4164 = vmul.f32 %v3588, %v3876
      %v4165 = vmul.f32 %v3589, %v3877
      %v4166 = vmul.f32 %v3590, %v3878
      %v4167 = vmul.f32 %v3591, %v3879
      %v4168 = vmul.f32 %v3592, %v3880
      %v4169 = vmul.f32 %v3593, %v3881
      %v4170 = vmul.f32 %v3594, %v3882
      %v4171 = vmul.f32 %v3595, %v3883
      %v4172 = vmul.f32 %v3596, %v3884
      %v4173 = vmul.f32 %v3597, %v3885
      %v4174 = vmul.f32 %v3598, %v3886
      %v4175 = vmul.f32 %v3599, %v3887
      %v4176 = vmul.f32 %v3600, %v3888
      %v4177 = vmul.f32 %v3601, %v3889
      %v4178 = vmul.f32 %v3602, %v3890
      %v4179 = vmul.f32 %v3603, %v3891
      %v4180 = vmul.f32 %v3604, %v3892
      %v4181 = vmul.f32 %v3605, %v3893
      %v4182 = vmul.f32 %v3606, %v3894
      %v4183 = vmul.f32 %v3607, %v3895
      %v4184 = vmul.f32 %v3608, %v3896
      %v4185 = vmul.f32 %v3609, %v3897
      %v4186 = vmul.f32 %v3610, %v3898
      %v4187 = vmul.f32 %v3611, %v3899
      %v4188 = vmul.f32 %v3612, %v3900
      %v4189 = vmul.f32 %v3613, %v3901
      %v4190 = vmul.f32 %v3614, %v3902
      %v4191 = vmul.f32 %v3615, %v3903
      %v4192 = vmul.f32 %v3616, %v3904
      %v4193 = vmul.f32 %v3617, %v3905
      %v4194 = vmul.f32 %v3618, %v3906
      %v4195 = vmul.f32 %v3619, %v3907
      %v4196 = vmul.f32 %v3620, %v3908
      %v4197 = vmul.f32 %v3621, %v3909
      %v4198 = vmul.f32 %v3622, %v3910
      %v4199 = vmul.f32 %v3623, %v3911
      %v4200 = vmul.f32 %v3624, %v3912
      %v4201 = vmul.f32 %v3625, %v3913
      %v4202 = vmul.f32 %v3626, %v3914
      %v4203 = vmul.f32 %v3627, %v3915
      %v4204 = vmul.f32 %v3628, %v3916
      %v4205 = vmul.f32 %v3629, %v3917
      %v4206 = vmul.f32 %v3630, %v3918
      %v4207 = vmul.f32 %v3631, %v3919
      %v4208 = vmul.f32 %v3632, %v3920
      %v4209 = vmul.f32 %v3633, %v3921
      %v4210 = vmul.f32 %v3634, %v3922
      %v4211 = vmul.f32 %v3635, %v3923
      %v4212 = vmul.f32 %v3636, %v3924
      %v4213 = vmul.f32 %v3637, %v3925
      %v4214 = vmul.f32 %v3638, %v3926
      %v4215 = vmul.f32 %v3639, %v3927
      %v4216 = vmul.f32 %v3640, %v3928
      %v4217 = vmul.f32 %v3641, %v3929
      %v4218 = vmul.f32 %v3642, %v3930
      %v4219 = vmul.f32 %v3643, %v3931
      %v4220 = vmul.f32 %v3644, %v3932
      %v4221 = vmul.f32 %v3645, %v3933
      %v4222 = vmul.f32 %v3646, %v3934
      %v4223 = vmul.f32 %v3647, %v3935
      %v4224 = vmul.f32 %v3648, %v3936
      %v4225 = vmul.f32 %v3649, %v3937
      %v4226 = vmul.f32 %v3650, %v3938
      %v4227 = vmul.f32 %v3651, %v3939
      %v4228 = vmul.f32 %v3652, %v3940
      %v4229 = vmul.f32 %v3653, %v3941
      %v4230 = vmul.f32 %v3654, %v3942
      %v4231 = vmul.f32 %v3655, %v3943
      %v4232 = vmul.f32 %v3656, %v3944
      %v4233 = vmul.f32 %v3657, %v3945
      %v4234 = vmul.f32 %v3658, %v3946
      %v4235 = vmul.f32 %v3659, %v3947
      %v4236 = vmul.f32 %v3660, %v3948
      %v4237 = vmul.f32 %v3661, %v3949
      %v4238 = vmul.f32 %v3662, %v3950
      %v4239 = vmul.f32 %v3663, %v3951
      %v4240 = vmul.f32 %v3664, %v3952
      %v4241 = vmul.f32 %v3665, %v3953
      %v4242 = vmul.f32 %v3666, %v3954
      %v4243 = vmul.f32 %v3667, %v3955
      %v4244 = vmul.f32 %v3668, %v3956
      %v4245 = vmul.f32 %v3669, %v3957
      %v4246 = vmul.f32 %v3670, %v3958
      %v4247 = vmul.f32 %v3671, %v3959
      %v4248 = vmul.f32 %v3672, %v3960
      %v4249 = vmul.f32 %v3673, %v3961
      %v4250 = vmul.f32 %v3674, %v3962
      %v4251 = vmul.f32 %v3675, %v3963
      %v4252 = vmul.f32 %v3676, %v3964
      %v4253 = vmul.f32 %v3677, %v3965
      %v4254 = vmul.f32 %v3678, %v3966
      %v4255 = vmul.f32 %v3679, %v3967
      %v4256 = vmul.f32 %v3680, %v3968
      %v4257 = vmul.f32 %v3681, %v3969
      %v4258 = vmul.f32 %v3682, %v3970
      %v4259 = vmul.f32 %v3683, %v3971
      %v4260 = vmul.f32 %v3684, %v3972
      %v4261 = vmul.f32 %v3685, %v3973
      %v4262 = vmul.f32 %v3686, %v3974
      %v4263 = vmul.f32 %v3687, %v3975
      %v4264 = vmul.f32 %v3688, %v3976
      %v4265 = vmul.f32 %v3689, %v3977
      %v4266 = vmul.f32 %v3690, %v3978
      %v4267 = vmul.f32 %v3691, %v3979
      %v4268 = vmul.f32 %v3692, %v3980
      %v4269 = vmul.f32 %v3693, %v3981
      %v4270 = vmul.f32 %v3694, %v3982
      %v4271 = vmul.f32 %v3695, %v3983
      %v4272 = vmul.f32 %v3696, %v3984
      %v4273 = vmul.f32 %v3697, %v3985
      %v4274 = vmul.f32 %v3698, %v3986
      %v4275 = vmul.f32 %v3699, %v3987
      %v4276 = vmul.f32 %v3700, %v3988
      %v4277 = vmul.f32 %v3701, %v3989
      %v4278 = vmul.f32 %v3702, %v3990
      %v4279 = vmul.f32 %v3703, %v3991
      %v4280 = vmul.f32 %v3704, %v3992
      %v4281 = vmul.f32 %v3705, %v3993
      %v4282 = vmul.f32 %v3706, %v3994
      %v4283 = vmul.f32 %v3707, %v3995
      %v4284 = vmul.f32 %v3708, %v3996
      %v4285 = vmul.f32 %v3709, %v3997
      %v4286 = vmul.f32 %v3710, %v3998
      %v4287 = vmul.f32 %v3711, %v3999
      %v4288 = vmul.f32 %v3712, %v4000
      %v4289 = vmul.f32 %v3713, %v4001
      %v4290 = vmul.f32 %v3714, %v4002
      %v4291 = vmul.f32 %v3715, %v4003
      %v4292 = vmul.f32 %v3716, %v4004
      %v4293 = vmul.f32 %v3717, %v4005
      %v4294 = vmul.f32 %v3718, %v4006
      %v4295 = vmul.f32 %v3719, %v4007
      %v4296 = vmul.f32 %v3720, %v4008
      %v4297 = vmul.f32 %v3721, %v4009
      %v4298 = vmul.f32 %v3722, %v4010
      %v4299 = vmul.f32 %v3723, %v4011
      %v4300 = vmul.f32 %v3724, %v4012
      %v4301 = vmul.f32 %v3725, %v4013
      %v4302 = vmul.f32 %v3726, %v4014
      %v4303 = vmul.f32 %v3727, %v4015
      %v4304 = vmul.f32 %v3728, %v4016
      %v4305 = vmul.f32 %v3729, %v4017
      %v4306 = vmul.f32 %v3730, %v4018
      %v4307 = vpack.c.bf16 %v4020, %v4019
      %v4308 = vpack.c.bf16 %v4022, %v4021
      %v4309 = vpack.c.bf16 %v4024, %v4023
      %v4310 = vpack.c.bf16 %v4026, %v4025
      %v4311 = vpack.c.bf16 %v4028, %v4027
      %v4312 = vpack.c.bf16 %v4030, %v4029
      %v4313 = vpack.c.bf16 %v4032, %v4031
      %v4314 = vpack.c.bf16 %v4034, %v4033
      %v4315 = vpack.c.bf16 %v4036, %v4035
      %v4316 = vpack.c.bf16 %v4038, %v4037
      %v4317 = vpack.c.bf16 %v4040, %v4039
      %v4318 = vpack.c.bf16 %v4042, %v4041
      %v4319 = vpack.c.bf16 %v4044, %v4043
      %v4320 = vpack.c.bf16 %v4046, %v4045
      %v4321 = vpack.c.bf16 %v4048, %v4047
      %v4322 = vpack.c.bf16 %v4050, %v4049
      %v4323 = vpack.c.bf16 %v4052, %v4051
      %v4324 = vpack.c.bf16 %v4054, %v4053
      %v4325 = vpack.c.bf16 %v4056, %v4055
      %v4326 = vpack.c.bf16 %v4058, %v4057
      %v4327 = vpack.c.bf16 %v4060, %v4059
      %v4328 = vpack.c.bf16 %v4062, %v4061
      %v4329 = vpack.c.bf16 %v4064, %v4063
      %v4330 = vpack.c.bf16 %v4066, %v4065
      %v4331 = vpack.c.bf16 %v4068, %v4067
      %v4332 = vpack.c.bf16 %v4070, %v4069
      %v4333 = vpack.c.bf16 %v4072, %v4071
      %v4334 = vpack.c.bf16 %v4074, %v4073
      %v4335 = vpack.c.bf16 %v4076, %v4075
      %v4336 = vpack.c.bf16 %v4078, %v4077
      %v4337 = vpack.c.bf16 %v4080, %v4079
      %v4338 = vpack.c.bf16 %v4082, %v4081
      %v4339 = vpack.c.bf16 %v4084, %v4083
      %v4340 = vpack.c.bf16 %v4086, %v4085
      %v4341 = vpack.c.bf16 %v4088, %v4087
      %v4342 = vpack.c.bf16 %v4090, %v4089
      %v4343 = vpack.c.bf16 %v4092, %v4091
      %v4344 = vpack.c.bf16 %v4094, %v4093
      %v4345 = vpack.c.bf16 %v4096, %v4095
      %v4346 = vpack.c.bf16 %v4098, %v4097
      %v4347 = vpack.c.bf16 %v4100, %v4099
      %v4348 = vpack.c.bf16 %v4102, %v4101
      %v4349 = vpack.c.bf16 %v4104, %v4103
      %v4350 = vpack.c.bf16 %v4106, %v4105
      %v4351 = vpack.c.bf16 %v4108, %v4107
      %v4352 = vpack.c.bf16 %v4110, %v4109
      %v4353 = vpack.c.bf16 %v4112, %v4111
      %v4354 = vpack.c.bf16 %v4114, %v4113
      %v4355 = vpack.c.bf16 %v4116, %v4115
      %v4356 = vpack.c.bf16 %v4118, %v4117
      %v4357 = vpack.c.bf16 %v4120, %v4119
      %v4358 = vpack.c.bf16 %v4122, %v4121
      %v4359 = vpack.c.bf16 %v4124, %v4123
      %v4360 = vpack.c.bf16 %v4126, %v4125
      %v4361 = vpack.c.bf16 %v4128, %v4127
      %v4362 = vpack.c.bf16 %v4130, %v4129
      %v4363 = vpack.c.bf16 %v4132, %v4131
      %v4364 = vpack.c.bf16 %v4134, %v4133
      %v4365 = vpack.c.bf16 %v4136, %v4135
      %v4366 = vpack.c.bf16 %v4138, %v4137
      %v4367 = vpack.c.bf16 %v4140, %v4139
      %v4368 = vpack.c.bf16 %v4142, %v4141
      %v4369 = vpack.c.bf16 %v4144, %v4143
      %v4370 = vpack.c.bf16 %v4146, %v4145
      %v4371 = vpack.c.bf16 %v4148, %v4147
      %v4372 = vpack.c.bf16 %v4150, %v4149
      %v4373 = vpack.c.bf16 %v4152, %v4151
      %v4374 = vpack.c.bf16 %v4154, %v4153
      %v4375 = vpack.c.bf16 %v4156, %v4155
      %v4376 = vpack.c.bf16 %v4158, %v4157
      %v4377 = vpack.c.bf16 %v4160, %v4159
      %v4378 = vpack.c.bf16 %v4162, %v4161
      %v4379 = vpack.c.bf16 %v4164, %v4163
      %v4380 = vpack.c.bf16 %v4166, %v4165
      %v4381 = vpack.c.bf16 %v4168, %v4167
      %v4382 = vpack.c.bf16 %v4170, %v4169
      %v4383 = vpack.c.bf16 %v4172, %v4171
      %v4384 = vpack.c.bf16 %v4174, %v4173
      %v4385 = vpack.c.bf16 %v4176, %v4175
      %v4386 = vpack.c.bf16 %v4178, %v4177
      %v4387 = vpack.c.bf16 %v4180, %v4179
      %v4388 = vpack.c.bf16 %v4182, %v4181
      %v4389 = vpack.c.bf16 %v4184, %v4183
      %v4390 = vpack.c.bf16 %v4186, %v4185
      %v4391 = vpack.c.bf16 %v4188, %v4187
      %v4392 = vpack.c.bf16 %v4190, %v4189
      %v4393 = vpack.c.bf16 %v4192, %v4191
      %v4394 = vpack.c.bf16 %v4194, %v4193
      %v4395 = vpack.c.bf16 %v4196, %v4195
      %v4396 = vpack.c.bf16 %v4198, %v4197
      %v4397 = vpack.c.bf16 %v4200, %v4199
      %v4398 = vpack.c.bf16 %v4202, %v4201
      %v4399 = vpack.c.bf16 %v4204, %v4203
      %v4400 = vpack.c.bf16 %v4206, %v4205
      %v4401 = vpack.c.bf16 %v4208, %v4207
      %v4402 = vpack.c.bf16 %v4210, %v4209
      %v4403 = vpack.c.bf16 %v4212, %v4211
      %v4404 = vpack.c.bf16 %v4214, %v4213
      %v4405 = vpack.c.bf16 %v4216, %v4215
      %v4406 = vpack.c.bf16 %v4218, %v4217
      %v4407 = vpack.c.bf16 %v4220, %v4219
      %v4408 = vpack.c.bf16 %v4222, %v4221
      %v4409 = vpack.c.bf16 %v4224, %v4223
      %v4410 = vpack.c.bf16 %v4226, %v4225
      %v4411 = vpack.c.bf16 %v4228, %v4227
      %v4412 = vpack.c.bf16 %v4230, %v4229
      %v4413 = vpack.c.bf16 %v4232, %v4231
      %v4414 = vpack.c.bf16 %v4234, %v4233
      %v4415 = vpack.c.bf16 %v4236, %v4235
      %v4416 = vpack.c.bf16 %v4238, %v4237
      %v4417 = vpack.c.bf16 %v4240, %v4239
      %v4418 = vpack.c.bf16 %v4242, %v4241
      %v4419 = vpack.c.bf16 %v4244, %v4243
      %v4420 = vpack.c.bf16 %v4246, %v4245
      %v4421 = vpack.c.bf16 %v4248, %v4247
      %v4422 = vpack.c.bf16 %v4250, %v4249
      %v4423 = vpack.c.bf16 %v4252, %v4251
      %v4424 = vpack.c.bf16 %v4254, %v4253
      %v4425 = vpack.c.bf16 %v4256, %v4255
      %v4426 = vpack.c.bf16 %v4258, %v4257
      %v4427 = vpack.c.bf16 %v4260, %v4259
      %v4428 = vpack.c.bf16 %v4262, %v4261
      %v4429 = vpack.c.bf16 %v4264, %v4263
      %v4430 = vpack.c.bf16 %v4266, %v4265
      %v4431 = vpack.c.bf16 %v4268, %v4267
      %v4432 = vpack.c.bf16 %v4270, %v4269
      %v4433 = vpack.c.bf16 %v4272, %v4271
      %v4434 = vpack.c.bf16 %v4274, %v4273
      %v4435 = vpack.c.bf16 %v4276, %v4275
      %v4436 = vpack.c.bf16 %v4278, %v4277
      %v4437 = vpack.c.bf16 %v4280, %v4279
      %v4438 = vpack.c.bf16 %v4282, %v4281
      %v4439 = vpack.c.bf16 %v4284, %v4283
      %v4440 = vpack.c.bf16 %v4286, %v4285
      %v4441 = vpack.c.bf16 %v4288, %v4287
      %v4442 = vpack.c.bf16 %v4290, %v4289
      %v4443 = vpack.c.bf16 %v4292, %v4291
      %v4444 = vpack.c.bf16 %v4294, %v4293
      %v4445 = vpack.c.bf16 %v4296, %v4295
      %v4446 = vpack.c.bf16 %v4298, %v4297
      %v4447 = vpack.c.bf16 %v4300, %v4299
      %v4448 = vpack.c.bf16 %v4302, %v4301
      %v4449 = vpack.c.bf16 %v4304, %v4303
      %v4450 = vpack.c.bf16 %v4306, %v4305
      %v4451 = vld [vmem:[%s255] sm:$0xff]
      %v4452 = vld [vmem:[%s255 + $0x8] sm:$0xff]
      %v4453 = vld [vmem:[%s255 + $0x10] sm:$0xff]
      %v4454 = vld [vmem:[%s255 + $0x18] sm:$0xff]
      %v4455 = vld [vmem:[%s255 + $0x20] sm:$0xff]
      %v4456 = vld [vmem:[%s255 + $0x28] sm:$0xff]
      %v4457 = vld [vmem:[%s255 + $0x30] sm:$0xff]
      %v4458 = vld [vmem:[%s255 + $0x38] sm:$0xff]
      %v4459 = vld [vmem:[%s255 + $0x40] sm:$0xff]
      %v4460 = vld [vmem:[%s255 + $0x48] sm:$0xff]
      %v4461 = vld [vmem:[%s255 + $0x50] sm:$0xff]
      %v4462 = vld [vmem:[%s255 + $0x58] sm:$0xff]
      %v4463 = vld [vmem:[%s255 + $0x60] sm:$0xff]
      %v4464 = vld [vmem:[%s255 + $0x68] sm:$0xff]
      %v4465 = vld [vmem:[%s255 + $0x70] sm:$0xff]
      %v4466 = vld [vmem:[%s255 + $0x78] sm:$0xff]
      %v4467 = vld [vmem:[%s255 + $0x80] sm:$0xff]
      %v4468 = vld [vmem:[%s255 + $0x88] sm:$0xff]
      %v4469 = vld [vmem:[%s255 + $0x90] sm:$0xff]
      %v4470 = vld [vmem:[%s255 + $0x98] sm:$0xff]
      %v4471 = vld [vmem:[%s255 + $0xa0] sm:$0xff]
      %v4472 = vld [vmem:[%s255 + $0xa8] sm:$0xff]
      %v4473 = vld [vmem:[%s255 + $0xb0] sm:$0xff]
      %v4474 = vld [vmem:[%s255 + $0xb8] sm:$0xff]
      %v4475 = vld [vmem:[%s255 + $0xc0] sm:$0xff]
      %v4476 = vld [vmem:[%s255 + $0xc8] sm:$0xff]
      %v4477 = vld [vmem:[%s255 + $0xd0] sm:$0xff]
      %v4478 = vld [vmem:[%s255 + $0xd8] sm:$0xff]
      %v4479 = vld [vmem:[%s255 + $0xe0] sm:$0xff]
      %v4480 = vld [vmem:[%s255 + $0xe8] sm:$0xff]
      %v4481 = vld [vmem:[%s255 + $0xf0] sm:$0xff]
      %v4482 = vld [vmem:[%s255 + $0xf8] sm:$0xff]
      %v4483 = vld [vmem:[%s255 + $0x100] sm:$0xff]
      %v4484 = vld [vmem:[%s255 + $0x108] sm:$0xff]
      %v4485 = vld [vmem:[%s255 + $0x110] sm:$0xff]
      %v4486 = vld [vmem:[%s255 + $0x118] sm:$0xff]
      %v4487 = vld [vmem:[%s255 + $0x120] sm:$0xff]
      %v4488 = vld [vmem:[%s255 + $0x128] sm:$0xff]
      %v4489 = vld [vmem:[%s255 + $0x130] sm:$0xff]
      %v4490 = vld [vmem:[%s255 + $0x138] sm:$0xff]
      %v4491 = vld [vmem:[%s255 + $0x140] sm:$0xff]
      %v4492 = vld [vmem:[%s255 + $0x148] sm:$0xff]
      %v4493 = vld [vmem:[%s255 + $0x150] sm:$0xff]
      %v4494 = vld [vmem:[%s255 + $0x158] sm:$0xff]
      %v4495 = vld [vmem:[%s255 + $0x160] sm:$0xff]
      %v4496 = vld [vmem:[%s255 + $0x168] sm:$0xff]
      %v4497 = vld [vmem:[%s255 + $0x170] sm:$0xff]
      %v4498 = vld [vmem:[%s255 + $0x178] sm:$0xff]
      %v4499 = vld [vmem:[%s255 + $0x180] sm:$0xff]
      %v4500 = vld [vmem:[%s255 + $0x188] sm:$0xff]
      %v4501 = vld [vmem:[%s255 + $0x190] sm:$0xff]
      %v4502 = vld [vmem:[%s255 + $0x198] sm:$0xff]
      %v4503 = vld [vmem:[%s255 + $0x1a0] sm:$0xff]
      %v4504 = vld [vmem:[%s255 + $0x1a8] sm:$0xff]
      %v4505 = vld [vmem:[%s255 + $0x1b0] sm:$0xff]
      %v4506 = vld [vmem:[%s255 + $0x1b8] sm:$0xff]
      %v4507 = vld [vmem:[%s255 + $0x1c0] sm:$0xff]
      %v4508 = vld [vmem:[%s255 + $0x1c8] sm:$0xff]
      %v4509 = vld [vmem:[%s255 + $0x1d0] sm:$0xff]
      %v4510 = vld [vmem:[%s255 + $0x1d8] sm:$0xff]
      %v4511 = vld [vmem:[%s255 + $0x1e0] sm:$0xff]
      %v4512 = vld [vmem:[%s255 + $0x1e8] sm:$0xff]
      %v4513 = vld [vmem:[%s255 + $0x1f0] sm:$0xff]
      %v4514 = vld [vmem:[%s255 + $0x1f8] sm:$0xff]
      %v4515 = vld [vmem:[%s255 + $0x200] sm:$0xff]
      %v4516 = vld [vmem:[%s255 + $0x208] sm:$0xff]
      %v4517 = vld [vmem:[%s255 + $0x210] sm:$0xff]
      %v4518 = vld [vmem:[%s255 + $0x218] sm:$0xff]
      %v4519 = vld [vmem:[%s255 + $0x220] sm:$0xff]
      %v4520 = vld [vmem:[%s255 + $0x228] sm:$0xff]
      %v4521 = vld [vmem:[%s255 + $0x230] sm:$0xff]
      %v4522 = vld [vmem:[%s255 + $0x238] sm:$0xff]
      %v4523 = vld [vmem:[%s255 + $0x240] sm:$0xff]
      %v4524 = vld [vmem:[%s255 + $0x248] sm:$0xff]
      %v4525 = vld [vmem:[%s255 + $0x250] sm:$0xff]
      %v4526 = vld [vmem:[%s255 + $0x258] sm:$0xff]
      %v4527 = vld [vmem:[%s255 + $0x260] sm:$0xff]
      %v4528 = vld [vmem:[%s255 + $0x268] sm:$0xff]
      %v4529 = vld [vmem:[%s255 + $0x270] sm:$0xff]
      %v4530 = vld [vmem:[%s255 + $0x278] sm:$0xff]
      %v4531 = vld [vmem:[%s255 + $0x280] sm:$0xff]
      %v4532 = vld [vmem:[%s255 + $0x288] sm:$0xff]
      %v4533 = vld [vmem:[%s255 + $0x290] sm:$0xff]
      %v4534 = vld [vmem:[%s255 + $0x298] sm:$0xff]
      %v4535 = vld [vmem:[%s255 + $0x2a0] sm:$0xff]
      %v4536 = vld [vmem:[%s255 + $0x2a8] sm:$0xff]
      %v4537 = vld [vmem:[%s255 + $0x2b0] sm:$0xff]
      %v4538 = vld [vmem:[%s255 + $0x2b8] sm:$0xff]
      %v4539 = vld [vmem:[%s255 + $0x2c0] sm:$0xff]
      %v4540 = vld [vmem:[%s255 + $0x2c8] sm:$0xff]
      %v4541 = vld [vmem:[%s255 + $0x2d0] sm:$0xff]
      %v4542 = vld [vmem:[%s255 + $0x2d8] sm:$0xff]
      %v4543 = vld [vmem:[%s255 + $0x2e0] sm:$0xff]
      %v4544 = vld [vmem:[%s255 + $0x2e8] sm:$0xff]
      %v4545 = vld [vmem:[%s255 + $0x2f0] sm:$0xff]
      %v4546 = vld [vmem:[%s255 + $0x2f8] sm:$0xff]
      %v4547 = vld [vmem:[%s255 + $0x300] sm:$0xff]
      %v4548 = vld [vmem:[%s255 + $0x308] sm:$0xff]
      %v4549 = vld [vmem:[%s255 + $0x310] sm:$0xff]
      %v4550 = vld [vmem:[%s255 + $0x318] sm:$0xff]
      %v4551 = vld [vmem:[%s255 + $0x320] sm:$0xff]
      %v4552 = vld [vmem:[%s255 + $0x328] sm:$0xff]
      %v4553 = vld [vmem:[%s255 + $0x330] sm:$0xff]
      %v4554 = vld [vmem:[%s255 + $0x338] sm:$0xff]
      %v4555 = vld [vmem:[%s255 + $0x340] sm:$0xff]
      %v4556 = vld [vmem:[%s255 + $0x348] sm:$0xff]
      %v4557 = vld [vmem:[%s255 + $0x350] sm:$0xff]
      %v4558 = vld [vmem:[%s255 + $0x358] sm:$0xff]
      %v4559 = vld [vmem:[%s255 + $0x360] sm:$0xff]
      %v4560 = vld [vmem:[%s255 + $0x368] sm:$0xff]
      %v4561 = vld [vmem:[%s255 + $0x370] sm:$0xff]
      %v4562 = vld [vmem:[%s255 + $0x378] sm:$0xff]
      %v4563 = vld [vmem:[%s255 + $0x380] sm:$0xff]
      %v4564 = vld [vmem:[%s255 + $0x388] sm:$0xff]
      %v4565 = vld [vmem:[%s255 + $0x390] sm:$0xff]
      %v4566 = vld [vmem:[%s255 + $0x398] sm:$0xff]
      %v4567 = vld [vmem:[%s255 + $0x3a0] sm:$0xff]
      %v4568 = vld [vmem:[%s255 + $0x3a8] sm:$0xff]
      %v4569 = vld [vmem:[%s255 + $0x3b0] sm:$0xff]
      %v4570 = vld [vmem:[%s255 + $0x3b8] sm:$0xff]
      %v4571 = vld [vmem:[%s255 + $0x3c0] sm:$0xff]
      %v4572 = vld [vmem:[%s255 + $0x3c8] sm:$0xff]
      %v4573 = vld [vmem:[%s255 + $0x3d0] sm:$0xff]
      %v4574 = vld [vmem:[%s255 + $0x3d8] sm:$0xff]
      %v4575 = vld [vmem:[%s255 + $0x3e0] sm:$0xff]
      %v4576 = vld [vmem:[%s255 + $0x3e8] sm:$0xff]
      %v4577 = vld [vmem:[%s255 + $0x3f0] sm:$0xff]
      %v4578 = vld [vmem:[%s255 + $0x3f8] sm:$0xff]
      %v4579 = vld [vmem:[%s255 + $0x400] sm:$0xff]
      %v4580 = vld [vmem:[%s255 + $0x408] sm:$0xff]
      %v4581 = vld [vmem:[%s255 + $0x410] sm:$0xff]
      %v4582 = vld [vmem:[%s255 + $0x418] sm:$0xff]
      %v4583 = vld [vmem:[%s255 + $0x420] sm:$0xff]
      %v4584 = vld [vmem:[%s255 + $0x428] sm:$0xff]
      %v4585 = vld [vmem:[%s255 + $0x430] sm:$0xff]
      %v4586 = vld [vmem:[%s255 + $0x438] sm:$0xff]
      %v4587 = vld [vmem:[%s255 + $0x440] sm:$0xff]
      %v4588 = vld [vmem:[%s255 + $0x448] sm:$0xff]
      %v4589 = vld [vmem:[%s255 + $0x450] sm:$0xff]
      %v4590 = vld [vmem:[%s255 + $0x458] sm:$0xff]
      %v4591 = vld [vmem:[%s255 + $0x460] sm:$0xff]
      %v4592 = vld [vmem:[%s255 + $0x468] sm:$0xff]
      %v4593 = vld [vmem:[%s255 + $0x470] sm:$0xff]
      %v4594 = vld [vmem:[%s255 + $0x478] sm:$0xff]
      %v4595 = vld [vmem:[%s255 + $0x480] sm:$0xff]
      %v4596 = vld [vmem:[%s255 + $0x488] sm:$0xff]
      %v4597 = vld [vmem:[%s255 + $0x490] sm:$0xff]
      %v4598 = vld [vmem:[%s255 + $0x498] sm:$0xff]
      %v4599 = vld [vmem:[%s255 + $0x4a0] sm:$0xff]
      %v4600 = vld [vmem:[%s255 + $0x4a8] sm:$0xff]
      %v4601 = vld [vmem:[%s255 + $0x4b0] sm:$0xff]
      %v4602 = vld [vmem:[%s255 + $0x4b8] sm:$0xff]
      %v4603 = vld [vmem:[%s255 + $0x4c0] sm:$0xff]
      %v4604 = vld [vmem:[%s255 + $0x4c8] sm:$0xff]
      %v4605 = vld [vmem:[%s255 + $0x4d0] sm:$0xff]
      %v4606 = vld [vmem:[%s255 + $0x4d8] sm:$0xff]
      %v4607 = vld [vmem:[%s255 + $0x4e0] sm:$0xff]
      %v4608 = vld [vmem:[%s255 + $0x4e8] sm:$0xff]
      %v4609 = vld [vmem:[%s255 + $0x4f0] sm:$0xff]
      %v4610 = vld [vmem:[%s255 + $0x4f8] sm:$0xff]
      %v4611 = vld [vmem:[%s255 + $0x500] sm:$0xff]
      %v4612 = vld [vmem:[%s255 + $0x508] sm:$0xff]
      %v4613 = vld [vmem:[%s255 + $0x510] sm:$0xff]
      %v4614 = vld [vmem:[%s255 + $0x518] sm:$0xff]
      %v4615 = vld [vmem:[%s255 + $0x520] sm:$0xff]
      %v4616 = vld [vmem:[%s255 + $0x528] sm:$0xff]
      %v4617 = vld [vmem:[%s255 + $0x530] sm:$0xff]
      %v4618 = vld [vmem:[%s255 + $0x538] sm:$0xff]
      %v4619 = vld [vmem:[%s255 + $0x540] sm:$0xff]
      %v4620 = vld [vmem:[%s255 + $0x548] sm:$0xff]
      %v4621 = vld [vmem:[%s255 + $0x550] sm:$0xff]
      %v4622 = vld [vmem:[%s255 + $0x558] sm:$0xff]
      %v4623 = vld [vmem:[%s255 + $0x560] sm:$0xff]
      %v4624 = vld [vmem:[%s255 + $0x568] sm:$0xff]
      %v4625 = vld [vmem:[%s255 + $0x570] sm:$0xff]
      %v4626 = vld [vmem:[%s255 + $0x578] sm:$0xff]
      %v4627 = vld [vmem:[%s255 + $0x580] sm:$0xff]
      %v4628 = vld [vmem:[%s255 + $0x588] sm:$0xff]
      %v4629 = vld [vmem:[%s255 + $0x590] sm:$0xff]
      %v4630 = vld [vmem:[%s255 + $0x598] sm:$0xff]
      %v4631 = vld [vmem:[%s255 + $0x5a0] sm:$0xff]
      %v4632 = vld [vmem:[%s255 + $0x5a8] sm:$0xff]
      %v4633 = vld [vmem:[%s255 + $0x5b0] sm:$0xff]
      %v4634 = vld [vmem:[%s255 + $0x5b8] sm:$0xff]
      %v4635 = vld [vmem:[%s255 + $0x5c0] sm:$0xff]
      %v4636 = vld [vmem:[%s255 + $0x5c8] sm:$0xff]
      %v4637 = vld [vmem:[%s255 + $0x5d0] sm:$0xff]
      %v4638 = vld [vmem:[%s255 + $0x5d8] sm:$0xff]
      %v4639 = vld [vmem:[%s255 + $0x5e0] sm:$0xff]
      %v4640 = vld [vmem:[%s255 + $0x5e8] sm:$0xff]
      %v4641 = vld [vmem:[%s255 + $0x5f0] sm:$0xff]
      %v4642 = vld [vmem:[%s255 + $0x5f8] sm:$0xff]
      %v4643 = vld [vmem:[%s255 + $0x600] sm:$0xff]
      %v4644 = vld [vmem:[%s255 + $0x608] sm:$0xff]
      %v4645 = vld [vmem:[%s255 + $0x610] sm:$0xff]
      %v4646 = vld [vmem:[%s255 + $0x618] sm:$0xff]
      %v4647 = vld [vmem:[%s255 + $0x620] sm:$0xff]
      %v4648 = vld [vmem:[%s255 + $0x628] sm:$0xff]
      %v4649 = vld [vmem:[%s255 + $0x630] sm:$0xff]
      %v4650 = vld [vmem:[%s255 + $0x638] sm:$0xff]
      %v4651 = vld [vmem:[%s255 + $0x640] sm:$0xff]
      %v4652 = vld [vmem:[%s255 + $0x648] sm:$0xff]
      %v4653 = vld [vmem:[%s255 + $0x650] sm:$0xff]
      %v4654 = vld [vmem:[%s255 + $0x658] sm:$0xff]
      %v4655 = vld [vmem:[%s255 + $0x660] sm:$0xff]
      %v4656 = vld [vmem:[%s255 + $0x668] sm:$0xff]
      %v4657 = vld [vmem:[%s255 + $0x670] sm:$0xff]
      %v4658 = vld [vmem:[%s255 + $0x678] sm:$0xff]
      %v4659 = vld [vmem:[%s255 + $0x680] sm:$0xff]
      %v4660 = vld [vmem:[%s255 + $0x688] sm:$0xff]
      %v4661 = vld [vmem:[%s255 + $0x690] sm:$0xff]
      %v4662 = vld [vmem:[%s255 + $0x698] sm:$0xff]
      %v4663 = vld [vmem:[%s255 + $0x6a0] sm:$0xff]
      %v4664 = vld [vmem:[%s255 + $0x6a8] sm:$0xff]
      %v4665 = vld [vmem:[%s255 + $0x6b0] sm:$0xff]
      %v4666 = vld [vmem:[%s255 + $0x6b8] sm:$0xff]
      %v4883 = vunpack.c.l.b16 %v4451
      %v4884 = vunpack.c.h.b16 %v4451
      %v4885 = vunpack.c.l.b16 %v4452
      %v4886 = vunpack.c.h.b16 %v4452
      %v4887 = vunpack.c.l.b16 %v4453
      %v4888 = vunpack.c.h.b16 %v4453
      %v4889 = vunpack.c.l.b16 %v4454
      %v4890 = vunpack.c.h.b16 %v4454
      %v4891 = vunpack.c.l.b16 %v4455
      %v4892 = vunpack.c.h.b16 %v4455
      %v4893 = vunpack.c.l.b16 %v4456
      %v4894 = vunpack.c.h.b16 %v4456
      %v4895 = vunpack.c.l.b16 %v4457
      %v4896 = vunpack.c.h.b16 %v4457
      %v4897 = vunpack.c.l.b16 %v4458
      %v4898 = vunpack.c.h.b16 %v4458
      %v4899 = vunpack.c.l.b16 %v4459
      %v4900 = vunpack.c.h.b16 %v4459
      %v4901 = vunpack.c.l.b16 %v4460
      %v4902 = vunpack.c.h.b16 %v4460
      %v4903 = vunpack.c.l.b16 %v4461
      %v4904 = vunpack.c.h.b16 %v4461
      %v4905 = vunpack.c.l.b16 %v4462
      %v4906 = vunpack.c.h.b16 %v4462
      %v4907 = vunpack.c.l.b16 %v4463
      %v4908 = vunpack.c.h.b16 %v4463
      %v4909 = vunpack.c.l.b16 %v4464
      %v4910 = vunpack.c.h.b16 %v4464
      %v4911 = vunpack.c.l.b16 %v4465
      %v4912 = vunpack.c.h.b16 %v4465
      %v4913 = vunpack.c.l.b16 %v4466
      %v4914 = vunpack.c.h.b16 %v4466
      %v4915 = vunpack.c.l.b16 %v4467
      %v4916 = vunpack.c.h.b16 %v4467
      %v4917 = vunpack.c.l.b16 %v4468
      %v4918 = vunpack.c.h.b16 %v4468
      %v4919 = vunpack.c.l.b16 %v4469
      %v4920 = vunpack.c.h.b16 %v4469
      %v4921 = vunpack.c.l.b16 %v4470
      %v4922 = vunpack.c.h.b16 %v4470
      %v4923 = vunpack.c.l.b16 %v4471
      %v4924 = vunpack.c.h.b16 %v4471
      %v4925 = vunpack.c.l.b16 %v4472
      %v4926 = vunpack.c.h.b16 %v4472
      %v4927 = vunpack.c.l.b16 %v4473
      %v4928 = vunpack.c.h.b16 %v4473
      %v4929 = vunpack.c.l.b16 %v4474
      %v4930 = vunpack.c.h.b16 %v4474
      %v4931 = vunpack.c.l.b16 %v4475
      %v4932 = vunpack.c.h.b16 %v4475
      %v4933 = vunpack.c.l.b16 %v4476
      %v4934 = vunpack.c.h.b16 %v4476
      %v4935 = vunpack.c.l.b16 %v4477
      %v4936 = vunpack.c.h.b16 %v4477
      %v4937 = vunpack.c.l.b16 %v4478
      %v4938 = vunpack.c.h.b16 %v4478
      %v4939 = vunpack.c.l.b16 %v4479
      %v4940 = vunpack.c.h.b16 %v4479
      %v4941 = vunpack.c.l.b16 %v4480
      %v4942 = vunpack.c.h.b16 %v4480
      %v4943 = vunpack.c.l.b16 %v4481
      %v4944 = vunpack.c.h.b16 %v4481
      %v4945 = vunpack.c.l.b16 %v4482
      %v4946 = vunpack.c.h.b16 %v4482
      %v4947 = vunpack.c.l.b16 %v4483
      %v4948 = vunpack.c.h.b16 %v4483
      %v4949 = vunpack.c.l.b16 %v4484
      %v4950 = vunpack.c.h.b16 %v4484
      %v4951 = vunpack.c.l.b16 %v4485
      %v4952 = vunpack.c.h.b16 %v4485
      %v4953 = vunpack.c.l.b16 %v4486
      %v4954 = vunpack.c.h.b16 %v4486
      %v4955 = vunpack.c.l.b16 %v4487
      %v4956 = vunpack.c.h.b16 %v4487
      %v4957 = vunpack.c.l.b16 %v4488
      %v4958 = vunpack.c.h.b16 %v4488
      %v4959 = vunpack.c.l.b16 %v4489
      %v4960 = vunpack.c.h.b16 %v4489
      %v4961 = vunpack.c.l.b16 %v4490
      %v4962 = vunpack.c.h.b16 %v4490
      %v4963 = vunpack.c.l.b16 %v4491
      %v4964 = vunpack.c.h.b16 %v4491
      %v4965 = vunpack.c.l.b16 %v4492
      %v4966 = vunpack.c.h.b16 %v4492
      %v4967 = vunpack.c.l.b16 %v4493
      %v4968 = vunpack.c.h.b16 %v4493
      %v4969 = vunpack.c.l.b16 %v4494
      %v4970 = vunpack.c.h.b16 %v4494
      %v4971 = vunpack.c.l.b16 %v4495
      %v4972 = vunpack.c.h.b16 %v4495
      %v4973 = vunpack.c.l.b16 %v4496
      %v4974 = vunpack.c.h.b16 %v4496
      %v4975 = vunpack.c.l.b16 %v4497
      %v4976 = vunpack.c.h.b16 %v4497
      %v4977 = vunpack.c.l.b16 %v4498
      %v4978 = vunpack.c.h.b16 %v4498
      %v4979 = vunpack.c.l.b16 %v4499
      %v4980 = vunpack.c.h.b16 %v4499
      %v4981 = vunpack.c.l.b16 %v4500
      %v4982 = vunpack.c.h.b16 %v4500
      %v4983 = vunpack.c.l.b16 %v4501
      %v4984 = vunpack.c.h.b16 %v4501
      %v4985 = vunpack.c.l.b16 %v4502
      %v4986 = vunpack.c.h.b16 %v4502
      %v4987 = vunpack.c.l.b16 %v4503
      %v4988 = vunpack.c.h.b16 %v4503
      %v4989 = vunpack.c.l.b16 %v4504
      %v4990 = vunpack.c.h.b16 %v4504
      %v4991 = vunpack.c.l.b16 %v4505
      %v4992 = vunpack.c.h.b16 %v4505
      %v4993 = vunpack.c.l.b16 %v4506
      %v4994 = vunpack.c.h.b16 %v4506
      %v4995 = vunpack.c.l.b16 %v4507
      %v4996 = vunpack.c.h.b16 %v4507
      %v4997 = vunpack.c.l.b16 %v4508
      %v4998 = vunpack.c.h.b16 %v4508
      %v4999 = vunpack.c.l.b16 %v4509
      %v5000 = vunpack.c.h.b16 %v4509
      %v5001 = vunpack.c.l.b16 %v4510
      %v5002 = vunpack.c.h.b16 %v4510
      %v5003 = vunpack.c.l.b16 %v4511
      %v5004 = vunpack.c.h.b16 %v4511
      %v5005 = vunpack.c.l.b16 %v4512
      %v5006 = vunpack.c.h.b16 %v4512
      %v5007 = vunpack.c.l.b16 %v4513
      %v5008 = vunpack.c.h.b16 %v4513
      %v5009 = vunpack.c.l.b16 %v4514
      %v5010 = vunpack.c.h.b16 %v4514
      %v5011 = vunpack.c.l.b16 %v4515
      %v5012 = vunpack.c.h.b16 %v4515
      %v5013 = vunpack.c.l.b16 %v4516
      %v5014 = vunpack.c.h.b16 %v4516
      %v5015 = vunpack.c.l.b16 %v4517
      %v5016 = vunpack.c.h.b16 %v4517
      %v5017 = vunpack.c.l.b16 %v4518
      %v5018 = vunpack.c.h.b16 %v4518
      %v5019 = vunpack.c.l.b16 %v4519
      %v5020 = vunpack.c.h.b16 %v4519
      %v5021 = vunpack.c.l.b16 %v4520
      %v5022 = vunpack.c.h.b16 %v4520
      %v5023 = vunpack.c.l.b16 %v4521
      %v5024 = vunpack.c.h.b16 %v4521
      %v5025 = vunpack.c.l.b16 %v4522
      %v5026 = vunpack.c.h.b16 %v4522
      %v5027 = vunpack.c.l.b16 %v4523
      %v5028 = vunpack.c.h.b16 %v4523
      %v5029 = vunpack.c.l.b16 %v4524
      %v5030 = vunpack.c.h.b16 %v4524
      %v5031 = vunpack.c.l.b16 %v4525
      %v5032 = vunpack.c.h.b16 %v4525
      %v5033 = vunpack.c.l.b16 %v4526
      %v5034 = vunpack.c.h.b16 %v4526
      %v5035 = vunpack.c.l.b16 %v4527
      %v5036 = vunpack.c.h.b16 %v4527
      %v5037 = vunpack.c.l.b16 %v4528
      %v5038 = vunpack.c.h.b16 %v4528
      %v5039 = vunpack.c.l.b16 %v4529
      %v5040 = vunpack.c.h.b16 %v4529
      %v5041 = vunpack.c.l.b16 %v4530
      %v5042 = vunpack.c.h.b16 %v4530
      %v5043 = vunpack.c.l.b16 %v4531
      %v5044 = vunpack.c.h.b16 %v4531
      %v5045 = vunpack.c.l.b16 %v4532
      %v5046 = vunpack.c.h.b16 %v4532
      %v5047 = vunpack.c.l.b16 %v4533
      %v5048 = vunpack.c.h.b16 %v4533
      %v5049 = vunpack.c.l.b16 %v4534
      %v5050 = vunpack.c.h.b16 %v4534
      %v5051 = vunpack.c.l.b16 %v4535
      %v5052 = vunpack.c.h.b16 %v4535
      %v5053 = vunpack.c.l.b16 %v4536
      %v5054 = vunpack.c.h.b16 %v4536
      %v5055 = vunpack.c.l.b16 %v4537
      %v5056 = vunpack.c.h.b16 %v4537
      %v5057 = vunpack.c.l.b16 %v4538
      %v5058 = vunpack.c.h.b16 %v4538
      %v5059 = vunpack.c.l.b16 %v4539
      %v5060 = vunpack.c.h.b16 %v4539
      %v5061 = vunpack.c.l.b16 %v4540
      %v5062 = vunpack.c.h.b16 %v4540
      %v5063 = vunpack.c.l.b16 %v4541
      %v5064 = vunpack.c.h.b16 %v4541
      %v5065 = vunpack.c.l.b16 %v4542
      %v5066 = vunpack.c.h.b16 %v4542
      %v5067 = vunpack.c.l.b16 %v4543
      %v5068 = vunpack.c.h.b16 %v4543
      %v5069 = vunpack.c.l.b16 %v4544
      %v5070 = vunpack.c.h.b16 %v4544
      %v5071 = vunpack.c.l.b16 %v4545
      %v5072 = vunpack.c.h.b16 %v4545
      %v5073 = vunpack.c.l.b16 %v4546
      %v5074 = vunpack.c.h.b16 %v4546
      %v5075 = vunpack.c.l.b16 %v4547
      %v5076 = vunpack.c.h.b16 %v4547
      %v5077 = vunpack.c.l.b16 %v4548
      %v5078 = vunpack.c.h.b16 %v4548
      %v5079 = vunpack.c.l.b16 %v4549
      %v5080 = vunpack.c.h.b16 %v4549
      %v5081 = vunpack.c.l.b16 %v4550
      %v5082 = vunpack.c.h.b16 %v4550
      %v5083 = vunpack.c.l.b16 %v4551
      %v5084 = vunpack.c.h.b16 %v4551
      %v5085 = vunpack.c.l.b16 %v4552
      %v5086 = vunpack.c.h.b16 %v4552
      %v5087 = vunpack.c.l.b16 %v4553
      %v5088 = vunpack.c.h.b16 %v4553
      %v5089 = vunpack.c.l.b16 %v4554
      %v5090 = vunpack.c.h.b16 %v4554
      %v5091 = vunpack.c.l.b16 %v4555
      %v5092 = vunpack.c.h.b16 %v4555
      %v5093 = vunpack.c.l.b16 %v4556
      %v5094 = vunpack.c.h.b16 %v4556
      %v5095 = vunpack.c.l.b16 %v4557
      %v5096 = vunpack.c.h.b16 %v4557
      %v5097 = vunpack.c.l.b16 %v4558
      %v5098 = vunpack.c.h.b16 %v4558
      %v5099 = vunpack.c.l.b16 %v4559
      %v5100 = vunpack.c.h.b16 %v4559
      %v5101 = vunpack.c.l.b16 %v4560
      %v5102 = vunpack.c.h.b16 %v4560
      %v5103 = vunpack.c.l.b16 %v4561
      %v5104 = vunpack.c.h.b16 %v4561
      %v5105 = vunpack.c.l.b16 %v4562
      %v5106 = vunpack.c.h.b16 %v4562
      %v5107 = vunpack.c.l.b16 %v4563
      %v5108 = vunpack.c.h.b16 %v4563
      %v5109 = vunpack.c.l.b16 %v4564
      %v5110 = vunpack.c.h.b16 %v4564
      %v5111 = vunpack.c.l.b16 %v4565
      %v5112 = vunpack.c.h.b16 %v4565
      %v5113 = vunpack.c.l.b16 %v4566
      %v5114 = vunpack.c.h.b16 %v4566
      %v5115 = vunpack.c.l.b16 %v4567
      %v5116 = vunpack.c.h.b16 %v4567
      %v5117 = vunpack.c.l.b16 %v4568
      %v5118 = vunpack.c.h.b16 %v4568
      %v5119 = vunpack.c.l.b16 %v4569
      %v5120 = vunpack.c.h.b16 %v4569
      %v5121 = vunpack.c.l.b16 %v4570
      %v5122 = vunpack.c.h.b16 %v4570
      %v5123 = vunpack.c.l.b16 %v4571
      %v5124 = vunpack.c.h.b16 %v4571
      %v5125 = vunpack.c.l.b16 %v4572
      %v5126 = vunpack.c.h.b16 %v4572
      %v5127 = vunpack.c.l.b16 %v4573
      %v5128 = vunpack.c.h.b16 %v4573
      %v5129 = vunpack.c.l.b16 %v4574
      %v5130 = vunpack.c.h.b16 %v4574
      %v5131 = vunpack.c.l.b16 %v4575
      %v5132 = vunpack.c.h.b16 %v4575
      %v5133 = vunpack.c.l.b16 %v4576
      %v5134 = vunpack.c.h.b16 %v4576
      %v5135 = vunpack.c.l.b16 %v4577
      %v5136 = vunpack.c.h.b16 %v4577
      %v5137 = vunpack.c.l.b16 %v4578
      %v5138 = vunpack.c.h.b16 %v4578
      %v5139 = vunpack.c.l.b16 %v4579
      %v5140 = vunpack.c.h.b16 %v4579
      %v5141 = vunpack.c.l.b16 %v4580
      %v5142 = vunpack.c.h.b16 %v4580
      %v5143 = vunpack.c.l.b16 %v4581
      %v5144 = vunpack.c.h.b16 %v4581
      %v5145 = vunpack.c.l.b16 %v4582
      %v5146 = vunpack.c.h.b16 %v4582
      %v5147 = vunpack.c.l.b16 %v4583
      %v5148 = vunpack.c.h.b16 %v4583
      %v5149 = vunpack.c.l.b16 %v4584
      %v5150 = vunpack.c.h.b16 %v4584
      %v5151 = vunpack.c.l.b16 %v4585
      %v5152 = vunpack.c.h.b16 %v4585
      %v5153 = vunpack.c.l.b16 %v4586
      %v5154 = vunpack.c.h.b16 %v4586
      %v5155 = vunpack.c.l.b16 %v4587
      %v5156 = vunpack.c.h.b16 %v4587
      %v5157 = vunpack.c.l.b16 %v4588
      %v5158 = vunpack.c.h.b16 %v4588
      %v5159 = vunpack.c.l.b16 %v4589
      %v5160 = vunpack.c.h.b16 %v4589
      %v5161 = vunpack.c.l.b16 %v4590
      %v5162 = vunpack.c.h.b16 %v4590
      %v5163 = vunpack.c.l.b16 %v4591
      %v5164 = vunpack.c.h.b16 %v4591
      %v5165 = vunpack.c.l.b16 %v4592
      %v5166 = vunpack.c.h.b16 %v4592
      %v5167 = vunpack.c.l.b16 %v4593
      %v5168 = vunpack.c.h.b16 %v4593
      %v5169 = vunpack.c.l.b16 %v4594
      %v5170 = vunpack.c.h.b16 %v4594
      %v5171 = vunpack.c.l.b16 %v4595
      %v5172 = vunpack.c.h.b16 %v4595
      %v5173 = vunpack.c.l.b16 %v4596
      %v5174 = vunpack.c.h.b16 %v4596
      %v5175 = vunpack.c.l.b16 %v4597
      %v5176 = vunpack.c.h.b16 %v4597
      %v5177 = vunpack.c.l.b16 %v4598
      %v5178 = vunpack.c.h.b16 %v4598
      %v5179 = vunpack.c.l.b16 %v4599
      %v5180 = vunpack.c.h.b16 %v4599
      %v5181 = vunpack.c.l.b16 %v4600
      %v5182 = vunpack.c.h.b16 %v4600
      %v5183 = vunpack.c.l.b16 %v4601
      %v5184 = vunpack.c.h.b16 %v4601
      %v5185 = vunpack.c.l.b16 %v4602
      %v5186 = vunpack.c.h.b16 %v4602
      %v5187 = vunpack.c.l.b16 %v4603
      %v5188 = vunpack.c.h.b16 %v4603
      %v5189 = vunpack.c.l.b16 %v4604
      %v5190 = vunpack.c.h.b16 %v4604
      %v5191 = vunpack.c.l.b16 %v4605
      %v5192 = vunpack.c.h.b16 %v4605
      %v5193 = vunpack.c.l.b16 %v4606
      %v5194 = vunpack.c.h.b16 %v4606
      %v5195 = vunpack.c.l.b16 %v4607
      %v5196 = vunpack.c.h.b16 %v4607
      %v5197 = vunpack.c.l.b16 %v4608
      %v5198 = vunpack.c.h.b16 %v4608
      %v5199 = vunpack.c.l.b16 %v4609
      %v5200 = vunpack.c.h.b16 %v4609
      %v5201 = vunpack.c.l.b16 %v4610
      %v5202 = vunpack.c.h.b16 %v4610
      %v5203 = vunpack.c.l.b16 %v4611
      %v5204 = vunpack.c.h.b16 %v4611
      %v5205 = vunpack.c.l.b16 %v4612
      %v5206 = vunpack.c.h.b16 %v4612
      %v5207 = vunpack.c.l.b16 %v4613
      %v5208 = vunpack.c.h.b16 %v4613
      %v5209 = vunpack.c.l.b16 %v4614
      %v5210 = vunpack.c.h.b16 %v4614
      %v5211 = vunpack.c.l.b16 %v4615
      %v5212 = vunpack.c.h.b16 %v4615
      %v5213 = vunpack.c.l.b16 %v4616
      %v5214 = vunpack.c.h.b16 %v4616
      %v5215 = vunpack.c.l.b16 %v4617
      %v5216 = vunpack.c.h.b16 %v4617
      %v5217 = vunpack.c.l.b16 %v4618
      %v5218 = vunpack.c.h.b16 %v4618
      %v5219 = vunpack.c.l.b16 %v4619
      %v5220 = vunpack.c.h.b16 %v4619
      %v5221 = vunpack.c.l.b16 %v4620
      %v5222 = vunpack.c.h.b16 %v4620
      %v5223 = vunpack.c.l.b16 %v4621
      %v5224 = vunpack.c.h.b16 %v4621
      %v5225 = vunpack.c.l.b16 %v4622
      %v5226 = vunpack.c.h.b16 %v4622
      %v5227 = vunpack.c.l.b16 %v4623
      %v5228 = vunpack.c.h.b16 %v4623
      %v5229 = vunpack.c.l.b16 %v4624
      %v5230 = vunpack.c.h.b16 %v4624
      %v5231 = vunpack.c.l.b16 %v4625
      %v5232 = vunpack.c.h.b16 %v4625
      %v5233 = vunpack.c.l.b16 %v4626
      %v5234 = vunpack.c.h.b16 %v4626
      %v5235 = vunpack.c.l.b16 %v4627
      %v5236 = vunpack.c.h.b16 %v4627
      %v5237 = vunpack.c.l.b16 %v4628
      %v5238 = vunpack.c.h.b16 %v4628
      %v5239 = vunpack.c.l.b16 %v4629
      %v5240 = vunpack.c.h.b16 %v4629
      %v5241 = vunpack.c.l.b16 %v4630
      %v5242 = vunpack.c.h.b16 %v4630
      %v5243 = vunpack.c.l.b16 %v4631
      %v5244 = vunpack.c.h.b16 %v4631
      %v5245 = vunpack.c.l.b16 %v4632
      %v5246 = vunpack.c.h.b16 %v4632
      %v5247 = vunpack.c.l.b16 %v4633
      %v5248 = vunpack.c.h.b16 %v4633
      %v5249 = vunpack.c.l.b16 %v4634
      %v5250 = vunpack.c.h.b16 %v4634
      %v5251 = vunpack.c.l.b16 %v4635
      %v5252 = vunpack.c.h.b16 %v4635
      %v5253 = vunpack.c.l.b16 %v4636
      %v5254 = vunpack.c.h.b16 %v4636
      %v5255 = vunpack.c.l.b16 %v4637
      %v5256 = vunpack.c.h.b16 %v4637
      %v5257 = vunpack.c.l.b16 %v4638
      %v5258 = vunpack.c.h.b16 %v4638
      %v5259 = vunpack.c.l.b16 %v4639
      %v5260 = vunpack.c.h.b16 %v4639
      %v5261 = vunpack.c.l.b16 %v4640
      %v5262 = vunpack.c.h.b16 %v4640
      %v5263 = vunpack.c.l.b16 %v4641
      %v5264 = vunpack.c.h.b16 %v4641
      %v5265 = vunpack.c.l.b16 %v4642
      %v5266 = vunpack.c.h.b16 %v4642
      %v5267 = vunpack.c.l.b16 %v4643
      %v5268 = vunpack.c.h.b16 %v4643
      %v5269 = vunpack.c.l.b16 %v4644
      %v5270 = vunpack.c.h.b16 %v4644
      %v5271 = vunpack.c.l.b16 %v4645
      %v5272 = vunpack.c.h.b16 %v4645
      %v5273 = vunpack.c.l.b16 %v4646
      %v5274 = vunpack.c.h.b16 %v4646
      %v5275 = vunpack.c.l.b16 %v4647
      %v5276 = vunpack.c.h.b16 %v4647
      %v5277 = vunpack.c.l.b16 %v4648
      %v5278 = vunpack.c.h.b16 %v4648
      %v5279 = vunpack.c.l.b16 %v4649
      %v5280 = vunpack.c.h.b16 %v4649
      %v5281 = vunpack.c.l.b16 %v4650
      %v5282 = vunpack.c.h.b16 %v4650
      %v5283 = vunpack.c.l.b16 %v4651
      %v5284 = vunpack.c.h.b16 %v4651
      %v5285 = vunpack.c.l.b16 %v4652
      %v5286 = vunpack.c.h.b16 %v4652
      %v5287 = vunpack.c.l.b16 %v4653
      %v5288 = vunpack.c.h.b16 %v4653
      %v5289 = vunpack.c.l.b16 %v4654
      %v5290 = vunpack.c.h.b16 %v4654
      %v5291 = vunpack.c.l.b16 %v4655
      %v5292 = vunpack.c.h.b16 %v4655
      %v5293 = vunpack.c.l.b16 %v4656
      %v5294 = vunpack.c.h.b16 %v4656
      %v5295 = vunpack.c.l.b16 %v4657
      %v5296 = vunpack.c.h.b16 %v4657
      %v5297 = vunpack.c.l.b16 %v4658
      %v5298 = vunpack.c.h.b16 %v4658
      %v5299 = vunpack.c.l.b16 %v4659
      %v5300 = vunpack.c.h.b16 %v4659
      %v5301 = vunpack.c.l.b16 %v4660
      %v5302 = vunpack.c.h.b16 %v4660
      %v5303 = vunpack.c.l.b16 %v4661
      %v5304 = vunpack.c.h.b16 %v4661
      %v5305 = vunpack.c.l.b16 %v4662
      %v5306 = vunpack.c.h.b16 %v4662
      %v5307 = vunpack.c.l.b16 %v4663
      %v5308 = vunpack.c.h.b16 %v4663
      %v5309 = vunpack.c.l.b16 %v4664
      %v5310 = vunpack.c.h.b16 %v4664
      %v5311 = vunpack.c.l.b16 %v4665
      %v5312 = vunpack.c.h.b16 %v4665
      %v5313 = vunpack.c.l.b16 %v4666
      %v5314 = vunpack.c.h.b16 %v4666
      %v5315 = vpack.c.b16 %v4901, %v4883
      %v5316 = vpack.c.b16 %v4902, %v4884
      %v5317 = vpack.c.b16 %v4903, %v4885
      %v5318 = vpack.c.b16 %v4904, %v4886
      %v5319 = vpack.c.b16 %v4905, %v4887
      %v5320 = vpack.c.b16 %v4906, %v4888
      %v5321 = vpack.c.b16 %v4907, %v4889
      %v5322 = vpack.c.b16 %v4908, %v4890
      %v5323 = vpack.c.b16 %v4909, %v4891
      %v5324 = vpack.c.b16 %v4910, %v4892
      %v5325 = vpack.c.b16 %v4911, %v4893
      %v5326 = vpack.c.b16 %v4912, %v4894
      %v5327 = vpack.c.b16 %v4913, %v4895
      %v5328 = vpack.c.b16 %v4914, %v4896
      %v5329 = vpack.c.b16 %v4915, %v4897
      %v5330 = vpack.c.b16 %v4916, %v4898
      %v5331 = vpack.c.b16 %v4917, %v4899
      %v5332 = vpack.c.b16 %v4918, %v4900
      %v5333 = vpack.c.b16 %v4937, %v4919
      %v5334 = vpack.c.b16 %v4938, %v4920
      %v5335 = vpack.c.b16 %v4939, %v4921
      %v5336 = vpack.c.b16 %v4940, %v4922
      %v5337 = vpack.c.b16 %v4941, %v4923
      %v5338 = vpack.c.b16 %v4942, %v4924
      %v5339 = vpack.c.b16 %v4943, %v4925
      %v5340 = vpack.c.b16 %v4944, %v4926
      %v5341 = vpack.c.b16 %v4945, %v4927
      %v5342 = vpack.c.b16 %v4946, %v4928
      %v5343 = vpack.c.b16 %v4947, %v4929
      %v5344 = vpack.c.b16 %v4948, %v4930
      %v5345 = vpack.c.b16 %v4949, %v4931
      %v5346 = vpack.c.b16 %v4950, %v4932
      %v5347 = vpack.c.b16 %v4951, %v4933
      %v5348 = vpack.c.b16 %v4952, %v4934
      %v5349 = vpack.c.b16 %v4953, %v4935
      %v5350 = vpack.c.b16 %v4954, %v4936
      %v5351 = vpack.c.b16 %v4973, %v4955
      %v5352 = vpack.c.b16 %v4974, %v4956
      %v5353 = vpack.c.b16 %v4975, %v4957
      %v5354 = vpack.c.b16 %v4976, %v4958
      %v5355 = vpack.c.b16 %v4977, %v4959
      %v5356 = vpack.c.b16 %v4978, %v4960
      %v5357 = vpack.c.b16 %v4979, %v4961
      %v5358 = vpack.c.b16 %v4980, %v4962
      %v5359 = vpack.c.b16 %v4981, %v4963
      %v5360 = vpack.c.b16 %v4982, %v4964
      %v5361 = vpack.c.b16 %v4983, %v4965
      %v5362 = vpack.c.b16 %v4984, %v4966
      %v5363 = vpack.c.b16 %v4985, %v4967
      %v5364 = vpack.c.b16 %v4986, %v4968
      %v5365 = vpack.c.b16 %v4987, %v4969
      %v5366 = vpack.c.b16 %v4988, %v4970
      %v5367 = vpack.c.b16 %v4989, %v4971
      %v5368 = vpack.c.b16 %v4990, %v4972
      %v5369 = vpack.c.b16 %v5009, %v4991
      %v5370 = vpack.c.b16 %v5010, %v4992
      %v5371 = vpack.c.b16 %v5011, %v4993
      %v5372 = vpack.c.b16 %v5012, %v4994
      %v5373 = vpack.c.b16 %v5013, %v4995
      %v5374 = vpack.c.b16 %v5014, %v4996
      %v5375 = vpack.c.b16 %v5015, %v4997
      %v5376 = vpack.c.b16 %v5016, %v4998
      %v5377 = vpack.c.b16 %v5017, %v4999
      %v5378 = vpack.c.b16 %v5018, %v5000
      %v5379 = vpack.c.b16 %v5019, %v5001
      %v5380 = vpack.c.b16 %v5020, %v5002
      %v5381 = vpack.c.b16 %v5021, %v5003
      %v5382 = vpack.c.b16 %v5022, %v5004
      %v5383 = vpack.c.b16 %v5023, %v5005
      %v5384 = vpack.c.b16 %v5024, %v5006
      %v5385 = vpack.c.b16 %v5025, %v5007
      %v5386 = vpack.c.b16 %v5026, %v5008
      %v5387 = vpack.c.b16 %v5045, %v5027
      %v5388 = vpack.c.b16 %v5046, %v5028
      %v5389 = vpack.c.b16 %v5047, %v5029
      %v5390 = vpack.c.b16 %v5048, %v5030
      %v5391 = vpack.c.b16 %v5049, %v5031
      %v5392 = vpack.c.b16 %v5050, %v5032
      %v5393 = vpack.c.b16 %v5051, %v5033
      %v5394 = vpack.c.b16 %v5052, %v5034
      %v5395 = vpack.c.b16 %v5053, %v5035
      %v5396 = vpack.c.b16 %v5054, %v5036
      %v5397 = vpack.c.b16 %v5055, %v5037
      %v5398 = vpack.c.b16 %v5056, %v5038
      %v5399 = vpack.c.b16 %v5057, %v5039
      %v5400 = vpack.c.b16 %v5058, %v5040
      %v5401 = vpack.c.b16 %v5059, %v5041
      %v5402 = vpack.c.b16 %v5060, %v5042
      %v5403 = vpack.c.b16 %v5061, %v5043
      %v5404 = vpack.c.b16 %v5062, %v5044
      %v5405 = vpack.c.b16 %v5081, %v5063
      %v5406 = vpack.c.b16 %v5082, %v5064
      %v5407 = vpack.c.b16 %v5083, %v5065
      %v5408 = vpack.c.b16 %v5084, %v5066
      %v5409 = vpack.c.b16 %v5085, %v5067
      %v5410 = vpack.c.b16 %v5086, %v5068
      %v5411 = vpack.c.b16 %v5087, %v5069
      %v5412 = vpack.c.b16 %v5088, %v5070
      %v5413 = vpack.c.b16 %v5089, %v5071
      %v5414 = vpack.c.b16 %v5090, %v5072
      %v5415 = vpack.c.b16 %v5091, %v5073
      %v5416 = vpack.c.b16 %v5092, %v5074
      %v5417 = vpack.c.b16 %v5093, %v5075
      %v5418 = vpack.c.b16 %v5094, %v5076
      %v5419 = vpack.c.b16 %v5095, %v5077
      %v5420 = vpack.c.b16 %v5096, %v5078
      %v5421 = vpack.c.b16 %v5097, %v5079
      %v5422 = vpack.c.b16 %v5098, %v5080
      %v5423 = vpack.c.b16 %v5117, %v5099
      %v5424 = vpack.c.b16 %v5118, %v5100
      %v5425 = vpack.c.b16 %v5119, %v5101
      %v5426 = vpack.c.b16 %v5120, %v5102
      %v5427 = vpack.c.b16 %v5121, %v5103
      %v5428 = vpack.c.b16 %v5122, %v5104
      %v5429 = vpack.c.b16 %v5123, %v5105
      %v5430 = vpack.c.b16 %v5124, %v5106
      %v5431 = vpack.c.b16 %v5125, %v5107
      %v5432 = vpack.c.b16 %v5126, %v5108
      %v5433 = vpack.c.b16 %v5127, %v5109
      %v5434 = vpack.c.b16 %v5128, %v5110
      %v5435 = vpack.c.b16 %v5129, %v5111
      %v5436 = vpack.c.b16 %v5130, %v5112
      %v5437 = vpack.c.b16 %v5131, %v5113
      %v5438 = vpack.c.b16 %v5132, %v5114
      %v5439 = vpack.c.b16 %v5133, %v5115
      %v5440 = vpack.c.b16 %v5134, %v5116
      %v5441 = vpack.c.b16 %v5153, %v5135
      %v5442 = vpack.c.b16 %v5154, %v5136
      %v5443 = vpack.c.b16 %v5155, %v5137
      %v5444 = vpack.c.b16 %v5156, %v5138
      %v5445 = vpack.c.b16 %v5157, %v5139
      %v5446 = vpack.c.b16 %v5158, %v5140
      %v5447 = vpack.c.b16 %v5159, %v5141
      %v5448 = vpack.c.b16 %v5160, %v5142
      %v5449 = vpack.c.b16 %v5161, %v5143
      %v5450 = vpack.c.b16 %v5162, %v5144
      %v5451 = vpack.c.b16 %v5163, %v5145
      %v5452 = vpack.c.b16 %v5164, %v5146
      %v5453 = vpack.c.b16 %v5165, %v5147
      %v5454 = vpack.c.b16 %v5166, %v5148
      %v5455 = vpack.c.b16 %v5167, %v5149
      %v5456 = vpack.c.b16 %v5168, %v5150
      %v5457 = vpack.c.b16 %v5169, %v5151
      %v5458 = vpack.c.b16 %v5170, %v5152
      %v5459 = vpack.c.b16 %v5189, %v5171
      %v5460 = vpack.c.b16 %v5190, %v5172
      %v5461 = vpack.c.b16 %v5191, %v5173
      %v5462 = vpack.c.b16 %v5192, %v5174
      %v5463 = vpack.c.b16 %v5193, %v5175
      %v5464 = vpack.c.b16 %v5194, %v5176
      %v5465 = vpack.c.b16 %v5195, %v5177
      %v5466 = vpack.c.b16 %v5196, %v5178
      %v5467 = vpack.c.b16 %v5197, %v5179
      %v5468 = vpack.c.b16 %v5198, %v5180
      %v5469 = vpack.c.b16 %v5199, %v5181
      %v5470 = vpack.c.b16 %v5200, %v5182
      %v5471 = vpack.c.b16 %v5201, %v5183
      %v5472 = vpack.c.b16 %v5202, %v5184
      %v5473 = vpack.c.b16 %v5203, %v5185
      %v5474 = vpack.c.b16 %v5204, %v5186
      %v5475 = vpack.c.b16 %v5205, %v5187
      %v5476 = vpack.c.b16 %v5206, %v5188
      %v5477 = vpack.c.b16 %v5225, %v5207
      %v5478 = vpack.c.b16 %v5226, %v5208
      %v5479 = vpack.c.b16 %v5227, %v5209
      %v5480 = vpack.c.b16 %v5228, %v5210
      %v5481 = vpack.c.b16 %v5229, %v5211
      %v5482 = vpack.c.b16 %v5230, %v5212
      %v5483 = vpack.c.b16 %v5231, %v5213
      %v5484 = vpack.c.b16 %v5232, %v5214
      %v5485 = vpack.c.b16 %v5233, %v5215
      %v5486 = vpack.c.b16 %v5234, %v5216
      %v5487 = vpack.c.b16 %v5235, %v5217
      %v5488 = vpack.c.b16 %v5236, %v5218
      %v5489 = vpack.c.b16 %v5237, %v5219
      %v5490 = vpack.c.b16 %v5238, %v5220
      %v5491 = vpack.c.b16 %v5239, %v5221
      %v5492 = vpack.c.b16 %v5240, %v5222
      %v5493 = vpack.c.b16 %v5241, %v5223
      %v5494 = vpack.c.b16 %v5242, %v5224
      %v5495 = vpack.c.b16 %v5261, %v5243
      %v5496 = vpack.c.b16 %v5262, %v5244
      %v5497 = vpack.c.b16 %v5263, %v5245
      %v5498 = vpack.c.b16 %v5264, %v5246
      %v5499 = vpack.c.b16 %v5265, %v5247
      %v5500 = vpack.c.b16 %v5266, %v5248
      %v5501 = vpack.c.b16 %v5267, %v5249
      %v5502 = vpack.c.b16 %v5268, %v5250
      %v5503 = vpack.c.b16 %v5269, %v5251
      %v5504 = vpack.c.b16 %v5270, %v5252
      %v5505 = vpack.c.b16 %v5271, %v5253
      %v5506 = vpack.c.b16 %v5272, %v5254
      %v5507 = vpack.c.b16 %v5273, %v5255
      %v5508 = vpack.c.b16 %v5274, %v5256
      %v5509 = vpack.c.b16 %v5275, %v5257
      %v5510 = vpack.c.b16 %v5276, %v5258
      %v5511 = vpack.c.b16 %v5277, %v5259
      %v5512 = vpack.c.b16 %v5278, %v5260
      %v5513 = vpack.c.b16 %v5297, %v5279
      %v5514 = vpack.c.b16 %v5298, %v5280
      %v5515 = vpack.c.b16 %v5299, %v5281
      %v5516 = vpack.c.b16 %v5300, %v5282
      %v5517 = vpack.c.b16 %v5301, %v5283
      %v5518 = vpack.c.b16 %v5302, %v5284
      %v5519 = vpack.c.b16 %v5303, %v5285
      %v5520 = vpack.c.b16 %v5304, %v5286
      %v5521 = vpack.c.b16 %v5305, %v5287
      %v5522 = vpack.c.b16 %v5306, %v5288
      %v5523 = vpack.c.b16 %v5307, %v5289
      %v5524 = vpack.c.b16 %v5308, %v5290
      %v5525 = vpack.c.b16 %v5309, %v5291
      %v5526 = vpack.c.b16 %v5310, %v5292
      %v5527 = vpack.c.b16 %v5311, %v5293
      %v5528 = vpack.c.b16 %v5312, %v5294
      %v5529 = vpack.c.b16 %v5313, %v5295
      %v5530 = vpack.c.b16 %v5314, %v5296
      %5747 = vmatpush.bf16.msra.mxu0 %v4314
      %5748 = vmatpush.bf16.msra.mxu0 %v4313
      %5749 = vmatpush.bf16.msra.mxu0 %v4312
      %5750 = vmatpush.bf16.msra.mxu0 %v4311
      %5751 = vmatpush.bf16.msra.mxu0 %v4310
      %5752 = vmatpush.bf16.msra.mxu0 %v4309
      %5753 = vmatpush.bf16.msra.mxu0 %v4308
      %5754 = vmatpush.bf16.msra.mxu0 %v4307
      %5755 = vmatmul.bf16.gmra.mxu0 %v5315
      %v5756 = vpop.f32.mrf.mxu0
      %v5757 = vadd.f32 0.0, %v5756
      %v5758 = vpop.f32.mrf.mxu0
      %v5759 = vadd.f32 0.0, %v5758
      %5760 = vmatmul.bf16.gmra.mxu0 %v5333
      %v5761 = vpop.f32.mrf.mxu0
      %v5762 = vadd.f32 0.0, %v5761
      %v5763 = vpop.f32.mrf.mxu0
      %v5764 = vadd.f32 0.0, %v5763
      %5765 = vmatmul.bf16.gmra.mxu0 %v5351
      %v5766 = vpop.f32.mrf.mxu0
      %v5767 = vadd.f32 0.0, %v5766
      %v5768 = vpop.f32.mrf.mxu0
      %v5769 = vadd.f32 0.0, %v5768
      %5770 = vmatmul.bf16.gmra.mxu0 %v5369
      %v5771 = vpop.f32.mrf.mxu0
      %v5772 = vadd.f32 0.0, %v5771
      %v5773 = vpop.f32.mrf.mxu0
      %v5774 = vadd.f32 0.0, %v5773
      %5775 = vmatmul.bf16.gmra.mxu0 %v5387
      %v5776 = vpop.f32.mrf.mxu0
      %v5777 = vadd.f32 0.0, %v5776
      %v5778 = vpop.f32.mrf.mxu0
      %v5779 = vadd.f32 0.0, %v5778
      %5780 = vmatmul.bf16.gmra.mxu0 %v5405
      %v5781 = vpop.f32.mrf.mxu0
      %v5782 = vadd.f32 0.0, %v5781
      %v5783 = vpop.f32.mrf.mxu0
      %v5784 = vadd.f32 0.0, %v5783
      %5785 = vmatmul.bf16.gmra.mxu0 %v5423
      %v5786 = vpop.f32.mrf.mxu0
      %v5787 = vadd.f32 0.0, %v5786
      %v5788 = vpop.f32.mrf.mxu0
      %v5789 = vadd.f32 0.0, %v5788
      %5790 = vmatmul.bf16.gmra.mxu0 %v5441
      %v5791 = vpop.f32.mrf.mxu0
      %v5792 = vadd.f32 0.0, %v5791
      %v5793 = vpop.f32.mrf.mxu0
      %v5794 = vadd.f32 0.0, %v5793
      %5795 = vmatmul.bf16.gmra.mxu0 %v5459
      %v5796 = vpop.f32.mrf.mxu0
      %v5797 = vadd.f32 0.0, %v5796
      %v5798 = vpop.f32.mrf.mxu0
      %v5799 = vadd.f32 0.0, %v5798
      %5800 = vmatmul.bf16.gmra.mxu0 %v5477
      %v5801 = vpop.f32.mrf.mxu0
      %v5802 = vadd.f32 0.0, %v5801
      %v5803 = vpop.f32.mrf.mxu0
      %v5804 = vadd.f32 0.0, %v5803
      %5805 = vmatmul.bf16.gmra.mxu0 %v5495
      %v5806 = vpop.f32.mrf.mxu0
      %v5807 = vadd.f32 0.0, %v5806
      %v5808 = vpop.f32.mrf.mxu0
      %v5809 = vadd.f32 0.0, %v5808
      %5810 = vmatmul.bf16.gmra.mxu0 %v5513
      %v5811 = vpop.f32.mrf.mxu0
      %v5812 = vadd.f32 0.0, %v5811
      %v5813 = vpop.f32.mrf.mxu0
      %v5814 = vadd.f32 0.0, %v5813
      %5815 = vdwg.mxu0
      %5816 = vmatpush.bf16.msra.mxu0 %v4322
      %5817 = vmatpush.bf16.msra.mxu0 %v4321
      %5818 = vmatpush.bf16.msra.mxu0 %v4320
      %5819 = vmatpush.bf16.msra.mxu0 %v4319
      %5820 = vmatpush.bf16.msra.mxu0 %v4318
      %5821 = vmatpush.bf16.msra.mxu0 %v4317
      %5822 = vmatpush.bf16.msra.mxu0 %v4316
      %5823 = vmatpush.bf16.msra.mxu0 %v4315
      %5824 = vmatmul.bf16.gmra.mxu0 %v5316
      %v5825 = vpop.f32.mrf.mxu0
      %v5826 = vadd.f32 %v5757, %v5825
      %v5827 = vpop.f32.mrf.mxu0
      %v5828 = vadd.f32 %v5759, %v5827
      %5829 = vmatmul.bf16.gmra.mxu0 %v5334
      %v5830 = vpop.f32.mrf.mxu0
      %v5831 = vadd.f32 %v5762, %v5830
      %v5832 = vpop.f32.mrf.mxu0
      %v5833 = vadd.f32 %v5764, %v5832
      %5834 = vmatmul.bf16.gmra.mxu0 %v5352
      %v5835 = vpop.f32.mrf.mxu0
      %v5836 = vadd.f32 %v5767, %v5835
      %v5837 = vpop.f32.mrf.mxu0
      %v5838 = vadd.f32 %v5769, %v5837
      %5839 = vmatmul.bf16.gmra.mxu0 %v5370
      %v5840 = vpop.f32.mrf.mxu0
      %v5841 = vadd.f32 %v5772, %v5840
      %v5842 = vpop.f32.mrf.mxu0
      %v5843 = vadd.f32 %v5774, %v5842
      %5844 = vmatmul.bf16.gmra.mxu0 %v5388
      %v5845 = vpop.f32.mrf.mxu0
      %v5846 = vadd.f32 %v5777, %v5845
      %v5847 = vpop.f32.mrf.mxu0
      %v5848 = vadd.f32 %v5779, %v5847
      %5849 = vmatmul.bf16.gmra.mxu0 %v5406
      %v5850 = vpop.f32.mrf.mxu0
      %v5851 = vadd.f32 %v5782, %v5850
      %v5852 = vpop.f32.mrf.mxu0
      %v5853 = vadd.f32 %v5784, %v5852
      %5854 = vmatmul.bf16.gmra.mxu0 %v5424
      %v5855 = vpop.f32.mrf.mxu0
      %v5856 = vadd.f32 %v5787, %v5855
      %v5857 = vpop.f32.mrf.mxu0
      %v5858 = vadd.f32 %v5789, %v5857
      %5859 = vmatmul.bf16.gmra.mxu0 %v5442
      %v5860 = vpop.f32.mrf.mxu0
      %v5861 = vadd.f32 %v5792, %v5860
      %v5862 = vpop.f32.mrf.mxu0
      %v5863 = vadd.f32 %v5794, %v5862
      %5864 = vmatmul.bf16.gmra.mxu0 %v5460
      %v5865 = vpop.f32.mrf.mxu0
      %v5866 = vadd.f32 %v5797, %v5865
      %v5867 = vpop.f32.mrf.mxu0
      %v5868 = vadd.f32 %v5799, %v5867
      %5869 = vmatmul.bf16.gmra.mxu0 %v5478
      %v5870 = vpop.f32.mrf.mxu0
      %v5871 = vadd.f32 %v5802, %v5870
      %v5872 = vpop.f32.mrf.mxu0
      %v5873 = vadd.f32 %v5804, %v5872
      %5874 = vmatmul.bf16.gmra.mxu0 %v5496
      %v5875 = vpop.f32.mrf.mxu0
      %v5876 = vadd.f32 %v5807, %v5875
      %v5877 = vpop.f32.mrf.mxu0
      %v5878 = vadd.f32 %v5809, %v5877
      %5879 = vmatmul.bf16.gmra.mxu0 %v5514
      %v5880 = vpop.f32.mrf.mxu0
      %v5881 = vadd.f32 %v5812, %v5880
      %v5882 = vpop.f32.mrf.mxu0
      %v5883 = vadd.f32 %v5814, %v5882
      %5884 = vdwg.mxu0
      %5885 = vmatpush.bf16.msra.mxu0 %v4330
      %5886 = vmatpush.bf16.msra.mxu0 %v4329
      %5887 = vmatpush.bf16.msra.mxu0 %v4328
      %5888 = vmatpush.bf16.msra.mxu0 %v4327
      %5889 = vmatpush.bf16.msra.mxu0 %v4326
      %5890 = vmatpush.bf16.msra.mxu0 %v4325
      %5891 = vmatpush.bf16.msra.mxu0 %v4324
      %5892 = vmatpush.bf16.msra.mxu0 %v4323
      %5893 = vmatmul.bf16.gmra.mxu0 %v5317
      %v5894 = vpop.f32.mrf.mxu0
      %v5895 = vadd.f32 %v5826, %v5894
      %v5896 = vpop.f32.mrf.mxu0
      %v5897 = vadd.f32 %v5828, %v5896
      %5898 = vmatmul.bf16.gmra.mxu0 %v5335
      %v5899 = vpop.f32.mrf.mxu0
      %v5900 = vadd.f32 %v5831, %v5899
      %v5901 = vpop.f32.mrf.mxu0
      %v5902 = vadd.f32 %v5833, %v5901
      %5903 = vmatmul.bf16.gmra.mxu0 %v5353
      %v5904 = vpop.f32.mrf.mxu0
      %v5905 = vadd.f32 %v5836, %v5904
      %v5906 = vpop.f32.mrf.mxu0
      %v5907 = vadd.f32 %v5838, %v5906
      %5908 = vmatmul.bf16.gmra.mxu0 %v5371
      %v5909 = vpop.f32.mrf.mxu0
      %v5910 = vadd.f32 %v5841, %v5909
      %v5911 = vpop.f32.mrf.mxu0
      %v5912 = vadd.f32 %v5843, %v5911
      %5913 = vmatmul.bf16.gmra.mxu0 %v5389
      %v5914 = vpop.f32.mrf.mxu0
      %v5915 = vadd.f32 %v5846, %v5914
      %v5916 = vpop.f32.mrf.mxu0
      %v5917 = vadd.f32 %v5848, %v5916
      %5918 = vmatmul.bf16.gmra.mxu0 %v5407
      %v5919 = vpop.f32.mrf.mxu0
      %v5920 = vadd.f32 %v5851, %v5919
      %v5921 = vpop.f32.mrf.mxu0
      %v5922 = vadd.f32 %v5853, %v5921
      %5923 = vmatmul.bf16.gmra.mxu0 %v5425
      %v5924 = vpop.f32.mrf.mxu0
      %v5925 = vadd.f32 %v5856, %v5924
      %v5926 = vpop.f32.mrf.mxu0
      %v5927 = vadd.f32 %v5858, %v5926
      %5928 = vmatmul.bf16.gmra.mxu0 %v5443
      %v5929 = vpop.f32.mrf.mxu0
      %v5930 = vadd.f32 %v5861, %v5929
      %v5931 = vpop.f32.mrf.mxu0
      %v5932 = vadd.f32 %v5863, %v5931
      %5933 = vmatmul.bf16.gmra.mxu0 %v5461
      %v5934 = vpop.f32.mrf.mxu0
      %v5935 = vadd.f32 %v5866, %v5934
      %v5936 = vpop.f32.mrf.mxu0
      %v5937 = vadd.f32 %v5868, %v5936
      %5938 = vmatmul.bf16.gmra.mxu0 %v5479
      %v5939 = vpop.f32.mrf.mxu0
      %v5940 = vadd.f32 %v5871, %v5939
      %v5941 = vpop.f32.mrf.mxu0
      %v5942 = vadd.f32 %v5873, %v5941
      %5943 = vmatmul.bf16.gmra.mxu0 %v5497
      %v5944 = vpop.f32.mrf.mxu0
      %v5945 = vadd.f32 %v5876, %v5944
      %v5946 = vpop.f32.mrf.mxu0
      %v5947 = vadd.f32 %v5878, %v5946
      %5948 = vmatmul.bf16.gmra.mxu0 %v5515
      %v5949 = vpop.f32.mrf.mxu0
      %v5950 = vadd.f32 %v5881, %v5949
      %v5951 = vpop.f32.mrf.mxu0
      %v5952 = vadd.f32 %v5883, %v5951
      %5953 = vdwg.mxu0
      %5954 = vmatpush.bf16.msra.mxu0 %v4338
      %5955 = vmatpush.bf16.msra.mxu0 %v4337
      %5956 = vmatpush.bf16.msra.mxu0 %v4336
      %5957 = vmatpush.bf16.msra.mxu0 %v4335
      %5958 = vmatpush.bf16.msra.mxu0 %v4334
      %5959 = vmatpush.bf16.msra.mxu0 %v4333
      %5960 = vmatpush.bf16.msra.mxu0 %v4332
      %5961 = vmatpush.bf16.msra.mxu0 %v4331
      %5962 = vmatmul.bf16.gmra.mxu0 %v5318
      %v5963 = vpop.f32.mrf.mxu0
      %v5964 = vadd.f32 %v5895, %v5963
      %v5965 = vpop.f32.mrf.mxu0
      %v5966 = vadd.f32 %v5897, %v5965
      %5967 = vmatmul.bf16.gmra.mxu0 %v5336
      %v5968 = vpop.f32.mrf.mxu0
      %v5969 = vadd.f32 %v5900, %v5968
      %v5970 = vpop.f32.mrf.mxu0
      %v5971 = vadd.f32 %v5902, %v5970
      %5972 = vmatmul.bf16.gmra.mxu0 %v5354
      %v5973 = vpop.f32.mrf.mxu0
      %v5974 = vadd.f32 %v5905, %v5973
      %v5975 = vpop.f32.mrf.mxu0
      %v5976 = vadd.f32 %v5907, %v5975
      %5977 = vmatmul.bf16.gmra.mxu0 %v5372
      %v5978 = vpop.f32.mrf.mxu0
      %v5979 = vadd.f32 %v5910, %v5978
      %v5980 = vpop.f32.mrf.mxu0
      %v5981 = vadd.f32 %v5912, %v5980
      %5982 = vmatmul.bf16.gmra.mxu0 %v5390
      %v5983 = vpop.f32.mrf.mxu0
      %v5984 = vadd.f32 %v5915, %v5983
      %v5985 = vpop.f32.mrf.mxu0
      %v5986 = vadd.f32 %v5917, %v5985
      %5987 = vmatmul.bf16.gmra.mxu0 %v5408
      %v5988 = vpop.f32.mrf.mxu0
      %v5989 = vadd.f32 %v5920, %v5988
      %v5990 = vpop.f32.mrf.mxu0
      %v5991 = vadd.f32 %v5922, %v5990
      %5992 = vmatmul.bf16.gmra.mxu0 %v5426
      %v5993 = vpop.f32.mrf.mxu0
      %v5994 = vadd.f32 %v5925, %v5993
      %v5995 = vpop.f32.mrf.mxu0
      %v5996 = vadd.f32 %v5927, %v5995
      %5997 = vmatmul.bf16.gmra.mxu0 %v5444
      %v5998 = vpop.f32.mrf.mxu0
      %v5999 = vadd.f32 %v5930, %v5998
      %v6000 = vpop.f32.mrf.mxu0
      %v6001 = vadd.f32 %v5932, %v6000
      %6002 = vmatmul.bf16.gmra.mxu0 %v5462
      %v6003 = vpop.f32.mrf.mxu0
      %v6004 = vadd.f32 %v5935, %v6003
      %v6005 = vpop.f32.mrf.mxu0
      %v6006 = vadd.f32 %v5937, %v6005
      %6007 = vmatmul.bf16.gmra.mxu0 %v5480
      %v6008 = vpop.f32.mrf.mxu0
      %v6009 = vadd.f32 %v5940, %v6008
      %v6010 = vpop.f32.mrf.mxu0
      %v6011 = vadd.f32 %v5942, %v6010
      %6012 = vmatmul.bf16.gmra.mxu0 %v5498
      %v6013 = vpop.f32.mrf.mxu0
      %v6014 = vadd.f32 %v5945, %v6013
      %v6015 = vpop.f32.mrf.mxu0
      %v6016 = vadd.f32 %v5947, %v6015
      %6017 = vmatmul.bf16.gmra.mxu0 %v5516
      %v6018 = vpop.f32.mrf.mxu0
      %v6019 = vadd.f32 %v5950, %v6018
      %v6020 = vpop.f32.mrf.mxu0
      %v6021 = vadd.f32 %v5952, %v6020
      %6022 = vdwg.mxu0
      %6023 = vmatpush.bf16.msra.mxu0 %v4346
      %6024 = vmatpush.bf16.msra.mxu0 %v4345
      %6025 = vmatpush.bf16.msra.mxu0 %v4344
      %6026 = vmatpush.bf16.msra.mxu0 %v4343
      %6027 = vmatpush.bf16.msra.mxu0 %v4342
      %6028 = vmatpush.bf16.msra.mxu0 %v4341
      %6029 = vmatpush.bf16.msra.mxu0 %v4340
      %6030 = vmatpush.bf16.msra.mxu0 %v4339
      %6031 = vmatmul.bf16.gmra.mxu0 %v5319
      %v6032 = vpop.f32.mrf.mxu0
      %v6033 = vadd.f32 %v5964, %v6032
      %v6034 = vpop.f32.mrf.mxu0
      %v6035 = vadd.f32 %v5966, %v6034
      %6036 = vmatmul.bf16.gmra.mxu0 %v5337
      %v6037 = vpop.f32.mrf.mxu0
      %v6038 = vadd.f32 %v5969, %v6037
      %v6039 = vpop.f32.mrf.mxu0
      %v6040 = vadd.f32 %v5971, %v6039
      %6041 = vmatmul.bf16.gmra.mxu0 %v5355
      %v6042 = vpop.f32.mrf.mxu0
      %v6043 = vadd.f32 %v5974, %v6042
      %v6044 = vpop.f32.mrf.mxu0
      %v6045 = vadd.f32 %v5976, %v6044
      %6046 = vmatmul.bf16.gmra.mxu0 %v5373
      %v6047 = vpop.f32.mrf.mxu0
      %v6048 = vadd.f32 %v5979, %v6047
      %v6049 = vpop.f32.mrf.mxu0
      %v6050 = vadd.f32 %v5981, %v6049
      %6051 = vmatmul.bf16.gmra.mxu0 %v5391
      %v6052 = vpop.f32.mrf.mxu0
      %v6053 = vadd.f32 %v5984, %v6052
      %v6054 = vpop.f32.mrf.mxu0
      %v6055 = vadd.f32 %v5986, %v6054
      %6056 = vmatmul.bf16.gmra.mxu0 %v5409
      %v6057 = vpop.f32.mrf.mxu0
      %v6058 = vadd.f32 %v5989, %v6057
      %v6059 = vpop.f32.mrf.mxu0
      %v6060 = vadd.f32 %v5991, %v6059
      %6061 = vmatmul.bf16.gmra.mxu0 %v5427
      %v6062 = vpop.f32.mrf.mxu0
      %v6063 = vadd.f32 %v5994, %v6062
      %v6064 = vpop.f32.mrf.mxu0
      %v6065 = vadd.f32 %v5996, %v6064
      %6066 = vmatmul.bf16.gmra.mxu0 %v5445
      %v6067 = vpop.f32.mrf.mxu0
      %v6068 = vadd.f32 %v5999, %v6067
      %v6069 = vpop.f32.mrf.mxu0
      %v6070 = vadd.f32 %v6001, %v6069
      %6071 = vmatmul.bf16.gmra.mxu0 %v5463
      %v6072 = vpop.f32.mrf.mxu0
      %v6073 = vadd.f32 %v6004, %v6072
      %v6074 = vpop.f32.mrf.mxu0
      %v6075 = vadd.f32 %v6006, %v6074
      %6076 = vmatmul.bf16.gmra.mxu0 %v5481
      %v6077 = vpop.f32.mrf.mxu0
      %v6078 = vadd.f32 %v6009, %v6077
      %v6079 = vpop.f32.mrf.mxu0
      %v6080 = vadd.f32 %v6011, %v6079
      %6081 = vmatmul.bf16.gmra.mxu0 %v5499
      %v6082 = vpop.f32.mrf.mxu0
      %v6083 = vadd.f32 %v6014, %v6082
      %v6084 = vpop.f32.mrf.mxu0
      %v6085 = vadd.f32 %v6016, %v6084
      %6086 = vmatmul.bf16.gmra.mxu0 %v5517
      %v6087 = vpop.f32.mrf.mxu0
      %v6088 = vadd.f32 %v6019, %v6087
      %v6089 = vpop.f32.mrf.mxu0
      %v6090 = vadd.f32 %v6021, %v6089
      %6091 = vdwg.mxu0
      %6092 = vmatpush.bf16.msra.mxu0 %v4354
      %6093 = vmatpush.bf16.msra.mxu0 %v4353
      %6094 = vmatpush.bf16.msra.mxu0 %v4352
      %6095 = vmatpush.bf16.msra.mxu0 %v4351
      %6096 = vmatpush.bf16.msra.mxu0 %v4350
      %6097 = vmatpush.bf16.msra.mxu0 %v4349
      %6098 = vmatpush.bf16.msra.mxu0 %v4348
      %6099 = vmatpush.bf16.msra.mxu0 %v4347
      %6100 = vmatmul.bf16.gmra.mxu0 %v5320
      %v6101 = vpop.f32.mrf.mxu0
      %v6102 = vadd.f32 %v6033, %v6101
      %v6103 = vpop.f32.mrf.mxu0
      %v6104 = vadd.f32 %v6035, %v6103
      %6105 = vmatmul.bf16.gmra.mxu0 %v5338
      %v6106 = vpop.f32.mrf.mxu0
      %v6107 = vadd.f32 %v6038, %v6106
      %v6108 = vpop.f32.mrf.mxu0
      %v6109 = vadd.f32 %v6040, %v6108
      %6110 = vmatmul.bf16.gmra.mxu0 %v5356
      %v6111 = vpop.f32.mrf.mxu0
      %v6112 = vadd.f32 %v6043, %v6111
      %v6113 = vpop.f32.mrf.mxu0
      %v6114 = vadd.f32 %v6045, %v6113
      %6115 = vmatmul.bf16.gmra.mxu0 %v5374
      %v6116 = vpop.f32.mrf.mxu0
      %v6117 = vadd.f32 %v6048, %v6116
      %v6118 = vpop.f32.mrf.mxu0
      %v6119 = vadd.f32 %v6050, %v6118
      %6120 = vmatmul.bf16.gmra.mxu0 %v5392
      %v6121 = vpop.f32.mrf.mxu0
      %v6122 = vadd.f32 %v6053, %v6121
      %v6123 = vpop.f32.mrf.mxu0
      %v6124 = vadd.f32 %v6055, %v6123
      %6125 = vmatmul.bf16.gmra.mxu0 %v5410
      %v6126 = vpop.f32.mrf.mxu0
      %v6127 = vadd.f32 %v6058, %v6126
      %v6128 = vpop.f32.mrf.mxu0
      %v6129 = vadd.f32 %v6060, %v6128
      %6130 = vmatmul.bf16.gmra.mxu0 %v5428
      %v6131 = vpop.f32.mrf.mxu0
      %v6132 = vadd.f32 %v6063, %v6131
      %v6133 = vpop.f32.mrf.mxu0
      %v6134 = vadd.f32 %v6065, %v6133
      %6135 = vmatmul.bf16.gmra.mxu0 %v5446
      %v6136 = vpop.f32.mrf.mxu0
      %v6137 = vadd.f32 %v6068, %v6136
      %v6138 = vpop.f32.mrf.mxu0
      %v6139 = vadd.f32 %v6070, %v6138
      %6140 = vmatmul.bf16.gmra.mxu0 %v5464
      %v6141 = vpop.f32.mrf.mxu0
      %v6142 = vadd.f32 %v6073, %v6141
      %v6143 = vpop.f32.mrf.mxu0
      %v6144 = vadd.f32 %v6075, %v6143
      %6145 = vmatmul.bf16.gmra.mxu0 %v5482
      %v6146 = vpop.f32.mrf.mxu0
      %v6147 = vadd.f32 %v6078, %v6146
      %v6148 = vpop.f32.mrf.mxu0
      %v6149 = vadd.f32 %v6080, %v6148
      %6150 = vmatmul.bf16.gmra.mxu0 %v5500
      %v6151 = vpop.f32.mrf.mxu0
      %v6152 = vadd.f32 %v6083, %v6151
      %v6153 = vpop.f32.mrf.mxu0
      %v6154 = vadd.f32 %v6085, %v6153
      %6155 = vmatmul.bf16.gmra.mxu0 %v5518
      %v6156 = vpop.f32.mrf.mxu0
      %v6157 = vadd.f32 %v6088, %v6156
      %v6158 = vpop.f32.mrf.mxu0
      %v6159 = vadd.f32 %v6090, %v6158
      %6160 = vdwg.mxu0
      %6161 = vmatpush.bf16.msra.mxu0 %v4362
      %6162 = vmatpush.bf16.msra.mxu0 %v4361
      %6163 = vmatpush.bf16.msra.mxu0 %v4360
      %6164 = vmatpush.bf16.msra.mxu0 %v4359
      %6165 = vmatpush.bf16.msra.mxu0 %v4358
      %6166 = vmatpush.bf16.msra.mxu0 %v4357
      %6167 = vmatpush.bf16.msra.mxu0 %v4356
      %6168 = vmatpush.bf16.msra.mxu0 %v4355
      %6169 = vmatmul.bf16.gmra.mxu0 %v5321
      %v6170 = vpop.f32.mrf.mxu0
      %v6171 = vadd.f32 %v6102, %v6170
      %v6172 = vpop.f32.mrf.mxu0
      %v6173 = vadd.f32 %v6104, %v6172
      %6174 = vmatmul.bf16.gmra.mxu0 %v5339
      %v6175 = vpop.f32.mrf.mxu0
      %v6176 = vadd.f32 %v6107, %v6175
      %v6177 = vpop.f32.mrf.mxu0
      %v6178 = vadd.f32 %v6109, %v6177
      %6179 = vmatmul.bf16.gmra.mxu0 %v5357
      %v6180 = vpop.f32.mrf.mxu0
      %v6181 = vadd.f32 %v6112, %v6180
      %v6182 = vpop.f32.mrf.mxu0
      %v6183 = vadd.f32 %v6114, %v6182
      %6184 = vmatmul.bf16.gmra.mxu0 %v5375
      %v6185 = vpop.f32.mrf.mxu0
      %v6186 = vadd.f32 %v6117, %v6185
      %v6187 = vpop.f32.mrf.mxu0
      %v6188 = vadd.f32 %v6119, %v6187
      %6189 = vmatmul.bf16.gmra.mxu0 %v5393
      %v6190 = vpop.f32.mrf.mxu0
      %v6191 = vadd.f32 %v6122, %v6190
      %v6192 = vpop.f32.mrf.mxu0
      %v6193 = vadd.f32 %v6124, %v6192
      %6194 = vmatmul.bf16.gmra.mxu0 %v5411
      %v6195 = vpop.f32.mrf.mxu0
      %v6196 = vadd.f32 %v6127, %v6195
      %v6197 = vpop.f32.mrf.mxu0
      %v6198 = vadd.f32 %v6129, %v6197
      %6199 = vmatmul.bf16.gmra.mxu0 %v5429
      %v6200 = vpop.f32.mrf.mxu0
      %v6201 = vadd.f32 %v6132, %v6200
      %v6202 = vpop.f32.mrf.mxu0
      %v6203 = vadd.f32 %v6134, %v6202
      %6204 = vmatmul.bf16.gmra.mxu0 %v5447
      %v6205 = vpop.f32.mrf.mxu0
      %v6206 = vadd.f32 %v6137, %v6205
      %v6207 = vpop.f32.mrf.mxu0
      %v6208 = vadd.f32 %v6139, %v6207
      %6209 = vmatmul.bf16.gmra.mxu0 %v5465
      %v6210 = vpop.f32.mrf.mxu0
      %v6211 = vadd.f32 %v6142, %v6210
      %v6212 = vpop.f32.mrf.mxu0
      %v6213 = vadd.f32 %v6144, %v6212
      %6214 = vmatmul.bf16.gmra.mxu0 %v5483
      %v6215 = vpop.f32.mrf.mxu0
      %v6216 = vadd.f32 %v6147, %v6215
      %v6217 = vpop.f32.mrf.mxu0
      %v6218 = vadd.f32 %v6149, %v6217
      %6219 = vmatmul.bf16.gmra.mxu0 %v5501
      %v6220 = vpop.f32.mrf.mxu0
      %v6221 = vadd.f32 %v6152, %v6220
      %v6222 = vpop.f32.mrf.mxu0
      %v6223 = vadd.f32 %v6154, %v6222
      %6224 = vmatmul.bf16.gmra.mxu0 %v5519
      %v6225 = vpop.f32.mrf.mxu0
      %v6226 = vadd.f32 %v6157, %v6225
      %v6227 = vpop.f32.mrf.mxu0
      %v6228 = vadd.f32 %v6159, %v6227
      %6229 = vdwg.mxu0
      %6230 = vmatpush.bf16.msra.mxu0 %v4370
      %6231 = vmatpush.bf16.msra.mxu0 %v4369
      %6232 = vmatpush.bf16.msra.mxu0 %v4368
      %6233 = vmatpush.bf16.msra.mxu0 %v4367
      %6234 = vmatpush.bf16.msra.mxu0 %v4366
      %6235 = vmatpush.bf16.msra.mxu0 %v4365
      %6236 = vmatpush.bf16.msra.mxu0 %v4364
      %6237 = vmatpush.bf16.msra.mxu0 %v4363
      %6238 = vmatmul.bf16.gmra.mxu0 %v5322
      %v6239 = vpop.f32.mrf.mxu0
      %v6240 = vadd.f32 %v6171, %v6239
      %v6241 = vpop.f32.mrf.mxu0
      %v6242 = vadd.f32 %v6173, %v6241
      %6243 = vmatmul.bf16.gmra.mxu0 %v5340
      %v6244 = vpop.f32.mrf.mxu0
      %v6245 = vadd.f32 %v6176, %v6244
      %v6246 = vpop.f32.mrf.mxu0
      %v6247 = vadd.f32 %v6178, %v6246
      %6248 = vmatmul.bf16.gmra.mxu0 %v5358
      %v6249 = vpop.f32.mrf.mxu0
      %v6250 = vadd.f32 %v6181, %v6249
      %v6251 = vpop.f32.mrf.mxu0
      %v6252 = vadd.f32 %v6183, %v6251
      %6253 = vmatmul.bf16.gmra.mxu0 %v5376
      %v6254 = vpop.f32.mrf.mxu0
      %v6255 = vadd.f32 %v6186, %v6254
      %v6256 = vpop.f32.mrf.mxu0
      %v6257 = vadd.f32 %v6188, %v6256
      %6258 = vmatmul.bf16.gmra.mxu0 %v5394
      %v6259 = vpop.f32.mrf.mxu0
      %v6260 = vadd.f32 %v6191, %v6259
      %v6261 = vpop.f32.mrf.mxu0
      %v6262 = vadd.f32 %v6193, %v6261
      %6263 = vmatmul.bf16.gmra.mxu0 %v5412
      %v6264 = vpop.f32.mrf.mxu0
      %v6265 = vadd.f32 %v6196, %v6264
      %v6266 = vpop.f32.mrf.mxu0
      %v6267 = vadd.f32 %v6198, %v6266
      %6268 = vmatmul.bf16.gmra.mxu0 %v5430
      %v6269 = vpop.f32.mrf.mxu0
      %v6270 = vadd.f32 %v6201, %v6269
      %v6271 = vpop.f32.mrf.mxu0
      %v6272 = vadd.f32 %v6203, %v6271
      %6273 = vmatmul.bf16.gmra.mxu0 %v5448
      %v6274 = vpop.f32.mrf.mxu0
      %v6275 = vadd.f32 %v6206, %v6274
      %v6276 = vpop.f32.mrf.mxu0
      %v6277 = vadd.f32 %v6208, %v6276
      %6278 = vmatmul.bf16.gmra.mxu0 %v5466
      %v6279 = vpop.f32.mrf.mxu0
      %v6280 = vadd.f32 %v6211, %v6279
      %v6281 = vpop.f32.mrf.mxu0
      %v6282 = vadd.f32 %v6213, %v6281
      %6283 = vmatmul.bf16.gmra.mxu0 %v5484
      %v6284 = vpop.f32.mrf.mxu0
      %v6285 = vadd.f32 %v6216, %v6284
      %v6286 = vpop.f32.mrf.mxu0
      %v6287 = vadd.f32 %v6218, %v6286
      %6288 = vmatmul.bf16.gmra.mxu0 %v5502
      %v6289 = vpop.f32.mrf.mxu0
      %v6290 = vadd.f32 %v6221, %v6289
      %v6291 = vpop.f32.mrf.mxu0
      %v6292 = vadd.f32 %v6223, %v6291
      %6293 = vmatmul.bf16.gmra.mxu0 %v5520
      %v6294 = vpop.f32.mrf.mxu0
      %v6295 = vadd.f32 %v6226, %v6294
      %v6296 = vpop.f32.mrf.mxu0
      %v6297 = vadd.f32 %v6228, %v6296
      %6298 = vdwg.mxu0
      %6299 = vmatpush.bf16.msra.mxu0 %v4378
      %6300 = vmatpush.bf16.msra.mxu0 %v4377
      %6301 = vmatpush.bf16.msra.mxu0 %v4376
      %6302 = vmatpush.bf16.msra.mxu0 %v4375
      %6303 = vmatpush.bf16.msra.mxu0 %v4374
      %6304 = vmatpush.bf16.msra.mxu0 %v4373
      %6305 = vmatpush.bf16.msra.mxu0 %v4372
      %6306 = vmatpush.bf16.msra.mxu0 %v4371
      %6307 = vmatmul.bf16.gmra.mxu0 %v5323
      %v6308 = vpop.f32.mrf.mxu0
      %v6309 = vadd.f32 %v6240, %v6308
      %v6310 = vpop.f32.mrf.mxu0
      %v6311 = vadd.f32 %v6242, %v6310
      %6312 = vmatmul.bf16.gmra.mxu0 %v5341
      %v6313 = vpop.f32.mrf.mxu0
      %v6314 = vadd.f32 %v6245, %v6313
      %v6315 = vpop.f32.mrf.mxu0
      %v6316 = vadd.f32 %v6247, %v6315
      %6317 = vmatmul.bf16.gmra.mxu0 %v5359
      %v6318 = vpop.f32.mrf.mxu0
      %v6319 = vadd.f32 %v6250, %v6318
      %v6320 = vpop.f32.mrf.mxu0
      %v6321 = vadd.f32 %v6252, %v6320
      %6322 = vmatmul.bf16.gmra.mxu0 %v5377
      %v6323 = vpop.f32.mrf.mxu0
      %v6324 = vadd.f32 %v6255, %v6323
      %v6325 = vpop.f32.mrf.mxu0
      %v6326 = vadd.f32 %v6257, %v6325
      %6327 = vmatmul.bf16.gmra.mxu0 %v5395
      %v6328 = vpop.f32.mrf.mxu0
      %v6329 = vadd.f32 %v6260, %v6328
      %v6330 = vpop.f32.mrf.mxu0
      %v6331 = vadd.f32 %v6262, %v6330
      %6332 = vmatmul.bf16.gmra.mxu0 %v5413
      %v6333 = vpop.f32.mrf.mxu0
      %v6334 = vadd.f32 %v6265, %v6333
      %v6335 = vpop.f32.mrf.mxu0
      %v6336 = vadd.f32 %v6267, %v6335
      %6337 = vmatmul.bf16.gmra.mxu0 %v5431
      %v6338 = vpop.f32.mrf.mxu0
      %v6339 = vadd.f32 %v6270, %v6338
      %v6340 = vpop.f32.mrf.mxu0
      %v6341 = vadd.f32 %v6272, %v6340
      %6342 = vmatmul.bf16.gmra.mxu0 %v5449
      %v6343 = vpop.f32.mrf.mxu0
      %v6344 = vadd.f32 %v6275, %v6343
      %v6345 = vpop.f32.mrf.mxu0
      %v6346 = vadd.f32 %v6277, %v6345
      %6347 = vmatmul.bf16.gmra.mxu0 %v5467
      %v6348 = vpop.f32.mrf.mxu0
      %v6349 = vadd.f32 %v6280, %v6348
      %v6350 = vpop.f32.mrf.mxu0
      %v6351 = vadd.f32 %v6282, %v6350
      %6352 = vmatmul.bf16.gmra.mxu0 %v5485
      %v6353 = vpop.f32.mrf.mxu0
      %v6354 = vadd.f32 %v6285, %v6353
      %v6355 = vpop.f32.mrf.mxu0
      %v6356 = vadd.f32 %v6287, %v6355
      %6357 = vmatmul.bf16.gmra.mxu0 %v5503
      %v6358 = vpop.f32.mrf.mxu0
      %v6359 = vadd.f32 %v6290, %v6358
      %v6360 = vpop.f32.mrf.mxu0
      %v6361 = vadd.f32 %v6292, %v6360
      %6362 = vmatmul.bf16.gmra.mxu0 %v5521
      %v6363 = vpop.f32.mrf.mxu0
      %v6364 = vadd.f32 %v6295, %v6363
      %v6365 = vpop.f32.mrf.mxu0
      %v6366 = vadd.f32 %v6297, %v6365
      %6367 = vdwg.mxu0
      %6368 = vmatpush.bf16.msra.mxu0 %v4386
      %6369 = vmatpush.bf16.msra.mxu0 %v4385
      %6370 = vmatpush.bf16.msra.mxu0 %v4384
      %6371 = vmatpush.bf16.msra.mxu0 %v4383
      %6372 = vmatpush.bf16.msra.mxu0 %v4382
      %6373 = vmatpush.bf16.msra.mxu0 %v4381
      %6374 = vmatpush.bf16.msra.mxu0 %v4380
      %6375 = vmatpush.bf16.msra.mxu0 %v4379
      %6376 = vmatmul.bf16.gmra.mxu0 %v5324
      %v6377 = vpop.f32.mrf.mxu0
      %v6378 = vadd.f32 %v6309, %v6377
      %v6379 = vpop.f32.mrf.mxu0
      %v6380 = vadd.f32 %v6311, %v6379
      %6381 = vmatmul.bf16.gmra.mxu0 %v5342
      %v6382 = vpop.f32.mrf.mxu0
      %v6383 = vadd.f32 %v6314, %v6382
      %v6384 = vpop.f32.mrf.mxu0
      %v6385 = vadd.f32 %v6316, %v6384
      %6386 = vmatmul.bf16.gmra.mxu0 %v5360
      %v6387 = vpop.f32.mrf.mxu0
      %v6388 = vadd.f32 %v6319, %v6387
      %v6389 = vpop.f32.mrf.mxu0
      %v6390 = vadd.f32 %v6321, %v6389
      %6391 = vmatmul.bf16.gmra.mxu0 %v5378
      %v6392 = vpop.f32.mrf.mxu0
      %v6393 = vadd.f32 %v6324, %v6392
      %v6394 = vpop.f32.mrf.mxu0
      %v6395 = vadd.f32 %v6326, %v6394
      %6396 = vmatmul.bf16.gmra.mxu0 %v5396
      %v6397 = vpop.f32.mrf.mxu0
      %v6398 = vadd.f32 %v6329, %v6397
      %v6399 = vpop.f32.mrf.mxu0
      %v6400 = vadd.f32 %v6331, %v6399
      %6401 = vmatmul.bf16.gmra.mxu0 %v5414
      %v6402 = vpop.f32.mrf.mxu0
      %v6403 = vadd.f32 %v6334, %v6402
      %v6404 = vpop.f32.mrf.mxu0
      %v6405 = vadd.f32 %v6336, %v6404
      %6406 = vmatmul.bf16.gmra.mxu0 %v5432
      %v6407 = vpop.f32.mrf.mxu0
      %v6408 = vadd.f32 %v6339, %v6407
      %v6409 = vpop.f32.mrf.mxu0
      %v6410 = vadd.f32 %v6341, %v6409
      %6411 = vmatmul.bf16.gmra.mxu0 %v5450
      %v6412 = vpop.f32.mrf.mxu0
      %v6413 = vadd.f32 %v6344, %v6412
      %v6414 = vpop.f32.mrf.mxu0
      %v6415 = vadd.f32 %v6346, %v6414
      %6416 = vmatmul.bf16.gmra.mxu0 %v5468
      %v6417 = vpop.f32.mrf.mxu0
      %v6418 = vadd.f32 %v6349, %v6417
      %v6419 = vpop.f32.mrf.mxu0
      %v6420 = vadd.f32 %v6351, %v6419
      %6421 = vmatmul.bf16.gmra.mxu0 %v5486
      %v6422 = vpop.f32.mrf.mxu0
      %v6423 = vadd.f32 %v6354, %v6422
      %v6424 = vpop.f32.mrf.mxu0
      %v6425 = vadd.f32 %v6356, %v6424
      %6426 = vmatmul.bf16.gmra.mxu0 %v5504
      %v6427 = vpop.f32.mrf.mxu0
      %v6428 = vadd.f32 %v6359, %v6427
      %v6429 = vpop.f32.mrf.mxu0
      %v6430 = vadd.f32 %v6361, %v6429
      %6431 = vmatmul.bf16.gmra.mxu0 %v5522
      %v6432 = vpop.f32.mrf.mxu0
      %v6433 = vadd.f32 %v6364, %v6432
      %v6434 = vpop.f32.mrf.mxu0
      %v6435 = vadd.f32 %v6366, %v6434
      %6436 = vdwg.mxu0
      %6437 = vmatpush.bf16.msra.mxu0 %v4394
      %6438 = vmatpush.bf16.msra.mxu0 %v4393
      %6439 = vmatpush.bf16.msra.mxu0 %v4392
      %6440 = vmatpush.bf16.msra.mxu0 %v4391
      %6441 = vmatpush.bf16.msra.mxu0 %v4390
      %6442 = vmatpush.bf16.msra.mxu0 %v4389
      %6443 = vmatpush.bf16.msra.mxu0 %v4388
      %6444 = vmatpush.bf16.msra.mxu0 %v4387
      %6445 = vmatmul.bf16.gmra.mxu0 %v5325
      %v6446 = vpop.f32.mrf.mxu0
      %v6447 = vadd.f32 %v6378, %v6446
      %v6448 = vpop.f32.mrf.mxu0
      %v6449 = vadd.f32 %v6380, %v6448
      %6450 = vmatmul.bf16.gmra.mxu0 %v5343
      %v6451 = vpop.f32.mrf.mxu0
      %v6452 = vadd.f32 %v6383, %v6451
      %v6453 = vpop.f32.mrf.mxu0
      %v6454 = vadd.f32 %v6385, %v6453
      %6455 = vmatmul.bf16.gmra.mxu0 %v5361
      %v6456 = vpop.f32.mrf.mxu0
      %v6457 = vadd.f32 %v6388, %v6456
      %v6458 = vpop.f32.mrf.mxu0
      %v6459 = vadd.f32 %v6390, %v6458
      %6460 = vmatmul.bf16.gmra.mxu0 %v5379
      %v6461 = vpop.f32.mrf.mxu0
      %v6462 = vadd.f32 %v6393, %v6461
      %v6463 = vpop.f32.mrf.mxu0
      %v6464 = vadd.f32 %v6395, %v6463
      %6465 = vmatmul.bf16.gmra.mxu0 %v5397
      %v6466 = vpop.f32.mrf.mxu0
      %v6467 = vadd.f32 %v6398, %v6466
      %v6468 = vpop.f32.mrf.mxu0
      %v6469 = vadd.f32 %v6400, %v6468
      %6470 = vmatmul.bf16.gmra.mxu0 %v5415
      %v6471 = vpop.f32.mrf.mxu0
      %v6472 = vadd.f32 %v6403, %v6471
      %v6473 = vpop.f32.mrf.mxu0
      %v6474 = vadd.f32 %v6405, %v6473
      %6475 = vmatmul.bf16.gmra.mxu0 %v5433
      %v6476 = vpop.f32.mrf.mxu0
      %v6477 = vadd.f32 %v6408, %v6476
      %v6478 = vpop.f32.mrf.mxu0
      %v6479 = vadd.f32 %v6410, %v6478
      %6480 = vmatmul.bf16.gmra.mxu0 %v5451
      %v6481 = vpop.f32.mrf.mxu0
      %v6482 = vadd.f32 %v6413, %v6481
      %v6483 = vpop.f32.mrf.mxu0
      %v6484 = vadd.f32 %v6415, %v6483
      %6485 = vmatmul.bf16.gmra.mxu0 %v5469
      %v6486 = vpop.f32.mrf.mxu0
      %v6487 = vadd.f32 %v6418, %v6486
      %v6488 = vpop.f32.mrf.mxu0
      %v6489 = vadd.f32 %v6420, %v6488
      %6490 = vmatmul.bf16.gmra.mxu0 %v5487
      %v6491 = vpop.f32.mrf.mxu0
      %v6492 = vadd.f32 %v6423, %v6491
      %v6493 = vpop.f32.mrf.mxu0
      %v6494 = vadd.f32 %v6425, %v6493
      %6495 = vmatmul.bf16.gmra.mxu0 %v5505
      %v6496 = vpop.f32.mrf.mxu0
      %v6497 = vadd.f32 %v6428, %v6496
      %v6498 = vpop.f32.mrf.mxu0
      %v6499 = vadd.f32 %v6430, %v6498
      %6500 = vmatmul.bf16.gmra.mxu0 %v5523
      %v6501 = vpop.f32.mrf.mxu0
      %v6502 = vadd.f32 %v6433, %v6501
      %v6503 = vpop.f32.mrf.mxu0
      %v6504 = vadd.f32 %v6435, %v6503
      %6505 = vdwg.mxu0
      %6506 = vmatpush.bf16.msra.mxu0 %v4402
      %6507 = vmatpush.bf16.msra.mxu0 %v4401
      %6508 = vmatpush.bf16.msra.mxu0 %v4400
      %6509 = vmatpush.bf16.msra.mxu0 %v4399
      %6510 = vmatpush.bf16.msra.mxu0 %v4398
      %6511 = vmatpush.bf16.msra.mxu0 %v4397
      %6512 = vmatpush.bf16.msra.mxu0 %v4396
      %6513 = vmatpush.bf16.msra.mxu0 %v4395
      %6514 = vmatmul.bf16.gmra.mxu0 %v5326
      %v6515 = vpop.f32.mrf.mxu0
      %v6516 = vadd.f32 %v6447, %v6515
      %v6517 = vpop.f32.mrf.mxu0
      %v6518 = vadd.f32 %v6449, %v6517
      %6519 = vmatmul.bf16.gmra.mxu0 %v5344
      %v6520 = vpop.f32.mrf.mxu0
      %v6521 = vadd.f32 %v6452, %v6520
      %v6522 = vpop.f32.mrf.mxu0
      %v6523 = vadd.f32 %v6454, %v6522
      %6524 = vmatmul.bf16.gmra.mxu0 %v5362
      %v6525 = vpop.f32.mrf.mxu0
      %v6526 = vadd.f32 %v6457, %v6525
      %v6527 = vpop.f32.mrf.mxu0
      %v6528 = vadd.f32 %v6459, %v6527
      %6529 = vmatmul.bf16.gmra.mxu0 %v5380
      %v6530 = vpop.f32.mrf.mxu0
      %v6531 = vadd.f32 %v6462, %v6530
      %v6532 = vpop.f32.mrf.mxu0
      %v6533 = vadd.f32 %v6464, %v6532
      %6534 = vmatmul.bf16.gmra.mxu0 %v5398
      %v6535 = vpop.f32.mrf.mxu0
      %v6536 = vadd.f32 %v6467, %v6535
      %v6537 = vpop.f32.mrf.mxu0
      %v6538 = vadd.f32 %v6469, %v6537
      %6539 = vmatmul.bf16.gmra.mxu0 %v5416
      %v6540 = vpop.f32.mrf.mxu0
      %v6541 = vadd.f32 %v6472, %v6540
      %v6542 = vpop.f32.mrf.mxu0
      %v6543 = vadd.f32 %v6474, %v6542
      %6544 = vmatmul.bf16.gmra.mxu0 %v5434
      %v6545 = vpop.f32.mrf.mxu0
      %v6546 = vadd.f32 %v6477, %v6545
      %v6547 = vpop.f32.mrf.mxu0
      %v6548 = vadd.f32 %v6479, %v6547
      %6549 = vmatmul.bf16.gmra.mxu0 %v5452
      %v6550 = vpop.f32.mrf.mxu0
      %v6551 = vadd.f32 %v6482, %v6550
      %v6552 = vpop.f32.mrf.mxu0
      %v6553 = vadd.f32 %v6484, %v6552
      %6554 = vmatmul.bf16.gmra.mxu0 %v5470
      %v6555 = vpop.f32.mrf.mxu0
      %v6556 = vadd.f32 %v6487, %v6555
      %v6557 = vpop.f32.mrf.mxu0
      %v6558 = vadd.f32 %v6489, %v6557
      %6559 = vmatmul.bf16.gmra.mxu0 %v5488
      %v6560 = vpop.f32.mrf.mxu0
      %v6561 = vadd.f32 %v6492, %v6560
      %v6562 = vpop.f32.mrf.mxu0
      %v6563 = vadd.f32 %v6494, %v6562
      %6564 = vmatmul.bf16.gmra.mxu0 %v5506
      %v6565 = vpop.f32.mrf.mxu0
      %v6566 = vadd.f32 %v6497, %v6565
      %v6567 = vpop.f32.mrf.mxu0
      %v6568 = vadd.f32 %v6499, %v6567
      %6569 = vmatmul.bf16.gmra.mxu0 %v5524
      %v6570 = vpop.f32.mrf.mxu0
      %v6571 = vadd.f32 %v6502, %v6570
      %v6572 = vpop.f32.mrf.mxu0
      %v6573 = vadd.f32 %v6504, %v6572
      %6574 = vdwg.mxu0
      %6575 = vmatpush.bf16.msra.mxu0 %v4410
      %6576 = vmatpush.bf16.msra.mxu0 %v4409
      %6577 = vmatpush.bf16.msra.mxu0 %v4408
      %6578 = vmatpush.bf16.msra.mxu0 %v4407
      %6579 = vmatpush.bf16.msra.mxu0 %v4406
      %6580 = vmatpush.bf16.msra.mxu0 %v4405
      %6581 = vmatpush.bf16.msra.mxu0 %v4404
      %6582 = vmatpush.bf16.msra.mxu0 %v4403
      %6583 = vmatmul.bf16.gmra.mxu0 %v5327
      %v6584 = vpop.f32.mrf.mxu0
      %v6585 = vadd.f32 %v6516, %v6584
      %v6586 = vpop.f32.mrf.mxu0
      %v6587 = vadd.f32 %v6518, %v6586
      %6588 = vmatmul.bf16.gmra.mxu0 %v5345
      %v6589 = vpop.f32.mrf.mxu0
      %v6590 = vadd.f32 %v6521, %v6589
      %v6591 = vpop.f32.mrf.mxu0
      %v6592 = vadd.f32 %v6523, %v6591
      %6593 = vmatmul.bf16.gmra.mxu0 %v5363
      %v6594 = vpop.f32.mrf.mxu0
      %v6595 = vadd.f32 %v6526, %v6594
      %v6596 = vpop.f32.mrf.mxu0
      %v6597 = vadd.f32 %v6528, %v6596
      %6598 = vmatmul.bf16.gmra.mxu0 %v5381
      %v6599 = vpop.f32.mrf.mxu0
      %v6600 = vadd.f32 %v6531, %v6599
      %v6601 = vpop.f32.mrf.mxu0
      %v6602 = vadd.f32 %v6533, %v6601
      %6603 = vmatmul.bf16.gmra.mxu0 %v5399
      %v6604 = vpop.f32.mrf.mxu0
      %v6605 = vadd.f32 %v6536, %v6604
      %v6606 = vpop.f32.mrf.mxu0
      %v6607 = vadd.f32 %v6538, %v6606
      %6608 = vmatmul.bf16.gmra.mxu0 %v5417
      %v6609 = vpop.f32.mrf.mxu0
      %v6610 = vadd.f32 %v6541, %v6609
      %v6611 = vpop.f32.mrf.mxu0
      %v6612 = vadd.f32 %v6543, %v6611
      %6613 = vmatmul.bf16.gmra.mxu0 %v5435
      %v6614 = vpop.f32.mrf.mxu0
      %v6615 = vadd.f32 %v6546, %v6614
      %v6616 = vpop.f32.mrf.mxu0
      %v6617 = vadd.f32 %v6548, %v6616
      %6618 = vmatmul.bf16.gmra.mxu0 %v5453
      %v6619 = vpop.f32.mrf.mxu0
      %v6620 = vadd.f32 %v6551, %v6619
      %v6621 = vpop.f32.mrf.mxu0
      %v6622 = vadd.f32 %v6553, %v6621
      %6623 = vmatmul.bf16.gmra.mxu0 %v5471
      %v6624 = vpop.f32.mrf.mxu0
      %v6625 = vadd.f32 %v6556, %v6624
      %v6626 = vpop.f32.mrf.mxu0
      %v6627 = vadd.f32 %v6558, %v6626
      %6628 = vmatmul.bf16.gmra.mxu0 %v5489
      %v6629 = vpop.f32.mrf.mxu0
      %v6630 = vadd.f32 %v6561, %v6629
      %v6631 = vpop.f32.mrf.mxu0
      %v6632 = vadd.f32 %v6563, %v6631
      %6633 = vmatmul.bf16.gmra.mxu0 %v5507
      %v6634 = vpop.f32.mrf.mxu0
      %v6635 = vadd.f32 %v6566, %v6634
      %v6636 = vpop.f32.mrf.mxu0
      %v6637 = vadd.f32 %v6568, %v6636
      %6638 = vmatmul.bf16.gmra.mxu0 %v5525
      %v6639 = vpop.f32.mrf.mxu0
      %v6640 = vadd.f32 %v6571, %v6639
      %v6641 = vpop.f32.mrf.mxu0
      %v6642 = vadd.f32 %v6573, %v6641
      %6643 = vdwg.mxu0
      %6644 = vmatpush.bf16.msra.mxu0 %v4418
      %6645 = vmatpush.bf16.msra.mxu0 %v4417
      %6646 = vmatpush.bf16.msra.mxu0 %v4416
      %6647 = vmatpush.bf16.msra.mxu0 %v4415
      %6648 = vmatpush.bf16.msra.mxu0 %v4414
      %6649 = vmatpush.bf16.msra.mxu0 %v4413
      %6650 = vmatpush.bf16.msra.mxu0 %v4412
      %6651 = vmatpush.bf16.msra.mxu0 %v4411
      %6652 = vmatmul.bf16.gmra.mxu0 %v5328
      %v6653 = vpop.f32.mrf.mxu0
      %v6654 = vadd.f32 %v6585, %v6653
      %v6655 = vpop.f32.mrf.mxu0
      %v6656 = vadd.f32 %v6587, %v6655
      %6657 = vmatmul.bf16.gmra.mxu0 %v5346
      %v6658 = vpop.f32.mrf.mxu0
      %v6659 = vadd.f32 %v6590, %v6658
      %v6660 = vpop.f32.mrf.mxu0
      %v6661 = vadd.f32 %v6592, %v6660
      %6662 = vmatmul.bf16.gmra.mxu0 %v5364
      %v6663 = vpop.f32.mrf.mxu0
      %v6664 = vadd.f32 %v6595, %v6663
      %v6665 = vpop.f32.mrf.mxu0
      %v6666 = vadd.f32 %v6597, %v6665
      %6667 = vmatmul.bf16.gmra.mxu0 %v5382
      %v6668 = vpop.f32.mrf.mxu0
      %v6669 = vadd.f32 %v6600, %v6668
      %v6670 = vpop.f32.mrf.mxu0
      %v6671 = vadd.f32 %v6602, %v6670
      %6672 = vmatmul.bf16.gmra.mxu0 %v5400
      %v6673 = vpop.f32.mrf.mxu0
      %v6674 = vadd.f32 %v6605, %v6673
      %v6675 = vpop.f32.mrf.mxu0
      %v6676 = vadd.f32 %v6607, %v6675
      %6677 = vmatmul.bf16.gmra.mxu0 %v5418
      %v6678 = vpop.f32.mrf.mxu0
      %v6679 = vadd.f32 %v6610, %v6678
      %v6680 = vpop.f32.mrf.mxu0
      %v6681 = vadd.f32 %v6612, %v6680
      %6682 = vmatmul.bf16.gmra.mxu0 %v5436
      %v6683 = vpop.f32.mrf.mxu0
      %v6684 = vadd.f32 %v6615, %v6683
      %v6685 = vpop.f32.mrf.mxu0
      %v6686 = vadd.f32 %v6617, %v6685
      %6687 = vmatmul.bf16.gmra.mxu0 %v5454
      %v6688 = vpop.f32.mrf.mxu0
      %v6689 = vadd.f32 %v6620, %v6688
      %v6690 = vpop.f32.mrf.mxu0
      %v6691 = vadd.f32 %v6622, %v6690
      %6692 = vmatmul.bf16.gmra.mxu0 %v5472
      %v6693 = vpop.f32.mrf.mxu0
      %v6694 = vadd.f32 %v6625, %v6693
      %v6695 = vpop.f32.mrf.mxu0
      %v6696 = vadd.f32 %v6627, %v6695
      %6697 = vmatmul.bf16.gmra.mxu0 %v5490
      %v6698 = vpop.f32.mrf.mxu0
      %v6699 = vadd.f32 %v6630, %v6698
      %v6700 = vpop.f32.mrf.mxu0
      %v6701 = vadd.f32 %v6632, %v6700
      %6702 = vmatmul.bf16.gmra.mxu0 %v5508
      %v6703 = vpop.f32.mrf.mxu0
      %v6704 = vadd.f32 %v6635, %v6703
      %v6705 = vpop.f32.mrf.mxu0
      %v6706 = vadd.f32 %v6637, %v6705
      %6707 = vmatmul.bf16.gmra.mxu0 %v5526
      %v6708 = vpop.f32.mrf.mxu0
      %v6709 = vadd.f32 %v6640, %v6708
      %v6710 = vpop.f32.mrf.mxu0
      %v6711 = vadd.f32 %v6642, %v6710
      %6712 = vdwg.mxu0
      %6713 = vmatpush.bf16.msra.mxu0 %v4426
      %6714 = vmatpush.bf16.msra.mxu0 %v4425
      %6715 = vmatpush.bf16.msra.mxu0 %v4424
      %6716 = vmatpush.bf16.msra.mxu0 %v4423
      %6717 = vmatpush.bf16.msra.mxu0 %v4422
      %6718 = vmatpush.bf16.msra.mxu0 %v4421
      %6719 = vmatpush.bf16.msra.mxu0 %v4420
      %6720 = vmatpush.bf16.msra.mxu0 %v4419
      %6721 = vmatmul.bf16.gmra.mxu0 %v5329
      %v6722 = vpop.f32.mrf.mxu0
      %v6723 = vadd.f32 %v6654, %v6722
      %v6724 = vpop.f32.mrf.mxu0
      %v6725 = vadd.f32 %v6656, %v6724
      %6726 = vmatmul.bf16.gmra.mxu0 %v5347
      %v6727 = vpop.f32.mrf.mxu0
      %v6728 = vadd.f32 %v6659, %v6727
      %v6729 = vpop.f32.mrf.mxu0
      %v6730 = vadd.f32 %v6661, %v6729
      %6731 = vmatmul.bf16.gmra.mxu0 %v5365
      %v6732 = vpop.f32.mrf.mxu0
      %v6733 = vadd.f32 %v6664, %v6732
      %v6734 = vpop.f32.mrf.mxu0
      %v6735 = vadd.f32 %v6666, %v6734
      %6736 = vmatmul.bf16.gmra.mxu0 %v5383
      %v6737 = vpop.f32.mrf.mxu0
      %v6738 = vadd.f32 %v6669, %v6737
      %v6739 = vpop.f32.mrf.mxu0
      %v6740 = vadd.f32 %v6671, %v6739
      %6741 = vmatmul.bf16.gmra.mxu0 %v5401
      %v6742 = vpop.f32.mrf.mxu0
      %v6743 = vadd.f32 %v6674, %v6742
      %v6744 = vpop.f32.mrf.mxu0
      %v6745 = vadd.f32 %v6676, %v6744
      %6746 = vmatmul.bf16.gmra.mxu0 %v5419
      %v6747 = vpop.f32.mrf.mxu0
      %v6748 = vadd.f32 %v6679, %v6747
      %v6749 = vpop.f32.mrf.mxu0
      %v6750 = vadd.f32 %v6681, %v6749
      %6751 = vmatmul.bf16.gmra.mxu0 %v5437
      %v6752 = vpop.f32.mrf.mxu0
      %v6753 = vadd.f32 %v6684, %v6752
      %v6754 = vpop.f32.mrf.mxu0
      %v6755 = vadd.f32 %v6686, %v6754
      %6756 = vmatmul.bf16.gmra.mxu0 %v5455
      %v6757 = vpop.f32.mrf.mxu0
      %v6758 = vadd.f32 %v6689, %v6757
      %v6759 = vpop.f32.mrf.mxu0
      %v6760 = vadd.f32 %v6691, %v6759
      %6761 = vmatmul.bf16.gmra.mxu0 %v5473
      %v6762 = vpop.f32.mrf.mxu0
      %v6763 = vadd.f32 %v6694, %v6762
      %v6764 = vpop.f32.mrf.mxu0
      %v6765 = vadd.f32 %v6696, %v6764
      %6766 = vmatmul.bf16.gmra.mxu0 %v5491
      %v6767 = vpop.f32.mrf.mxu0
      %v6768 = vadd.f32 %v6699, %v6767
      %v6769 = vpop.f32.mrf.mxu0
      %v6770 = vadd.f32 %v6701, %v6769
      %6771 = vmatmul.bf16.gmra.mxu0 %v5509
      %v6772 = vpop.f32.mrf.mxu0
      %v6773 = vadd.f32 %v6704, %v6772
      %v6774 = vpop.f32.mrf.mxu0
      %v6775 = vadd.f32 %v6706, %v6774
      %6776 = vmatmul.bf16.gmra.mxu0 %v5527
      %v6777 = vpop.f32.mrf.mxu0
      %v6778 = vadd.f32 %v6709, %v6777
      %v6779 = vpop.f32.mrf.mxu0
      %v6780 = vadd.f32 %v6711, %v6779
      %6781 = vdwg.mxu0
      %6782 = vmatpush.bf16.msra.mxu0 %v4434
      %6783 = vmatpush.bf16.msra.mxu0 %v4433
      %6784 = vmatpush.bf16.msra.mxu0 %v4432
      %6785 = vmatpush.bf16.msra.mxu0 %v4431
      %6786 = vmatpush.bf16.msra.mxu0 %v4430
      %6787 = vmatpush.bf16.msra.mxu0 %v4429
      %6788 = vmatpush.bf16.msra.mxu0 %v4428
      %6789 = vmatpush.bf16.msra.mxu0 %v4427
      %6790 = vmatmul.bf16.gmra.mxu0 %v5330
      %v6791 = vpop.f32.mrf.mxu0
      %v6792 = vadd.f32 %v6723, %v6791
      %v6793 = vpop.f32.mrf.mxu0
      %v6794 = vadd.f32 %v6725, %v6793
      %6795 = vmatmul.bf16.gmra.mxu0 %v5348
      %v6796 = vpop.f32.mrf.mxu0
      %v6797 = vadd.f32 %v6728, %v6796
      %v6798 = vpop.f32.mrf.mxu0
      %v6799 = vadd.f32 %v6730, %v6798
      %6800 = vmatmul.bf16.gmra.mxu0 %v5366
      %v6801 = vpop.f32.mrf.mxu0
      %v6802 = vadd.f32 %v6733, %v6801
      %v6803 = vpop.f32.mrf.mxu0
      %v6804 = vadd.f32 %v6735, %v6803
      %6805 = vmatmul.bf16.gmra.mxu0 %v5384
      %v6806 = vpop.f32.mrf.mxu0
      %v6807 = vadd.f32 %v6738, %v6806
      %v6808 = vpop.f32.mrf.mxu0
      %v6809 = vadd.f32 %v6740, %v6808
      %6810 = vmatmul.bf16.gmra.mxu0 %v5402
      %v6811 = vpop.f32.mrf.mxu0
      %v6812 = vadd.f32 %v6743, %v6811
      %v6813 = vpop.f32.mrf.mxu0
      %v6814 = vadd.f32 %v6745, %v6813
      %6815 = vmatmul.bf16.gmra.mxu0 %v5420
      %v6816 = vpop.f32.mrf.mxu0
      %v6817 = vadd.f32 %v6748, %v6816
      %v6818 = vpop.f32.mrf.mxu0
      %v6819 = vadd.f32 %v6750, %v6818
      %6820 = vmatmul.bf16.gmra.mxu0 %v5438
      %v6821 = vpop.f32.mrf.mxu0
      %v6822 = vadd.f32 %v6753, %v6821
      %v6823 = vpop.f32.mrf.mxu0
      %v6824 = vadd.f32 %v6755, %v6823
      %6825 = vmatmul.bf16.gmra.mxu0 %v5456
      %v6826 = vpop.f32.mrf.mxu0
      %v6827 = vadd.f32 %v6758, %v6826
      %v6828 = vpop.f32.mrf.mxu0
      %v6829 = vadd.f32 %v6760, %v6828
      %6830 = vmatmul.bf16.gmra.mxu0 %v5474
      %v6831 = vpop.f32.mrf.mxu0
      %v6832 = vadd.f32 %v6763, %v6831
      %v6833 = vpop.f32.mrf.mxu0
      %v6834 = vadd.f32 %v6765, %v6833
      %6835 = vmatmul.bf16.gmra.mxu0 %v5492
      %v6836 = vpop.f32.mrf.mxu0
      %v6837 = vadd.f32 %v6768, %v6836
      %v6838 = vpop.f32.mrf.mxu0
      %v6839 = vadd.f32 %v6770, %v6838
      %6840 = vmatmul.bf16.gmra.mxu0 %v5510
      %v6841 = vpop.f32.mrf.mxu0
      %v6842 = vadd.f32 %v6773, %v6841
      %v6843 = vpop.f32.mrf.mxu0
      %v6844 = vadd.f32 %v6775, %v6843
      %6845 = vmatmul.bf16.gmra.mxu0 %v5528
      %v6846 = vpop.f32.mrf.mxu0
      %v6847 = vadd.f32 %v6778, %v6846
      %v6848 = vpop.f32.mrf.mxu0
      %v6849 = vadd.f32 %v6780, %v6848
      %6850 = vdwg.mxu0
      %6851 = vmatpush.bf16.msra.mxu0 %v4442
      %6852 = vmatpush.bf16.msra.mxu0 %v4441
      %6853 = vmatpush.bf16.msra.mxu0 %v4440
      %6854 = vmatpush.bf16.msra.mxu0 %v4439
      %6855 = vmatpush.bf16.msra.mxu0 %v4438
      %6856 = vmatpush.bf16.msra.mxu0 %v4437
      %6857 = vmatpush.bf16.msra.mxu0 %v4436
      %6858 = vmatpush.bf16.msra.mxu0 %v4435
      %6859 = vmatmul.bf16.gmra.mxu0 %v5331
      %v6860 = vpop.f32.mrf.mxu0
      %v6861 = vadd.f32 %v6792, %v6860
      %v6862 = vpop.f32.mrf.mxu0
      %v6863 = vadd.f32 %v6794, %v6862
      %6864 = vmatmul.bf16.gmra.mxu0 %v5349
      %v6865 = vpop.f32.mrf.mxu0
      %v6866 = vadd.f32 %v6797, %v6865
      %v6867 = vpop.f32.mrf.mxu0
      %v6868 = vadd.f32 %v6799, %v6867
      %6869 = vmatmul.bf16.gmra.mxu0 %v5367
      %v6870 = vpop.f32.mrf.mxu0
      %v6871 = vadd.f32 %v6802, %v6870
      %v6872 = vpop.f32.mrf.mxu0
      %v6873 = vadd.f32 %v6804, %v6872
      %6874 = vmatmul.bf16.gmra.mxu0 %v5385
      %v6875 = vpop.f32.mrf.mxu0
      %v6876 = vadd.f32 %v6807, %v6875
      %v6877 = vpop.f32.mrf.mxu0
      %v6878 = vadd.f32 %v6809, %v6877
      %6879 = vmatmul.bf16.gmra.mxu0 %v5403
      %v6880 = vpop.f32.mrf.mxu0
      %v6881 = vadd.f32 %v6812, %v6880
      %v6882 = vpop.f32.mrf.mxu0
      %v6883 = vadd.f32 %v6814, %v6882
      %6884 = vmatmul.bf16.gmra.mxu0 %v5421
      %v6885 = vpop.f32.mrf.mxu0
      %v6886 = vadd.f32 %v6817, %v6885
      %v6887 = vpop.f32.mrf.mxu0
      %v6888 = vadd.f32 %v6819, %v6887
      %6889 = vmatmul.bf16.gmra.mxu0 %v5439
      %v6890 = vpop.f32.mrf.mxu0
      %v6891 = vadd.f32 %v6822, %v6890
      %v6892 = vpop.f32.mrf.mxu0
      %v6893 = vadd.f32 %v6824, %v6892
      %6894 = vmatmul.bf16.gmra.mxu0 %v5457
      %v6895 = vpop.f32.mrf.mxu0
      %v6896 = vadd.f32 %v6827, %v6895
      %v6897 = vpop.f32.mrf.mxu0
      %v6898 = vadd.f32 %v6829, %v6897
      %6899 = vmatmul.bf16.gmra.mxu0 %v5475
      %v6900 = vpop.f32.mrf.mxu0
      %v6901 = vadd.f32 %v6832, %v6900
      %v6902 = vpop.f32.mrf.mxu0
      %v6903 = vadd.f32 %v6834, %v6902
      %6904 = vmatmul.bf16.gmra.mxu0 %v5493
      %v6905 = vpop.f32.mrf.mxu0
      %v6906 = vadd.f32 %v6837, %v6905
      %v6907 = vpop.f32.mrf.mxu0
      %v6908 = vadd.f32 %v6839, %v6907
      %6909 = vmatmul.bf16.gmra.mxu0 %v5511
      %v6910 = vpop.f32.mrf.mxu0
      %v6911 = vadd.f32 %v6842, %v6910
      %v6912 = vpop.f32.mrf.mxu0
      %v6913 = vadd.f32 %v6844, %v6912
      %6914 = vmatmul.bf16.gmra.mxu0 %v5529
      %v6915 = vpop.f32.mrf.mxu0
      %v6916 = vadd.f32 %v6847, %v6915
      %v6917 = vpop.f32.mrf.mxu0
      %v6918 = vadd.f32 %v6849, %v6917
      %6919 = vdwg.mxu0
      %6920 = vmatpush.bf16.msra.mxu0 %v4450
      %6921 = vmatpush.bf16.msra.mxu0 %v4449
      %6922 = vmatpush.bf16.msra.mxu0 %v4448
      %6923 = vmatpush.bf16.msra.mxu0 %v4447
      %6924 = vmatpush.bf16.msra.mxu0 %v4446
      %6925 = vmatpush.bf16.msra.mxu0 %v4445
      %6926 = vmatpush.bf16.msra.mxu0 %v4444
      %6927 = vmatpush.bf16.msra.mxu0 %v4443
      %6928 = vmatmul.bf16.gmra.mxu0 %v5332
      %v6929 = vpop.f32.mrf.mxu0
      %v6930 = vadd.f32 %v6861, %v6929
      %v6931 = vpop.f32.mrf.mxu0
      %v6932 = vadd.f32 %v6863, %v6931
      %6933 = vmatmul.bf16.gmra.mxu0 %v5350
      %v6934 = vpop.f32.mrf.mxu0
      %v6935 = vadd.f32 %v6866, %v6934
      %v6936 = vpop.f32.mrf.mxu0
      %v6937 = vadd.f32 %v6868, %v6936
      %6938 = vmatmul.bf16.gmra.mxu0 %v5368
      %v6939 = vpop.f32.mrf.mxu0
      %v6940 = vadd.f32 %v6871, %v6939
      %v6941 = vpop.f32.mrf.mxu0
      %v6942 = vadd.f32 %v6873, %v6941
      %6943 = vmatmul.bf16.gmra.mxu0 %v5386
      %v6944 = vpop.f32.mrf.mxu0
      %v6945 = vadd.f32 %v6876, %v6944
      %v6946 = vpop.f32.mrf.mxu0
      %v6947 = vadd.f32 %v6878, %v6946
      %6948 = vmatmul.bf16.gmra.mxu0 %v5404
      %v6949 = vpop.f32.mrf.mxu0
      %v6950 = vadd.f32 %v6881, %v6949
      %v6951 = vpop.f32.mrf.mxu0
      %v6952 = vadd.f32 %v6883, %v6951
      %6953 = vmatmul.bf16.gmra.mxu0 %v5422
      %v6954 = vpop.f32.mrf.mxu0
      %v6955 = vadd.f32 %v6886, %v6954
      %v6956 = vpop.f32.mrf.mxu0
      %v6957 = vadd.f32 %v6888, %v6956
      %6958 = vmatmul.bf16.gmra.mxu0 %v5440
      %v6959 = vpop.f32.mrf.mxu0
      %v6960 = vadd.f32 %v6891, %v6959
      %v6961 = vpop.f32.mrf.mxu0
      %v6962 = vadd.f32 %v6893, %v6961
      %6963 = vmatmul.bf16.gmra.mxu0 %v5458
      %v6964 = vpop.f32.mrf.mxu0
      %v6965 = vadd.f32 %v6896, %v6964
      %v6966 = vpop.f32.mrf.mxu0
      %v6967 = vadd.f32 %v6898, %v6966
      %6968 = vmatmul.bf16.gmra.mxu0 %v5476
      %v6969 = vpop.f32.mrf.mxu0
      %v6970 = vadd.f32 %v6901, %v6969
      %v6971 = vpop.f32.mrf.mxu0
      %v6972 = vadd.f32 %v6903, %v6971
      %6973 = vmatmul.bf16.gmra.mxu0 %v5494
      %v6974 = vpop.f32.mrf.mxu0
      %v6975 = vadd.f32 %v6906, %v6974
      %v6976 = vpop.f32.mrf.mxu0
      %v6977 = vadd.f32 %v6908, %v6976
      %6978 = vmatmul.bf16.gmra.mxu0 %v5512
      %v6979 = vpop.f32.mrf.mxu0
      %v6980 = vadd.f32 %v6911, %v6979
      %v6981 = vpop.f32.mrf.mxu0
      %v6982 = vadd.f32 %v6913, %v6981
      %6983 = vmatmul.bf16.gmra.mxu0 %v5530
      %v6984 = vpop.f32.mrf.mxu0
      %v6985 = vadd.f32 %v6916, %v6984
      %v6986 = vpop.f32.mrf.mxu0
      %v6987 = vadd.f32 %v6918, %v6986
      %6988 = vdwg.mxu0
      %vm6989 = vcmask 400384
      %v6990 = vsel %vm6989, %v6930, 0.0
      %6991 = vadd.xlane.f32.xlu0 %v6990
      %v6992 = vpop.xlane.xlu0 %6991
      %v6993 = vsel %vm6989, %v6932, 0.0
      %6994 = vadd.xlane.f32.xlu0 %v6993
      %v6995 = vpop.xlane.xlu0 %6994
      %v6996 = vsel %vm6989, %v6935, 0.0
      %6997 = vadd.xlane.f32.xlu0 %v6996
      %v6998 = vpop.xlane.xlu0 %6997
      %v6999 = vsel %vm6989, %v6937, 0.0
      %7000 = vadd.xlane.f32.xlu0 %v6999
      %v7001 = vpop.xlane.xlu0 %7000
      %v7002 = vsel %vm6989, %v6940, 0.0
      %7003 = vadd.xlane.f32.xlu0 %v7002
      %v7004 = vpop.xlane.xlu0 %7003
      %v7005 = vsel %vm6989, %v6942, 0.0
      %7006 = vadd.xlane.f32.xlu0 %v7005
      %v7007 = vpop.xlane.xlu0 %7006
      %v7008 = vsel %vm6989, %v6945, 0.0
      %7009 = vadd.xlane.f32.xlu0 %v7008
      %v7010 = vpop.xlane.xlu0 %7009
      %v7011 = vsel %vm6989, %v6947, 0.0
      %7012 = vadd.xlane.f32.xlu0 %v7011
      %v7013 = vpop.xlane.xlu0 %7012
      %v7014 = vsel %vm6989, %v6950, 0.0
      %7015 = vadd.xlane.f32.xlu0 %v7014
      %v7016 = vpop.xlane.xlu0 %7015
      %v7017 = vsel %vm6989, %v6952, 0.0
      %7018 = vadd.xlane.f32.xlu0 %v7017
      %v7019 = vpop.xlane.xlu0 %7018
      %v7020 = vsel %vm6989, %v6955, 0.0
      %7021 = vadd.xlane.f32.xlu0 %v7020
      %v7022 = vpop.xlane.xlu0 %7021
      %v7023 = vsel %vm6989, %v6957, 0.0
      %7024 = vadd.xlane.f32.xlu0 %v7023
      %v7025 = vpop.xlane.xlu0 %7024
      %v7026 = vsel %vm6989, %v6960, 0.0
      %7027 = vadd.xlane.f32.xlu0 %v7026
      %v7028 = vpop.xlane.xlu0 %7027
      %v7029 = vsel %vm6989, %v6962, 0.0
      %7030 = vadd.xlane.f32.xlu0 %v7029
      %v7031 = vpop.xlane.xlu0 %7030
      %v7032 = vsel %vm6989, %v6965, 0.0
      %7033 = vadd.xlane.f32.xlu0 %v7032
      %v7034 = vpop.xlane.xlu0 %7033
      %v7035 = vsel %vm6989, %v6967, 0.0
      %7036 = vadd.xlane.f32.xlu0 %v7035
      %v7037 = vpop.xlane.xlu0 %7036
      %v7038 = vsel %vm6989, %v6970, 0.0
      %7039 = vadd.xlane.f32.xlu0 %v7038
      %v7040 = vpop.xlane.xlu0 %7039
      %v7041 = vsel %vm6989, %v6972, 0.0
      %7042 = vadd.xlane.f32.xlu0 %v7041
      %v7043 = vpop.xlane.xlu0 %7042
      %v7044 = vsel %vm6989, %v6975, 0.0
      %7045 = vadd.xlane.f32.xlu0 %v7044
      %v7046 = vpop.xlane.xlu0 %7045
      %v7047 = vsel %vm6989, %v6977, 0.0
      %7048 = vadd.xlane.f32.xlu0 %v7047
      %v7049 = vpop.xlane.xlu0 %7048
      %v7050 = vsel %vm6989, %v6980, 0.0
      %7051 = vadd.xlane.f32.xlu0 %v7050
      %v7052 = vpop.xlane.xlu0 %7051
      %v7053 = vsel %vm6989, %v6982, 0.0
      %7054 = vadd.xlane.f32.xlu0 %v7053
      %v7055 = vpop.xlane.xlu0 %7054
      %v7056 = vsel %vm6989, %v6985, 0.0
      %7057 = vadd.xlane.f32.xlu0 %v7056
      %v7058 = vpop.xlane.xlu0 %7057
      %v7059 = vsel %vm6989, %v6987, 0.0
      %7060 = vadd.xlane.f32.xlu0 %v7059
      %v7061 = vpop.xlane.xlu0 %7060
      %v7062 = vmul.f32 %v6930, %v6930
      %v7063 = vmul.f32 %v6932, %v6932
      %v7064 = vmul.f32 %v6935, %v6935
      %v7065 = vmul.f32 %v6937, %v6937
      %v7066 = vmul.f32 %v6940, %v6940
      %v7067 = vmul.f32 %v6942, %v6942
      %v7068 = vmul.f32 %v6945, %v6945
      %v7069 = vmul.f32 %v6947, %v6947
      %v7070 = vmul.f32 %v6950, %v6950
      %v7071 = vmul.f32 %v6952, %v6952
      %v7072 = vmul.f32 %v6955, %v6955
      %v7073 = vmul.f32 %v6957, %v6957
      %v7074 = vmul.f32 %v6960, %v6960
      %v7075 = vmul.f32 %v6962, %v6962
      %v7076 = vmul.f32 %v6965, %v6965
      %v7077 = vmul.f32 %v6967, %v6967
      %v7078 = vmul.f32 %v6970, %v6970
      %v7079 = vmul.f32 %v6972, %v6972
      %v7080 = vmul.f32 %v6975, %v6975
      %v7081 = vmul.f32 %v6977, %v6977
      %v7082 = vmul.f32 %v6980, %v6980
      %v7083 = vmul.f32 %v6982, %v6982
      %v7084 = vmul.f32 %v6985, %v6985
      %v7085 = vmul.f32 %v6987, %v6987
      %v7086 = vsel %vm6989, %v7062, 0.0
      %7087 = vadd.xlane.f32.xlu0 %v7086
      %v7088 = vpop.xlane.xlu0 %7087
      %v7089 = vsel %vm6989, %v7063, 0.0
      %7090 = vadd.xlane.f32.xlu0 %v7089
      %v7091 = vpop.xlane.xlu0 %7090
      %v7092 = vsel %vm6989, %v7064, 0.0
      %7093 = vadd.xlane.f32.xlu0 %v7092
      %v7094 = vpop.xlane.xlu0 %7093
      %v7095 = vsel %vm6989, %v7065, 0.0
      %7096 = vadd.xlane.f32.xlu0 %v7095
      %v7097 = vpop.xlane.xlu0 %7096
      %v7098 = vsel %vm6989, %v7066, 0.0
      %7099 = vadd.xlane.f32.xlu0 %v7098
      %v7100 = vpop.xlane.xlu0 %7099
      %v7101 = vsel %vm6989, %v7067, 0.0
      %7102 = vadd.xlane.f32.xlu0 %v7101
      %v7103 = vpop.xlane.xlu0 %7102
      %v7104 = vsel %vm6989, %v7068, 0.0
      %7105 = vadd.xlane.f32.xlu0 %v7104
      %v7106 = vpop.xlane.xlu0 %7105
      %v7107 = vsel %vm6989, %v7069, 0.0
      %7108 = vadd.xlane.f32.xlu0 %v7107
      %v7109 = vpop.xlane.xlu0 %7108
      %v7110 = vsel %vm6989, %v7070, 0.0
      %7111 = vadd.xlane.f32.xlu0 %v7110
      %v7112 = vpop.xlane.xlu0 %7111
      %v7113 = vsel %vm6989, %v7071, 0.0
      %7114 = vadd.xlane.f32.xlu0 %v7113
      %v7115 = vpop.xlane.xlu0 %7114
      %v7116 = vsel %vm6989, %v7072, 0.0
      %7117 = vadd.xlane.f32.xlu0 %v7116
      %v7118 = vpop.xlane.xlu0 %7117
      %v7119 = vsel %vm6989, %v7073, 0.0
      %7120 = vadd.xlane.f32.xlu0 %v7119
      %v7121 = vpop.xlane.xlu0 %7120
      %v7122 = vsel %vm6989, %v7074, 0.0
      %7123 = vadd.xlane.f32.xlu0 %v7122
      %v7124 = vpop.xlane.xlu0 %7123
      %v7125 = vsel %vm6989, %v7075, 0.0
      %7126 = vadd.xlane.f32.xlu0 %v7125
      %v7127 = vpop.xlane.xlu0 %7126
      %v7128 = vsel %vm6989, %v7076, 0.0
      %7129 = vadd.xlane.f32.xlu0 %v7128
      %v7130 = vpop.xlane.xlu0 %7129
      %v7131 = vsel %vm6989, %v7077, 0.0
      %7132 = vadd.xlane.f32.xlu0 %v7131
      %v7133 = vpop.xlane.xlu0 %7132
      %v7134 = vsel %vm6989, %v7078, 0.0
      %7135 = vadd.xlane.f32.xlu0 %v7134
      %v7136 = vpop.xlane.xlu0 %7135
      %v7137 = vsel %vm6989, %v7079, 0.0
      %7138 = vadd.xlane.f32.xlu0 %v7137
      %v7139 = vpop.xlane.xlu0 %7138
      %v7140 = vsel %vm6989, %v7080, 0.0
      %7141 = vadd.xlane.f32.xlu0 %v7140
      %v7142 = vpop.xlane.xlu0 %7141
      %v7143 = vsel %vm6989, %v7081, 0.0
      %7144 = vadd.xlane.f32.xlu0 %v7143
      %v7145 = vpop.xlane.xlu0 %7144
      %v7146 = vsel %vm6989, %v7082, 0.0
      %7147 = vadd.xlane.f32.xlu0 %v7146
      %v7148 = vpop.xlane.xlu0 %7147
      %v7149 = vsel %vm6989, %v7083, 0.0
      %7150 = vadd.xlane.f32.xlu0 %v7149
      %v7151 = vpop.xlane.xlu0 %7150
      %v7152 = vsel %vm6989, %v7084, 0.0
      %7153 = vadd.xlane.f32.xlu0 %v7152
      %v7154 = vpop.xlane.xlu0 %7153
      %v7155 = vsel %vm6989, %v7085, 0.0
      %7156 = vadd.xlane.f32.xlu0 %v7155
      %v7157 = vpop.xlane.xlu0 %7156
      %v7158 = vmul.f32 %v6992, 0.020408163
      %v7159 = vmul.f32 %v6995, 0.020408163
      %v7160 = vmul.f32 %v6998, 0.020408163
      %v7161 = vmul.f32 %v7001, 0.020408163
      %v7162 = vmul.f32 %v7004, 0.020408163
      %v7163 = vmul.f32 %v7007, 0.020408163
      %v7164 = vmul.f32 %v7010, 0.020408163
      %v7165 = vmul.f32 %v7013, 0.020408163
      %v7166 = vmul.f32 %v7016, 0.020408163
      %v7167 = vmul.f32 %v7019, 0.020408163
      %v7168 = vmul.f32 %v7022, 0.020408163
      %v7169 = vmul.f32 %v7025, 0.020408163
      %v7170 = vmul.f32 %v7028, 0.020408163
      %v7171 = vmul.f32 %v7031, 0.020408163
      %v7172 = vmul.f32 %v7034, 0.020408163
      %v7173 = vmul.f32 %v7037, 0.020408163
      %v7174 = vmul.f32 %v7040, 0.020408163
      %v7175 = vmul.f32 %v7043, 0.020408163
      %v7176 = vmul.f32 %v7046, 0.020408163
      %v7177 = vmul.f32 %v7049, 0.020408163
      %v7178 = vmul.f32 %v7052, 0.020408163
      %v7179 = vmul.f32 %v7055, 0.020408163
      %v7180 = vmul.f32 %v7058, 0.020408163
      %v7181 = vmul.f32 %v7061, 0.020408163
      %v7182 = vmul.f32 %v7088, 0.020408163
      %v7183 = vmul.f32 %v7091, 0.020408163
      %v7184 = vmul.f32 %v7094, 0.020408163
      %v7185 = vmul.f32 %v7097, 0.020408163
      %v7186 = vmul.f32 %v7100, 0.020408163
      %v7187 = vmul.f32 %v7103, 0.020408163
      %v7188 = vmul.f32 %v7106, 0.020408163
      %v7189 = vmul.f32 %v7109, 0.020408163
      %v7190 = vmul.f32 %v7112, 0.020408163
      %v7191 = vmul.f32 %v7115, 0.020408163
      %v7192 = vmul.f32 %v7118, 0.020408163
      %v7193 = vmul.f32 %v7121, 0.020408163
      %v7194 = vmul.f32 %v7124, 0.020408163
      %v7195 = vmul.f32 %v7127, 0.020408163
      %v7196 = vmul.f32 %v7130, 0.020408163
      %v7197 = vmul.f32 %v7133, 0.020408163
      %v7198 = vmul.f32 %v7136, 0.020408163
      %v7199 = vmul.f32 %v7139, 0.020408163
      %v7200 = vmul.f32 %v7142, 0.020408163
      %v7201 = vmul.f32 %v7145, 0.020408163
      %v7202 = vmul.f32 %v7148, 0.020408163
      %v7203 = vmul.f32 %v7151, 0.020408163
      %v7204 = vmul.f32 %v7154, 0.020408163
      %v7205 = vmul.f32 %v7157, 0.020408163
      %v7206 = vmul.f32 %v7158, %v7158
      %v7207 = vmul.f32 %v7159, %v7159
      %v7208 = vmul.f32 %v7160, %v7160
      %v7209 = vmul.f32 %v7161, %v7161
      %v7210 = vmul.f32 %v7162, %v7162
      %v7211 = vmul.f32 %v7163, %v7163
      %v7212 = vmul.f32 %v7164, %v7164
      %v7213 = vmul.f32 %v7165, %v7165
      %v7214 = vmul.f32 %v7166, %v7166
      %v7215 = vmul.f32 %v7167, %v7167
      %v7216 = vmul.f32 %v7168, %v7168
      %v7217 = vmul.f32 %v7169, %v7169
      %v7218 = vmul.f32 %v7170, %v7170
      %v7219 = vmul.f32 %v7171, %v7171
      %v7220 = vmul.f32 %v7172, %v7172
      %v7221 = vmul.f32 %v7173, %v7173
      %v7222 = vmul.f32 %v7174, %v7174
      %v7223 = vmul.f32 %v7175, %v7175
      %v7224 = vmul.f32 %v7176, %v7176
      %v7225 = vmul.f32 %v7177, %v7177
      %v7226 = vmul.f32 %v7178, %v7178
      %v7227 = vmul.f32 %v7179, %v7179
      %v7228 = vmul.f32 %v7180, %v7180
      %v7229 = vmul.f32 %v7181, %v7181
      %v7230 = vsub.f32 %v7182, %v7206
      %v7231 = vsub.f32 %v7183, %v7207
      %v7232 = vsub.f32 %v7184, %v7208
      %v7233 = vsub.f32 %v7185, %v7209
      %v7234 = vsub.f32 %v7186, %v7210
      %v7235 = vsub.f32 %v7187, %v7211
      %v7236 = vsub.f32 %v7188, %v7212
      %v7237 = vsub.f32 %v7189, %v7213
      %v7238 = vsub.f32 %v7190, %v7214
      %v7239 = vsub.f32 %v7191, %v7215
      %v7240 = vsub.f32 %v7192, %v7216
      %v7241 = vsub.f32 %v7193, %v7217
      %v7242 = vsub.f32 %v7194, %v7218
      %v7243 = vsub.f32 %v7195, %v7219
      %v7244 = vsub.f32 %v7196, %v7220
      %v7245 = vsub.f32 %v7197, %v7221
      %v7246 = vsub.f32 %v7198, %v7222
      %v7247 = vsub.f32 %v7199, %v7223
      %v7248 = vsub.f32 %v7200, %v7224
      %v7249 = vsub.f32 %v7201, %v7225
      %v7250 = vsub.f32 %v7202, %v7226
      %v7251 = vsub.f32 %v7203, %v7227
      %v7252 = vsub.f32 %v7204, %v7228
      %v7253 = vsub.f32 %v7205, %v7229
      %v7254 = vmax.f32 %v7230, 0.0
      %v7255 = vmax.f32 %v7231, 0.0
      %v7256 = vmax.f32 %v7232, 0.0
      %v7257 = vmax.f32 %v7233, 0.0
      %v7258 = vmax.f32 %v7234, 0.0
      %v7259 = vmax.f32 %v7235, 0.0
      %v7260 = vmax.f32 %v7236, 0.0
      %v7261 = vmax.f32 %v7237, 0.0
      %v7262 = vmax.f32 %v7238, 0.0
      %v7263 = vmax.f32 %v7239, 0.0
      %v7264 = vmax.f32 %v7240, 0.0
      %v7265 = vmax.f32 %v7241, 0.0
      %v7266 = vmax.f32 %v7242, 0.0
      %v7267 = vmax.f32 %v7243, 0.0
      %v7268 = vmax.f32 %v7244, 0.0
      %v7269 = vmax.f32 %v7245, 0.0
      %v7270 = vmax.f32 %v7246, 0.0
      %v7271 = vmax.f32 %v7247, 0.0
      %v7272 = vmax.f32 %v7248, 0.0
      %v7273 = vmax.f32 %v7249, 0.0
      %v7274 = vmax.f32 %v7250, 0.0
      %v7275 = vmax.f32 %v7251, 0.0
      %v7276 = vmax.f32 %v7252, 0.0
      %v7277 = vmax.f32 %v7253, 0.0
      %v7278 = vld [vmem:[%s261] sm:$0xff]
      %v7279 = vld [vmem:[%s261 + $0x8] sm:$0xff]
      %v7280 = vld [vmem:[%s261 + $0x10] sm:$0xff]
      %v7281 = vld [vmem:[%s261 + $0x18] sm:$0xff]
      %v7282 = vld [vmem:[%s261 + $0x20] sm:$0xff]
      %v7283 = vld [vmem:[%s261 + $0x28] sm:$0xff]
      %v7284 = vld [vmem:[%s261 + $0x30] sm:$0xff]
      %v7285 = vld [vmem:[%s261 + $0x38] sm:$0xff]
      %v7286 = vld [vmem:[%s261 + $0x40] sm:$0xff]
      %v7287 = vld [vmem:[%s261 + $0x48] sm:$0xff]
      %v7288 = vld [vmem:[%s261 + $0x50] sm:$0xff]
      %v7289 = vld [vmem:[%s261 + $0x58] sm:$0xff]
      %v7290 = vld [vmem:[%s261 + $0x60] sm:$0xff]
      %v7291 = vld [vmem:[%s261 + $0x68] sm:$0xff]
      %v7292 = vld [vmem:[%s261 + $0x70] sm:$0xff]
      %v7293 = vld [vmem:[%s261 + $0x78] sm:$0xff]
      %v7294 = vld [vmem:[%s261 + $0x80] sm:$0xff]
      %v7295 = vld [vmem:[%s261 + $0x88] sm:$0xff]
      %v7296 = vld [vmem:[%s261 + $0x90] sm:$0xff]
      %v7297 = vld [vmem:[%s261 + $0x98] sm:$0xff]
      %v7298 = vld [vmem:[%s261 + $0xa0] sm:$0xff]
      %v7299 = vld [vmem:[%s261 + $0xa8] sm:$0xff]
      %v7300 = vld [vmem:[%s261 + $0xb0] sm:$0xff]
      %v7301 = vld [vmem:[%s261 + $0xb8] sm:$0xff]
      %v7302 = vadd.f32 %v7254, 0.001
      %v7303 = vadd.f32 %v7255, 0.001
      %v7304 = vadd.f32 %v7256, 0.001
      %v7305 = vadd.f32 %v7257, 0.001
      %v7306 = vadd.f32 %v7258, 0.001
      %v7307 = vadd.f32 %v7259, 0.001
      %v7308 = vadd.f32 %v7260, 0.001
      %v7309 = vadd.f32 %v7261, 0.001
      %v7310 = vadd.f32 %v7262, 0.001
      %v7311 = vadd.f32 %v7263, 0.001
      %v7312 = vadd.f32 %v7264, 0.001
      %v7313 = vadd.f32 %v7265, 0.001
      %v7314 = vadd.f32 %v7266, 0.001
      %v7315 = vadd.f32 %v7267, 0.001
      %v7316 = vadd.f32 %v7268, 0.001
      %v7317 = vadd.f32 %v7269, 0.001
      %v7318 = vadd.f32 %v7270, 0.001
      %v7319 = vadd.f32 %v7271, 0.001
      %v7320 = vadd.f32 %v7272, 0.001
      %v7321 = vadd.f32 %v7273, 0.001
      %v7322 = vadd.f32 %v7274, 0.001
      %v7323 = vadd.f32 %v7275, 0.001
      %v7324 = vadd.f32 %v7276, 0.001
      %v7325 = vadd.f32 %v7277, 0.001
      %v7326 = vrsqrt.pop %v7302
      %v7327 = vmul.f32 %v7326, %v7302
      %v7328 = vmul.f32 %v7327, %v7326
      %v7329 = vmul.f32 0.5, %v7328
      %v7330 = vsub.f32 1.5, %v7329
      %v7331 = vmul.f32 %v7326, %v7330
      %vm7332 = vweird.f32 %v7302
      %vm7333 = vweird.f32 %v7326
      %vm7334 = vmor %vm7332, %vm7333
      %v7335 = vsel %vm7334, %v7326, %v7331
      %v7336 = vrsqrt.pop %v7303
      %v7337 = vmul.f32 %v7336, %v7303
      %v7338 = vmul.f32 %v7337, %v7336
      %v7339 = vmul.f32 0.5, %v7338
      %v7340 = vsub.f32 1.5, %v7339
      %v7341 = vmul.f32 %v7336, %v7340
      %vm7342 = vweird.f32 %v7303
      %vm7343 = vweird.f32 %v7336
      %vm7344 = vmor %vm7342, %vm7343
      %v7345 = vsel %vm7344, %v7336, %v7341
      %v7346 = vrsqrt.pop %v7304
      %v7347 = vmul.f32 %v7346, %v7304
      %v7348 = vmul.f32 %v7347, %v7346
      %v7349 = vmul.f32 0.5, %v7348
      %v7350 = vsub.f32 1.5, %v7349
      %v7351 = vmul.f32 %v7346, %v7350
      %vm7352 = vweird.f32 %v7304
      %vm7353 = vweird.f32 %v7346
      %vm7354 = vmor %vm7352, %vm7353
      %v7355 = vsel %vm7354, %v7346, %v7351
      %v7356 = vrsqrt.pop %v7305
      %v7357 = vmul.f32 %v7356, %v7305
      %v7358 = vmul.f32 %v7357, %v7356
      %v7359 = vmul.f32 0.5, %v7358
      %v7360 = vsub.f32 1.5, %v7359
      %v7361 = vmul.f32 %v7356, %v7360
      %vm7362 = vweird.f32 %v7305
      %vm7363 = vweird.f32 %v7356
      %vm7364 = vmor %vm7362, %vm7363
      %v7365 = vsel %vm7364, %v7356, %v7361
      %v7366 = vrsqrt.pop %v7306
      %v7367 = vmul.f32 %v7366, %v7306
      %v7368 = vmul.f32 %v7367, %v7366
      %v7369 = vmul.f32 0.5, %v7368
      %v7370 = vsub.f32 1.5, %v7369
      %v7371 = vmul.f32 %v7366, %v7370
      %vm7372 = vweird.f32 %v7306
      %vm7373 = vweird.f32 %v7366
      %vm7374 = vmor %vm7372, %vm7373
      %v7375 = vsel %vm7374, %v7366, %v7371
      %v7376 = vrsqrt.pop %v7307
      %v7377 = vmul.f32 %v7376, %v7307
      %v7378 = vmul.f32 %v7377, %v7376
      %v7379 = vmul.f32 0.5, %v7378
      %v7380 = vsub.f32 1.5, %v7379
      %v7381 = vmul.f32 %v7376, %v7380
      %vm7382 = vweird.f32 %v7307
      %vm7383 = vweird.f32 %v7376
      %vm7384 = vmor %vm7382, %vm7383
      %v7385 = vsel %vm7384, %v7376, %v7381
      %v7386 = vrsqrt.pop %v7308
      %v7387 = vmul.f32 %v7386, %v7308
      %v7388 = vmul.f32 %v7387, %v7386
      %v7389 = vmul.f32 0.5, %v7388
      %v7390 = vsub.f32 1.5, %v7389
      %v7391 = vmul.f32 %v7386, %v7390
      %vm7392 = vweird.f32 %v7308
      %vm7393 = vweird.f32 %v7386
      %vm7394 = vmor %vm7392, %vm7393
      %v7395 = vsel %vm7394, %v7386, %v7391
      %v7396 = vrsqrt.pop %v7309
      %v7397 = vmul.f32 %v7396, %v7309
      %v7398 = vmul.f32 %v7397, %v7396
      %v7399 = vmul.f32 0.5, %v7398
      %v7400 = vsub.f32 1.5, %v7399
      %v7401 = vmul.f32 %v7396, %v7400
      %vm7402 = vweird.f32 %v7309
      %vm7403 = vweird.f32 %v7396
      %vm7404 = vmor %vm7402, %vm7403
      %v7405 = vsel %vm7404, %v7396, %v7401
      %v7406 = vrsqrt.pop %v7310
      %v7407 = vmul.f32 %v7406, %v7310
      %v7408 = vmul.f32 %v7407, %v7406
      %v7409 = vmul.f32 0.5, %v7408
      %v7410 = vsub.f32 1.5, %v7409
      %v7411 = vmul.f32 %v7406, %v7410
      %vm7412 = vweird.f32 %v7310
      %vm7413 = vweird.f32 %v7406
      %vm7414 = vmor %vm7412, %vm7413
      %v7415 = vsel %vm7414, %v7406, %v7411
      %v7416 = vrsqrt.pop %v7311
      %v7417 = vmul.f32 %v7416, %v7311
      %v7418 = vmul.f32 %v7417, %v7416
      %v7419 = vmul.f32 0.5, %v7418
      %v7420 = vsub.f32 1.5, %v7419
      %v7421 = vmul.f32 %v7416, %v7420
      %vm7422 = vweird.f32 %v7311
      %vm7423 = vweird.f32 %v7416
      %vm7424 = vmor %vm7422, %vm7423
      %v7425 = vsel %vm7424, %v7416, %v7421
      %v7426 = vrsqrt.pop %v7312
      %v7427 = vmul.f32 %v7426, %v7312
      %v7428 = vmul.f32 %v7427, %v7426
      %v7429 = vmul.f32 0.5, %v7428
      %v7430 = vsub.f32 1.5, %v7429
      %v7431 = vmul.f32 %v7426, %v7430
      %vm7432 = vweird.f32 %v7312
      %vm7433 = vweird.f32 %v7426
      %vm7434 = vmor %vm7432, %vm7433
      %v7435 = vsel %vm7434, %v7426, %v7431
      %v7436 = vrsqrt.pop %v7313
      %v7437 = vmul.f32 %v7436, %v7313
      %v7438 = vmul.f32 %v7437, %v7436
      %v7439 = vmul.f32 0.5, %v7438
      %v7440 = vsub.f32 1.5, %v7439
      %v7441 = vmul.f32 %v7436, %v7440
      %vm7442 = vweird.f32 %v7313
      %vm7443 = vweird.f32 %v7436
      %vm7444 = vmor %vm7442, %vm7443
      %v7445 = vsel %vm7444, %v7436, %v7441
      %v7446 = vrsqrt.pop %v7314
      %v7447 = vmul.f32 %v7446, %v7314
      %v7448 = vmul.f32 %v7447, %v7446
      %v7449 = vmul.f32 0.5, %v7448
      %v7450 = vsub.f32 1.5, %v7449
      %v7451 = vmul.f32 %v7446, %v7450
      %vm7452 = vweird.f32 %v7314
      %vm7453 = vweird.f32 %v7446
      %vm7454 = vmor %vm7452, %vm7453
      %v7455 = vsel %vm7454, %v7446, %v7451
      %v7456 = vrsqrt.pop %v7315
      %v7457 = vmul.f32 %v7456, %v7315
      %v7458 = vmul.f32 %v7457, %v7456
      %v7459 = vmul.f32 0.5, %v7458
      %v7460 = vsub.f32 1.5, %v7459
      %v7461 = vmul.f32 %v7456, %v7460
      %vm7462 = vweird.f32 %v7315
      %vm7463 = vweird.f32 %v7456
      %vm7464 = vmor %vm7462, %vm7463
      %v7465 = vsel %vm7464, %v7456, %v7461
      %v7466 = vrsqrt.pop %v7316
      %v7467 = vmul.f32 %v7466, %v7316
      %v7468 = vmul.f32 %v7467, %v7466
      %v7469 = vmul.f32 0.5, %v7468
      %v7470 = vsub.f32 1.5, %v7469
      %v7471 = vmul.f32 %v7466, %v7470
      %vm7472 = vweird.f32 %v7316
      %vm7473 = vweird.f32 %v7466
      %vm7474 = vmor %vm7472, %vm7473
      %v7475 = vsel %vm7474, %v7466, %v7471
      %v7476 = vrsqrt.pop %v7317
      %v7477 = vmul.f32 %v7476, %v7317
      %v7478 = vmul.f32 %v7477, %v7476
      %v7479 = vmul.f32 0.5, %v7478
      %v7480 = vsub.f32 1.5, %v7479
      %v7481 = vmul.f32 %v7476, %v7480
      %vm7482 = vweird.f32 %v7317
      %vm7483 = vweird.f32 %v7476
      %vm7484 = vmor %vm7482, %vm7483
      %v7485 = vsel %vm7484, %v7476, %v7481
      %v7486 = vrsqrt.pop %v7318
      %v7487 = vmul.f32 %v7486, %v7318
      %v7488 = vmul.f32 %v7487, %v7486
      %v7489 = vmul.f32 0.5, %v7488
      %v7490 = vsub.f32 1.5, %v7489
      %v7491 = vmul.f32 %v7486, %v7490
      %vm7492 = vweird.f32 %v7318
      %vm7493 = vweird.f32 %v7486
      %vm7494 = vmor %vm7492, %vm7493
      %v7495 = vsel %vm7494, %v7486, %v7491
      %v7496 = vrsqrt.pop %v7319
      %v7497 = vmul.f32 %v7496, %v7319
      %v7498 = vmul.f32 %v7497, %v7496
      %v7499 = vmul.f32 0.5, %v7498
      %v7500 = vsub.f32 1.5, %v7499
      %v7501 = vmul.f32 %v7496, %v7500
      %vm7502 = vweird.f32 %v7319
      %vm7503 = vweird.f32 %v7496
      %vm7504 = vmor %vm7502, %vm7503
      %v7505 = vsel %vm7504, %v7496, %v7501
      %v7506 = vrsqrt.pop %v7320
      %v7507 = vmul.f32 %v7506, %v7320
      %v7508 = vmul.f32 %v7507, %v7506
      %v7509 = vmul.f32 0.5, %v7508
      %v7510 = vsub.f32 1.5, %v7509
      %v7511 = vmul.f32 %v7506, %v7510
      %vm7512 = vweird.f32 %v7320
      %vm7513 = vweird.f32 %v7506
      %vm7514 = vmor %vm7512, %vm7513
      %v7515 = vsel %vm7514, %v7506, %v7511
      %v7516 = vrsqrt.pop %v7321
      %v7517 = vmul.f32 %v7516, %v7321
      %v7518 = vmul.f32 %v7517, %v7516
      %v7519 = vmul.f32 0.5, %v7518
      %v7520 = vsub.f32 1.5, %v7519
      %v7521 = vmul.f32 %v7516, %v7520
      %vm7522 = vweird.f32 %v7321
      %vm7523 = vweird.f32 %v7516
      %vm7524 = vmor %vm7522, %vm7523
      %v7525 = vsel %vm7524, %v7516, %v7521
      %v7526 = vrsqrt.pop %v7322
      %v7527 = vmul.f32 %v7526, %v7322
      %v7528 = vmul.f32 %v7527, %v7526
      %v7529 = vmul.f32 0.5, %v7528
      %v7530 = vsub.f32 1.5, %v7529
      %v7531 = vmul.f32 %v7526, %v7530
      %vm7532 = vweird.f32 %v7322
      %vm7533 = vweird.f32 %v7526
      %vm7534 = vmor %vm7532, %vm7533
      %v7535 = vsel %vm7534, %v7526, %v7531
      %v7536 = vrsqrt.pop %v7323
      %v7537 = vmul.f32 %v7536, %v7323
      %v7538 = vmul.f32 %v7537, %v7536
      %v7539 = vmul.f32 0.5, %v7538
      %v7540 = vsub.f32 1.5, %v7539
      %v7541 = vmul.f32 %v7536, %v7540
      %vm7542 = vweird.f32 %v7323
      %vm7543 = vweird.f32 %v7536
      %vm7544 = vmor %vm7542, %vm7543
      %v7545 = vsel %vm7544, %v7536, %v7541
      %v7546 = vrsqrt.pop %v7324
      %v7547 = vmul.f32 %v7546, %v7324
      %v7548 = vmul.f32 %v7547, %v7546
      %v7549 = vmul.f32 0.5, %v7548
      %v7550 = vsub.f32 1.5, %v7549
      %v7551 = vmul.f32 %v7546, %v7550
      %vm7552 = vweird.f32 %v7324
      %vm7553 = vweird.f32 %v7546
      %vm7554 = vmor %vm7552, %vm7553
      %v7555 = vsel %vm7554, %v7546, %v7551
      %v7556 = vrsqrt.pop %v7325
      %v7557 = vmul.f32 %v7556, %v7325
      %v7558 = vmul.f32 %v7557, %v7556
      %v7559 = vmul.f32 0.5, %v7558
      %v7560 = vsub.f32 1.5, %v7559
      %v7561 = vmul.f32 %v7556, %v7560
      %vm7562 = vweird.f32 %v7325
      %vm7563 = vweird.f32 %v7556
      %vm7564 = vmor %vm7562, %vm7563
      %v7565 = vsel %vm7564, %v7556, %v7561
      %v7566 = vmul.f32 %v7278, %v7335
      %v7567 = vmul.f32 %v7279, %v7345
      %v7568 = vmul.f32 %v7280, %v7355
      %v7569 = vmul.f32 %v7281, %v7365
      %v7570 = vmul.f32 %v7282, %v7375
      %v7571 = vmul.f32 %v7283, %v7385
      %v7572 = vmul.f32 %v7284, %v7395
      %v7573 = vmul.f32 %v7285, %v7405
      %v7574 = vmul.f32 %v7286, %v7415
      %v7575 = vmul.f32 %v7287, %v7425
      %v7576 = vmul.f32 %v7288, %v7435
      %v7577 = vmul.f32 %v7289, %v7445
      %v7578 = vmul.f32 %v7290, %v7455
      %v7579 = vmul.f32 %v7291, %v7465
      %v7580 = vmul.f32 %v7292, %v7475
      %v7581 = vmul.f32 %v7293, %v7485
      %v7582 = vmul.f32 %v7294, %v7495
      %v7583 = vmul.f32 %v7295, %v7505
      %v7584 = vmul.f32 %v7296, %v7515
      %v7585 = vmul.f32 %v7297, %v7525
      %v7586 = vmul.f32 %v7298, %v7535
      %v7587 = vmul.f32 %v7299, %v7545
      %v7588 = vmul.f32 %v7300, %v7555
      %v7589 = vmul.f32 %v7301, %v7565
      %v7590 = vld [vmem:[%s267] sm:$0xff]
      %v7591 = vld [vmem:[%s267 + $0x8] sm:$0xff]
      %v7592 = vld [vmem:[%s267 + $0x10] sm:$0xff]
      %v7593 = vld [vmem:[%s267 + $0x18] sm:$0xff]
      %v7594 = vld [vmem:[%s267 + $0x20] sm:$0xff]
      %v7595 = vld [vmem:[%s267 + $0x28] sm:$0xff]
      %v7596 = vld [vmem:[%s267 + $0x30] sm:$0xff]
      %v7597 = vld [vmem:[%s267 + $0x38] sm:$0xff]
      %v7598 = vld [vmem:[%s267 + $0x40] sm:$0xff]
      %v7599 = vld [vmem:[%s267 + $0x48] sm:$0xff]
      %v7600 = vld [vmem:[%s267 + $0x50] sm:$0xff]
      %v7601 = vld [vmem:[%s267 + $0x58] sm:$0xff]
      %v7602 = vld [vmem:[%s267 + $0x60] sm:$0xff]
      %v7603 = vld [vmem:[%s267 + $0x68] sm:$0xff]
      %v7604 = vld [vmem:[%s267 + $0x70] sm:$0xff]
      %v7605 = vld [vmem:[%s267 + $0x78] sm:$0xff]
      %v7606 = vld [vmem:[%s267 + $0x80] sm:$0xff]
      %v7607 = vld [vmem:[%s267 + $0x88] sm:$0xff]
      %v7608 = vld [vmem:[%s267 + $0x90] sm:$0xff]
      %v7609 = vld [vmem:[%s267 + $0x98] sm:$0xff]
      %v7610 = vld [vmem:[%s267 + $0xa0] sm:$0xff]
      %v7611 = vld [vmem:[%s267 + $0xa8] sm:$0xff]
      %v7612 = vld [vmem:[%s267 + $0xb0] sm:$0xff]
      %v7613 = vld [vmem:[%s267 + $0xb8] sm:$0xff]
      %v7614 = vmul.f32 %v7158, %v7566
      %v7615 = vmul.f32 %v7159, %v7567
      %v7616 = vmul.f32 %v7160, %v7568
      %v7617 = vmul.f32 %v7161, %v7569
      %v7618 = vmul.f32 %v7162, %v7570
      %v7619 = vmul.f32 %v7163, %v7571
      %v7620 = vmul.f32 %v7164, %v7572
      %v7621 = vmul.f32 %v7165, %v7573
      %v7622 = vmul.f32 %v7166, %v7574
      %v7623 = vmul.f32 %v7167, %v7575
      %v7624 = vmul.f32 %v7168, %v7576
      %v7625 = vmul.f32 %v7169, %v7577
      %v7626 = vmul.f32 %v7170, %v7578
      %v7627 = vmul.f32 %v7171, %v7579
      %v7628 = vmul.f32 %v7172, %v7580
      %v7629 = vmul.f32 %v7173, %v7581
      %v7630 = vmul.f32 %v7174, %v7582
      %v7631 = vmul.f32 %v7175, %v7583
      %v7632 = vmul.f32 %v7176, %v7584
      %v7633 = vmul.f32 %v7177, %v7585
      %v7634 = vmul.f32 %v7178, %v7586
      %v7635 = vmul.f32 %v7179, %v7587
      %v7636 = vmul.f32 %v7180, %v7588
      %v7637 = vmul.f32 %v7181, %v7589
      %v7638 = vsub.f32 %v7590, %v7614
      %v7639 = vsub.f32 %v7591, %v7615
      %v7640 = vsub.f32 %v7592, %v7616
      %v7641 = vsub.f32 %v7593, %v7617
      %v7642 = vsub.f32 %v7594, %v7618
      %v7643 = vsub.f32 %v7595, %v7619
      %v7644 = vsub.f32 %v7596, %v7620
      %v7645 = vsub.f32 %v7597, %v7621
      %v7646 = vsub.f32 %v7598, %v7622
      %v7647 = vsub.f32 %v7599, %v7623
      %v7648 = vsub.f32 %v7600, %v7624
      %v7649 = vsub.f32 %v7601, %v7625
      %v7650 = vsub.f32 %v7602, %v7626
      %v7651 = vsub.f32 %v7603, %v7627
      %v7652 = vsub.f32 %v7604, %v7628
      %v7653 = vsub.f32 %v7605, %v7629
      %v7654 = vsub.f32 %v7606, %v7630
      %v7655 = vsub.f32 %v7607, %v7631
      %v7656 = vsub.f32 %v7608, %v7632
      %v7657 = vsub.f32 %v7609, %v7633
      %v7658 = vsub.f32 %v7610, %v7634
      %v7659 = vsub.f32 %v7611, %v7635
      %v7660 = vsub.f32 %v7612, %v7636
      %v7661 = vsub.f32 %v7613, %v7637
      %7663 = vset.pattern.permute.xlu0 0
      %7664 = vperm.xlu0 %7663, %v7566
      %v7665 = vpop.permute.xlu0 %7664
      %7668 = vset.pattern.permute.xlu0 0
      %7669 = vperm.xlu0 %7668, %v7567
      %v7670 = vpop.permute.xlu0 %7669
      %7673 = vset.pattern.permute.xlu0 0
      %7674 = vperm.xlu0 %7673, %v7568
      %v7675 = vpop.permute.xlu0 %7674
      %7678 = vset.pattern.permute.xlu0 0
      %7679 = vperm.xlu0 %7678, %v7569
      %v7680 = vpop.permute.xlu0 %7679
      %7683 = vset.pattern.permute.xlu0 0
      %7684 = vperm.xlu0 %7683, %v7570
      %v7685 = vpop.permute.xlu0 %7684
      %7688 = vset.pattern.permute.xlu0 0
      %7689 = vperm.xlu0 %7688, %v7571
      %v7690 = vpop.permute.xlu0 %7689
      %7693 = vset.pattern.permute.xlu0 0
      %7694 = vperm.xlu0 %7693, %v7572
      %v7695 = vpop.permute.xlu0 %7694
      %7698 = vset.pattern.permute.xlu0 0
      %7699 = vperm.xlu0 %7698, %v7573
      %v7700 = vpop.permute.xlu0 %7699
      %7703 = vset.pattern.permute.xlu0 0
      %7704 = vperm.xlu0 %7703, %v7574
      %v7705 = vpop.permute.xlu0 %7704
      %7708 = vset.pattern.permute.xlu0 0
      %7709 = vperm.xlu0 %7708, %v7575
      %v7710 = vpop.permute.xlu0 %7709
      %7713 = vset.pattern.permute.xlu0 0
      %7714 = vperm.xlu0 %7713, %v7576
      %v7715 = vpop.permute.xlu0 %7714
      %7718 = vset.pattern.permute.xlu0 0
      %7719 = vperm.xlu0 %7718, %v7577
      %v7720 = vpop.permute.xlu0 %7719
      %7723 = vset.pattern.permute.xlu0 0
      %7724 = vperm.xlu0 %7723, %v7578
      %v7725 = vpop.permute.xlu0 %7724
      %7728 = vset.pattern.permute.xlu0 0
      %7729 = vperm.xlu0 %7728, %v7579
      %v7730 = vpop.permute.xlu0 %7729
      %7733 = vset.pattern.permute.xlu0 0
      %7734 = vperm.xlu0 %7733, %v7580
      %v7735 = vpop.permute.xlu0 %7734
      %7738 = vset.pattern.permute.xlu0 0
      %7739 = vperm.xlu0 %7738, %v7581
      %v7740 = vpop.permute.xlu0 %7739
      %7743 = vset.pattern.permute.xlu0 0
      %7744 = vperm.xlu0 %7743, %v7582
      %v7745 = vpop.permute.xlu0 %7744
      %7748 = vset.pattern.permute.xlu0 0
      %7749 = vperm.xlu0 %7748, %v7583
      %v7750 = vpop.permute.xlu0 %7749
      %7753 = vset.pattern.permute.xlu0 0
      %7754 = vperm.xlu0 %7753, %v7584
      %v7755 = vpop.permute.xlu0 %7754
      %7758 = vset.pattern.permute.xlu0 0
      %7759 = vperm.xlu0 %7758, %v7585
      %v7760 = vpop.permute.xlu0 %7759
      %7763 = vset.pattern.permute.xlu0 0
      %7764 = vperm.xlu0 %7763, %v7586
      %v7765 = vpop.permute.xlu0 %7764
      %7768 = vset.pattern.permute.xlu0 0
      %7769 = vperm.xlu0 %7768, %v7587
      %v7770 = vpop.permute.xlu0 %7769
      %7773 = vset.pattern.permute.xlu0 0
      %7774 = vperm.xlu0 %7773, %v7588
      %v7775 = vpop.permute.xlu0 %7774
      %7778 = vset.pattern.permute.xlu0 0
      %7779 = vperm.xlu0 %7778, %v7589
      %v7780 = vpop.permute.xlu0 %7779
      %v7782 = vmul.f32 %v6930, %v7665
      %v7783 = vmul.f32 %v6932, %v7670
      %v7784 = vmul.f32 %v6935, %v7675
      %v7785 = vmul.f32 %v6937, %v7680
      %v7786 = vmul.f32 %v6940, %v7685
      %v7787 = vmul.f32 %v6942, %v7690
      %v7788 = vmul.f32 %v6945, %v7695
      %v7789 = vmul.f32 %v6947, %v7700
      %v7790 = vmul.f32 %v6950, %v7705
      %v7791 = vmul.f32 %v6952, %v7710
      %v7792 = vmul.f32 %v6955, %v7715
      %v7793 = vmul.f32 %v6957, %v7720
      %v7794 = vmul.f32 %v6960, %v7725
      %v7795 = vmul.f32 %v6962, %v7730
      %v7796 = vmul.f32 %v6965, %v7735
      %v7797 = vmul.f32 %v6967, %v7740
      %v7798 = vmul.f32 %v6970, %v7745
      %v7799 = vmul.f32 %v6972, %v7750
      %v7800 = vmul.f32 %v6975, %v7755
      %v7801 = vmul.f32 %v6977, %v7760
      %v7802 = vmul.f32 %v6980, %v7765
      %v7803 = vmul.f32 %v6982, %v7770
      %v7804 = vmul.f32 %v6985, %v7775
      %v7805 = vmul.f32 %v6987, %v7780
      %7807 = vset.pattern.permute.xlu0 0
      %7808 = vperm.xlu0 %7807, %v7638
      %v7809 = vpop.permute.xlu0 %7808
      %7812 = vset.pattern.permute.xlu0 0
      %7813 = vperm.xlu0 %7812, %v7639
      %v7814 = vpop.permute.xlu0 %7813
      %7817 = vset.pattern.permute.xlu0 0
      %7818 = vperm.xlu0 %7817, %v7640
      %v7819 = vpop.permute.xlu0 %7818
      %7822 = vset.pattern.permute.xlu0 0
      %7823 = vperm.xlu0 %7822, %v7641
      %v7824 = vpop.permute.xlu0 %7823
      %7827 = vset.pattern.permute.xlu0 0
      %7828 = vperm.xlu0 %7827, %v7642
      %v7829 = vpop.permute.xlu0 %7828
      %7832 = vset.pattern.permute.xlu0 0
      %7833 = vperm.xlu0 %7832, %v7643
      %v7834 = vpop.permute.xlu0 %7833
      %7837 = vset.pattern.permute.xlu0 0
      %7838 = vperm.xlu0 %7837, %v7644
      %v7839 = vpop.permute.xlu0 %7838
      %7842 = vset.pattern.permute.xlu0 0
      %7843 = vperm.xlu0 %7842, %v7645
      %v7844 = vpop.permute.xlu0 %7843
      %7847 = vset.pattern.permute.xlu0 0
      %7848 = vperm.xlu0 %7847, %v7646
      %v7849 = vpop.permute.xlu0 %7848
      %7852 = vset.pattern.permute.xlu0 0
      %7853 = vperm.xlu0 %7852, %v7647
      %v7854 = vpop.permute.xlu0 %7853
      %7857 = vset.pattern.permute.xlu0 0
      %7858 = vperm.xlu0 %7857, %v7648
      %v7859 = vpop.permute.xlu0 %7858
      %7862 = vset.pattern.permute.xlu0 0
      %7863 = vperm.xlu0 %7862, %v7649
      %v7864 = vpop.permute.xlu0 %7863
      %7867 = vset.pattern.permute.xlu0 0
      %7868 = vperm.xlu0 %7867, %v7650
      %v7869 = vpop.permute.xlu0 %7868
      %7872 = vset.pattern.permute.xlu0 0
      %7873 = vperm.xlu0 %7872, %v7651
      %v7874 = vpop.permute.xlu0 %7873
      %7877 = vset.pattern.permute.xlu0 0
      %7878 = vperm.xlu0 %7877, %v7652
      %v7879 = vpop.permute.xlu0 %7878
      %7882 = vset.pattern.permute.xlu0 0
      %7883 = vperm.xlu0 %7882, %v7653
      %v7884 = vpop.permute.xlu0 %7883
      %7887 = vset.pattern.permute.xlu0 0
      %7888 = vperm.xlu0 %7887, %v7654
      %v7889 = vpop.permute.xlu0 %7888
      %7892 = vset.pattern.permute.xlu0 0
      %7893 = vperm.xlu0 %7892, %v7655
      %v7894 = vpop.permute.xlu0 %7893
      %7897 = vset.pattern.permute.xlu0 0
      %7898 = vperm.xlu0 %7897, %v7656
      %v7899 = vpop.permute.xlu0 %7898
      %7902 = vset.pattern.permute.xlu0 0
      %7903 = vperm.xlu0 %7902, %v7657
      %v7904 = vpop.permute.xlu0 %7903
      %7907 = vset.pattern.permute.xlu0 0
      %7908 = vperm.xlu0 %7907, %v7658
      %v7909 = vpop.permute.xlu0 %7908
      %7912 = vset.pattern.permute.xlu0 0
      %7913 = vperm.xlu0 %7912, %v7659
      %v7914 = vpop.permute.xlu0 %7913
      %7917 = vset.pattern.permute.xlu0 0
      %7918 = vperm.xlu0 %7917, %v7660
      %v7919 = vpop.permute.xlu0 %7918
      %7922 = vset.pattern.permute.xlu0 0
      %7923 = vperm.xlu0 %7922, %v7661
      %v7924 = vpop.permute.xlu0 %7923
      %v7926 = vadd.f32 %v7782, %v7809
      %v7927 = vadd.f32 %v7783, %v7814
      %v7928 = vadd.f32 %v7784, %v7819
      %v7929 = vadd.f32 %v7785, %v7824
      %v7930 = vadd.f32 %v7786, %v7829
      %v7931 = vadd.f32 %v7787, %v7834
      %v7932 = vadd.f32 %v7788, %v7839
      %v7933 = vadd.f32 %v7789, %v7844
      %v7934 = vadd.f32 %v7790, %v7849
      %v7935 = vadd.f32 %v7791, %v7854
      %v7936 = vadd.f32 %v7792, %v7859
      %v7937 = vadd.f32 %v7793, %v7864
      %v7938 = vadd.f32 %v7794, %v7869
      %v7939 = vadd.f32 %v7795, %v7874
      %v7940 = vadd.f32 %v7796, %v7879
      %v7941 = vadd.f32 %v7797, %v7884
      %v7942 = vadd.f32 %v7798, %v7889
      %v7943 = vadd.f32 %v7799, %v7894
      %v7944 = vadd.f32 %v7800, %v7899
      %v7945 = vadd.f32 %v7801, %v7904
      %v7946 = vadd.f32 %v7802, %v7909
      %v7947 = vadd.f32 %v7803, %v7914
      %v7948 = vadd.f32 %v7804, %v7919
      %v7949 = vadd.f32 %v7805, %v7924
      %7950 = vst.msk [vmem:[%s273] sm:$0xff] %vm6989, %v7926
      %7951 = vst.msk [vmem:[%s273 + $0x8] sm:$0xff] %vm6989, %v7927
      %7952 = vst.msk [vmem:[%s273 + $0x10] sm:$0xff] %vm6989, %v7928
      %7953 = vst.msk [vmem:[%s273 + $0x18] sm:$0xff] %vm6989, %v7929
      %7954 = vst.msk [vmem:[%s273 + $0x20] sm:$0xff] %vm6989, %v7930
      %7955 = vst.msk [vmem:[%s273 + $0x28] sm:$0xff] %vm6989, %v7931
      %7956 = vst.msk [vmem:[%s273 + $0x30] sm:$0xff] %vm6989, %v7932
      %7957 = vst.msk [vmem:[%s273 + $0x38] sm:$0xff] %vm6989, %v7933
      %7958 = vst.msk [vmem:[%s273 + $0x40] sm:$0xff] %vm6989, %v7934
      %7959 = vst.msk [vmem:[%s273 + $0x48] sm:$0xff] %vm6989, %v7935
      %7960 = vst.msk [vmem:[%s273 + $0x50] sm:$0xff] %vm6989, %v7936
      %7961 = vst.msk [vmem:[%s273 + $0x58] sm:$0xff] %vm6989, %v7937
      %7962 = vst.msk [vmem:[%s273 + $0x60] sm:$0xff] %vm6989, %v7938
      %7963 = vst.msk [vmem:[%s273 + $0x68] sm:$0xff] %vm6989, %v7939
      %7964 = vst.msk [vmem:[%s273 + $0x70] sm:$0xff] %vm6989, %v7940
      %7965 = vst.msk [vmem:[%s273 + $0x78] sm:$0xff] %vm6989, %v7941
      %7966 = vst.msk [vmem:[%s273 + $0x80] sm:$0xff] %vm6989, %v7942
      %7967 = vst.msk [vmem:[%s273 + $0x88] sm:$0xff] %vm6989, %v7943
      %7968 = vst.msk [vmem:[%s273 + $0x90] sm:$0xff] %vm6989, %v7944
      %7969 = vst.msk [vmem:[%s273 + $0x98] sm:$0xff] %vm6989, %v7945
      %7970 = vst.msk [vmem:[%s273 + $0xa0] sm:$0xff] %vm6989, %v7946
      %7971 = vst.msk [vmem:[%s273 + $0xa8] sm:$0xff] %vm6989, %v7947
      %7972 = vst.msk [vmem:[%s273 + $0xb0] sm:$0xff] %vm6989, %v7948
      %7973 = vst.msk [vmem:[%s273 + $0xb8] sm:$0xff] %vm6989, %v7949
      %s7974 = smul.u32 24, %s16
      %p7975 = scmp.lt.s32.totalorder %s7974, 47
      %s7976 = scalar_select %p7975, %s7974, 47
      %s7977 = smul.addr %s7976, 8
      %s7978 = scalar_lea.vmem %s5, %s7977
      // Predicated region
      $region41: #{tpu_custom_call.1} parent=39 // pred_check
        %p7979 = pneg %p154
      $region42: #{tpu_custom_call.1} parent=39 // pred_check_branch
        %7981 = sbr.rel (%p7979) target = $region44
      $region43: #{tpu_custom_call.1} parent=39 // pred_region
        %s7982 = smul.u32 24, %s16
      $region44: #{tpu_custom_call.1} parent=39 // pred_fallthru
        _
    $region40: #{tpu_custom_call.1} parent=5 // pred_fallthru
      _
    %p7983 = scmp.le.s32.totalorder 2, %s11
    // Predicated region
    $region45: #{tpu_custom_call.1} parent=5 // pred_check
      %p7984 = pneg %p7983
    $region46: #{tpu_custom_call.1} parent=5 // pred_check_branch
      %7986 = sbr.rel (%p7984) target = $region48
    $region47: #{tpu_custom_call.1} parent=5 // pred_region
      %s7987 = ssub.s32 %s11, 2
      // Predicated region
      $region49: #{tpu_custom_call.1} parent=47 // pred_check
        %p7988 = pneg %p160
      $region50: #{tpu_custom_call.1} parent=47 // pred_check_branch
        %7990 = sbr.rel (%p7988) target = $region52
      $region51: #{tpu_custom_call.1} parent=47 // pred_region
        %s7991 = smul.u32 24, %s17
        %p7992 = scmp.lt.s32.totalorder %s7991, 47
        %s7993 = scalar_select %p7992, %s7991, 47
        %s7994 = smul.addr %s7993, 8
        %s7995 = scalar_lea.vmem %s5, %s7994
      $region52: #{tpu_custom_call.1} parent=47 // pred_fallthru
        _
    $region48: #{tpu_custom_call.1} parent=5 // pred_fallthru
      _
  $region6: #{tpu_custom_call.1} parent=0 // loop_footer
    %s15 = sadd.s32 1, %s11
  $region7: #{tpu_custom_call.1} parent=0 // loop_footer_branch
    %10 = sbr.rel target = $region3
  $region8: #{tpu_custom_call.1} parent=0 // loop_exit
    _

</llo_original>
